<compile_context>
chip_gen: v6e
topology: v6e:2x2x1
jax: 0.10.0
libtpu: 0.0.40
codegen_flags: <defaults>
</compile_context>

<pallas_src>
import jax
import jax.numpy as jnp
from jax.experimental import pallas as pl
from jax.experimental.pallas import tpu as pltpu

EPS = 1e-6


def _stab(z):
    """LRP epsilon-stabilized denominator: z + eps * sign(z) (sign(0) := +1)."""
    return z + EPS * jnp.where(z >= 0.0, 1.0, -1.0)


def _tap_valid_masks(H, W):
    """(9, H*W) masks: mask[d0*3+d1, h*W+w] = 1 iff (h+d0-1, w+d1-1) in-bounds."""
    hh = jnp.arange(H)
    ww = jnp.arange(W)
    rows = []
    for d0 in range(3):
        mh = ((hh + (d0 - 1) >= 0) & (hh + (d0 - 1) < H)).astype(jnp.float32)
        for d1 in range(3):
            mw = ((ww + (d1 - 1) >= 0) & (ww + (d1 - 1) < W)).astype(jnp.float32)
            rows.append((mh[:, None] * mw[None, :]).reshape(H * W))
    return jnp.stack(rows, axis=0)


def _lrp_fused(x_s, w9s, conv_b2, fc_wt, fc_w2, fc_b2, inv_z, wflip9c, mask9c,
               *, H, W):
    """Fused forward + LRP chain.  One grid step per batch element."""
    N, HW, Cin = x_s.shape
    Cout = conv_b2.shape[1]
    NC = fc_b2.shape[1]
    LP = 128                       # sublane-aligned zero pad (>= W+1 rows)
    SROWS = LP + HW + LP           # padded scratch rows (zeros on both sides)
    inv_hw = 1.0 / HW
    f32 = jnp.float32

    def kernel(x_ref, w9_ref, cb_ref, fcwt_ref, fcw_ref, fcb_ref, invz_ref,
               wflip_ref, mask_ref, out_ref, xsc, ssc):
        # Zero the padded scratches: pad rows must be exact zeros
        # (uninitialised VMEM could hold NaNs, and the validity masks only
        # protect against finite garbage).
        xsc[...] = jnp.zeros_like(xsc)
        ssc[...] = jnp.zeros_like(ssc)
        xsc[LP:LP + HW, :] = x_ref[0]                        # (HW, Cin)

        # ---- conv3x3(pad=1) + bias + ReLU: 9 shifted/masked MXU matmuls ----
        conv = jnp.zeros((HW, Cout), f32)
        for d0 in range(3):
            for d1 in range(3):
                tap = d0 * 3 + d1
                off = (d0 - 1) * W + (d1 - 1)
                xs = xsc[LP + off:LP + off + HW, :] * mask_ref[tap]
                conv = conv + jnp.dot(xs, w9_ref[tap],
                                      preferred_element_type=f32)
        relu = jnp.maximum(conv + cb_ref[...], 0.0)          # (HW, Cout)

        # ---- global avg pool -> classifier -> softmax relevance seed -------
        gap = jnp.sum(relu, axis=0, keepdims=True) * inv_hw  # (1, Cout)
        fcwt = fcwt_ref[...]                                 # (Cout, NC)
        fcw = fcw_ref[...]                                   # (NC, Cout)
        logits = jnp.dot(gap, fcwt, preferred_element_type=f32) + fcb_ref[...]
        lmax = jnp.max(logits, axis=-1, keepdims=True)
        ex = jnp.exp(logits - lmax)
        rel = ex / jnp.sum(ex, axis=-1, keepdims=True)       # (1, NC)

        # ---- LRP(Linear), z+ rule (activation = flatten output == gap) -----
        fcwt_p = jnp.maximum(fcwt, 0.0)
        fcw_p = jnp.maximum(fcw, 0.0)
        z = jnp.dot(gap, fcwt_p, preferred_element_type=f32)
        s = rel / _stab(z)
        c = jnp.dot(s, fcw_p, preferred_element_type=f32)    # (1, Cout)
        rel = gap * c

        # ---- LRP(Flatten)=reshape; LRP(AvgPool) z rule; LRP(ReLU)=identity;
        # then the (hoisted) conv z+ denominator of the ones-activation:
        # inv_z = (1/HW) / stab(zmap) precomputed on the host. ----------------
        s2 = rel / _stab(gap)                                # (1, Cout)
        s_map = relu * s2 * invz_ref[...]                    # (HW, Cout)
        ssc[LP:LP + HW, :] = s_map

        # ---- LRP(Conv2d) z+ rule + final channel sum: the transpose-conv is
        # 9 shifted reads of the VMEM-resident s map contracted on the MXU
        # with the channel-summed, spatially flipped positive taps. ----------
        acc = jnp.zeros((HW, 1), f32)
        for d0 in range(3):
            for d1 in range(3):
                tap = d0 * 3 + d1
                off = (d0 - 1) * W + (d1 - 1)
                sh = ssc[LP + off:LP + off + HW, :]          # (HW, Cout)
                acc = acc + (jnp.dot(sh, wflip_ref[tap],
                                     preferred_element_type=f32)
                             * mask_ref[tap])
        out_ref[0] = acc

    return pl.pallas_call(
        kernel,
        grid=(N,),
        in_specs=[
            pl.BlockSpec((1, HW, Cin), lambda n: (n, 0, 0)),
            pl.BlockSpec((9, Cin, Cout), lambda n: (0, 0, 0)),
            pl.BlockSpec((1, Cout), lambda n: (0, 0)),
            pl.BlockSpec((Cout, NC), lambda n: (0, 0)),
            pl.BlockSpec((NC, Cout), lambda n: (0, 0)),
            pl.BlockSpec((1, NC), lambda n: (0, 0)),
            pl.BlockSpec((HW, Cout), lambda n: (0, 0)),
            pl.BlockSpec((9, Cout, 1), lambda n: (0, 0, 0)),
            pl.BlockSpec((9, HW, 1), lambda n: (0, 0, 0)),
        ],
        out_specs=pl.BlockSpec((1, HW, 1), lambda n: (n, 0, 0)),
        out_shape=jax.ShapeDtypeStruct((N, HW, 1), f32),
        scratch_shapes=[pltpu.VMEM((SROWS, Cin), f32),
                        pltpu.VMEM((SROWS, Cout), f32)],
        compiler_params=pltpu.CompilerParams(
            dimension_semantics=("parallel",)),
    )(x_s, w9s, conv_b2, fc_wt, fc_w2, fc_b2, inv_z, wflip9c, mask9c)


@jax.jit
def lrp_model_forward(x_nchw, conv_w, conv_b, fc_w, fc_b):
    """Mirrors LRPModel.forward (topk=-1, target_class=None).

    Returns per-pixel relevance (N, H, W) (channel-summed), matching
    `relevance.permute(0, 2, 3, 1).sum(dim=-1).squeeze()`.
    """
    x = jnp.transpose(x_nchw, (0, 2, 3, 1)).astype(jnp.float32)   # NHWC
    N, H, W, Cin = x.shape
    Cout = conv_w.shape[0]
    NC = fc_w.shape[0]
    HW = H * W

    x_s = x.reshape(N, HW, Cin)                                   # (N, HW, Cin)

    # conv weight per tap:  w9s[d0*3+d1, ci, co] = conv_w[co, ci, d0, d1]
    w4 = jnp.transpose(conv_w, (2, 3, 1, 0)).astype(jnp.float32)  # (3,3,Cin,Cout)
    w9s = w4.reshape(9, Cin, Cout)

    # channel-summed positive taps (the "ones" activation, the multiply-by-ones
    # and the final Cin sum of the LRP conv rule all fold into these scalars),
    # spatially flipped for the transpose-conv.
    tap_sums = jnp.sum(jnp.maximum(w4, 0.0), axis=2)              # (3,3,Cout)
    wflip9c = tap_sums[::-1, ::-1, :].reshape(9, Cout)[..., None] # (9,Cout,1)

    # 3x3 boundary-validity masks shared by the forward conv and the backward
    # transpose-conv (batch independent, constant-folded by XLA).
    mask9 = _tap_valid_masks(H, W)                                # (9, HW)
    mask9c = mask9[..., None]                                     # (9, HW, 1)

    # Hoisted, batch-independent conv z+ denominator for the all-ones first
    # activation, pre-inverted and fused with the avg-pool 1/HW factor.
    zmap = jnp.einsum('ti,tc->ic', mask9, tap_sums.reshape(9, Cout))
    inv_z = (1.0 / HW) / _stab(zmap)                              # (HW, Cout)

    conv_b2 = conv_b.reshape(1, Cout).astype(jnp.float32)
    fc_w2 = fc_w.astype(jnp.float32)                              # (NC, Cout)
    fc_wt = jnp.transpose(fc_w2)                                  # (Cout, NC)
    fc_b2 = fc_b.reshape(1, NC).astype(jnp.float32)

    rel = _lrp_fused(x_s, w9s, conv_b2, fc_wt, fc_w2, fc_b2, inv_z,
                     wflip9c, mask9c, H=H, W=W)                   # (N, HW, 1)

    # permute(0,2,3,1).sum(-1).squeeze()  (channel sum already fused in-kernel)
    return jnp.squeeze(rel.reshape(N, H, W))


if __name__ == "__main__":
    key = jax.random.PRNGKey(0)
    k_x, k_cw, k_cb, k_fw, k_fb = jax.random.split(key, 5)

    N, Cin, H, W = 2, 4, 16, 16
    Cout, n_classes = 8, 10

    x = jax.random.normal(k_x, (N, Cin, H, W), jnp.float32)
    conv_w = 0.1 * jax.random.normal(k_cw, (Cout, Cin, 3, 3), jnp.float32)
    conv_b = 0.1 * jax.random.normal(k_cb, (Cout,), jnp.float32)
    fc_w = 0.1 * jax.random.normal(k_fw, (n_classes, Cout), jnp.float32)
    fc_b = 0.1 * jax.random.normal(k_fb, (n_classes,), jnp.float32)

    out = lrp_model_forward(x, conv_w, conv_b, fc_w, fc_b)
    jax.block_until_ready(out)
    assert out.shape == (N, H, W), out.shape
    print("KERNEL_OK")
</pallas_src>

<mosaic_0001>
module attributes {stable_mosaic.version = 11 : i64} {
  func.func @kernel(%arg0: i32, %arg1: memref<1x256x4xf32, #tpu.memory_space<vmem>>, %arg2: memref<9x4x8xf32, #tpu.memory_space<vmem>>, %arg3: memref<1x8xf32, #tpu.memory_space<vmem>>, %arg4: memref<8x10xf32, #tpu.memory_space<vmem>>, %arg5: memref<10x8xf32, #tpu.memory_space<vmem>>, %arg6: memref<1x10xf32, #tpu.memory_space<vmem>>, %arg7: memref<256x8xf32, #tpu.memory_space<vmem>>, %arg8: memref<9x8x1xf32, #tpu.memory_space<vmem>>, %arg9: memref<9x256x1xf32, #tpu.memory_space<vmem>>, %arg10: memref<1x256x1xf32, #tpu.memory_space<vmem>>, %arg11: memref<512x4xf32, #tpu.memory_space<vmem>>, %arg12: memref<512x8xf32, #tpu.memory_space<vmem>>) attributes {dimension_semantics = [#tpu.dimension_semantics<parallel>], iteration_bounds = array<i64: 2>, scalar_prefetch = 0 : i64, scratch_operands = 2 : i64, tpu.core_type = #tpu.core_type<tc>, window_params = [{transform_indices = @transform_0, window_bounds = array<i64: 1, 256, 4>}, {pipeline_mode = #tpu.pipeline_mode<synchronous>, transform_indices = @transform_1, window_bounds = array<i64: 9, 4, 8>}, {pipeline_mode = #tpu.pipeline_mode<synchronous>, transform_indices = @transform_2, window_bounds = array<i64: 1, 8>}, {pipeline_mode = #tpu.pipeline_mode<synchronous>, transform_indices = @transform_3, window_bounds = array<i64: 8, 10>}, {pipeline_mode = #tpu.pipeline_mode<synchronous>, transform_indices = @transform_4, window_bounds = array<i64: 10, 8>}, {pipeline_mode = #tpu.pipeline_mode<synchronous>, transform_indices = @transform_5, window_bounds = array<i64: 1, 10>}, {pipeline_mode = #tpu.pipeline_mode<synchronous>, transform_indices = @transform_6, window_bounds = array<i64: 256, 8>}, {pipeline_mode = #tpu.pipeline_mode<synchronous>, transform_indices = @transform_7, window_bounds = array<i64: 9, 8, 1>}, {pipeline_mode = #tpu.pipeline_mode<synchronous>, transform_indices = @transform_8, window_bounds = array<i64: 9, 256, 1>}, {transform_indices = @transform_9, window_bounds = array<i64: 1, 256, 1>}]} {
    %cst = arith.constant 0.000000e+00 : f32
    %0 = vector.broadcast %cst : f32 to vector<512x4xf32>
    %c0 = arith.constant 0 : index
    %c0_0 = arith.constant 0 : index
    %1 = vector.load %arg11[%c0, %c0_0] : memref<512x4xf32, #tpu.memory_space<vmem>>, vector<512x4xf32>
    tpu.vector_store %arg11[%c0, %c0_0], %0 {strides = array<i32>} : memref<512x4xf32, #tpu.memory_space<vmem>>, vector<512x4xf32>,
    %cst_1 = arith.constant 0.000000e+00 : f32
    %2 = vector.broadcast %cst_1 : f32 to vector<512x8xf32>
    %c0_2 = arith.constant 0 : index
    %c0_3 = arith.constant 0 : index
    %3 = vector.load %arg12[%c0_2, %c0_3] : memref<512x8xf32, #tpu.memory_space<vmem>>, vector<512x8xf32>
    tpu.vector_store %arg12[%c0_2, %c0_3], %2 {strides = array<i32>} : memref<512x8xf32, #tpu.memory_space<vmem>>, vector<512x8xf32>,
    %c0_4 = arith.constant 0 : index
    %c0_5 = arith.constant 0 : index
    %c0_6 = arith.constant 0 : index
    %4 = vector.load %arg1[%c0_4, %c0_5, %c0_6] : memref<1x256x4xf32, #tpu.memory_space<vmem>>, vector<1x256x4xf32>
    %5 = vector.shape_cast %4 : vector<1x256x4xf32> to vector<256x4xf32>
    %c128 = arith.constant 128 : index
    %c0_7 = arith.constant 0 : index
    %6 = vector.load %arg11[%c128, %c0_7] : memref<512x4xf32, #tpu.memory_space<vmem>>, vector<256x4xf32>
    tpu.vector_store %arg11[%c128, %c0_7], %5 {strides = array<i32>} : memref<512x4xf32, #tpu.memory_space<vmem>>, vector<256x4xf32>,
    %cst_8 = arith.constant 0.000000e+00 : f32
    %7 = vector.broadcast %cst_8 : f32 to vector<256x8xf32>
    %c111 = arith.constant 111 : index
    %c0_9 = arith.constant 0 : index
    %8 = vector.load %arg11[%c111, %c0_9] : memref<512x4xf32, #tpu.memory_space<vmem>>, vector<256x4xf32>
    %c0_10 = arith.constant 0 : index
    %c0_11 = arith.constant 0 : index
    %c0_12 = arith.constant 0 : index
    %9 = vector.load %arg9[%c0_10, %c0_11, %c0_12] : memref<9x256x1xf32, #tpu.memory_space<vmem>>, vector<1x256x1xf32>
    %10 = vector.shape_cast %9 : vector<1x256x1xf32> to vector<256x1xf32>
    %11 = vector.broadcast %10 : vector<256x1xf32> to vector<256x4xf32>
    %12 = arith.mulf %8, %11 : vector<256x4xf32>
    %c0_13 = arith.constant 0 : index
    %c0_14 = arith.constant 0 : index
    %c0_15 = arith.constant 0 : index
    %13 = vector.load %arg2[%c0_13, %c0_14, %c0_15] : memref<9x4x8xf32, #tpu.memory_space<vmem>>, vector<1x4x8xf32>
    %14 = vector.shape_cast %13 : vector<1x4x8xf32> to vector<4x8xf32>
    %cst_16 = arith.constant dense<0.000000e+00> : vector<256x8xf32>
    %15 = tpu.matmul %12, %14, %cst_16 {dimension_numbers = #tpu.dot_dimension_numbers<[1], [0], [0], [1], [0, 0, 1, 1], [], []>} : vector<256x4xf32>, vector<4x8xf32>, vector<256x8xf32> -> vector<256x8xf32>
    %16 = arith.addf %7, %15 : vector<256x8xf32>
    %c112 = arith.constant 112 : index
    %c0_17 = arith.constant 0 : index
    %17 = vector.load %arg11[%c112, %c0_17] : memref<512x4xf32, #tpu.memory_space<vmem>>, vector<256x4xf32>
    %c1 = arith.constant 1 : index
    %c0_18 = arith.constant 0 : index
    %c0_19 = arith.constant 0 : index
    %18 = vector.load %arg9[%c1, %c0_18, %c0_19] : memref<9x256x1xf32, #tpu.memory_space<vmem>>, vector<1x256x1xf32>
    %19 = vector.shape_cast %18 : vector<1x256x1xf32> to vector<256x1xf32>
    %20 = vector.broadcast %19 : vector<256x1xf32> to vector<256x4xf32>
    %21 = arith.mulf %17, %20 : vector<256x4xf32>
    %c1_20 = arith.constant 1 : index
    %c0_21 = arith.constant 0 : index
    %c0_22 = arith.constant 0 : index
    %22 = vector.load %arg2[%c1_20, %c0_21, %c0_22] : memref<9x4x8xf32, #tpu.memory_space<vmem>>, vector<1x4x8xf32>
    %23 = vector.shape_cast %22 : vector<1x4x8xf32> to vector<4x8xf32>
    %cst_23 = arith.constant dense<0.000000e+00> : vector<256x8xf32>
    %24 = tpu.matmul %21, %23, %cst_23 {dimension_numbers = #tpu.dot_dimension_numbers<[1], [0], [0], [1], [0, 0, 1, 1], [], []>} : vector<256x4xf32>, vector<4x8xf32>, vector<256x8xf32> -> vector<256x8xf32>
    %25 = arith.addf %16, %24 : vector<256x8xf32>
    %c113 = arith.constant 113 : index
    %c0_24 = arith.constant 0 : index
    %26 = vector.load %arg11[%c113, %c0_24] : memref<512x4xf32, #tpu.memory_space<vmem>>, vector<256x4xf32>
    %c2 = arith.constant 2 : index
    %c0_25 = arith.constant 0 : index
    %c0_26 = arith.constant 0 : index
    %27 = vector.load %arg9[%c2, %c0_25, %c0_26] : memref<9x256x1xf32, #tpu.memory_space<vmem>>, vector<1x256x1xf32>
    %28 = vector.shape_cast %27 : vector<1x256x1xf32> to vector<256x1xf32>
    %29 = vector.broadcast %28 : vector<256x1xf32> to vector<256x4xf32>
    %30 = arith.mulf %26, %29 : vector<256x4xf32>
    %c2_27 = arith.constant 2 : index
    %c0_28 = arith.constant 0 : index
    %c0_29 = arith.constant 0 : index
    %31 = vector.load %arg2[%c2_27, %c0_28, %c0_29] : memref<9x4x8xf32, #tpu.memory_space<vmem>>, vector<1x4x8xf32>
    %32 = vector.shape_cast %31 : vector<1x4x8xf32> to vector<4x8xf32>
    %cst_30 = arith.constant dense<0.000000e+00> : vector<256x8xf32>
    %33 = tpu.matmul %30, %32, %cst_30 {dimension_numbers = #tpu.dot_dimension_numbers<[1], [0], [0], [1], [0, 0, 1, 1], [], []>} : vector<256x4xf32>, vector<4x8xf32>, vector<256x8xf32> -> vector<256x8xf32>
    %34 = arith.addf %25, %33 : vector<256x8xf32>
    %c127 = arith.constant 127 : index
    %c0_31 = arith.constant 0 : index
    %35 = vector.load %arg11[%c127, %c0_31] : memref<512x4xf32, #tpu.memory_space<vmem>>, vector<256x4xf32>
    %c3 = arith.constant 3 : index
    %c0_32 = arith.constant 0 : index
    %c0_33 = arith.constant 0 : index
    %36 = vector.load %arg9[%c3, %c0_32, %c0_33] : memref<9x256x1xf32, #tpu.memory_space<vmem>>, vector<1x256x1xf32>
    %37 = vector.shape_cast %36 : vector<1x256x1xf32> to vector<256x1xf32>
    %38 = vector.broadcast %37 : vector<256x1xf32> to vector<256x4xf32>
    %39 = arith.mulf %35, %38 : vector<256x4xf32>
    %c3_34 = arith.constant 3 : index
    %c0_35 = arith.constant 0 : index
    %c0_36 = arith.constant 0 : index
    %40 = vector.load %arg2[%c3_34, %c0_35, %c0_36] : memref<9x4x8xf32, #tpu.memory_space<vmem>>, vector<1x4x8xf32>
    %41 = vector.shape_cast %40 : vector<1x4x8xf32> to vector<4x8xf32>
    %cst_37 = arith.constant dense<0.000000e+00> : vector<256x8xf32>
    %42 = tpu.matmul %39, %41, %cst_37 {dimension_numbers = #tpu.dot_dimension_numbers<[1], [0], [0], [1], [0, 0, 1, 1], [], []>} : vector<256x4xf32>, vector<4x8xf32>, vector<256x8xf32> -> vector<256x8xf32>
    %43 = arith.addf %34, %42 : vector<256x8xf32>
    %c128_38 = arith.constant 128 : index
    %c0_39 = arith.constant 0 : index
    %44 = vector.load %arg11[%c128_38, %c0_39] : memref<512x4xf32, #tpu.memory_space<vmem>>, vector<256x4xf32>
    %c4 = arith.constant 4 : index
    %c0_40 = arith.constant 0 : index
    %c0_41 = arith.constant 0 : index
    %45 = vector.load %arg9[%c4, %c0_40, %c0_41] : memref<9x256x1xf32, #tpu.memory_space<vmem>>, vector<1x256x1xf32>
    %46 = vector.shape_cast %45 : vector<1x256x1xf32> to vector<256x1xf32>
    %47 = vector.broadcast %46 : vector<256x1xf32> to vector<256x4xf32>
    %48 = arith.mulf %44, %47 : vector<256x4xf32>
    %c4_42 = arith.constant 4 : index
    %c0_43 = arith.constant 0 : index
    %c0_44 = arith.constant 0 : index
    %49 = vector.load %arg2[%c4_42, %c0_43, %c0_44] : memref<9x4x8xf32, #tpu.memory_space<vmem>>, vector<1x4x8xf32>
    %50 = vector.shape_cast %49 : vector<1x4x8xf32> to vector<4x8xf32>
    %cst_45 = arith.constant dense<0.000000e+00> : vector<256x8xf32>
    %51 = tpu.matmul %48, %50, %cst_45 {dimension_numbers = #tpu.dot_dimension_numbers<[1], [0], [0], [1], [0, 0, 1, 1], [], []>} : vector<256x4xf32>, vector<4x8xf32>, vector<256x8xf32> -> vector<256x8xf32>
    %52 = arith.addf %43, %51 : vector<256x8xf32>
    %c129 = arith.constant 129 : index
    %c0_46 = arith.constant 0 : index
    %53 = vector.load %arg11[%c129, %c0_46] : memref<512x4xf32, #tpu.memory_space<vmem>>, vector<256x4xf32>
    %c5 = arith.constant 5 : index
    %c0_47 = arith.constant 0 : index
    %c0_48 = arith.constant 0 : index
    %54 = vector.load %arg9[%c5, %c0_47, %c0_48] : memref<9x256x1xf32, #tpu.memory_space<vmem>>, vector<1x256x1xf32>
    %55 = vector.shape_cast %54 : vector<1x256x1xf32> to vector<256x1xf32>
    %56 = vector.broadcast %55 : vector<256x1xf32> to vector<256x4xf32>
    %57 = arith.mulf %53, %56 : vector<256x4xf32>
    %c5_49 = arith.constant 5 : index
    %c0_50 = arith.constant 0 : index
    %c0_51 = arith.constant 0 : index
    %58 = vector.load %arg2[%c5_49, %c0_50, %c0_51] : memref<9x4x8xf32, #tpu.memory_space<vmem>>, vector<1x4x8xf32>
    %59 = vector.shape_cast %58 : vector<1x4x8xf32> to vector<4x8xf32>
    %cst_52 = arith.constant dense<0.000000e+00> : vector<256x8xf32>
    %60 = tpu.matmul %57, %59, %cst_52 {dimension_numbers = #tpu.dot_dimension_numbers<[1], [0], [0], [1], [0, 0, 1, 1], [], []>} : vector<256x4xf32>, vector<4x8xf32>, vector<256x8xf32> -> vector<256x8xf32>
    %61 = arith.addf %52, %60 : vector<256x8xf32>
    %c143 = arith.constant 143 : index
    %c0_53 = arith.constant 0 : index
    %62 = vector.load %arg11[%c143, %c0_53] : memref<512x4xf32, #tpu.memory_space<vmem>>, vector<256x4xf32>
    %c6 = arith.constant 6 : index
    %c0_54 = arith.constant 0 : index
    %c0_55 = arith.constant 0 : index
    %63 = vector.load %arg9[%c6, %c0_54, %c0_55] : memref<9x256x1xf32, #tpu.memory_space<vmem>>, vector<1x256x1xf32>
    %64 = vector.shape_cast %63 : vector<1x256x1xf32> to vector<256x1xf32>
    %65 = vector.broadcast %64 : vector<256x1xf32> to vector<256x4xf32>
    %66 = arith.mulf %62, %65 : vector<256x4xf32>
    %c6_56 = arith.constant 6 : index
    %c0_57 = arith.constant 0 : index
    %c0_58 = arith.constant 0 : index
    %67 = vector.load %arg2[%c6_56, %c0_57, %c0_58] : memref<9x4x8xf32, #tpu.memory_space<vmem>>, vector<1x4x8xf32>
    %68 = vector.shape_cast %67 : vector<1x4x8xf32> to vector<4x8xf32>
    %cst_59 = arith.constant dense<0.000000e+00> : vector<256x8xf32>
    %69 = tpu.matmul %66, %68, %cst_59 {dimension_numbers = #tpu.dot_dimension_numbers<[1], [0], [0], [1], [0, 0, 1, 1], [], []>} : vector<256x4xf32>, vector<4x8xf32>, vector<256x8xf32> -> vector<256x8xf32>
    %70 = arith.addf %61, %69 : vector<256x8xf32>
    %c144 = arith.constant 144 : index
    %c0_60 = arith.constant 0 : index
    %71 = vector.load %arg11[%c144, %c0_60] : memref<512x4xf32, #tpu.memory_space<vmem>>, vector<256x4xf32>
    %c7 = arith.constant 7 : index
    %c0_61 = arith.constant 0 : index
    %c0_62 = arith.constant 0 : index
    %72 = vector.load %arg9[%c7, %c0_61, %c0_62] : memref<9x256x1xf32, #tpu.memory_space<vmem>>, vector<1x256x1xf32>
    %73 = vector.shape_cast %72 : vector<1x256x1xf32> to vector<256x1xf32>
    %74 = vector.broadcast %73 : vector<256x1xf32> to vector<256x4xf32>
    %75 = arith.mulf %71, %74 : vector<256x4xf32>
    %c7_63 = arith.constant 7 : index
    %c0_64 = arith.constant 0 : index
    %c0_65 = arith.constant 0 : index
    %76 = vector.load %arg2[%c7_63, %c0_64, %c0_65] : memref<9x4x8xf32, #tpu.memory_space<vmem>>, vector<1x4x8xf32>
    %77 = vector.shape_cast %76 : vector<1x4x8xf32> to vector<4x8xf32>
    %cst_66 = arith.constant dense<0.000000e+00> : vector<256x8xf32>
    %78 = tpu.matmul %75, %77, %cst_66 {dimension_numbers = #tpu.dot_dimension_numbers<[1], [0], [0], [1], [0, 0, 1, 1], [], []>} : vector<256x4xf32>, vector<4x8xf32>, vector<256x8xf32> -> vector<256x8xf32>
    %79 = arith.addf %70, %78 : vector<256x8xf32>
    %c145 = arith.constant 145 : index
    %c0_67 = arith.constant 0 : index
    %80 = vector.load %arg11[%c145, %c0_67] : memref<512x4xf32, #tpu.memory_space<vmem>>, vector<256x4xf32>
    %c8 = arith.constant 8 : index
    %c0_68 = arith.constant 0 : index
    %c0_69 = arith.constant 0 : index
    %81 = vector.load %arg9[%c8, %c0_68, %c0_69] : memref<9x256x1xf32, #tpu.memory_space<vmem>>, vector<1x256x1xf32>
    %82 = vector.shape_cast %81 : vector<1x256x1xf32> to vector<256x1xf32>
    %83 = vector.broadcast %82 : vector<256x1xf32> to vector<256x4xf32>
    %84 = arith.mulf %80, %83 : vector<256x4xf32>
    %c8_70 = arith.constant 8 : index
    %c0_71 = arith.constant 0 : index
    %c0_72 = arith.constant 0 : index
    %85 = vector.load %arg2[%c8_70, %c0_71, %c0_72] : memref<9x4x8xf32, #tpu.memory_space<vmem>>, vector<1x4x8xf32>
    %86 = vector.shape_cast %85 : vector<1x4x8xf32> to vector<4x8xf32>
    %cst_73 = arith.constant dense<0.000000e+00> : vector<256x8xf32>
    %87 = tpu.matmul %84, %86, %cst_73 {dimension_numbers = #tpu.dot_dimension_numbers<[1], [0], [0], [1], [0, 0, 1, 1], [], []>} : vector<256x4xf32>, vector<4x8xf32>, vector<256x8xf32> -> vector<256x8xf32>
    %88 = arith.addf %79, %87 : vector<256x8xf32>
    %c0_74 = arith.constant 0 : index
    %c0_75 = arith.constant 0 : index
    %89 = vector.load %arg3[%c0_74, %c0_75] : memref<1x8xf32, #tpu.memory_space<vmem>>, vector<1x8xf32>
    %90 = vector.broadcast %89 : vector<1x8xf32> to vector<256x8xf32>
    %91 = arith.addf %88, %90 : vector<256x8xf32>
    %cst_76 = arith.constant 0.000000e+00 : f32
    %92 = vector.broadcast %cst_76 : f32 to vector<256x8xf32>
    %93 = arith.maximumf %91, %92 : vector<256x8xf32>
    %cst_77 = arith.constant dense<0.000000e+00> : vector<8xf32>
    %94 = vector.multi_reduction <add>, %93, %cst_77 [0] : vector<256x8xf32> to vector<8xf32>
    %95 = vector.shape_cast %94 : vector<8xf32> to vector<1x8xf32>
    %cst_78 = arith.constant 3.906250e-03 : f32
    %96 = vector.broadcast %cst_78 : f32 to vector<1x8xf32>
    %97 = arith.mulf %95, %96 : vector<1x8xf32>
    %c0_79 = arith.constant 0 : index
    %c0_80 = arith.constant 0 : index
    %98 = vector.load %arg4[%c0_79, %c0_80] : memref<8x10xf32, #tpu.memory_space<vmem>>, vector<8x10xf32>
    %c0_81 = arith.constant 0 : index
    %c0_82 = arith.constant 0 : index
    %99 = vector.load %arg5[%c0_81, %c0_82] : memref<10x8xf32, #tpu.memory_space<vmem>>, vector<10x8xf32>
    %cst_83 = arith.constant dense<0.000000e+00> : vector<1x10xf32>
    %100 = tpu.matmul %97, %98, %cst_83 {dimension_numbers = #tpu.dot_dimension_numbers<[1], [0], [0], [1], [0, 0, 1, 1], [], []>} : vector<1x8xf32>, vector<8x10xf32>, vector<1x10xf32> -> vector<1x10xf32>
    %c0_84 = arith.constant 0 : index
    %c0_85 = arith.constant 0 : index
    %101 = vector.load %arg6[%c0_84, %c0_85] : memref<1x10xf32, #tpu.memory_space<vmem>>, vector<1x10xf32>
    %102 = arith.addf %100, %101 : vector<1x10xf32>
    %cst_86 = arith.constant dense<0xFF800000> : vector<1xf32>
    %103 = vector.multi_reduction <maximumf>, %102, %cst_86 [1] : vector<1x10xf32> to vector<1xf32>
    %104 = vector.shape_cast %103 : vector<1xf32> to vector<1x1xf32>
    %105 = vector.broadcast %104 : vector<1x1xf32> to vector<1x10xf32>
    %106 = arith.subf %102, %105 : vector<1x10xf32>
    %107 = math.exp %106 : vector<1x10xf32>
    %cst_87 = arith.constant dense<0.000000e+00> : vector<1xf32>
    %108 = vector.multi_reduction <add>, %107, %cst_87 [1] : vector<1x10xf32> to vector<1xf32>
    %109 = vector.shape_cast %108 : vector<1xf32> to vector<1x1xf32>
    %110 = vector.broadcast %109 : vector<1x1xf32> to vector<1x10xf32>
    %111 = arith.divf %107, %110 : vector<1x10xf32>
    %cst_88 = arith.constant 0.000000e+00 : f32
    %112 = vector.broadcast %cst_88 : f32 to vector<8x10xf32>
    %113 = arith.maximumf %98, %112 : vector<8x10xf32>
    %cst_89 = arith.constant 0.000000e+00 : f32
    %114 = vector.broadcast %cst_89 : f32 to vector<10x8xf32>
    %115 = arith.maximumf %99, %114 : vector<10x8xf32>
    %cst_90 = arith.constant dense<0.000000e+00> : vector<1x10xf32>
    %116 = tpu.matmul %97, %113, %cst_90 {dimension_numbers = #tpu.dot_dimension_numbers<[1], [0], [0], [1], [0, 0, 1, 1], [], []>} : vector<1x8xf32>, vector<8x10xf32>, vector<1x10xf32> -> vector<1x10xf32>
    %cst_91 = arith.constant 0.000000e+00 : f32
    %117 = vector.broadcast %cst_91 : f32 to vector<1x10xf32>
    %118 = arith.cmpf oge, %116, %117 : vector<1x10xf32>
    %cst_92 = arith.constant 1.000000e+00 : f32
    %cst_93 = arith.constant -1.000000e+00 : f32
    %119 = vector.broadcast %cst_92 : f32 to vector<1x10xf32>
    %120 = vector.broadcast %cst_93 : f32 to vector<1x10xf32>
    %121 = arith.select %118, %119, %120 : vector<1x10xi1>, vector<1x10xf32>
    %cst_94 = arith.constant 9.99999997E-7 : f32
    %122 = vector.broadcast %cst_94 : f32 to vector<1x10xf32>
    %123 = arith.mulf %122, %121 : vector<1x10xf32>
    %124 = arith.addf %116, %123 : vector<1x10xf32>
    %125 = arith.divf %111, %124 : vector<1x10xf32>
    %cst_95 = arith.constant dense<0.000000e+00> : vector<1x8xf32>
    %126 = tpu.matmul %125, %115, %cst_95 {dimension_numbers = #tpu.dot_dimension_numbers<[1], [0], [0], [1], [0, 0, 1, 1], [], []>} : vector<1x10xf32>, vector<10x8xf32>, vector<1x8xf32> -> vector<1x8xf32>
    %127 = arith.mulf %97, %126 : vector<1x8xf32>
    %cst_96 = arith.constant 0.000000e+00 : f32
    %128 = vector.broadcast %cst_96 : f32 to vector<1x8xf32>
    %129 = arith.cmpf oge, %97, %128 : vector<1x8xf32>
    %cst_97 = arith.constant 1.000000e+00 : f32
    %cst_98 = arith.constant -1.000000e+00 : f32
    %130 = vector.broadcast %cst_97 : f32 to vector<1x8xf32>
    %131 = vector.broadcast %cst_98 : f32 to vector<1x8xf32>
    %132 = arith.select %129, %130, %131 : vector<1x8xi1>, vector<1x8xf32>
    %cst_99 = arith.constant 9.99999997E-7 : f32
    %133 = vector.broadcast %cst_99 : f32 to vector<1x8xf32>
    %134 = arith.mulf %133, %132 : vector<1x8xf32>
    %135 = arith.addf %97, %134 : vector<1x8xf32>
    %136 = arith.divf %127, %135 : vector<1x8xf32>
    %137 = vector.broadcast %136 : vector<1x8xf32> to vector<256x8xf32>
    %138 = arith.mulf %93, %137 : vector<256x8xf32>
    %c0_100 = arith.constant 0 : index
    %c0_101 = arith.constant 0 : index
    %139 = vector.load %arg7[%c0_100, %c0_101] : memref<256x8xf32, #tpu.memory_space<vmem>>, vector<256x8xf32>
    %140 = arith.mulf %138, %139 : vector<256x8xf32>
    %c128_102 = arith.constant 128 : index
    %c0_103 = arith.constant 0 : index
    %141 = vector.load %arg12[%c128_102, %c0_103] : memref<512x8xf32, #tpu.memory_space<vmem>>, vector<256x8xf32>
    tpu.vector_store %arg12[%c128_102, %c0_103], %140 {strides = array<i32>} : memref<512x8xf32, #tpu.memory_space<vmem>>, vector<256x8xf32>,
    %cst_104 = arith.constant 0.000000e+00 : f32
    %142 = vector.broadcast %cst_104 : f32 to vector<256x1xf32>
    %c111_105 = arith.constant 111 : index
    %c0_106 = arith.constant 0 : index
    %143 = vector.load %arg12[%c111_105, %c0_106] : memref<512x8xf32, #tpu.memory_space<vmem>>, vector<256x8xf32>
    %c0_107 = arith.constant 0 : index
    %c0_108 = arith.constant 0 : index
    %c0_109 = arith.constant 0 : index
    %144 = vector.load %arg8[%c0_107, %c0_108, %c0_109] : memref<9x8x1xf32, #tpu.memory_space<vmem>>, vector<1x8x1xf32>
    %145 = vector.shape_cast %144 : vector<1x8x1xf32> to vector<8x1xf32>
    %cst_110 = arith.constant dense<0.000000e+00> : vector<256x1xf32>
    %146 = tpu.matmul %143, %145, %cst_110 {dimension_numbers = #tpu.dot_dimension_numbers<[1], [0], [0], [1], [0, 0, 1, 1], [], []>} : vector<256x8xf32>, vector<8x1xf32>, vector<256x1xf32> -> vector<256x1xf32>
    %c0_111 = arith.constant 0 : index
    %c0_112 = arith.constant 0 : index
    %c0_113 = arith.constant 0 : index
    %147 = vector.load %arg9[%c0_111, %c0_112, %c0_113] : memref<9x256x1xf32, #tpu.memory_space<vmem>>, vector<1x256x1xf32>
    %148 = vector.shape_cast %147 : vector<1x256x1xf32> to vector<256x1xf32>
    %149 = arith.mulf %146, %148 : vector<256x1xf32>
    %150 = arith.addf %142, %149 : vector<256x1xf32>
    %c112_114 = arith.constant 112 : index
    %c0_115 = arith.constant 0 : index
    %151 = vector.load %arg12[%c112_114, %c0_115] : memref<512x8xf32, #tpu.memory_space<vmem>>, vector<256x8xf32>
    %c1_116 = arith.constant 1 : index
    %c0_117 = arith.constant 0 : index
    %c0_118 = arith.constant 0 : index
    %152 = vector.load %arg8[%c1_116, %c0_117, %c0_118] : memref<9x8x1xf32, #tpu.memory_space<vmem>>, vector<1x8x1xf32>
    %153 = vector.shape_cast %152 : vector<1x8x1xf32> to vector<8x1xf32>
    %cst_119 = arith.constant dense<0.000000e+00> : vector<256x1xf32>
    %154 = tpu.matmul %151, %153, %cst_119 {dimension_numbers = #tpu.dot_dimension_numbers<[1], [0], [0], [1], [0, 0, 1, 1], [], []>} : vector<256x8xf32>, vector<8x1xf32>, vector<256x1xf32> -> vector<256x1xf32>
    %c1_120 = arith.constant 1 : index
    %c0_121 = arith.constant 0 : index
    %c0_122 = arith.constant 0 : index
    %155 = vector.load %arg9[%c1_120, %c0_121, %c0_122] : memref<9x256x1xf32, #tpu.memory_space<vmem>>, vector<1x256x1xf32>
    %156 = vector.shape_cast %155 : vector<1x256x1xf32> to vector<256x1xf32>
    %157 = arith.mulf %154, %156 : vector<256x1xf32>
    %158 = arith.addf %150, %157 : vector<256x1xf32>
    %c113_123 = arith.constant 113 : index
    %c0_124 = arith.constant 0 : index
    %159 = vector.load %arg12[%c113_123, %c0_124] : memref<512x8xf32, #tpu.memory_space<vmem>>, vector<256x8xf32>
    %c2_125 = arith.constant 2 : index
    %c0_126 = arith.constant 0 : index
    %c0_127 = arith.constant 0 : index
    %160 = vector.load %arg8[%c2_125, %c0_126, %c0_127] : memref<9x8x1xf32, #tpu.memory_space<vmem>>, vector<1x8x1xf32>
    %161 = vector.shape_cast %160 : vector<1x8x1xf32> to vector<8x1xf32>
    %cst_128 = arith.constant dense<0.000000e+00> : vector<256x1xf32>
    %162 = tpu.matmul %159, %161, %cst_128 {dimension_numbers = #tpu.dot_dimension_numbers<[1], [0], [0], [1], [0, 0, 1, 1], [], []>} : vector<256x8xf32>, vector<8x1xf32>, vector<256x1xf32> -> vector<256x1xf32>
    %c2_129 = arith.constant 2 : index
    %c0_130 = arith.constant 0 : index
    %c0_131 = arith.constant 0 : index
    %163 = vector.load %arg9[%c2_129, %c0_130, %c0_131] : memref<9x256x1xf32, #tpu.memory_space<vmem>>, vector<1x256x1xf32>
    %164 = vector.shape_cast %163 : vector<1x256x1xf32> to vector<256x1xf32>
    %165 = arith.mulf %162, %164 : vector<256x1xf32>
    %166 = arith.addf %158, %165 : vector<256x1xf32>
    %c127_132 = arith.constant 127 : index
    %c0_133 = arith.constant 0 : index
    %167 = vector.load %arg12[%c127_132, %c0_133] : memref<512x8xf32, #tpu.memory_space<vmem>>, vector<256x8xf32>
    %c3_134 = arith.constant 3 : index
    %c0_135 = arith.constant 0 : index
    %c0_136 = arith.constant 0 : index
    %168 = vector.load %arg8[%c3_134, %c0_135, %c0_136] : memref<9x8x1xf32, #tpu.memory_space<vmem>>, vector<1x8x1xf32>
    %169 = vector.shape_cast %168 : vector<1x8x1xf32> to vector<8x1xf32>
    %cst_137 = arith.constant dense<0.000000e+00> : vector<256x1xf32>
    %170 = tpu.matmul %167, %169, %cst_137 {dimension_numbers = #tpu.dot_dimension_numbers<[1], [0], [0], [1], [0, 0, 1, 1], [], []>} : vector<256x8xf32>, vector<8x1xf32>, vector<256x1xf32> -> vector<256x1xf32>
    %c3_138 = arith.constant 3 : index
    %c0_139 = arith.constant 0 : index
    %c0_140 = arith.constant 0 : index
    %171 = vector.load %arg9[%c3_138, %c0_139, %c0_140] : memref<9x256x1xf32, #tpu.memory_space<vmem>>, vector<1x256x1xf32>
    %172 = vector.shape_cast %171 : vector<1x256x1xf32> to vector<256x1xf32>
    %173 = arith.mulf %170, %172 : vector<256x1xf32>
    %174 = arith.addf %166, %173 : vector<256x1xf32>
    %c128_141 = arith.constant 128 : index
    %c0_142 = arith.constant 0 : index
    %175 = vector.load %arg12[%c128_141, %c0_142] : memref<512x8xf32, #tpu.memory_space<vmem>>, vector<256x8xf32>
    %c4_143 = arith.constant 4 : index
    %c0_144 = arith.constant 0 : index
    %c0_145 = arith.constant 0 : index
    %176 = vector.load %arg8[%c4_143, %c0_144, %c0_145] : memref<9x8x1xf32, #tpu.memory_space<vmem>>, vector<1x8x1xf32>
    %177 = vector.shape_cast %176 : vector<1x8x1xf32> to vector<8x1xf32>
    %cst_146 = arith.constant dense<0.000000e+00> : vector<256x1xf32>
    %178 = tpu.matmul %175, %177, %cst_146 {dimension_numbers = #tpu.dot_dimension_numbers<[1], [0], [0], [1], [0, 0, 1, 1], [], []>} : vector<256x8xf32>, vector<8x1xf32>, vector<256x1xf32> -> vector<256x1xf32>
    %c4_147 = arith.constant 4 : index
    %c0_148 = arith.constant 0 : index
    %c0_149 = arith.constant 0 : index
    %179 = vector.load %arg9[%c4_147, %c0_148, %c0_149] : memref<9x256x1xf32, #tpu.memory_space<vmem>>, vector<1x256x1xf32>
    %180 = vector.shape_cast %179 : vector<1x256x1xf32> to vector<256x1xf32>
    %181 = arith.mulf %178, %180 : vector<256x1xf32>
    %182 = arith.addf %174, %181 : vector<256x1xf32>
    %c129_150 = arith.constant 129 : index
    %c0_151 = arith.constant 0 : index
    %183 = vector.load %arg12[%c129_150, %c0_151] : memref<512x8xf32, #tpu.memory_space<vmem>>, vector<256x8xf32>
    %c5_152 = arith.constant 5 : index
    %c0_153 = arith.constant 0 : index
    %c0_154 = arith.constant 0 : index
    %184 = vector.load %arg8[%c5_152, %c0_153, %c0_154] : memref<9x8x1xf32, #tpu.memory_space<vmem>>, vector<1x8x1xf32>
    %185 = vector.shape_cast %184 : vector<1x8x1xf32> to vector<8x1xf32>
    %cst_155 = arith.constant dense<0.000000e+00> : vector<256x1xf32>
    %186 = tpu.matmul %183, %185, %cst_155 {dimension_numbers = #tpu.dot_dimension_numbers<[1], [0], [0], [1], [0, 0, 1, 1], [], []>} : vector<256x8xf32>, vector<8x1xf32>, vector<256x1xf32> -> vector<256x1xf32>
    %c5_156 = arith.constant 5 : index
    %c0_157 = arith.constant 0 : index
    %c0_158 = arith.constant 0 : index
    %187 = vector.load %arg9[%c5_156, %c0_157, %c0_158] : memref<9x256x1xf32, #tpu.memory_space<vmem>>, vector<1x256x1xf32>
    %188 = vector.shape_cast %187 : vector<1x256x1xf32> to vector<256x1xf32>
    %189 = arith.mulf %186, %188 : vector<256x1xf32>
    %190 = arith.addf %182, %189 : vector<256x1xf32>
    %c143_159 = arith.constant 143 : index
    %c0_160 = arith.constant 0 : index
    %191 = vector.load %arg12[%c143_159, %c0_160] : memref<512x8xf32, #tpu.memory_space<vmem>>, vector<256x8xf32>
    %c6_161 = arith.constant 6 : index
    %c0_162 = arith.constant 0 : index
    %c0_163 = arith.constant 0 : index
    %192 = vector.load %arg8[%c6_161, %c0_162, %c0_163] : memref<9x8x1xf32, #tpu.memory_space<vmem>>, vector<1x8x1xf32>
    %193 = vector.shape_cast %192 : vector<1x8x1xf32> to vector<8x1xf32>
    %cst_164 = arith.constant dense<0.000000e+00> : vector<256x1xf32>
    %194 = tpu.matmul %191, %193, %cst_164 {dimension_numbers = #tpu.dot_dimension_numbers<[1], [0], [0], [1], [0, 0, 1, 1], [], []>} : vector<256x8xf32>, vector<8x1xf32>, vector<256x1xf32> -> vector<256x1xf32>
    %c6_165 = arith.constant 6 : index
    %c0_166 = arith.constant 0 : index
    %c0_167 = arith.constant 0 : index
    %195 = vector.load %arg9[%c6_165, %c0_166, %c0_167] : memref<9x256x1xf32, #tpu.memory_space<vmem>>, vector<1x256x1xf32>
    %196 = vector.shape_cast %195 : vector<1x256x1xf32> to vector<256x1xf32>
    %197 = arith.mulf %194, %196 : vector<256x1xf32>
    %198 = arith.addf %190, %197 : vector<256x1xf32>
    %c144_168 = arith.constant 144 : index
    %c0_169 = arith.constant 0 : index
    %199 = vector.load %arg12[%c144_168, %c0_169] : memref<512x8xf32, #tpu.memory_space<vmem>>, vector<256x8xf32>
    %c7_170 = arith.constant 7 : index
    %c0_171 = arith.constant 0 : index
    %c0_172 = arith.constant 0 : index
    %200 = vector.load %arg8[%c7_170, %c0_171, %c0_172] : memref<9x8x1xf32, #tpu.memory_space<vmem>>, vector<1x8x1xf32>
    %201 = vector.shape_cast %200 : vector<1x8x1xf32> to vector<8x1xf32>
    %cst_173 = arith.constant dense<0.000000e+00> : vector<256x1xf32>
    %202 = tpu.matmul %199, %201, %cst_173 {dimension_numbers = #tpu.dot_dimension_numbers<[1], [0], [0], [1], [0, 0, 1, 1], [], []>} : vector<256x8xf32>, vector<8x1xf32>, vector<256x1xf32> -> vector<256x1xf32>
    %c7_174 = arith.constant 7 : index
    %c0_175 = arith.constant 0 : index
    %c0_176 = arith.constant 0 : index
    %203 = vector.load %arg9[%c7_174, %c0_175, %c0_176] : memref<9x256x1xf32, #tpu.memory_space<vmem>>, vector<1x256x1xf32>
    %204 = vector.shape_cast %203 : vector<1x256x1xf32> to vector<256x1xf32>
    %205 = arith.mulf %202, %204 : vector<256x1xf32>
    %206 = arith.addf %198, %205 : vector<256x1xf32>
    %c145_177 = arith.constant 145 : index
    %c0_178 = arith.constant 0 : index
    %207 = vector.load %arg12[%c145_177, %c0_178] : memref<512x8xf32, #tpu.memory_space<vmem>>, vector<256x8xf32>
    %c8_179 = arith.constant 8 : index
    %c0_180 = arith.constant 0 : index
    %c0_181 = arith.constant 0 : index
    %208 = vector.load %arg8[%c8_179, %c0_180, %c0_181] : memref<9x8x1xf32, #tpu.memory_space<vmem>>, vector<1x8x1xf32>
    %209 = vector.shape_cast %208 : vector<1x8x1xf32> to vector<8x1xf32>
    %cst_182 = arith.constant dense<0.000000e+00> : vector<256x1xf32>
    %210 = tpu.matmul %207, %209, %cst_182 {dimension_numbers = #tpu.dot_dimension_numbers<[1], [0], [0], [1], [0, 0, 1, 1], [], []>} : vector<256x8xf32>, vector<8x1xf32>, vector<256x1xf32> -> vector<256x1xf32>
    %c8_183 = arith.constant 8 : index
    %c0_184 = arith.constant 0 : index
    %c0_185 = arith.constant 0 : index
    %211 = vector.load %arg9[%c8_183, %c0_184, %c0_185] : memref<9x256x1xf32, #tpu.memory_space<vmem>>, vector<1x256x1xf32>
    %212 = vector.shape_cast %211 : vector<1x256x1xf32> to vector<256x1xf32>
    %213 = arith.mulf %210, %212 : vector<256x1xf32>
    %214 = arith.addf %206, %213 : vector<256x1xf32>
    %c0_186 = arith.constant 0 : index
    %c0_187 = arith.constant 0 : index
    %c0_188 = arith.constant 0 : index
    %215 = vector.load %arg10[%c0_186, %c0_187, %c0_188] : memref<1x256x1xf32, #tpu.memory_space<vmem>>, vector<1x256x1xf32>
    %216 = vector.shape_cast %215 : vector<1x256x1xf32> to vector<256x1xf32>
    %217 = vector.shape_cast %214 : vector<256x1xf32> to vector<1x256x1xf32>
    tpu.vector_store %arg10[%c0_186, %c0_187, %c0_188], %217 {strides = array<i32>} : memref<1x256x1xf32, #tpu.memory_space<vmem>>, vector<1x256x1xf32>,
    return
  }
  func.func @transform_0(%arg0: i32) -> (i32, i32, i32) {
    %c0_i32 = arith.constant 0 : i32
    %c0_i32_0 = arith.constant 0 : i32
    %c0_i32_1 = arith.constant 0 : i32
    return %arg0, %c0_i32, %c0_i32_0 : i32, i32, i32
  }
  func.func @transform_1(%arg0: i32) -> (i32, i32, i32) {
    %c0_i32 = arith.constant 0 : i32
    %c0_i32_0 = arith.constant 0 : i32
    %c0_i32_1 = arith.constant 0 : i32
    %c0_i32_2 = arith.constant 0 : i32
    return %c0_i32, %c0_i32_0, %c0_i32_1 : i32, i32, i32
  }
  func.func @transform_2(%arg0: i32) -> (i32, i32) {
    %c0_i32 = arith.constant 0 : i32
    %c0_i32_0 = arith.constant 0 : i32
    %c0_i32_1 = arith.constant 0 : i32
    return %c0_i32, %c0_i32_0 : i32, i32
  }
  func.func @transform_3(%arg0: i32) -> (i32, i32) {
    %c0_i32 = arith.constant 0 : i32
    %c0_i32_0 = arith.constant 0 : i32
    %c0_i32_1 = arith.constant 0 : i32
    return %c0_i32, %c0_i32_0 : i32, i32
  }
  func.func @transform_4(%arg0: i32) -> (i32, i32) {
    %c0_i32 = arith.constant 0 : i32
    %c0_i32_0 = arith.constant 0 : i32
    %c0_i32_1 = arith.constant 0 : i32
    return %c0_i32, %c0_i32_0 : i32, i32
  }
  func.func @transform_5(%arg0: i32) -> (i32, i32) {
    %c0_i32 = arith.constant 0 : i32
    %c0_i32_0 = arith.constant 0 : i32
    %c0_i32_1 = arith.constant 0 : i32
    return %c0_i32, %c0_i32_0 : i32, i32
  }
  func.func @transform_6(%arg0: i32) -> (i32, i32) {
    %c0_i32 = arith.constant 0 : i32
    %c0_i32_0 = arith.constant 0 : i32
    %c0_i32_1 = arith.constant 0 : i32
    return %c0_i32, %c0_i32_0 : i32, i32
  }
  func.func @transform_7(%arg0: i32) -> (i32, i32, i32) {
    %c0_i32 = arith.constant 0 : i32
    %c0_i32_0 = arith.constant 0 : i32
    %c0_i32_1 = arith.constant 0 : i32
    %c0_i32_2 = arith.constant 0 : i32
    return %c0_i32, %c0_i32_0, %c0_i32_1 : i32, i32, i32
  }
  func.func @transform_8(%arg0: i32) -> (i32, i32, i32) {
    %c0_i32 = arith.constant 0 : i32
    %c0_i32_0 = arith.constant 0 : i32
    %c0_i32_1 = arith.constant 0 : i32
    %c0_i32_2 = arith.constant 0 : i32
    return %c0_i32, %c0_i32_0, %c0_i32_1 : i32, i32, i32
  }
  func.func @transform_9(%arg0: i32) -> (i32, i32, i32) {
    %c0_i32 = arith.constant 0 : i32
    %c0_i32_0 = arith.constant 0 : i32
    %c0_i32_1 = arith.constant 0 : i32
    return %arg0, %c0_i32, %c0_i32_0 : i32, i32, i32
  }
}

</mosaic_0001>

<llo_original>
// kernel: lrp_model_forward.1
$region0: #{lrp_model_forward.1}
  #allocation0 [shape = 'u32[]', space=smem, size = 0x4, offset = 0x4, fixed_abs, tag = 'smem constant byte address 0x4 - core index']
  #allocation1 [shape = 'u32[144,128]{1,0:T(1,128)}', space=vmem, size = 0x12000, scoped, tag = 'internal scratch']
  #allocation2 [shape = 'f32[512,4]{1,0:T(8,128)}', space=vmem, size = 0x40000, scoped, tag = 'scratch operand']
  #allocation3 [shape = 'f32[512,8]{1,0:T(8,128)}', space=vmem, size = 0x40000, scoped, tag = 'scratch operand']
  %s0 = inlined_call_operand.vmem [shape: f32[2,256,4], index: 0, kind: input, shape index: {}]
  %s1 = inlined_call_operand.vmem [shape: f32[9,4,8], index: 1, kind: input, shape index: {}]
  %s2 = inlined_call_operand.vmem [shape: f32[1,8], index: 2, kind: input, shape index: {}]
  %s3 = inlined_call_operand.vmem [shape: f32[8,10], index: 3, kind: input, shape index: {}]
  %s4 = inlined_call_operand.vmem [shape: f32[10,8], index: 4, kind: input, shape index: {}]
  %s5 = inlined_call_operand.vmem [shape: f32[1,10], index: 5, kind: input, shape index: {}]
  %s6 = inlined_call_operand.vmem [shape: f32[256,8], index: 6, kind: input, shape index: {}]
  %s7 = inlined_call_operand.vmem [shape: f32[9,8,1], index: 7, kind: input, shape index: {}]
  %s8 = inlined_call_operand.vmem [shape: f32[9,256,1], index: 8, kind: input, shape index: {}]
  %s9 = inlined_call_operand.vmem [shape: f32[2,256,1], index: 9, kind: output, shape index: {}]
  %s10 = sld [smem:[#allocation0]]
  $region69: #{lrp_model_forward.1} parent=0
    _
  %s12 = ssub.s32 1, %s10
  %s13 = scalar_select 0, %s12, %s10
  loop: start=0, step=1, limit=4
  $region2: #{lrp_model_forward.1} parent=0 // loop_pre_header
    _
  $region3: #{lrp_model_forward.1} parent=0 // loop_header
    %s15 = sphi 0, %s19
    %p16 = scmp.ge.s32.totalorder %s15, 4
    %s25 = sphi 0, %s27
    %s28 = sphi 0, %s25
    %s29 = sphi 0, %s28
    %s45 = sphi 0, %s29
    %s49 = sphi 0, %s49
    %s51 = sphi 0, %s49
    %s52 = sphi 0, %s51
    %s66 = sphi 0, %s52
    %s70 = sphi 0, %s70
    %s72 = sphi 0, %s70
    %s73 = sphi 0, %s72
    %s87 = sphi 0, %s73
    %s91 = sphi 0, %s91
    %s93 = sphi 0, %s91
    %s94 = sphi 0, %s93
    %s108 = sphi 0, %s94
    %s112 = sphi 0, %s112
    %s114 = sphi 0, %s112
    %s115 = sphi 0, %s114
    %s129 = sphi 0, %s115
    %s133 = sphi 0, %s133
    %s135 = sphi 0, %s133
    %s136 = sphi 0, %s135
    %s150 = sphi 0, %s136
    %s154 = sphi 0, %s154
    %s156 = sphi 0, %s154
    %s157 = sphi 0, %s156
    %s171 = sphi 0, %s157
    %s175 = sphi 0, %s175
    %s177 = sphi 0, %s175
    %s178 = sphi 0, %s177
    %s192 = sphi 0, %s178
    %s196 = sphi 0, %s196
    %s198 = sphi 0, %s196
    %s199 = sphi 0, %s198
    %s213 = sphi 0, %s199
    %s219 = sphi 0, %s221
    %s222 = sphi 0, %s219
    %s223 = sphi 0, %s222
    %s239 = sphi 0, %s223
  $region4: #{lrp_model_forward.1} parent=0 // loop_header_branch
    %18 = sbr.rel (%p16) target = $region8
  $region5: #{lrp_model_forward.1} parent=0 // loop_body
    %s20 = ssub.s32 %s15, 1
    %s21 = ssub.s32 %s15, 2
    %s22 = sadd.s32 %s15, 1
    %s23 = ssub.s32 %s15, %s22
    %p24 = scmp.eq.s32.totalorder %s23, 0
    %s26 = sadd.s32 %s25, 1
    %s27 = scalar_select %p24, %s25, %s26
    %p30 = pneg %p24
    %p31 = scmp.eq.s32.totalorder %s15, 1
    %p32 = por %p30, %p31
    %p33 = scmp.ne.s32.totalorder %s25, %s28
    %p34 = scmp.eq.s32.totalorder %s15, 0
    %p35 = por %p33, %p34
    %p36 = scmp.ne.s32.totalorder %s25, %s28
    %p37 = scmp.eq.s32.totalorder %s20, 1
    %p38 = por %p36, %p37
    %p39 = scmp.ne.s32.totalorder %s28, %s29
    %p40 = scmp.eq.s32.totalorder %s20, 0
    %p41 = por %p39, %p40
    %p42 = scmp.ne.s32.totalorder %s28, %s29
    %p43 = scmp.eq.s32.totalorder %s21, 1
    %p44 = por %p42, %p43
    %p46 = scmp.ne.s32.totalorder %s29, %s45
    %p47 = scmp.eq.s32.totalorder %s21, 0
    %p48 = por %p46, %p47
    %s50 = sadd.s32 %s49, 1
    %p53 = scmp.eq.s32.totalorder %s15, 1
    %p54 = scmp.ne.s32.totalorder %s49, %s51
    %p55 = scmp.eq.s32.totalorder %s15, 0
    %p56 = por %p54, %p55
    %p57 = scmp.ne.s32.totalorder %s49, %s51
    %p58 = scmp.eq.s32.totalorder %s20, 1
    %p59 = por %p57, %p58
    %p60 = scmp.ne.s32.totalorder %s51, %s52
    %p61 = scmp.eq.s32.totalorder %s20, 0
    %p62 = por %p60, %p61
    %p63 = scmp.ne.s32.totalorder %s51, %s52
    %p64 = scmp.eq.s32.totalorder %s21, 1
    %p65 = por %p63, %p64
    %p67 = scmp.ne.s32.totalorder %s52, %s66
    %p68 = scmp.eq.s32.totalorder %s21, 0
    %p69 = por %p67, %p68
    %s71 = sadd.s32 %s70, 1
    %p74 = scmp.eq.s32.totalorder %s15, 1
    %p75 = scmp.ne.s32.totalorder %s70, %s72
    %p76 = scmp.eq.s32.totalorder %s15, 0
    %p77 = por %p75, %p76
    %p78 = scmp.ne.s32.totalorder %s70, %s72
    %p79 = scmp.eq.s32.totalorder %s20, 1
    %p80 = por %p78, %p79
    %p81 = scmp.ne.s32.totalorder %s72, %s73
    %p82 = scmp.eq.s32.totalorder %s20, 0
    %p83 = por %p81, %p82
    %p84 = scmp.ne.s32.totalorder %s72, %s73
    %p85 = scmp.eq.s32.totalorder %s21, 1
    %p86 = por %p84, %p85
    %p88 = scmp.ne.s32.totalorder %s73, %s87
    %p89 = scmp.eq.s32.totalorder %s21, 0
    %p90 = por %p88, %p89
    %s92 = sadd.s32 %s91, 1
    %p95 = scmp.eq.s32.totalorder %s15, 1
    %p96 = scmp.ne.s32.totalorder %s91, %s93
    %p97 = scmp.eq.s32.totalorder %s15, 0
    %p98 = por %p96, %p97
    %p99 = scmp.ne.s32.totalorder %s91, %s93
    %p100 = scmp.eq.s32.totalorder %s20, 1
    %p101 = por %p99, %p100
    %p102 = scmp.ne.s32.totalorder %s93, %s94
    %p103 = scmp.eq.s32.totalorder %s20, 0
    %p104 = por %p102, %p103
    %p105 = scmp.ne.s32.totalorder %s93, %s94
    %p106 = scmp.eq.s32.totalorder %s21, 1
    %p107 = por %p105, %p106
    %p109 = scmp.ne.s32.totalorder %s94, %s108
    %p110 = scmp.eq.s32.totalorder %s21, 0
    %p111 = por %p109, %p110
    %s113 = sadd.s32 %s112, 1
    %p116 = scmp.eq.s32.totalorder %s15, 1
    %p117 = scmp.ne.s32.totalorder %s112, %s114
    %p118 = scmp.eq.s32.totalorder %s15, 0
    %p119 = por %p117, %p118
    %p120 = scmp.ne.s32.totalorder %s112, %s114
    %p121 = scmp.eq.s32.totalorder %s20, 1
    %p122 = por %p120, %p121
    %p123 = scmp.ne.s32.totalorder %s114, %s115
    %p124 = scmp.eq.s32.totalorder %s20, 0
    %p125 = por %p123, %p124
    %p126 = scmp.ne.s32.totalorder %s114, %s115
    %p127 = scmp.eq.s32.totalorder %s21, 1
    %p128 = por %p126, %p127
    %p130 = scmp.ne.s32.totalorder %s115, %s129
    %p131 = scmp.eq.s32.totalorder %s21, 0
    %p132 = por %p130, %p131
    %s134 = sadd.s32 %s133, 1
    %p137 = scmp.eq.s32.totalorder %s15, 1
    %p138 = scmp.ne.s32.totalorder %s133, %s135
    %p139 = scmp.eq.s32.totalorder %s15, 0
    %p140 = por %p138, %p139
    %p141 = scmp.ne.s32.totalorder %s133, %s135
    %p142 = scmp.eq.s32.totalorder %s20, 1
    %p143 = por %p141, %p142
    %p144 = scmp.ne.s32.totalorder %s135, %s136
    %p145 = scmp.eq.s32.totalorder %s20, 0
    %p146 = por %p144, %p145
    %p147 = scmp.ne.s32.totalorder %s135, %s136
    %p148 = scmp.eq.s32.totalorder %s21, 1
    %p149 = por %p147, %p148
    %p151 = scmp.ne.s32.totalorder %s136, %s150
    %p152 = scmp.eq.s32.totalorder %s21, 0
    %p153 = por %p151, %p152
    %s155 = sadd.s32 %s154, 1
    %p158 = scmp.eq.s32.totalorder %s15, 1
    %p159 = scmp.ne.s32.totalorder %s154, %s156
    %p160 = scmp.eq.s32.totalorder %s15, 0
    %p161 = por %p159, %p160
    %p162 = scmp.ne.s32.totalorder %s154, %s156
    %p163 = scmp.eq.s32.totalorder %s20, 1
    %p164 = por %p162, %p163
    %p165 = scmp.ne.s32.totalorder %s156, %s157
    %p166 = scmp.eq.s32.totalorder %s20, 0
    %p167 = por %p165, %p166
    %p168 = scmp.ne.s32.totalorder %s156, %s157
    %p169 = scmp.eq.s32.totalorder %s21, 1
    %p170 = por %p168, %p169
    %p172 = scmp.ne.s32.totalorder %s157, %s171
    %p173 = scmp.eq.s32.totalorder %s21, 0
    %p174 = por %p172, %p173
    %s176 = sadd.s32 %s175, 1
    %p179 = scmp.eq.s32.totalorder %s15, 1
    %p180 = scmp.ne.s32.totalorder %s175, %s177
    %p181 = scmp.eq.s32.totalorder %s15, 0
    %p182 = por %p180, %p181
    %p183 = scmp.ne.s32.totalorder %s175, %s177
    %p184 = scmp.eq.s32.totalorder %s20, 1
    %p185 = por %p183, %p184
    %p186 = scmp.ne.s32.totalorder %s177, %s178
    %p187 = scmp.eq.s32.totalorder %s20, 0
    %p188 = por %p186, %p187
    %p189 = scmp.ne.s32.totalorder %s177, %s178
    %p190 = scmp.eq.s32.totalorder %s21, 1
    %p191 = por %p189, %p190
    %p193 = scmp.ne.s32.totalorder %s178, %s192
    %p194 = scmp.eq.s32.totalorder %s21, 0
    %p195 = por %p193, %p194
    %s197 = sadd.s32 %s196, 1
    %p200 = scmp.eq.s32.totalorder %s15, 1
    %p201 = scmp.ne.s32.totalorder %s196, %s198
    %p202 = scmp.eq.s32.totalorder %s15, 0
    %p203 = por %p201, %p202
    %p204 = scmp.ne.s32.totalorder %s196, %s198
    %p205 = scmp.eq.s32.totalorder %s20, 1
    %p206 = por %p204, %p205
    %p207 = scmp.ne.s32.totalorder %s198, %s199
    %p208 = scmp.eq.s32.totalorder %s20, 0
    %p209 = por %p207, %p208
    %p210 = scmp.ne.s32.totalorder %s198, %s199
    %p211 = scmp.eq.s32.totalorder %s21, 1
    %p212 = por %p210, %p211
    %p214 = scmp.ne.s32.totalorder %s199, %s213
    %p215 = scmp.eq.s32.totalorder %s21, 0
    %p216 = por %p214, %p215
    %s217 = ssub.s32 %s15, %s22
    %p218 = scmp.eq.s32.totalorder %s217, 0
    %s220 = sadd.s32 %s219, 1
    %s221 = scalar_select %p218, %s219, %s220
    %p224 = pneg %p218
    %p225 = scmp.eq.s32.totalorder %s15, 1
    %p226 = por %p224, %p225
    %p227 = scmp.ne.s32.totalorder %s219, %s222
    %p228 = scmp.eq.s32.totalorder %s15, 0
    %p229 = por %p227, %p228
    %p230 = scmp.ne.s32.totalorder %s219, %s222
    %p231 = scmp.eq.s32.totalorder %s20, 1
    %p232 = por %p230, %p231
    %p233 = scmp.ne.s32.totalorder %s222, %s223
    %p234 = scmp.eq.s32.totalorder %s20, 0
    %p235 = por %p233, %p234
    %p236 = scmp.ne.s32.totalorder %s222, %s223
    %p237 = scmp.eq.s32.totalorder %s21, 1
    %p238 = por %p236, %p237
    %p240 = scmp.ne.s32.totalorder %s223, %s239
    %p241 = scmp.eq.s32.totalorder %s21, 0
    %p242 = por %p240, %p241
    %p243 = scmp.le.s32.totalorder 1, %s15
    %p244 = scmp.lt.s32.totalorder %s15, 3
    %p245 = pnand %p243, %p244
    %p246 = pneg %p245
    // Predicated region
    $region9: #{lrp_model_forward.1} parent=5 // pred_check
      _
    $region10: #{lrp_model_forward.1} parent=5 // pred_check_branch
      %248 = sbr.rel (%p245) target = $region12
    $region11: #{lrp_model_forward.1} parent=5 // pred_region
      %s249 = ssub.s32 %s15, 1
      // Predicated region
      $region13: #{lrp_model_forward.1} parent=11 // pred_check
        %p250 = pneg %p62
      $region14: #{lrp_model_forward.1} parent=11 // pred_check_branch
        %252 = sbr.rel (%p250) target = $region16
      $region15: #{lrp_model_forward.1} parent=11 // pred_region
        _
      $region16: #{lrp_model_forward.1} parent=11 // pred_fallthru
        _
      // Predicated region
      $region17: #{lrp_model_forward.1} parent=11 // pred_check
        %p253 = pneg %p83
      $region18: #{lrp_model_forward.1} parent=11 // pred_check_branch
        %255 = sbr.rel (%p253) target = $region20
      $region19: #{lrp_model_forward.1} parent=11 // pred_region
        _
      $region20: #{lrp_model_forward.1} parent=11 // pred_fallthru
        _
      // Predicated region
      $region21: #{lrp_model_forward.1} parent=11 // pred_check
        %p256 = pneg %p104
      $region22: #{lrp_model_forward.1} parent=11 // pred_check_branch
        %258 = sbr.rel (%p256) target = $region24
      $region23: #{lrp_model_forward.1} parent=11 // pred_region
        _
      $region24: #{lrp_model_forward.1} parent=11 // pred_fallthru
        _
      // Predicated region
      $region25: #{lrp_model_forward.1} parent=11 // pred_check
        %p259 = pneg %p125
      $region26: #{lrp_model_forward.1} parent=11 // pred_check_branch
        %261 = sbr.rel (%p259) target = $region28
      $region27: #{lrp_model_forward.1} parent=11 // pred_region
        _
      $region28: #{lrp_model_forward.1} parent=11 // pred_fallthru
        _
      // Predicated region
      $region29: #{lrp_model_forward.1} parent=11 // pred_check
        %p262 = pneg %p146
      $region30: #{lrp_model_forward.1} parent=11 // pred_check_branch
        %264 = sbr.rel (%p262) target = $region32
      $region31: #{lrp_model_forward.1} parent=11 // pred_region
        _
      $region32: #{lrp_model_forward.1} parent=11 // pred_fallthru
        _
      // Predicated region
      $region33: #{lrp_model_forward.1} parent=11 // pred_check
        %p265 = pneg %p167
      $region34: #{lrp_model_forward.1} parent=11 // pred_check_branch
        %267 = sbr.rel (%p265) target = $region36
      $region35: #{lrp_model_forward.1} parent=11 // pred_region
        _
      $region36: #{lrp_model_forward.1} parent=11 // pred_fallthru
        _
      // Predicated region
      $region37: #{lrp_model_forward.1} parent=11 // pred_check
        %p268 = pneg %p188
      $region38: #{lrp_model_forward.1} parent=11 // pred_check_branch
        %270 = sbr.rel (%p268) target = $region40
      $region39: #{lrp_model_forward.1} parent=11 // pred_region
        _
      $region40: #{lrp_model_forward.1} parent=11 // pred_fallthru
        _
      // Predicated region
      $region41: #{lrp_model_forward.1} parent=11 // pred_check
        %p271 = pneg %p209
      $region42: #{lrp_model_forward.1} parent=11 // pred_check_branch
        %273 = sbr.rel (%p271) target = $region44
      $region43: #{lrp_model_forward.1} parent=11 // pred_region
        _
      $region44: #{lrp_model_forward.1} parent=11 // pred_fallthru
        _
    $region12: #{lrp_model_forward.1} parent=5 // pred_fallthru
      _
    %p274 = scmp.lt.s32.totalorder %s15, 2
    // Predicated region
    $region45: #{lrp_model_forward.1} parent=5 // pred_check
      %p275 = pneg %p274
    $region46: #{lrp_model_forward.1} parent=5 // pred_check_branch
      %277 = sbr.rel (%p275) target = $region48
    $region47: #{lrp_model_forward.1} parent=5 // pred_region
      // Predicated region
      $region49: #{lrp_model_forward.1} parent=47 // pred_check
        %p278 = pneg %p35
      $region50: #{lrp_model_forward.1} parent=47 // pred_check_branch
        %280 = sbr.rel (%p278) target = $region52
      $region51: #{lrp_model_forward.1} parent=47 // pred_region
        %p281 = scmp.lt.s32.totalorder %s15, 1
        %s282 = scalar_select %p281, %s15, 1
        %s283 = smul.addr %s282, 32
        %s284 = smul.addr %s283, 8
        %s285 = scalar_lea.vmem %s0, %s284
      $region52: #{lrp_model_forward.1} parent=47 // pred_fallthru
        _
    $region48: #{lrp_model_forward.1} parent=5 // pred_fallthru
      _
    %p286 = scmp.le.s32.totalorder 1, %s15
    %p287 = scmp.lt.s32.totalorder %s15, 3
    %p288 = pnand %p286, %p287
    %p289 = pneg %p288
    // Predicated region
    $region53: #{lrp_model_forward.1} parent=5 // pred_check
      _
    $region54: #{lrp_model_forward.1} parent=5 // pred_check_branch
      %291 = sbr.rel (%p288) target = $region56
    $region55: #{lrp_model_forward.1} parent=5 // pred_region
      %s292 = ssub.s32 %s15, 1
      %p293 = scmp.lt.s32.totalorder %s20, 1
      %s294 = scalar_select %p293, %s20, 1
      %s295 = smul.addr %s294, 32
      %s296 = smul.addr %s295, 8
      %s297 = scalar_lea.vmem %s0, %s296
      %p298 = pneg %p41
      %p299 = pneg %p38
      %p300 = pneg %p62
      %p301 = pneg %p59
      %p302 = pneg %p83
      %p303 = pneg %p80
      %p304 = pneg %p104
      %p305 = pneg %p101
      %p306 = pneg %p125
      %p307 = pneg %p122
      %p308 = pneg %p146
      %p309 = pneg %p143
      %p310 = pneg %p167
      %p311 = pneg %p164
      %p312 = pneg %p188
      %p313 = pneg %p185
      %p314 = pneg %p209
      %p315 = pneg %p206
      %p316 = pneg %p235
      %p317 = pneg %p232
      %p318 = scmp.lt.s32.totalorder %s20, 1
      %s319 = scalar_select %p318, %s20, 1
      %s320 = smul.addr %s319, 32
      %s321 = smul.addr %s320, 8
      %s322 = scalar_lea.vmem %s9, %s321
      %p323 = scmp.lt.s32.totalorder %s20, 1
      %s324 = scalar_select %p323, %s20, 1
      %s325 = smul.addr %s324, 32
      %s326 = smul.addr %s325, 8
      %s327 = scalar_lea.vmem %s0, %s326
      %p328 = scmp.lt.s32.totalorder %s20, 1
      %s329 = scalar_select %p328, %s20, 1
      %s330 = smul.addr %s329, 32
      %s331 = smul.addr %s330, 8
      %s332 = scalar_lea.vmem %s9, %s331
      %vm333 = vcmask 31744
      %334 = vst.msk [vmem:[#allocation2] sm:$0xff] %vm333, 0.0
      %335 = vst.msk [vmem:[#allocation2 + $0x8] sm:$0xff] %vm333, 0.0
      %336 = vst.msk [vmem:[#allocation2 + $0x10] sm:$0xff] %vm333, 0.0
      %337 = vst.msk [vmem:[#allocation2 + $0x18] sm:$0xff] %vm333, 0.0
      %338 = vst.msk [vmem:[#allocation2 + $0x20] sm:$0xff] %vm333, 0.0
      %339 = vst.msk [vmem:[#allocation2 + $0x28] sm:$0xff] %vm333, 0.0
      %340 = vst.msk [vmem:[#allocation2 + $0x30] sm:$0xff] %vm333, 0.0
      %341 = vst.msk [vmem:[#allocation2 + $0x38] sm:$0xff] %vm333, 0.0
      %342 = vst.msk [vmem:[#allocation2 + $0x40] sm:$0xff] %vm333, 0.0
      %343 = vst.msk [vmem:[#allocation2 + $0x48] sm:$0xff] %vm333, 0.0
      %344 = vst.msk [vmem:[#allocation2 + $0x50] sm:$0xff] %vm333, 0.0
      %345 = vst.msk [vmem:[#allocation2 + $0x58] sm:$0xff] %vm333, 0.0
      %346 = vst.msk [vmem:[#allocation2 + $0x60] sm:$0xff] %vm333, 0.0
      %347 = vst.msk [vmem:[#allocation2 + $0x68] sm:$0xff] %vm333, 0.0
      %348 = vst.msk [vmem:[#allocation2 + $0x70] sm:$0xff] %vm333, 0.0
      %349 = vst.msk [vmem:[#allocation2 + $0x78] sm:$0xff] %vm333, 0.0
      %350 = vst.msk [vmem:[#allocation2 + $0x80] sm:$0xff] %vm333, 0.0
      %351 = vst.msk [vmem:[#allocation2 + $0x88] sm:$0xff] %vm333, 0.0
      %352 = vst.msk [vmem:[#allocation2 + $0x90] sm:$0xff] %vm333, 0.0
      %353 = vst.msk [vmem:[#allocation2 + $0x98] sm:$0xff] %vm333, 0.0
      %354 = vst.msk [vmem:[#allocation2 + $0xa0] sm:$0xff] %vm333, 0.0
      %355 = vst.msk [vmem:[#allocation2 + $0xa8] sm:$0xff] %vm333, 0.0
      %356 = vst.msk [vmem:[#allocation2 + $0xb0] sm:$0xff] %vm333, 0.0
      %357 = vst.msk [vmem:[#allocation2 + $0xb8] sm:$0xff] %vm333, 0.0
      %358 = vst.msk [vmem:[#allocation2 + $0xc0] sm:$0xff] %vm333, 0.0
      %359 = vst.msk [vmem:[#allocation2 + $0xc8] sm:$0xff] %vm333, 0.0
      %360 = vst.msk [vmem:[#allocation2 + $0xd0] sm:$0xff] %vm333, 0.0
      %361 = vst.msk [vmem:[#allocation2 + $0xd8] sm:$0xff] %vm333, 0.0
      %362 = vst.msk [vmem:[#allocation2 + $0xe0] sm:$0xff] %vm333, 0.0
      %363 = vst.msk [vmem:[#allocation2 + $0xe8] sm:$0xff] %vm333, 0.0
      %364 = vst.msk [vmem:[#allocation2 + $0xf0] sm:$0xff] %vm333, 0.0
      %365 = vst.msk [vmem:[#allocation2 + $0xf8] sm:$0xff] %vm333, 0.0
      %366 = vst.msk [vmem:[#allocation2 + $0x100] sm:$0xff] %vm333, 0.0
      %367 = vst.msk [vmem:[#allocation2 + $0x108] sm:$0xff] %vm333, 0.0
      %368 = vst.msk [vmem:[#allocation2 + $0x110] sm:$0xff] %vm333, 0.0
      %369 = vst.msk [vmem:[#allocation2 + $0x118] sm:$0xff] %vm333, 0.0
      %370 = vst.msk [vmem:[#allocation2 + $0x120] sm:$0xff] %vm333, 0.0
      %371 = vst.msk [vmem:[#allocation2 + $0x128] sm:$0xff] %vm333, 0.0
      %372 = vst.msk [vmem:[#allocation2 + $0x130] sm:$0xff] %vm333, 0.0
      %373 = vst.msk [vmem:[#allocation2 + $0x138] sm:$0xff] %vm333, 0.0
      %374 = vst.msk [vmem:[#allocation2 + $0x140] sm:$0xff] %vm333, 0.0
      %375 = vst.msk [vmem:[#allocation2 + $0x148] sm:$0xff] %vm333, 0.0
      %376 = vst.msk [vmem:[#allocation2 + $0x150] sm:$0xff] %vm333, 0.0
      %377 = vst.msk [vmem:[#allocation2 + $0x158] sm:$0xff] %vm333, 0.0
      %378 = vst.msk [vmem:[#allocation2 + $0x160] sm:$0xff] %vm333, 0.0
      %379 = vst.msk [vmem:[#allocation2 + $0x168] sm:$0xff] %vm333, 0.0
      %380 = vst.msk [vmem:[#allocation2 + $0x170] sm:$0xff] %vm333, 0.0
      %381 = vst.msk [vmem:[#allocation2 + $0x178] sm:$0xff] %vm333, 0.0
      %382 = vst.msk [vmem:[#allocation2 + $0x180] sm:$0xff] %vm333, 0.0
      %383 = vst.msk [vmem:[#allocation2 + $0x188] sm:$0xff] %vm333, 0.0
      %384 = vst.msk [vmem:[#allocation2 + $0x190] sm:$0xff] %vm333, 0.0
      %385 = vst.msk [vmem:[#allocation2 + $0x198] sm:$0xff] %vm333, 0.0
      %386 = vst.msk [vmem:[#allocation2 + $0x1a0] sm:$0xff] %vm333, 0.0
      %387 = vst.msk [vmem:[#allocation2 + $0x1a8] sm:$0xff] %vm333, 0.0
      %388 = vst.msk [vmem:[#allocation2 + $0x1b0] sm:$0xff] %vm333, 0.0
      %389 = vst.msk [vmem:[#allocation2 + $0x1b8] sm:$0xff] %vm333, 0.0
      %390 = vst.msk [vmem:[#allocation2 + $0x1c0] sm:$0xff] %vm333, 0.0
      %391 = vst.msk [vmem:[#allocation2 + $0x1c8] sm:$0xff] %vm333, 0.0
      %392 = vst.msk [vmem:[#allocation2 + $0x1d0] sm:$0xff] %vm333, 0.0
      %393 = vst.msk [vmem:[#allocation2 + $0x1d8] sm:$0xff] %vm333, 0.0
      %394 = vst.msk [vmem:[#allocation2 + $0x1e0] sm:$0xff] %vm333, 0.0
      %395 = vst.msk [vmem:[#allocation2 + $0x1e8] sm:$0xff] %vm333, 0.0
      %396 = vst.msk [vmem:[#allocation2 + $0x1f0] sm:$0xff] %vm333, 0.0
      %397 = vst.msk [vmem:[#allocation2 + $0x1f8] sm:$0xff] %vm333, 0.0
      %vm398 = vcmask 64512
      %399 = vst.msk [vmem:[#allocation3] sm:$0xff] %vm398, 0.0
      %400 = vst.msk [vmem:[#allocation3 + $0x8] sm:$0xff] %vm398, 0.0
      %401 = vst.msk [vmem:[#allocation3 + $0x10] sm:$0xff] %vm398, 0.0
      %402 = vst.msk [vmem:[#allocation3 + $0x18] sm:$0xff] %vm398, 0.0
      %403 = vst.msk [vmem:[#allocation3 + $0x20] sm:$0xff] %vm398, 0.0
      %404 = vst.msk [vmem:[#allocation3 + $0x28] sm:$0xff] %vm398, 0.0
      %405 = vst.msk [vmem:[#allocation3 + $0x30] sm:$0xff] %vm398, 0.0
      %406 = vst.msk [vmem:[#allocation3 + $0x38] sm:$0xff] %vm398, 0.0
      %407 = vst.msk [vmem:[#allocation3 + $0x40] sm:$0xff] %vm398, 0.0
      %408 = vst.msk [vmem:[#allocation3 + $0x48] sm:$0xff] %vm398, 0.0
      %409 = vst.msk [vmem:[#allocation3 + $0x50] sm:$0xff] %vm398, 0.0
      %410 = vst.msk [vmem:[#allocation3 + $0x58] sm:$0xff] %vm398, 0.0
      %411 = vst.msk [vmem:[#allocation3 + $0x60] sm:$0xff] %vm398, 0.0
      %412 = vst.msk [vmem:[#allocation3 + $0x68] sm:$0xff] %vm398, 0.0
      %413 = vst.msk [vmem:[#allocation3 + $0x70] sm:$0xff] %vm398, 0.0
      %414 = vst.msk [vmem:[#allocation3 + $0x78] sm:$0xff] %vm398, 0.0
      %415 = vst.msk [vmem:[#allocation3 + $0x80] sm:$0xff] %vm398, 0.0
      %416 = vst.msk [vmem:[#allocation3 + $0x88] sm:$0xff] %vm398, 0.0
      %417 = vst.msk [vmem:[#allocation3 + $0x90] sm:$0xff] %vm398, 0.0
      %418 = vst.msk [vmem:[#allocation3 + $0x98] sm:$0xff] %vm398, 0.0
      %419 = vst.msk [vmem:[#allocation3 + $0xa0] sm:$0xff] %vm398, 0.0
      %420 = vst.msk [vmem:[#allocation3 + $0xa8] sm:$0xff] %vm398, 0.0
      %421 = vst.msk [vmem:[#allocation3 + $0xb0] sm:$0xff] %vm398, 0.0
      %422 = vst.msk [vmem:[#allocation3 + $0xb8] sm:$0xff] %vm398, 0.0
      %423 = vst.msk [vmem:[#allocation3 + $0xc0] sm:$0xff] %vm398, 0.0
      %424 = vst.msk [vmem:[#allocation3 + $0xc8] sm:$0xff] %vm398, 0.0
      %425 = vst.msk [vmem:[#allocation3 + $0xd0] sm:$0xff] %vm398, 0.0
      %426 = vst.msk [vmem:[#allocation3 + $0xd8] sm:$0xff] %vm398, 0.0
      %427 = vst.msk [vmem:[#allocation3 + $0xe0] sm:$0xff] %vm398, 0.0
      %428 = vst.msk [vmem:[#allocation3 + $0xe8] sm:$0xff] %vm398, 0.0
      %429 = vst.msk [vmem:[#allocation3 + $0xf0] sm:$0xff] %vm398, 0.0
      %430 = vst.msk [vmem:[#allocation3 + $0xf8] sm:$0xff] %vm398, 0.0
      %431 = vst.msk [vmem:[#allocation3 + $0x100] sm:$0xff] %vm398, 0.0
      %432 = vst.msk [vmem:[#allocation3 + $0x108] sm:$0xff] %vm398, 0.0
      %433 = vst.msk [vmem:[#allocation3 + $0x110] sm:$0xff] %vm398, 0.0
      %434 = vst.msk [vmem:[#allocation3 + $0x118] sm:$0xff] %vm398, 0.0
      %435 = vst.msk [vmem:[#allocation3 + $0x120] sm:$0xff] %vm398, 0.0
      %436 = vst.msk [vmem:[#allocation3 + $0x128] sm:$0xff] %vm398, 0.0
      %437 = vst.msk [vmem:[#allocation3 + $0x130] sm:$0xff] %vm398, 0.0
      %438 = vst.msk [vmem:[#allocation3 + $0x138] sm:$0xff] %vm398, 0.0
      %439 = vst.msk [vmem:[#allocation3 + $0x140] sm:$0xff] %vm398, 0.0
      %440 = vst.msk [vmem:[#allocation3 + $0x148] sm:$0xff] %vm398, 0.0
      %441 = vst.msk [vmem:[#allocation3 + $0x150] sm:$0xff] %vm398, 0.0
      %442 = vst.msk [vmem:[#allocation3 + $0x158] sm:$0xff] %vm398, 0.0
      %443 = vst.msk [vmem:[#allocation3 + $0x160] sm:$0xff] %vm398, 0.0
      %444 = vst.msk [vmem:[#allocation3 + $0x168] sm:$0xff] %vm398, 0.0
      %445 = vst.msk [vmem:[#allocation3 + $0x170] sm:$0xff] %vm398, 0.0
      %446 = vst.msk [vmem:[#allocation3 + $0x178] sm:$0xff] %vm398, 0.0
      %447 = vst.msk [vmem:[#allocation3 + $0x180] sm:$0xff] %vm398, 0.0
      %448 = vst.msk [vmem:[#allocation3 + $0x188] sm:$0xff] %vm398, 0.0
      %449 = vst.msk [vmem:[#allocation3 + $0x190] sm:$0xff] %vm398, 0.0
      %450 = vst.msk [vmem:[#allocation3 + $0x198] sm:$0xff] %vm398, 0.0
      %451 = vst.msk [vmem:[#allocation3 + $0x1a0] sm:$0xff] %vm398, 0.0
      %452 = vst.msk [vmem:[#allocation3 + $0x1a8] sm:$0xff] %vm398, 0.0
      %453 = vst.msk [vmem:[#allocation3 + $0x1b0] sm:$0xff] %vm398, 0.0
      %454 = vst.msk [vmem:[#allocation3 + $0x1b8] sm:$0xff] %vm398, 0.0
      %455 = vst.msk [vmem:[#allocation3 + $0x1c0] sm:$0xff] %vm398, 0.0
      %456 = vst.msk [vmem:[#allocation3 + $0x1c8] sm:$0xff] %vm398, 0.0
      %457 = vst.msk [vmem:[#allocation3 + $0x1d0] sm:$0xff] %vm398, 0.0
      %458 = vst.msk [vmem:[#allocation3 + $0x1d8] sm:$0xff] %vm398, 0.0
      %459 = vst.msk [vmem:[#allocation3 + $0x1e0] sm:$0xff] %vm398, 0.0
      %460 = vst.msk [vmem:[#allocation3 + $0x1e8] sm:$0xff] %vm398, 0.0
      %461 = vst.msk [vmem:[#allocation3 + $0x1f0] sm:$0xff] %vm398, 0.0
      %462 = vst.msk [vmem:[#allocation3 + $0x1f8] sm:$0xff] %vm398, 0.0
      %v463 = vld [vmem:[%s327] sm:$0xff]
      %v464 = vld [vmem:[%s327 + $0x8] sm:$0xff]
      %v465 = vld [vmem:[%s327 + $0x10] sm:$0xff]
      %v466 = vld [vmem:[%s327 + $0x18] sm:$0xff]
      %v467 = vld [vmem:[%s327 + $0x20] sm:$0xff]
      %v468 = vld [vmem:[%s327 + $0x28] sm:$0xff]
      %v469 = vld [vmem:[%s327 + $0x30] sm:$0xff]
      %v470 = vld [vmem:[%s327 + $0x38] sm:$0xff]
      %v471 = vld [vmem:[%s327 + $0x40] sm:$0xff]
      %v472 = vld [vmem:[%s327 + $0x48] sm:$0xff]
      %v473 = vld [vmem:[%s327 + $0x50] sm:$0xff]
      %v474 = vld [vmem:[%s327 + $0x58] sm:$0xff]
      %v475 = vld [vmem:[%s327 + $0x60] sm:$0xff]
      %v476 = vld [vmem:[%s327 + $0x68] sm:$0xff]
      %v477 = vld [vmem:[%s327 + $0x70] sm:$0xff]
      %v478 = vld [vmem:[%s327 + $0x78] sm:$0xff]
      %v479 = vld [vmem:[%s327 + $0x80] sm:$0xff]
      %v480 = vld [vmem:[%s327 + $0x88] sm:$0xff]
      %v481 = vld [vmem:[%s327 + $0x90] sm:$0xff]
      %v482 = vld [vmem:[%s327 + $0x98] sm:$0xff]
      %v483 = vld [vmem:[%s327 + $0xa0] sm:$0xff]
      %v484 = vld [vmem:[%s327 + $0xa8] sm:$0xff]
      %v485 = vld [vmem:[%s327 + $0xb0] sm:$0xff]
      %v486 = vld [vmem:[%s327 + $0xb8] sm:$0xff]
      %v487 = vld [vmem:[%s327 + $0xc0] sm:$0xff]
      %v488 = vld [vmem:[%s327 + $0xc8] sm:$0xff]
      %v489 = vld [vmem:[%s327 + $0xd0] sm:$0xff]
      %v490 = vld [vmem:[%s327 + $0xd8] sm:$0xff]
      %v491 = vld [vmem:[%s327 + $0xe0] sm:$0xff]
      %v492 = vld [vmem:[%s327 + $0xe8] sm:$0xff]
      %v493 = vld [vmem:[%s327 + $0xf0] sm:$0xff]
      %v494 = vld [vmem:[%s327 + $0xf8] sm:$0xff]
      %495 = vst.msk [vmem:[#allocation2 + $0x80] sm:$0xff] %vm333, %v463
      %496 = vst.msk [vmem:[#allocation2 + $0x88] sm:$0xff] %vm333, %v464
      %497 = vst.msk [vmem:[#allocation2 + $0x90] sm:$0xff] %vm333, %v465
      %498 = vst.msk [vmem:[#allocation2 + $0x98] sm:$0xff] %vm333, %v466
      %499 = vst.msk [vmem:[#allocation2 + $0xa0] sm:$0xff] %vm333, %v467
      %500 = vst.msk [vmem:[#allocation2 + $0xa8] sm:$0xff] %vm333, %v468
      %501 = vst.msk [vmem:[#allocation2 + $0xb0] sm:$0xff] %vm333, %v469
      %502 = vst.msk [vmem:[#allocation2 + $0xb8] sm:$0xff] %vm333, %v470
      %503 = vst.msk [vmem:[#allocation2 + $0xc0] sm:$0xff] %vm333, %v471
      %504 = vst.msk [vmem:[#allocation2 + $0xc8] sm:$0xff] %vm333, %v472
      %505 = vst.msk [vmem:[#allocation2 + $0xd0] sm:$0xff] %vm333, %v473
      %506 = vst.msk [vmem:[#allocation2 + $0xd8] sm:$0xff] %vm333, %v474
      %507 = vst.msk [vmem:[#allocation2 + $0xe0] sm:$0xff] %vm333, %v475
      %508 = vst.msk [vmem:[#allocation2 + $0xe8] sm:$0xff] %vm333, %v476
      %509 = vst.msk [vmem:[#allocation2 + $0xf0] sm:$0xff] %vm333, %v477
      %510 = vst.msk [vmem:[#allocation2 + $0xf8] sm:$0xff] %vm333, %v478
      %511 = vst.msk [vmem:[#allocation2 + $0x100] sm:$0xff] %vm333, %v479
      %512 = vst.msk [vmem:[#allocation2 + $0x108] sm:$0xff] %vm333, %v480
      %513 = vst.msk [vmem:[#allocation2 + $0x110] sm:$0xff] %vm333, %v481
      %514 = vst.msk [vmem:[#allocation2 + $0x118] sm:$0xff] %vm333, %v482
      %515 = vst.msk [vmem:[#allocation2 + $0x120] sm:$0xff] %vm333, %v483
      %516 = vst.msk [vmem:[#allocation2 + $0x128] sm:$0xff] %vm333, %v484
      %517 = vst.msk [vmem:[#allocation2 + $0x130] sm:$0xff] %vm333, %v485
      %518 = vst.msk [vmem:[#allocation2 + $0x138] sm:$0xff] %vm333, %v486
      %519 = vst.msk [vmem:[#allocation2 + $0x140] sm:$0xff] %vm333, %v487
      %520 = vst.msk [vmem:[#allocation2 + $0x148] sm:$0xff] %vm333, %v488
      %521 = vst.msk [vmem:[#allocation2 + $0x150] sm:$0xff] %vm333, %v489
      %522 = vst.msk [vmem:[#allocation2 + $0x158] sm:$0xff] %vm333, %v490
      %523 = vst.msk [vmem:[#allocation2 + $0x160] sm:$0xff] %vm333, %v491
      %524 = vst.msk [vmem:[#allocation2 + $0x168] sm:$0xff] %vm333, %v492
      %525 = vst.msk [vmem:[#allocation2 + $0x170] sm:$0xff] %vm333, %v493
      %526 = vst.msk [vmem:[#allocation2 + $0x178] sm:$0xff] %vm333, %v494
      %v527 = vld [vmem:[#allocation2 + $0x6f] sm:$0xff]
      %v528 = vld [vmem:[#allocation2 + $0x77] sm:$0xff]
      %v529 = vld [vmem:[#allocation2 + $0x7f] sm:$0xff]
      %v530 = vld [vmem:[#allocation2 + $0x87] sm:$0xff]
      %v531 = vld [vmem:[#allocation2 + $0x8f] sm:$0xff]
      %v532 = vld [vmem:[#allocation2 + $0x97] sm:$0xff]
      %v533 = vld [vmem:[#allocation2 + $0x9f] sm:$0xff]
      %v534 = vld [vmem:[#allocation2 + $0xa7] sm:$0xff]
      %v535 = vld [vmem:[#allocation2 + $0xaf] sm:$0xff]
      %v536 = vld [vmem:[#allocation2 + $0xb7] sm:$0xff]
      %v537 = vld [vmem:[#allocation2 + $0xbf] sm:$0xff]
      %v538 = vld [vmem:[#allocation2 + $0xc7] sm:$0xff]
      %v539 = vld [vmem:[#allocation2 + $0xcf] sm:$0xff]
      %v540 = vld [vmem:[#allocation2 + $0xd7] sm:$0xff]
      %v541 = vld [vmem:[#allocation2 + $0xdf] sm:$0xff]
      %v542 = vld [vmem:[#allocation2 + $0xe7] sm:$0xff]
      %v543 = vld [vmem:[#allocation2 + $0xef] sm:$0xff]
      %v544 = vld [vmem:[#allocation2 + $0xf7] sm:$0xff]
      %v545 = vld [vmem:[#allocation2 + $0xff] sm:$0xff]
      %v546 = vld [vmem:[#allocation2 + $0x107] sm:$0xff]
      %v547 = vld [vmem:[#allocation2 + $0x10f] sm:$0xff]
      %v548 = vld [vmem:[#allocation2 + $0x117] sm:$0xff]
      %v549 = vld [vmem:[#allocation2 + $0x11f] sm:$0xff]
      %v550 = vld [vmem:[#allocation2 + $0x127] sm:$0xff]
      %v551 = vld [vmem:[#allocation2 + $0x12f] sm:$0xff]
      %v552 = vld [vmem:[#allocation2 + $0x137] sm:$0xff]
      %v553 = vld [vmem:[#allocation2 + $0x13f] sm:$0xff]
      %v554 = vld [vmem:[#allocation2 + $0x147] sm:$0xff]
      %v555 = vld [vmem:[#allocation2 + $0x14f] sm:$0xff]
      %v556 = vld [vmem:[#allocation2 + $0x157] sm:$0xff]
      %v557 = vld [vmem:[#allocation2 + $0x15f] sm:$0xff]
      %v558 = vld [vmem:[#allocation2 + $0x167] sm:$0xff]
      %v559 = vld [vmem:[%s8] sm:$0xff]
      %v560 = vld [vmem:[%s8 + $0x8] sm:$0xff]
      %v561 = vld [vmem:[%s8 + $0x10] sm:$0xff]
      %v562 = vld [vmem:[%s8 + $0x18] sm:$0xff]
      %v563 = vld [vmem:[%s8 + $0x20] sm:$0xff]
      %v564 = vld [vmem:[%s8 + $0x28] sm:$0xff]
      %v565 = vld [vmem:[%s8 + $0x30] sm:$0xff]
      %v566 = vld [vmem:[%s8 + $0x38] sm:$0xff]
      %v567 = vld [vmem:[%s8 + $0x40] sm:$0xff]
      %v568 = vld [vmem:[%s8 + $0x48] sm:$0xff]
      %v569 = vld [vmem:[%s8 + $0x50] sm:$0xff]
      %v570 = vld [vmem:[%s8 + $0x58] sm:$0xff]
      %v571 = vld [vmem:[%s8 + $0x60] sm:$0xff]
      %v572 = vld [vmem:[%s8 + $0x68] sm:$0xff]
      %v573 = vld [vmem:[%s8 + $0x70] sm:$0xff]
      %v574 = vld [vmem:[%s8 + $0x78] sm:$0xff]
      %v575 = vld [vmem:[%s8 + $0x80] sm:$0xff]
      %v576 = vld [vmem:[%s8 + $0x88] sm:$0xff]
      %v577 = vld [vmem:[%s8 + $0x90] sm:$0xff]
      %v578 = vld [vmem:[%s8 + $0x98] sm:$0xff]
      %v579 = vld [vmem:[%s8 + $0xa0] sm:$0xff]
      %v580 = vld [vmem:[%s8 + $0xa8] sm:$0xff]
      %v581 = vld [vmem:[%s8 + $0xb0] sm:$0xff]
      %v582 = vld [vmem:[%s8 + $0xb8] sm:$0xff]
      %v583 = vld [vmem:[%s8 + $0xc0] sm:$0xff]
      %v584 = vld [vmem:[%s8 + $0xc8] sm:$0xff]
      %v585 = vld [vmem:[%s8 + $0xd0] sm:$0xff]
      %v586 = vld [vmem:[%s8 + $0xd8] sm:$0xff]
      %v587 = vld [vmem:[%s8 + $0xe0] sm:$0xff]
      %v588 = vld [vmem:[%s8 + $0xe8] sm:$0xff]
      %v589 = vld [vmem:[%s8 + $0xf0] sm:$0xff]
      %v590 = vld [vmem:[%s8 + $0xf8] sm:$0xff]
      %592 = vset.pattern.permute.xlu0 0
      %593 = vperm.xlu0 %592, %v559
      %v594 = vpop.permute.xlu0 %593
      %597 = vset.pattern.permute.xlu0 0
      %598 = vperm.xlu0 %597, %v560
      %v599 = vpop.permute.xlu0 %598
      %602 = vset.pattern.permute.xlu0 0
      %603 = vperm.xlu0 %602, %v561
      %v604 = vpop.permute.xlu0 %603
      %607 = vset.pattern.permute.xlu0 0
      %608 = vperm.xlu0 %607, %v562
      %v609 = vpop.permute.xlu0 %608
      %612 = vset.pattern.permute.xlu0 0
      %613 = vperm.xlu0 %612, %v563
      %v614 = vpop.permute.xlu0 %613
      %617 = vset.pattern.permute.xlu0 0
      %618 = vperm.xlu0 %617, %v564
      %v619 = vpop.permute.xlu0 %618
      %622 = vset.pattern.permute.xlu0 0
      %623 = vperm.xlu0 %622, %v565
      %v624 = vpop.permute.xlu0 %623
      %627 = vset.pattern.permute.xlu0 0
      %628 = vperm.xlu0 %627, %v566
      %v629 = vpop.permute.xlu0 %628
      %632 = vset.pattern.permute.xlu0 0
      %633 = vperm.xlu0 %632, %v567
      %v634 = vpop.permute.xlu0 %633
      %637 = vset.pattern.permute.xlu0 0
      %638 = vperm.xlu0 %637, %v568
      %v639 = vpop.permute.xlu0 %638
      %642 = vset.pattern.permute.xlu0 0
      %643 = vperm.xlu0 %642, %v569
      %v644 = vpop.permute.xlu0 %643
      %647 = vset.pattern.permute.xlu0 0
      %648 = vperm.xlu0 %647, %v570
      %v649 = vpop.permute.xlu0 %648
      %652 = vset.pattern.permute.xlu0 0
      %653 = vperm.xlu0 %652, %v571
      %v654 = vpop.permute.xlu0 %653
      %657 = vset.pattern.permute.xlu0 0
      %658 = vperm.xlu0 %657, %v572
      %v659 = vpop.permute.xlu0 %658
      %662 = vset.pattern.permute.xlu0 0
      %663 = vperm.xlu0 %662, %v573
      %v664 = vpop.permute.xlu0 %663
      %667 = vset.pattern.permute.xlu0 0
      %668 = vperm.xlu0 %667, %v574
      %v669 = vpop.permute.xlu0 %668
      %672 = vset.pattern.permute.xlu0 0
      %673 = vperm.xlu0 %672, %v575
      %v674 = vpop.permute.xlu0 %673
      %677 = vset.pattern.permute.xlu0 0
      %678 = vperm.xlu0 %677, %v576
      %v679 = vpop.permute.xlu0 %678
      %682 = vset.pattern.permute.xlu0 0
      %683 = vperm.xlu0 %682, %v577
      %v684 = vpop.permute.xlu0 %683
      %687 = vset.pattern.permute.xlu0 0
      %688 = vperm.xlu0 %687, %v578
      %v689 = vpop.permute.xlu0 %688
      %692 = vset.pattern.permute.xlu0 0
      %693 = vperm.xlu0 %692, %v579
      %v694 = vpop.permute.xlu0 %693
      %697 = vset.pattern.permute.xlu0 0
      %698 = vperm.xlu0 %697, %v580
      %v699 = vpop.permute.xlu0 %698
      %702 = vset.pattern.permute.xlu0 0
      %703 = vperm.xlu0 %702, %v581
      %v704 = vpop.permute.xlu0 %703
      %707 = vset.pattern.permute.xlu0 0
      %708 = vperm.xlu0 %707, %v582
      %v709 = vpop.permute.xlu0 %708
      %712 = vset.pattern.permute.xlu0 0
      %713 = vperm.xlu0 %712, %v583
      %v714 = vpop.permute.xlu0 %713
      %717 = vset.pattern.permute.xlu0 0
      %718 = vperm.xlu0 %717, %v584
      %v719 = vpop.permute.xlu0 %718
      %722 = vset.pattern.permute.xlu0 0
      %723 = vperm.xlu0 %722, %v585
      %v724 = vpop.permute.xlu0 %723
      %727 = vset.pattern.permute.xlu0 0
      %728 = vperm.xlu0 %727, %v586
      %v729 = vpop.permute.xlu0 %728
      %732 = vset.pattern.permute.xlu0 0
      %733 = vperm.xlu0 %732, %v587
      %v734 = vpop.permute.xlu0 %733
      %737 = vset.pattern.permute.xlu0 0
      %738 = vperm.xlu0 %737, %v588
      %v739 = vpop.permute.xlu0 %738
      %742 = vset.pattern.permute.xlu0 0
      %743 = vperm.xlu0 %742, %v589
      %v744 = vpop.permute.xlu0 %743
      %747 = vset.pattern.permute.xlu0 0
      %748 = vperm.xlu0 %747, %v590
      %v749 = vpop.permute.xlu0 %748
      %v751 = vmul.f32 %v527, %v594
      %v752 = vmul.f32 %v528, %v599
      %v753 = vmul.f32 %v529, %v604
      %v754 = vmul.f32 %v530, %v609
      %v755 = vmul.f32 %v531, %v614
      %v756 = vmul.f32 %v532, %v619
      %v757 = vmul.f32 %v533, %v624
      %v758 = vmul.f32 %v534, %v629
      %v759 = vmul.f32 %v535, %v634
      %v760 = vmul.f32 %v536, %v639
      %v761 = vmul.f32 %v537, %v644
      %v762 = vmul.f32 %v538, %v649
      %v763 = vmul.f32 %v539, %v654
      %v764 = vmul.f32 %v540, %v659
      %v765 = vmul.f32 %v541, %v664
      %v766 = vmul.f32 %v542, %v669
      %v767 = vmul.f32 %v543, %v674
      %v768 = vmul.f32 %v544, %v679
      %v769 = vmul.f32 %v545, %v684
      %v770 = vmul.f32 %v546, %v689
      %v771 = vmul.f32 %v547, %v694
      %v772 = vmul.f32 %v548, %v699
      %v773 = vmul.f32 %v549, %v704
      %v774 = vmul.f32 %v550, %v709
      %v775 = vmul.f32 %v551, %v714
      %v776 = vmul.f32 %v552, %v719
      %v777 = vmul.f32 %v553, %v724
      %v778 = vmul.f32 %v554, %v729
      %v779 = vmul.f32 %v555, %v734
      %v780 = vmul.f32 %v556, %v739
      %v781 = vmul.f32 %v557, %v744
      %v782 = vmul.f32 %v558, %v749
      %v783 = vld [vmem:[%s1] sm:$0xf]
      %v784 = vld [vmem:[#allocation2 + $0x70] sm:$0xff]
      %v785 = vld [vmem:[#allocation2 + $0x78] sm:$0xff]
      %v786 = vld [vmem:[#allocation2 + $0x80] sm:$0xff]
      %v787 = vld [vmem:[#allocation2 + $0x88] sm:$0xff]
      %v788 = vld [vmem:[#allocation2 + $0x90] sm:$0xff]
      %v789 = vld [vmem:[#allocation2 + $0x98] sm:$0xff]
      %v790 = vld [vmem:[#allocation2 + $0xa0] sm:$0xff]
      %v791 = vld [vmem:[#allocation2 + $0xa8] sm:$0xff]
      %v792 = vld [vmem:[#allocation2 + $0xb0] sm:$0xff]
      %v793 = vld [vmem:[#allocation2 + $0xb8] sm:$0xff]
      %v794 = vld [vmem:[#allocation2 + $0xc0] sm:$0xff]
      %v795 = vld [vmem:[#allocation2 + $0xc8] sm:$0xff]
      %v796 = vld [vmem:[#allocation2 + $0xd0] sm:$0xff]
      %v797 = vld [vmem:[#allocation2 + $0xd8] sm:$0xff]
      %v798 = vld [vmem:[#allocation2 + $0xe0] sm:$0xff]
      %v799 = vld [vmem:[#allocation2 + $0xe8] sm:$0xff]
      %v800 = vld [vmem:[#allocation2 + $0xf0] sm:$0xff]
      %v801 = vld [vmem:[#allocation2 + $0xf8] sm:$0xff]
      %v802 = vld [vmem:[#allocation2 + $0x100] sm:$0xff]
      %v803 = vld [vmem:[#allocation2 + $0x108] sm:$0xff]
      %v804 = vld [vmem:[#allocation2 + $0x110] sm:$0xff]
      %v805 = vld [vmem:[#allocation2 + $0x118] sm:$0xff]
      %v806 = vld [vmem:[#allocation2 + $0x120] sm:$0xff]
      %v807 = vld [vmem:[#allocation2 + $0x128] sm:$0xff]
      %v808 = vld [vmem:[#allocation2 + $0x130] sm:$0xff]
      %v809 = vld [vmem:[#allocation2 + $0x138] sm:$0xff]
      %v810 = vld [vmem:[#allocation2 + $0x140] sm:$0xff]
      %v811 = vld [vmem:[#allocation2 + $0x148] sm:$0xff]
      %v812 = vld [vmem:[#allocation2 + $0x150] sm:$0xff]
      %v813 = vld [vmem:[#allocation2 + $0x158] sm:$0xff]
      %v814 = vld [vmem:[#allocation2 + $0x160] sm:$0xff]
      %v815 = vld [vmem:[#allocation2 + $0x168] sm:$0xff]
      %s816 = scalar_lea.vmem %s8, 256
      %v817 = vld [vmem:[%s816] sm:$0xff]
      %v818 = vld [vmem:[%s816 + $0x8] sm:$0xff]
      %v819 = vld [vmem:[%s816 + $0x10] sm:$0xff]
      %v820 = vld [vmem:[%s816 + $0x18] sm:$0xff]
      %v821 = vld [vmem:[%s816 + $0x20] sm:$0xff]
      %v822 = vld [vmem:[%s816 + $0x28] sm:$0xff]
      %v823 = vld [vmem:[%s816 + $0x30] sm:$0xff]
      %v824 = vld [vmem:[%s816 + $0x38] sm:$0xff]
      %v825 = vld [vmem:[%s816 + $0x40] sm:$0xff]
      %v826 = vld [vmem:[%s816 + $0x48] sm:$0xff]
      %v827 = vld [vmem:[%s816 + $0x50] sm:$0xff]
      %v828 = vld [vmem:[%s816 + $0x58] sm:$0xff]
      %v829 = vld [vmem:[%s816 + $0x60] sm:$0xff]
      %v830 = vld [vmem:[%s816 + $0x68] sm:$0xff]
      %v831 = vld [vmem:[%s816 + $0x70] sm:$0xff]
      %v832 = vld [vmem:[%s816 + $0x78] sm:$0xff]
      %v833 = vld [vmem:[%s816 + $0x80] sm:$0xff]
      %v834 = vld [vmem:[%s816 + $0x88] sm:$0xff]
      %v835 = vld [vmem:[%s816 + $0x90] sm:$0xff]
      %v836 = vld [vmem:[%s816 + $0x98] sm:$0xff]
      %v837 = vld [vmem:[%s816 + $0xa0] sm:$0xff]
      %v838 = vld [vmem:[%s816 + $0xa8] sm:$0xff]
      %v839 = vld [vmem:[%s816 + $0xb0] sm:$0xff]
      %v840 = vld [vmem:[%s816 + $0xb8] sm:$0xff]
      %v841 = vld [vmem:[%s816 + $0xc0] sm:$0xff]
      %v842 = vld [vmem:[%s816 + $0xc8] sm:$0xff]
      %v843 = vld [vmem:[%s816 + $0xd0] sm:$0xff]
      %v844 = vld [vmem:[%s816 + $0xd8] sm:$0xff]
      %v845 = vld [vmem:[%s816 + $0xe0] sm:$0xff]
      %v846 = vld [vmem:[%s816 + $0xe8] sm:$0xff]
      %v847 = vld [vmem:[%s816 + $0xf0] sm:$0xff]
      %v848 = vld [vmem:[%s816 + $0xf8] sm:$0xff]
      %850 = vset.pattern.permute.xlu0 0
      %851 = vperm.xlu0 %850, %v817
      %v852 = vpop.permute.xlu0 %851
      %855 = vset.pattern.permute.xlu0 0
      %856 = vperm.xlu0 %855, %v818
      %v857 = vpop.permute.xlu0 %856
      %860 = vset.pattern.permute.xlu0 0
      %861 = vperm.xlu0 %860, %v819
      %v862 = vpop.permute.xlu0 %861
      %865 = vset.pattern.permute.xlu0 0
      %866 = vperm.xlu0 %865, %v820
      %v867 = vpop.permute.xlu0 %866
      %870 = vset.pattern.permute.xlu0 0
      %871 = vperm.xlu0 %870, %v821
      %v872 = vpop.permute.xlu0 %871
      %875 = vset.pattern.permute.xlu0 0
      %876 = vperm.xlu0 %875, %v822
      %v877 = vpop.permute.xlu0 %876
      %880 = vset.pattern.permute.xlu0 0
      %881 = vperm.xlu0 %880, %v823
      %v882 = vpop.permute.xlu0 %881
      %885 = vset.pattern.permute.xlu0 0
      %886 = vperm.xlu0 %885, %v824
      %v887 = vpop.permute.xlu0 %886
      %890 = vset.pattern.permute.xlu0 0
      %891 = vperm.xlu0 %890, %v825
      %v892 = vpop.permute.xlu0 %891
      %895 = vset.pattern.permute.xlu0 0
      %896 = vperm.xlu0 %895, %v826
      %v897 = vpop.permute.xlu0 %896
      %900 = vset.pattern.permute.xlu0 0
      %901 = vperm.xlu0 %900, %v827
      %v902 = vpop.permute.xlu0 %901
      %905 = vset.pattern.permute.xlu0 0
      %906 = vperm.xlu0 %905, %v828
      %v907 = vpop.permute.xlu0 %906
      %910 = vset.pattern.permute.xlu0 0
      %911 = vperm.xlu0 %910, %v829
      %v912 = vpop.permute.xlu0 %911
      %915 = vset.pattern.permute.xlu0 0
      %916 = vperm.xlu0 %915, %v830
      %v917 = vpop.permute.xlu0 %916
      %920 = vset.pattern.permute.xlu0 0
      %921 = vperm.xlu0 %920, %v831
      %v922 = vpop.permute.xlu0 %921
      %925 = vset.pattern.permute.xlu0 0
      %926 = vperm.xlu0 %925, %v832
      %v927 = vpop.permute.xlu0 %926
      %930 = vset.pattern.permute.xlu0 0
      %931 = vperm.xlu0 %930, %v833
      %v932 = vpop.permute.xlu0 %931
      %935 = vset.pattern.permute.xlu0 0
      %936 = vperm.xlu0 %935, %v834
      %v937 = vpop.permute.xlu0 %936
      %940 = vset.pattern.permute.xlu0 0
      %941 = vperm.xlu0 %940, %v835
      %v942 = vpop.permute.xlu0 %941
      %945 = vset.pattern.permute.xlu0 0
      %946 = vperm.xlu0 %945, %v836
      %v947 = vpop.permute.xlu0 %946
      %950 = vset.pattern.permute.xlu0 0
      %951 = vperm.xlu0 %950, %v837
      %v952 = vpop.permute.xlu0 %951
      %955 = vset.pattern.permute.xlu0 0
      %956 = vperm.xlu0 %955, %v838
      %v957 = vpop.permute.xlu0 %956
      %960 = vset.pattern.permute.xlu0 0
      %961 = vperm.xlu0 %960, %v839
      %v962 = vpop.permute.xlu0 %961
      %965 = vset.pattern.permute.xlu0 0
      %966 = vperm.xlu0 %965, %v840
      %v967 = vpop.permute.xlu0 %966
      %970 = vset.pattern.permute.xlu0 0
      %971 = vperm.xlu0 %970, %v841
      %v972 = vpop.permute.xlu0 %971
      %975 = vset.pattern.permute.xlu0 0
      %976 = vperm.xlu0 %975, %v842
      %v977 = vpop.permute.xlu0 %976
      %980 = vset.pattern.permute.xlu0 0
      %981 = vperm.xlu0 %980, %v843
      %v982 = vpop.permute.xlu0 %981
      %985 = vset.pattern.permute.xlu0 0
      %986 = vperm.xlu0 %985, %v844
      %v987 = vpop.permute.xlu0 %986
      %990 = vset.pattern.permute.xlu0 0
      %991 = vperm.xlu0 %990, %v845
      %v992 = vpop.permute.xlu0 %991
      %995 = vset.pattern.permute.xlu0 0
      %996 = vperm.xlu0 %995, %v846
      %v997 = vpop.permute.xlu0 %996
      %1000 = vset.pattern.permute.xlu0 0
      %1001 = vperm.xlu0 %1000, %v847
      %v1002 = vpop.permute.xlu0 %1001
      %1005 = vset.pattern.permute.xlu0 0
      %1006 = vperm.xlu0 %1005, %v848
      %v1007 = vpop.permute.xlu0 %1006
      %v1009 = vmul.f32 %v784, %v852
      %v1010 = vmul.f32 %v785, %v857
      %v1011 = vmul.f32 %v786, %v862
      %v1012 = vmul.f32 %v787, %v867
      %v1013 = vmul.f32 %v788, %v872
      %v1014 = vmul.f32 %v789, %v877
      %v1015 = vmul.f32 %v790, %v882
      %v1016 = vmul.f32 %v791, %v887
      %v1017 = vmul.f32 %v792, %v892
      %v1018 = vmul.f32 %v793, %v897
      %v1019 = vmul.f32 %v794, %v902
      %v1020 = vmul.f32 %v795, %v907
      %v1021 = vmul.f32 %v796, %v912
      %v1022 = vmul.f32 %v797, %v917
      %v1023 = vmul.f32 %v798, %v922
      %v1024 = vmul.f32 %v799, %v927
      %v1025 = vmul.f32 %v800, %v932
      %v1026 = vmul.f32 %v801, %v937
      %v1027 = vmul.f32 %v802, %v942
      %v1028 = vmul.f32 %v803, %v947
      %v1029 = vmul.f32 %v804, %v952
      %v1030 = vmul.f32 %v805, %v957
      %v1031 = vmul.f32 %v806, %v962
      %v1032 = vmul.f32 %v807, %v967
      %v1033 = vmul.f32 %v808, %v972
      %v1034 = vmul.f32 %v809, %v977
      %v1035 = vmul.f32 %v810, %v982
      %v1036 = vmul.f32 %v811, %v987
      %v1037 = vmul.f32 %v812, %v992
      %v1038 = vmul.f32 %v813, %v997
      %v1039 = vmul.f32 %v814, %v1002
      %v1040 = vmul.f32 %v815, %v1007
      %s1041 = scalar_lea.vmem %s1, 4
      %v1042 = vld [vmem:[%s1041] sm:$0xf]
      %v1044 = vsel %vm333, %v1009, 0
      %v1047 = vsel %vm333, %v1010, 0
      %v1050 = vsel %vm333, %v1011, 0
      %v1053 = vsel %vm333, %v1012, 0
      %v1056 = vsel %vm333, %v1013, 0
      %v1059 = vsel %vm333, %v1014, 0
      %v1062 = vsel %vm333, %v1015, 0
      %v1065 = vsel %vm333, %v1016, 0
      %v1068 = vsel %vm333, %v1017, 0
      %v1071 = vsel %vm333, %v1018, 0
      %v1074 = vsel %vm333, %v1019, 0
      %v1077 = vsel %vm333, %v1020, 0
      %v1080 = vsel %vm333, %v1021, 0
      %v1083 = vsel %vm333, %v1022, 0
      %v1086 = vsel %vm333, %v1023, 0
      %v1089 = vsel %vm333, %v1024, 0
      %v1092 = vsel %vm333, %v1025, 0
      %v1095 = vsel %vm333, %v1026, 0
      %v1098 = vsel %vm333, %v1027, 0
      %v1101 = vsel %vm333, %v1028, 0
      %v1104 = vsel %vm333, %v1029, 0
      %v1107 = vsel %vm333, %v1030, 0
      %v1110 = vsel %vm333, %v1031, 0
      %v1113 = vsel %vm333, %v1032, 0
      %v1116 = vsel %vm333, %v1033, 0
      %v1119 = vsel %vm333, %v1034, 0
      %v1122 = vsel %vm333, %v1035, 0
      %v1125 = vsel %vm333, %v1036, 0
      %v1128 = vsel %vm333, %v1037, 0
      %v1131 = vsel %vm333, %v1038, 0
      %v1134 = vsel %vm333, %v1039, 0
      %v1137 = vsel %vm333, %v1040, 0
      %vm1139 = vcmask 1043456
      %v1141 = vsel %vm1139, %v1042, 0
      %1143 = vmatprep.subr.mxu0 0.0
      %1144 = vmatpush1.msra.mxu0 0.0
      %1145 = vmatprep.subr.mxu0 0.0
      %1146 = vmatpush1.msra.mxu0 0.0
      %1147 = vmatprep.subr.mxu0 0.0
      %1148 = vmatpush1.msra.mxu0 0.0
      %1149 = vmatprep.subr.mxu0 0.0
      %1150 = vmatpush1.msra.mxu0 0.0
      %1151 = vmatprep.subr.mxu0 0.0
      %1152 = vmatpush1.msra.mxu0 0.0
      %1153 = vmatprep.subr.mxu0 0.0
      %1154 = vmatpush1.msra.mxu0 0.0
      %1155 = vmatprep.subr.mxu0 0.0
      %1156 = vmatpush1.msra.mxu0 0.0
      %1157 = vmatprep.subr.mxu0 0.0
      %1158 = vmatpush1.msra.mxu0 0.0
      %1159 = vmatprep.subr.mxu0 0.0
      %1160 = vmatpush1.msra.mxu0 0.0
      %1161 = vmatprep.subr.mxu0 0.0
      %1162 = vmatpush1.msra.mxu0 0.0
      %1163 = vmatprep.subr.mxu0 0.0
      %1164 = vmatpush1.msra.mxu0 0.0
      %1165 = vmatprep.subr.mxu0 0.0
      %1166 = vmatpush1.msra.mxu0 0.0
      %1167 = vmatprep.subr.mxu0 0.0
      %1168 = vmatpush1.msra.mxu0 0.0
      %1169 = vmatprep.subr.mxu0 0.0
      %1170 = vmatpush1.msra.mxu0 0.0
      %1171 = vmatprep.subr.mxu0 0.0
      %1172 = vmatpush1.msra.mxu0 0.0
      %1173 = vmatprep.subr.mxu0 0.0
      %1174 = vmatpush1.msra.mxu0 %v1141
      %1175 = vmatprep.subr.mxu0 0.0
      %1176 = vmatpush2.msra.mxu0 0.0
      %1177 = vmatprep.subr.mxu0 0.0
      %1178 = vmatpush2.msra.mxu0 0.0
      %1179 = vmatprep.subr.mxu0 0.0
      %1180 = vmatpush2.msra.mxu0 0.0
      %1181 = vmatprep.subr.mxu0 0.0
      %1182 = vmatpush2.msra.mxu0 0.0
      %1183 = vmatprep.subr.mxu0 0.0
      %1184 = vmatpush2.msra.mxu0 0.0
      %1185 = vmatprep.subr.mxu0 0.0
      %1186 = vmatpush2.msra.mxu0 0.0
      %1187 = vmatprep.subr.mxu0 0.0
      %1188 = vmatpush2.msra.mxu0 0.0
      %1189 = vmatprep.subr.mxu0 0.0
      %1190 = vmatpush2.msra.mxu0 0.0
      %1191 = vmatprep.subr.mxu0 0.0
      %1192 = vmatpush2.msra.mxu0 0.0
      %1193 = vmatprep.subr.mxu0 0.0
      %1194 = vmatpush2.msra.mxu0 0.0
      %1195 = vmatprep.subr.mxu0 0.0
      %1196 = vmatpush2.msra.mxu0 0.0
      %1197 = vmatprep.subr.mxu0 0.0
      %1198 = vmatpush2.msra.mxu0 0.0
      %1199 = vmatprep.subr.mxu0 0.0
      %1200 = vmatpush2.msra.mxu0 0.0
      %1201 = vmatprep.subr.mxu0 0.0
      %1202 = vmatpush2.msra.mxu0 0.0
      %1203 = vmatprep.subr.mxu0 0.0
      %1204 = vmatpush2.msra.mxu0 0.0
      %1205 = vmatprep.subr.mxu0 0.0
      %1206 = vmatpush2.msra.mxu0 0.0
      %1207 = vmatprep.mubr.f32.mxu0 0.0
      %1208 = vmatmul.mubr.f32.gmra.mxu0 %v1044
      %v1209 = vpop.f32.mrf.mxu0
      %v1210 = vadd.f32 0.0, %v1209
      %v1211 = vpop.f32.mrf.mxu0
      %1212 = vmatprep.mubr.f32.mxu0 0.0
      %1213 = vmatmul.mubr.f32.gmra.mxu0 %v1047
      %v1214 = vpop.f32.mrf.mxu0
      %v1215 = vadd.f32 0.0, %v1214
      %v1216 = vpop.f32.mrf.mxu0
      %1217 = vmatprep.mubr.f32.mxu0 0.0
      %1218 = vmatmul.mubr.f32.gmra.mxu0 %v1050
      %v1219 = vpop.f32.mrf.mxu0
      %v1220 = vadd.f32 0.0, %v1219
      %v1221 = vpop.f32.mrf.mxu0
      %1222 = vmatprep.mubr.f32.mxu0 0.0
      %1223 = vmatmul.mubr.f32.gmra.mxu0 %v1053
      %v1224 = vpop.f32.mrf.mxu0
      %v1225 = vadd.f32 0.0, %v1224
      %v1226 = vpop.f32.mrf.mxu0
      %1227 = vmatprep.mubr.f32.mxu0 0.0
      %1228 = vmatmul.mubr.f32.gmra.mxu0 %v1056
      %v1229 = vpop.f32.mrf.mxu0
      %v1230 = vadd.f32 0.0, %v1229
      %v1231 = vpop.f32.mrf.mxu0
      %1232 = vmatprep.mubr.f32.mxu0 0.0
      %1233 = vmatmul.mubr.f32.gmra.mxu0 %v1059
      %v1234 = vpop.f32.mrf.mxu0
      %v1235 = vadd.f32 0.0, %v1234
      %v1236 = vpop.f32.mrf.mxu0
      %1237 = vmatprep.mubr.f32.mxu0 0.0
      %1238 = vmatmul.mubr.f32.gmra.mxu0 %v1062
      %v1239 = vpop.f32.mrf.mxu0
      %v1240 = vadd.f32 0.0, %v1239
      %v1241 = vpop.f32.mrf.mxu0
      %1242 = vmatprep.mubr.f32.mxu0 0.0
      %1243 = vmatmul.mubr.f32.gmra.mxu0 %v1065
      %v1244 = vpop.f32.mrf.mxu0
      %v1245 = vadd.f32 0.0, %v1244
      %v1246 = vpop.f32.mrf.mxu0
      %1247 = vmatprep.mubr.f32.mxu0 0.0
      %1248 = vmatmul.mubr.f32.gmra.mxu0 %v1068
      %v1249 = vpop.f32.mrf.mxu0
      %v1250 = vadd.f32 0.0, %v1249
      %v1251 = vpop.f32.mrf.mxu0
      %1252 = vmatprep.mubr.f32.mxu0 0.0
      %1253 = vmatmul.mubr.f32.gmra.mxu0 %v1071
      %v1254 = vpop.f32.mrf.mxu0
      %v1255 = vadd.f32 0.0, %v1254
      %v1256 = vpop.f32.mrf.mxu0
      %1257 = vmatprep.mubr.f32.mxu0 0.0
      %1258 = vmatmul.mubr.f32.gmra.mxu0 %v1074
      %v1259 = vpop.f32.mrf.mxu0
      %v1260 = vadd.f32 0.0, %v1259
      %v1261 = vpop.f32.mrf.mxu0
      %1262 = vmatprep.mubr.f32.mxu0 0.0
      %1263 = vmatmul.mubr.f32.gmra.mxu0 %v1077
      %v1264 = vpop.f32.mrf.mxu0
      %v1265 = vadd.f32 0.0, %v1264
      %v1266 = vpop.f32.mrf.mxu0
      %1267 = vmatprep.mubr.f32.mxu0 0.0
      %1268 = vmatmul.mubr.f32.gmra.mxu0 %v1080
      %v1269 = vpop.f32.mrf.mxu0
      %v1270 = vadd.f32 0.0, %v1269
      %v1271 = vpop.f32.mrf.mxu0
      %1272 = vmatprep.mubr.f32.mxu0 0.0
      %1273 = vmatmul.mubr.f32.gmra.mxu0 %v1083
      %v1274 = vpop.f32.mrf.mxu0
      %v1275 = vadd.f32 0.0, %v1274
      %v1276 = vpop.f32.mrf.mxu0
      %1277 = vmatprep.mubr.f32.mxu0 0.0
      %1278 = vmatmul.mubr.f32.gmra.mxu0 %v1086
      %v1279 = vpop.f32.mrf.mxu0
      %v1280 = vadd.f32 0.0, %v1279
      %v1281 = vpop.f32.mrf.mxu0
      %1282 = vmatprep.mubr.f32.mxu0 0.0
      %1283 = vmatmul.mubr.f32.gmra.mxu0 %v1089
      %v1284 = vpop.f32.mrf.mxu0
      %v1285 = vadd.f32 0.0, %v1284
      %v1286 = vpop.f32.mrf.mxu0
      %1287 = vmatprep.mubr.f32.mxu0 0.0
      %1288 = vmatmul.mubr.f32.gmra.mxu0 %v1092
      %v1289 = vpop.f32.mrf.mxu0
      %v1290 = vadd.f32 0.0, %v1289
      %v1291 = vpop.f32.mrf.mxu0
      %1292 = vmatprep.mubr.f32.mxu0 0.0
      %1293 = vmatmul.mubr.f32.gmra.mxu0 %v1095
      %v1294 = vpop.f32.mrf.mxu0
      %v1295 = vadd.f32 0.0, %v1294
      %v1296 = vpop.f32.mrf.mxu0
      %1297 = vmatprep.mubr.f32.mxu0 0.0
      %1298 = vmatmul.mubr.f32.gmra.mxu0 %v1098
      %v1299 = vpop.f32.mrf.mxu0
      %v1300 = vadd.f32 0.0, %v1299
      %v1301 = vpop.f32.mrf.mxu0
      %1302 = vmatprep.mubr.f32.mxu0 0.0
      %1303 = vmatmul.mubr.f32.gmra.mxu0 %v1101
      %v1304 = vpop.f32.mrf.mxu0
      %v1305 = vadd.f32 0.0, %v1304
      %v1306 = vpop.f32.mrf.mxu0
      %1307 = vmatprep.mubr.f32.mxu0 0.0
      %1308 = vmatmul.mubr.f32.gmra.mxu0 %v1104
      %v1309 = vpop.f32.mrf.mxu0
      %v1310 = vadd.f32 0.0, %v1309
      %v1311 = vpop.f32.mrf.mxu0
      %1312 = vmatprep.mubr.f32.mxu0 0.0
      %1313 = vmatmul.mubr.f32.gmra.mxu0 %v1107
      %v1314 = vpop.f32.mrf.mxu0
      %v1315 = vadd.f32 0.0, %v1314
      %v1316 = vpop.f32.mrf.mxu0
      %1317 = vmatprep.mubr.f32.mxu0 0.0
      %1318 = vmatmul.mubr.f32.gmra.mxu0 %v1110
      %v1319 = vpop.f32.mrf.mxu0
      %v1320 = vadd.f32 0.0, %v1319
      %v1321 = vpop.f32.mrf.mxu0
      %1322 = vmatprep.mubr.f32.mxu0 0.0
      %1323 = vmatmul.mubr.f32.gmra.mxu0 %v1113
      %v1324 = vpop.f32.mrf.mxu0
      %v1325 = vadd.f32 0.0, %v1324
      %v1326 = vpop.f32.mrf.mxu0
      %1327 = vmatprep.mubr.f32.mxu0 0.0
      %1328 = vmatmul.mubr.f32.gmra.mxu0 %v1116
      %v1329 = vpop.f32.mrf.mxu0
      %v1330 = vadd.f32 0.0, %v1329
      %v1331 = vpop.f32.mrf.mxu0
      %1332 = vmatprep.mubr.f32.mxu0 0.0
      %1333 = vmatmul.mubr.f32.gmra.mxu0 %v1119
      %v1334 = vpop.f32.mrf.mxu0
      %v1335 = vadd.f32 0.0, %v1334
      %v1336 = vpop.f32.mrf.mxu0
      %1337 = vmatprep.mubr.f32.mxu0 0.0
      %1338 = vmatmul.mubr.f32.gmra.mxu0 %v1122
      %v1339 = vpop.f32.mrf.mxu0
      %v1340 = vadd.f32 0.0, %v1339
      %v1341 = vpop.f32.mrf.mxu0
      %1342 = vmatprep.mubr.f32.mxu0 0.0
      %1343 = vmatmul.mubr.f32.gmra.mxu0 %v1125
      %v1344 = vpop.f32.mrf.mxu0
      %v1345 = vadd.f32 0.0, %v1344
      %v1346 = vpop.f32.mrf.mxu0
      %1347 = vmatprep.mubr.f32.mxu0 0.0
      %1348 = vmatmul.mubr.f32.gmra.mxu0 %v1128
      %v1349 = vpop.f32.mrf.mxu0
      %v1350 = vadd.f32 0.0, %v1349
      %v1351 = vpop.f32.mrf.mxu0
      %1352 = vmatprep.mubr.f32.mxu0 0.0
      %1353 = vmatmul.mubr.f32.gmra.mxu0 %v1131
      %v1354 = vpop.f32.mrf.mxu0
      %v1355 = vadd.f32 0.0, %v1354
      %v1356 = vpop.f32.mrf.mxu0
      %1357 = vmatprep.mubr.f32.mxu0 0.0
      %1358 = vmatmul.mubr.f32.gmra.mxu0 %v1134
      %v1359 = vpop.f32.mrf.mxu0
      %v1360 = vadd.f32 0.0, %v1359
      %v1361 = vpop.f32.mrf.mxu0
      %1362 = vmatprep.mubr.f32.mxu0 0.0
      %1363 = vmatmul.mubr.f32.gmra.mxu0 %v1137
      %v1364 = vpop.f32.mrf.mxu0
      %v1365 = vadd.f32 0.0, %v1364
      %v1366 = vpop.f32.mrf.mxu0
      %1367 = vdwg.mxu0
      %v1369 = vsel %vm333, %v751, 0
      %v1372 = vsel %vm333, %v752, 0
      %v1375 = vsel %vm333, %v753, 0
      %v1378 = vsel %vm333, %v754, 0
      %v1381 = vsel %vm333, %v755, 0
      %v1384 = vsel %vm333, %v756, 0
      %v1387 = vsel %vm333, %v757, 0
      %v1390 = vsel %vm333, %v758, 0
      %v1393 = vsel %vm333, %v759, 0
      %v1396 = vsel %vm333, %v760, 0
      %v1399 = vsel %vm333, %v761, 0
      %v1402 = vsel %vm333, %v762, 0
      %v1405 = vsel %vm333, %v763, 0
      %v1408 = vsel %vm333, %v764, 0
      %v1411 = vsel %vm333, %v765, 0
      %v1414 = vsel %vm333, %v766, 0
      %v1417 = vsel %vm333, %v767, 0
      %v1420 = vsel %vm333, %v768, 0
      %v1423 = vsel %vm333, %v769, 0
      %v1426 = vsel %vm333, %v770, 0
      %v1429 = vsel %vm333, %v771, 0
      %v1432 = vsel %vm333, %v772, 0
      %v1435 = vsel %vm333, %v773, 0
      %v1438 = vsel %vm333, %v774, 0
      %v1441 = vsel %vm333, %v775, 0
      %v1444 = vsel %vm333, %v776, 0
      %v1447 = vsel %vm333, %v777, 0
      %v1450 = vsel %vm333, %v778, 0
      %v1453 = vsel %vm333, %v779, 0
      %v1456 = vsel %vm333, %v780, 0
      %v1459 = vsel %vm333, %v781, 0
      %v1462 = vsel %vm333, %v782, 0
      %v1465 = vsel %vm1139, %v783, 0
      %1467 = vmatprep.subr.mxu0 0.0
      %1468 = vmatpush1.msra.mxu0 0.0
      %1469 = vmatprep.subr.mxu0 0.0
      %1470 = vmatpush1.msra.mxu0 0.0
      %1471 = vmatprep.subr.mxu0 0.0
      %1472 = vmatpush1.msra.mxu0 0.0
      %1473 = vmatprep.subr.mxu0 0.0
      %1474 = vmatpush1.msra.mxu0 0.0
      %1475 = vmatprep.subr.mxu0 0.0
      %1476 = vmatpush1.msra.mxu0 0.0
      %1477 = vmatprep.subr.mxu0 0.0
      %1478 = vmatpush1.msra.mxu0 0.0
      %1479 = vmatprep.subr.mxu0 0.0
      %1480 = vmatpush1.msra.mxu0 0.0
      %1481 = vmatprep.subr.mxu0 0.0
      %1482 = vmatpush1.msra.mxu0 0.0
      %1483 = vmatprep.subr.mxu0 0.0
      %1484 = vmatpush1.msra.mxu0 0.0
      %1485 = vmatprep.subr.mxu0 0.0
      %1486 = vmatpush1.msra.mxu0 0.0
      %1487 = vmatprep.subr.mxu0 0.0
      %1488 = vmatpush1.msra.mxu0 0.0
      %1489 = vmatprep.subr.mxu0 0.0
      %1490 = vmatpush1.msra.mxu0 0.0
      %1491 = vmatprep.subr.mxu0 0.0
      %1492 = vmatpush1.msra.mxu0 0.0
      %1493 = vmatprep.subr.mxu0 0.0
      %1494 = vmatpush1.msra.mxu0 0.0
      %1495 = vmatprep.subr.mxu0 0.0
      %1496 = vmatpush1.msra.mxu0 0.0
      %1497 = vmatprep.subr.mxu0 0.0
      %1498 = vmatpush1.msra.mxu0 %v1465
      %1499 = vmatprep.subr.mxu0 0.0
      %1500 = vmatpush2.msra.mxu0 0.0
      %1501 = vmatprep.subr.mxu0 0.0
      %1502 = vmatpush2.msra.mxu0 0.0
      %1503 = vmatprep.subr.mxu0 0.0
      %1504 = vmatpush2.msra.mxu0 0.0
      %1505 = vmatprep.subr.mxu0 0.0
      %1506 = vmatpush2.msra.mxu0 0.0
      %1507 = vmatprep.subr.mxu0 0.0
      %1508 = vmatpush2.msra.mxu0 0.0
      %1509 = vmatprep.subr.mxu0 0.0
      %1510 = vmatpush2.msra.mxu0 0.0
      %1511 = vmatprep.subr.mxu0 0.0
      %1512 = vmatpush2.msra.mxu0 0.0
      %1513 = vmatprep.subr.mxu0 0.0
      %1514 = vmatpush2.msra.mxu0 0.0
      %1515 = vmatprep.subr.mxu0 0.0
      %1516 = vmatpush2.msra.mxu0 0.0
      %1517 = vmatprep.subr.mxu0 0.0
      %1518 = vmatpush2.msra.mxu0 0.0
      %1519 = vmatprep.subr.mxu0 0.0
      %1520 = vmatpush2.msra.mxu0 0.0
      %1521 = vmatprep.subr.mxu0 0.0
      %1522 = vmatpush2.msra.mxu0 0.0
      %1523 = vmatprep.subr.mxu0 0.0
      %1524 = vmatpush2.msra.mxu0 0.0
      %1525 = vmatprep.subr.mxu0 0.0
      %1526 = vmatpush2.msra.mxu0 0.0
      %1527 = vmatprep.subr.mxu0 0.0
      %1528 = vmatpush2.msra.mxu0 0.0
      %1529 = vmatprep.subr.mxu0 0.0
      %1530 = vmatpush2.msra.mxu0 0.0
      %1531 = vmatprep.mubr.f32.mxu0 0.0
      %1532 = vmatmul.mubr.f32.gmra.mxu0 %v1369
      %v1533 = vpop.f32.mrf.mxu0
      %v1534 = vadd.f32 %v1210, %v1533
      %v1535 = vpop.f32.mrf.mxu0
      %1536 = vmatprep.mubr.f32.mxu0 0.0
      %1537 = vmatmul.mubr.f32.gmra.mxu0 %v1372
      %v1538 = vpop.f32.mrf.mxu0
      %v1539 = vadd.f32 %v1215, %v1538
      %v1540 = vpop.f32.mrf.mxu0
      %1541 = vmatprep.mubr.f32.mxu0 0.0
      %1542 = vmatmul.mubr.f32.gmra.mxu0 %v1375
      %v1543 = vpop.f32.mrf.mxu0
      %v1544 = vadd.f32 %v1220, %v1543
      %v1545 = vpop.f32.mrf.mxu0
      %1546 = vmatprep.mubr.f32.mxu0 0.0
      %1547 = vmatmul.mubr.f32.gmra.mxu0 %v1378
      %v1548 = vpop.f32.mrf.mxu0
      %v1549 = vadd.f32 %v1225, %v1548
      %v1550 = vpop.f32.mrf.mxu0
      %1551 = vmatprep.mubr.f32.mxu0 0.0
      %1552 = vmatmul.mubr.f32.gmra.mxu0 %v1381
      %v1553 = vpop.f32.mrf.mxu0
      %v1554 = vadd.f32 %v1230, %v1553
      %v1555 = vpop.f32.mrf.mxu0
      %1556 = vmatprep.mubr.f32.mxu0 0.0
      %1557 = vmatmul.mubr.f32.gmra.mxu0 %v1384
      %v1558 = vpop.f32.mrf.mxu0
      %v1559 = vadd.f32 %v1235, %v1558
      %v1560 = vpop.f32.mrf.mxu0
      %1561 = vmatprep.mubr.f32.mxu0 0.0
      %1562 = vmatmul.mubr.f32.gmra.mxu0 %v1387
      %v1563 = vpop.f32.mrf.mxu0
      %v1564 = vadd.f32 %v1240, %v1563
      %v1565 = vpop.f32.mrf.mxu0
      %1566 = vmatprep.mubr.f32.mxu0 0.0
      %1567 = vmatmul.mubr.f32.gmra.mxu0 %v1390
      %v1568 = vpop.f32.mrf.mxu0
      %v1569 = vadd.f32 %v1245, %v1568
      %v1570 = vpop.f32.mrf.mxu0
      %1571 = vmatprep.mubr.f32.mxu0 0.0
      %1572 = vmatmul.mubr.f32.gmra.mxu0 %v1393
      %v1573 = vpop.f32.mrf.mxu0
      %v1574 = vadd.f32 %v1250, %v1573
      %v1575 = vpop.f32.mrf.mxu0
      %1576 = vmatprep.mubr.f32.mxu0 0.0
      %1577 = vmatmul.mubr.f32.gmra.mxu0 %v1396
      %v1578 = vpop.f32.mrf.mxu0
      %v1579 = vadd.f32 %v1255, %v1578
      %v1580 = vpop.f32.mrf.mxu0
      %1581 = vmatprep.mubr.f32.mxu0 0.0
      %1582 = vmatmul.mubr.f32.gmra.mxu0 %v1399
      %v1583 = vpop.f32.mrf.mxu0
      %v1584 = vadd.f32 %v1260, %v1583
      %v1585 = vpop.f32.mrf.mxu0
      %1586 = vmatprep.mubr.f32.mxu0 0.0
      %1587 = vmatmul.mubr.f32.gmra.mxu0 %v1402
      %v1588 = vpop.f32.mrf.mxu0
      %v1589 = vadd.f32 %v1265, %v1588
      %v1590 = vpop.f32.mrf.mxu0
      %1591 = vmatprep.mubr.f32.mxu0 0.0
      %1592 = vmatmul.mubr.f32.gmra.mxu0 %v1405
      %v1593 = vpop.f32.mrf.mxu0
      %v1594 = vadd.f32 %v1270, %v1593
      %v1595 = vpop.f32.mrf.mxu0
      %1596 = vmatprep.mubr.f32.mxu0 0.0
      %1597 = vmatmul.mubr.f32.gmra.mxu0 %v1408
      %v1598 = vpop.f32.mrf.mxu0
      %v1599 = vadd.f32 %v1275, %v1598
      %v1600 = vpop.f32.mrf.mxu0
      %1601 = vmatprep.mubr.f32.mxu0 0.0
      %1602 = vmatmul.mubr.f32.gmra.mxu0 %v1411
      %v1603 = vpop.f32.mrf.mxu0
      %v1604 = vadd.f32 %v1280, %v1603
      %v1605 = vpop.f32.mrf.mxu0
      %1606 = vmatprep.mubr.f32.mxu0 0.0
      %1607 = vmatmul.mubr.f32.gmra.mxu0 %v1414
      %v1608 = vpop.f32.mrf.mxu0
      %v1609 = vadd.f32 %v1285, %v1608
      %v1610 = vpop.f32.mrf.mxu0
      %1611 = vmatprep.mubr.f32.mxu0 0.0
      %1612 = vmatmul.mubr.f32.gmra.mxu0 %v1417
      %v1613 = vpop.f32.mrf.mxu0
      %v1614 = vadd.f32 %v1290, %v1613
      %v1615 = vpop.f32.mrf.mxu0
      %1616 = vmatprep.mubr.f32.mxu0 0.0
      %1617 = vmatmul.mubr.f32.gmra.mxu0 %v1420
      %v1618 = vpop.f32.mrf.mxu0
      %v1619 = vadd.f32 %v1295, %v1618
      %v1620 = vpop.f32.mrf.mxu0
      %1621 = vmatprep.mubr.f32.mxu0 0.0
      %1622 = vmatmul.mubr.f32.gmra.mxu0 %v1423
      %v1623 = vpop.f32.mrf.mxu0
      %v1624 = vadd.f32 %v1300, %v1623
      %v1625 = vpop.f32.mrf.mxu0
      %1626 = vmatprep.mubr.f32.mxu0 0.0
      %1627 = vmatmul.mubr.f32.gmra.mxu0 %v1426
      %v1628 = vpop.f32.mrf.mxu0
      %v1629 = vadd.f32 %v1305, %v1628
      %v1630 = vpop.f32.mrf.mxu0
      %1631 = vmatprep.mubr.f32.mxu0 0.0
      %1632 = vmatmul.mubr.f32.gmra.mxu0 %v1429
      %v1633 = vpop.f32.mrf.mxu0
      %v1634 = vadd.f32 %v1310, %v1633
      %v1635 = vpop.f32.mrf.mxu0
      %1636 = vmatprep.mubr.f32.mxu0 0.0
      %1637 = vmatmul.mubr.f32.gmra.mxu0 %v1432
      %v1638 = vpop.f32.mrf.mxu0
      %v1639 = vadd.f32 %v1315, %v1638
      %v1640 = vpop.f32.mrf.mxu0
      %1641 = vmatprep.mubr.f32.mxu0 0.0
      %1642 = vmatmul.mubr.f32.gmra.mxu0 %v1435
      %v1643 = vpop.f32.mrf.mxu0
      %v1644 = vadd.f32 %v1320, %v1643
      %v1645 = vpop.f32.mrf.mxu0
      %1646 = vmatprep.mubr.f32.mxu0 0.0
      %1647 = vmatmul.mubr.f32.gmra.mxu0 %v1438
      %v1648 = vpop.f32.mrf.mxu0
      %v1649 = vadd.f32 %v1325, %v1648
      %v1650 = vpop.f32.mrf.mxu0
      %1651 = vmatprep.mubr.f32.mxu0 0.0
      %1652 = vmatmul.mubr.f32.gmra.mxu0 %v1441
      %v1653 = vpop.f32.mrf.mxu0
      %v1654 = vadd.f32 %v1330, %v1653
      %v1655 = vpop.f32.mrf.mxu0
      %1656 = vmatprep.mubr.f32.mxu0 0.0
      %1657 = vmatmul.mubr.f32.gmra.mxu0 %v1444
      %v1658 = vpop.f32.mrf.mxu0
      %v1659 = vadd.f32 %v1335, %v1658
      %v1660 = vpop.f32.mrf.mxu0
      %1661 = vmatprep.mubr.f32.mxu0 0.0
      %1662 = vmatmul.mubr.f32.gmra.mxu0 %v1447
      %v1663 = vpop.f32.mrf.mxu0
      %v1664 = vadd.f32 %v1340, %v1663
      %v1665 = vpop.f32.mrf.mxu0
      %1666 = vmatprep.mubr.f32.mxu0 0.0
      %1667 = vmatmul.mubr.f32.gmra.mxu0 %v1450
      %v1668 = vpop.f32.mrf.mxu0
      %v1669 = vadd.f32 %v1345, %v1668
      %v1670 = vpop.f32.mrf.mxu0
      %1671 = vmatprep.mubr.f32.mxu0 0.0
      %1672 = vmatmul.mubr.f32.gmra.mxu0 %v1453
      %v1673 = vpop.f32.mrf.mxu0
      %v1674 = vadd.f32 %v1350, %v1673
      %v1675 = vpop.f32.mrf.mxu0
      %1676 = vmatprep.mubr.f32.mxu0 0.0
      %1677 = vmatmul.mubr.f32.gmra.mxu0 %v1456
      %v1678 = vpop.f32.mrf.mxu0
      %v1679 = vadd.f32 %v1355, %v1678
      %v1680 = vpop.f32.mrf.mxu0
      %1681 = vmatprep.mubr.f32.mxu0 0.0
      %1682 = vmatmul.mubr.f32.gmra.mxu0 %v1459
      %v1683 = vpop.f32.mrf.mxu0
      %v1684 = vadd.f32 %v1360, %v1683
      %v1685 = vpop.f32.mrf.mxu0
      %1686 = vmatprep.mubr.f32.mxu0 0.0
      %1687 = vmatmul.mubr.f32.gmra.mxu0 %v1462
      %v1688 = vpop.f32.mrf.mxu0
      %v1689 = vadd.f32 %v1365, %v1688
      %v1690 = vpop.f32.mrf.mxu0
      %1691 = vdwg.mxu0
      %v1692 = vld [vmem:[#allocation2 + $0x71] sm:$0xff]
      %v1693 = vld [vmem:[#allocation2 + $0x79] sm:$0xff]
      %v1694 = vld [vmem:[#allocation2 + $0x81] sm:$0xff]
      %v1695 = vld [vmem:[#allocation2 + $0x89] sm:$0xff]
      %v1696 = vld [vmem:[#allocation2 + $0x91] sm:$0xff]
      %v1697 = vld [vmem:[#allocation2 + $0x99] sm:$0xff]
      %v1698 = vld [vmem:[#allocation2 + $0xa1] sm:$0xff]
      %v1699 = vld [vmem:[#allocation2 + $0xa9] sm:$0xff]
      %v1700 = vld [vmem:[#allocation2 + $0xb1] sm:$0xff]
      %v1701 = vld [vmem:[#allocation2 + $0xb9] sm:$0xff]
      %v1702 = vld [vmem:[#allocation2 + $0xc1] sm:$0xff]
      %v1703 = vld [vmem:[#allocation2 + $0xc9] sm:$0xff]
      %v1704 = vld [vmem:[#allocation2 + $0xd1] sm:$0xff]
      %v1705 = vld [vmem:[#allocation2 + $0xd9] sm:$0xff]
      %v1706 = vld [vmem:[#allocation2 + $0xe1] sm:$0xff]
      %v1707 = vld [vmem:[#allocation2 + $0xe9] sm:$0xff]
      %v1708 = vld [vmem:[#allocation2 + $0xf1] sm:$0xff]
      %v1709 = vld [vmem:[#allocation2 + $0xf9] sm:$0xff]
      %v1710 = vld [vmem:[#allocation2 + $0x101] sm:$0xff]
      %v1711 = vld [vmem:[#allocation2 + $0x109] sm:$0xff]
      %v1712 = vld [vmem:[#allocation2 + $0x111] sm:$0xff]
      %v1713 = vld [vmem:[#allocation2 + $0x119] sm:$0xff]
      %v1714 = vld [vmem:[#allocation2 + $0x121] sm:$0xff]
      %v1715 = vld [vmem:[#allocation2 + $0x129] sm:$0xff]
      %v1716 = vld [vmem:[#allocation2 + $0x131] sm:$0xff]
      %v1717 = vld [vmem:[#allocation2 + $0x139] sm:$0xff]
      %v1718 = vld [vmem:[#allocation2 + $0x141] sm:$0xff]
      %v1719 = vld [vmem:[#allocation2 + $0x149] sm:$0xff]
      %v1720 = vld [vmem:[#allocation2 + $0x151] sm:$0xff]
      %v1721 = vld [vmem:[#allocation2 + $0x159] sm:$0xff]
      %v1722 = vld [vmem:[#allocation2 + $0x161] sm:$0xff]
      %v1723 = vld [vmem:[#allocation2 + $0x169] sm:$0xff]
      %s1724 = scalar_lea.vmem %s8, 512
      %v1725 = vld [vmem:[%s1724] sm:$0xff]
      %v1726 = vld [vmem:[%s1724 + $0x8] sm:$0xff]
      %v1727 = vld [vmem:[%s1724 + $0x10] sm:$0xff]
      %v1728 = vld [vmem:[%s1724 + $0x18] sm:$0xff]
      %v1729 = vld [vmem:[%s1724 + $0x20] sm:$0xff]
      %v1730 = vld [vmem:[%s1724 + $0x28] sm:$0xff]
      %v1731 = vld [vmem:[%s1724 + $0x30] sm:$0xff]
      %v1732 = vld [vmem:[%s1724 + $0x38] sm:$0xff]
      %v1733 = vld [vmem:[%s1724 + $0x40] sm:$0xff]
      %v1734 = vld [vmem:[%s1724 + $0x48] sm:$0xff]
      %v1735 = vld [vmem:[%s1724 + $0x50] sm:$0xff]
      %v1736 = vld [vmem:[%s1724 + $0x58] sm:$0xff]
      %v1737 = vld [vmem:[%s1724 + $0x60] sm:$0xff]
      %v1738 = vld [vmem:[%s1724 + $0x68] sm:$0xff]
      %v1739 = vld [vmem:[%s1724 + $0x70] sm:$0xff]
      %v1740 = vld [vmem:[%s1724 + $0x78] sm:$0xff]
      %v1741 = vld [vmem:[%s1724 + $0x80] sm:$0xff]
      %v1742 = vld [vmem:[%s1724 + $0x88] sm:$0xff]
      %v1743 = vld [vmem:[%s1724 + $0x90] sm:$0xff]
      %v1744 = vld [vmem:[%s1724 + $0x98] sm:$0xff]
      %v1745 = vld [vmem:[%s1724 + $0xa0] sm:$0xff]
      %v1746 = vld [vmem:[%s1724 + $0xa8] sm:$0xff]
      %v1747 = vld [vmem:[%s1724 + $0xb0] sm:$0xff]
      %v1748 = vld [vmem:[%s1724 + $0xb8] sm:$0xff]
      %v1749 = vld [vmem:[%s1724 + $0xc0] sm:$0xff]
      %v1750 = vld [vmem:[%s1724 + $0xc8] sm:$0xff]
      %v1751 = vld [vmem:[%s1724 + $0xd0] sm:$0xff]
      %v1752 = vld [vmem:[%s1724 + $0xd8] sm:$0xff]
      %v1753 = vld [vmem:[%s1724 + $0xe0] sm:$0xff]
      %v1754 = vld [vmem:[%s1724 + $0xe8] sm:$0xff]
      %v1755 = vld [vmem:[%s1724 + $0xf0] sm:$0xff]
      %v1756 = vld [vmem:[%s1724 + $0xf8] sm:$0xff]
      %1758 = vset.pattern.permute.xlu0 0
      %1759 = vperm.xlu0 %1758, %v1725
      %v1760 = vpop.permute.xlu0 %1759
      %1763 = vset.pattern.permute.xlu0 0
      %1764 = vperm.xlu0 %1763, %v1726
      %v1765 = vpop.permute.xlu0 %1764
      %1768 = vset.pattern.permute.xlu0 0
      %1769 = vperm.xlu0 %1768, %v1727
      %v1770 = vpop.permute.xlu0 %1769
      %1773 = vset.pattern.permute.xlu0 0
      %1774 = vperm.xlu0 %1773, %v1728
      %v1775 = vpop.permute.xlu0 %1774
      %1778 = vset.pattern.permute.xlu0 0
      %1779 = vperm.xlu0 %1778, %v1729
      %v1780 = vpop.permute.xlu0 %1779
      %1783 = vset.pattern.permute.xlu0 0
      %1784 = vperm.xlu0 %1783, %v1730
      %v1785 = vpop.permute.xlu0 %1784
      %1788 = vset.pattern.permute.xlu0 0
      %1789 = vperm.xlu0 %1788, %v1731
      %v1790 = vpop.permute.xlu0 %1789
      %1793 = vset.pattern.permute.xlu0 0
      %1794 = vperm.xlu0 %1793, %v1732
      %v1795 = vpop.permute.xlu0 %1794
      %1798 = vset.pattern.permute.xlu0 0
      %1799 = vperm.xlu0 %1798, %v1733
      %v1800 = vpop.permute.xlu0 %1799
      %1803 = vset.pattern.permute.xlu0 0
      %1804 = vperm.xlu0 %1803, %v1734
      %v1805 = vpop.permute.xlu0 %1804
      %1808 = vset.pattern.permute.xlu0 0
      %1809 = vperm.xlu0 %1808, %v1735
      %v1810 = vpop.permute.xlu0 %1809
      %1813 = vset.pattern.permute.xlu0 0
      %1814 = vperm.xlu0 %1813, %v1736
      %v1815 = vpop.permute.xlu0 %1814
      %1818 = vset.pattern.permute.xlu0 0
      %1819 = vperm.xlu0 %1818, %v1737
      %v1820 = vpop.permute.xlu0 %1819
      %1823 = vset.pattern.permute.xlu0 0
      %1824 = vperm.xlu0 %1823, %v1738
      %v1825 = vpop.permute.xlu0 %1824
      %1828 = vset.pattern.permute.xlu0 0
      %1829 = vperm.xlu0 %1828, %v1739
      %v1830 = vpop.permute.xlu0 %1829
      %1833 = vset.pattern.permute.xlu0 0
      %1834 = vperm.xlu0 %1833, %v1740
      %v1835 = vpop.permute.xlu0 %1834
      %1838 = vset.pattern.permute.xlu0 0
      %1839 = vperm.xlu0 %1838, %v1741
      %v1840 = vpop.permute.xlu0 %1839
      %1843 = vset.pattern.permute.xlu0 0
      %1844 = vperm.xlu0 %1843, %v1742
      %v1845 = vpop.permute.xlu0 %1844
      %1848 = vset.pattern.permute.xlu0 0
      %1849 = vperm.xlu0 %1848, %v1743
      %v1850 = vpop.permute.xlu0 %1849
      %1853 = vset.pattern.permute.xlu0 0
      %1854 = vperm.xlu0 %1853, %v1744
      %v1855 = vpop.permute.xlu0 %1854
      %1858 = vset.pattern.permute.xlu0 0
      %1859 = vperm.xlu0 %1858, %v1745
      %v1860 = vpop.permute.xlu0 %1859
      %1863 = vset.pattern.permute.xlu0 0
      %1864 = vperm.xlu0 %1863, %v1746
      %v1865 = vpop.permute.xlu0 %1864
      %1868 = vset.pattern.permute.xlu0 0
      %1869 = vperm.xlu0 %1868, %v1747
      %v1870 = vpop.permute.xlu0 %1869
      %1873 = vset.pattern.permute.xlu0 0
      %1874 = vperm.xlu0 %1873, %v1748
      %v1875 = vpop.permute.xlu0 %1874
      %1878 = vset.pattern.permute.xlu0 0
      %1879 = vperm.xlu0 %1878, %v1749
      %v1880 = vpop.permute.xlu0 %1879
      %1883 = vset.pattern.permute.xlu0 0
      %1884 = vperm.xlu0 %1883, %v1750
      %v1885 = vpop.permute.xlu0 %1884
      %1888 = vset.pattern.permute.xlu0 0
      %1889 = vperm.xlu0 %1888, %v1751
      %v1890 = vpop.permute.xlu0 %1889
      %1893 = vset.pattern.permute.xlu0 0
      %1894 = vperm.xlu0 %1893, %v1752
      %v1895 = vpop.permute.xlu0 %1894
      %1898 = vset.pattern.permute.xlu0 0
      %1899 = vperm.xlu0 %1898, %v1753
      %v1900 = vpop.permute.xlu0 %1899
      %1903 = vset.pattern.permute.xlu0 0
      %1904 = vperm.xlu0 %1903, %v1754
      %v1905 = vpop.permute.xlu0 %1904
      %1908 = vset.pattern.permute.xlu0 0
      %1909 = vperm.xlu0 %1908, %v1755
      %v1910 = vpop.permute.xlu0 %1909
      %1913 = vset.pattern.permute.xlu0 0
      %1914 = vperm.xlu0 %1913, %v1756
      %v1915 = vpop.permute.xlu0 %1914
      %v1917 = vmul.f32 %v1692, %v1760
      %v1918 = vmul.f32 %v1693, %v1765
      %v1919 = vmul.f32 %v1694, %v1770
      %v1920 = vmul.f32 %v1695, %v1775
      %v1921 = vmul.f32 %v1696, %v1780
      %v1922 = vmul.f32 %v1697, %v1785
      %v1923 = vmul.f32 %v1698, %v1790
      %v1924 = vmul.f32 %v1699, %v1795
      %v1925 = vmul.f32 %v1700, %v1800
      %v1926 = vmul.f32 %v1701, %v1805
      %v1927 = vmul.f32 %v1702, %v1810
      %v1928 = vmul.f32 %v1703, %v1815
      %v1929 = vmul.f32 %v1704, %v1820
      %v1930 = vmul.f32 %v1705, %v1825
      %v1931 = vmul.f32 %v1706, %v1830
      %v1932 = vmul.f32 %v1707, %v1835
      %v1933 = vmul.f32 %v1708, %v1840
      %v1934 = vmul.f32 %v1709, %v1845
      %v1935 = vmul.f32 %v1710, %v1850
      %v1936 = vmul.f32 %v1711, %v1855
      %v1937 = vmul.f32 %v1712, %v1860
      %v1938 = vmul.f32 %v1713, %v1865
      %v1939 = vmul.f32 %v1714, %v1870
      %v1940 = vmul.f32 %v1715, %v1875
      %v1941 = vmul.f32 %v1716, %v1880
      %v1942 = vmul.f32 %v1717, %v1885
      %v1943 = vmul.f32 %v1718, %v1890
      %v1944 = vmul.f32 %v1719, %v1895
      %v1945 = vmul.f32 %v1720, %v1900
      %v1946 = vmul.f32 %v1721, %v1905
      %v1947 = vmul.f32 %v1722, %v1910
      %v1948 = vmul.f32 %v1723, %v1915
      %s1949 = scalar_lea.vmem %s1, 8
      %v1950 = vld [vmem:[%s1949] sm:$0xf]
      %v1952 = vsel %vm333, %v1917, 0
      %v1955 = vsel %vm333, %v1918, 0
      %v1958 = vsel %vm333, %v1919, 0
      %v1961 = vsel %vm333, %v1920, 0
      %v1964 = vsel %vm333, %v1921, 0
      %v1967 = vsel %vm333, %v1922, 0
      %v1970 = vsel %vm333, %v1923, 0
      %v1973 = vsel %vm333, %v1924, 0
      %v1976 = vsel %vm333, %v1925, 0
      %v1979 = vsel %vm333, %v1926, 0
      %v1982 = vsel %vm333, %v1927, 0
      %v1985 = vsel %vm333, %v1928, 0
      %v1988 = vsel %vm333, %v1929, 0
      %v1991 = vsel %vm333, %v1930, 0
      %v1994 = vsel %vm333, %v1931, 0
      %v1997 = vsel %vm333, %v1932, 0
      %v2000 = vsel %vm333, %v1933, 0
      %v2003 = vsel %vm333, %v1934, 0
      %v2006 = vsel %vm333, %v1935, 0
      %v2009 = vsel %vm333, %v1936, 0
      %v2012 = vsel %vm333, %v1937, 0
      %v2015 = vsel %vm333, %v1938, 0
      %v2018 = vsel %vm333, %v1939, 0
      %v2021 = vsel %vm333, %v1940, 0
      %v2024 = vsel %vm333, %v1941, 0
      %v2027 = vsel %vm333, %v1942, 0
      %v2030 = vsel %vm333, %v1943, 0
      %v2033 = vsel %vm333, %v1944, 0
      %v2036 = vsel %vm333, %v1945, 0
      %v2039 = vsel %vm333, %v1946, 0
      %v2042 = vsel %vm333, %v1947, 0
      %v2045 = vsel %vm333, %v1948, 0
      %v2048 = vsel %vm1139, %v1950, 0
      %2050 = vmatprep.subr.mxu0 0.0
      %2051 = vmatpush1.msra.mxu0 0.0
      %2052 = vmatprep.subr.mxu0 0.0
      %2053 = vmatpush1.msra.mxu0 0.0
      %2054 = vmatprep.subr.mxu0 0.0
      %2055 = vmatpush1.msra.mxu0 0.0
      %2056 = vmatprep.subr.mxu0 0.0
      %2057 = vmatpush1.msra.mxu0 0.0
      %2058 = vmatprep.subr.mxu0 0.0
      %2059 = vmatpush1.msra.mxu0 0.0
      %2060 = vmatprep.subr.mxu0 0.0
      %2061 = vmatpush1.msra.mxu0 0.0
      %2062 = vmatprep.subr.mxu0 0.0
      %2063 = vmatpush1.msra.mxu0 0.0
      %2064 = vmatprep.subr.mxu0 0.0
      %2065 = vmatpush1.msra.mxu0 0.0
      %2066 = vmatprep.subr.mxu0 0.0
      %2067 = vmatpush1.msra.mxu0 0.0
      %2068 = vmatprep.subr.mxu0 0.0
      %2069 = vmatpush1.msra.mxu0 0.0
      %2070 = vmatprep.subr.mxu0 0.0
      %2071 = vmatpush1.msra.mxu0 0.0
      %2072 = vmatprep.subr.mxu0 0.0
      %2073 = vmatpush1.msra.mxu0 0.0
      %2074 = vmatprep.subr.mxu0 0.0
      %2075 = vmatpush1.msra.mxu0 0.0
      %2076 = vmatprep.subr.mxu0 0.0
      %2077 = vmatpush1.msra.mxu0 0.0
      %2078 = vmatprep.subr.mxu0 0.0
      %2079 = vmatpush1.msra.mxu0 0.0
      %2080 = vmatprep.subr.mxu0 0.0
      %2081 = vmatpush1.msra.mxu0 %v2048
      %2082 = vmatprep.subr.mxu0 0.0
      %2083 = vmatpush2.msra.mxu0 0.0
      %2084 = vmatprep.subr.mxu0 0.0
      %2085 = vmatpush2.msra.mxu0 0.0
      %2086 = vmatprep.subr.mxu0 0.0
      %2087 = vmatpush2.msra.mxu0 0.0
      %2088 = vmatprep.subr.mxu0 0.0
      %2089 = vmatpush2.msra.mxu0 0.0
      %2090 = vmatprep.subr.mxu0 0.0
      %2091 = vmatpush2.msra.mxu0 0.0
      %2092 = vmatprep.subr.mxu0 0.0
      %2093 = vmatpush2.msra.mxu0 0.0
      %2094 = vmatprep.subr.mxu0 0.0
      %2095 = vmatpush2.msra.mxu0 0.0
      %2096 = vmatprep.subr.mxu0 0.0
      %2097 = vmatpush2.msra.mxu0 0.0
      %2098 = vmatprep.subr.mxu0 0.0
      %2099 = vmatpush2.msra.mxu0 0.0
      %2100 = vmatprep.subr.mxu0 0.0
      %2101 = vmatpush2.msra.mxu0 0.0
      %2102 = vmatprep.subr.mxu0 0.0
      %2103 = vmatpush2.msra.mxu0 0.0
      %2104 = vmatprep.subr.mxu0 0.0
      %2105 = vmatpush2.msra.mxu0 0.0
      %2106 = vmatprep.subr.mxu0 0.0
      %2107 = vmatpush2.msra.mxu0 0.0
      %2108 = vmatprep.subr.mxu0 0.0
      %2109 = vmatpush2.msra.mxu0 0.0
      %2110 = vmatprep.subr.mxu0 0.0
      %2111 = vmatpush2.msra.mxu0 0.0
      %2112 = vmatprep.subr.mxu0 0.0
      %2113 = vmatpush2.msra.mxu0 0.0
      %2114 = vmatprep.mubr.f32.mxu0 0.0
      %2115 = vmatmul.mubr.f32.gmra.mxu0 %v1952
      %v2116 = vpop.f32.mrf.mxu0
      %v2117 = vadd.f32 0.0, %v2116
      %v2118 = vpop.f32.mrf.mxu0
      %2119 = vmatprep.mubr.f32.mxu0 0.0
      %2120 = vmatmul.mubr.f32.gmra.mxu0 %v1955
      %v2121 = vpop.f32.mrf.mxu0
      %v2122 = vadd.f32 0.0, %v2121
      %v2123 = vpop.f32.mrf.mxu0
      %2124 = vmatprep.mubr.f32.mxu0 0.0
      %2125 = vmatmul.mubr.f32.gmra.mxu0 %v1958
      %v2126 = vpop.f32.mrf.mxu0
      %v2127 = vadd.f32 0.0, %v2126
      %v2128 = vpop.f32.mrf.mxu0
      %2129 = vmatprep.mubr.f32.mxu0 0.0
      %2130 = vmatmul.mubr.f32.gmra.mxu0 %v1961
      %v2131 = vpop.f32.mrf.mxu0
      %v2132 = vadd.f32 0.0, %v2131
      %v2133 = vpop.f32.mrf.mxu0
      %2134 = vmatprep.mubr.f32.mxu0 0.0
      %2135 = vmatmul.mubr.f32.gmra.mxu0 %v1964
      %v2136 = vpop.f32.mrf.mxu0
      %v2137 = vadd.f32 0.0, %v2136
      %v2138 = vpop.f32.mrf.mxu0
      %2139 = vmatprep.mubr.f32.mxu0 0.0
      %2140 = vmatmul.mubr.f32.gmra.mxu0 %v1967
      %v2141 = vpop.f32.mrf.mxu0
      %v2142 = vadd.f32 0.0, %v2141
      %v2143 = vpop.f32.mrf.mxu0
      %2144 = vmatprep.mubr.f32.mxu0 0.0
      %2145 = vmatmul.mubr.f32.gmra.mxu0 %v1970
      %v2146 = vpop.f32.mrf.mxu0
      %v2147 = vadd.f32 0.0, %v2146
      %v2148 = vpop.f32.mrf.mxu0
      %2149 = vmatprep.mubr.f32.mxu0 0.0
      %2150 = vmatmul.mubr.f32.gmra.mxu0 %v1973
      %v2151 = vpop.f32.mrf.mxu0
      %v2152 = vadd.f32 0.0, %v2151
      %v2153 = vpop.f32.mrf.mxu0
      %2154 = vmatprep.mubr.f32.mxu0 0.0
      %2155 = vmatmul.mubr.f32.gmra.mxu0 %v1976
      %v2156 = vpop.f32.mrf.mxu0
      %v2157 = vadd.f32 0.0, %v2156
      %v2158 = vpop.f32.mrf.mxu0
      %2159 = vmatprep.mubr.f32.mxu0 0.0
      %2160 = vmatmul.mubr.f32.gmra.mxu0 %v1979
      %v2161 = vpop.f32.mrf.mxu0
      %v2162 = vadd.f32 0.0, %v2161
      %v2163 = vpop.f32.mrf.mxu0
      %2164 = vmatprep.mubr.f32.mxu0 0.0
      %2165 = vmatmul.mubr.f32.gmra.mxu0 %v1982
      %v2166 = vpop.f32.mrf.mxu0
      %v2167 = vadd.f32 0.0, %v2166
      %v2168 = vpop.f32.mrf.mxu0
      %2169 = vmatprep.mubr.f32.mxu0 0.0
      %2170 = vmatmul.mubr.f32.gmra.mxu0 %v1985
      %v2171 = vpop.f32.mrf.mxu0
      %v2172 = vadd.f32 0.0, %v2171
      %v2173 = vpop.f32.mrf.mxu0
      %2174 = vmatprep.mubr.f32.mxu0 0.0
      %2175 = vmatmul.mubr.f32.gmra.mxu0 %v1988
      %v2176 = vpop.f32.mrf.mxu0
      %v2177 = vadd.f32 0.0, %v2176
      %v2178 = vpop.f32.mrf.mxu0
      %2179 = vmatprep.mubr.f32.mxu0 0.0
      %2180 = vmatmul.mubr.f32.gmra.mxu0 %v1991
      %v2181 = vpop.f32.mrf.mxu0
      %v2182 = vadd.f32 0.0, %v2181
      %v2183 = vpop.f32.mrf.mxu0
      %2184 = vmatprep.mubr.f32.mxu0 0.0
      %2185 = vmatmul.mubr.f32.gmra.mxu0 %v1994
      %v2186 = vpop.f32.mrf.mxu0
      %v2187 = vadd.f32 0.0, %v2186
      %v2188 = vpop.f32.mrf.mxu0
      %2189 = vmatprep.mubr.f32.mxu0 0.0
      %2190 = vmatmul.mubr.f32.gmra.mxu0 %v1997
      %v2191 = vpop.f32.mrf.mxu0
      %v2192 = vadd.f32 0.0, %v2191
      %v2193 = vpop.f32.mrf.mxu0
      %2194 = vmatprep.mubr.f32.mxu0 0.0
      %2195 = vmatmul.mubr.f32.gmra.mxu0 %v2000
      %v2196 = vpop.f32.mrf.mxu0
      %v2197 = vadd.f32 0.0, %v2196
      %v2198 = vpop.f32.mrf.mxu0
      %2199 = vmatprep.mubr.f32.mxu0 0.0
      %2200 = vmatmul.mubr.f32.gmra.mxu0 %v2003
      %v2201 = vpop.f32.mrf.mxu0
      %v2202 = vadd.f32 0.0, %v2201
      %v2203 = vpop.f32.mrf.mxu0
      %2204 = vmatprep.mubr.f32.mxu0 0.0
      %2205 = vmatmul.mubr.f32.gmra.mxu0 %v2006
      %v2206 = vpop.f32.mrf.mxu0
      %v2207 = vadd.f32 0.0, %v2206
      %v2208 = vpop.f32.mrf.mxu0
      %2209 = vmatprep.mubr.f32.mxu0 0.0
      %2210 = vmatmul.mubr.f32.gmra.mxu0 %v2009
      %v2211 = vpop.f32.mrf.mxu0
      %v2212 = vadd.f32 0.0, %v2211
      %v2213 = vpop.f32.mrf.mxu0
      %2214 = vmatprep.mubr.f32.mxu0 0.0
      %2215 = vmatmul.mubr.f32.gmra.mxu0 %v2012
      %v2216 = vpop.f32.mrf.mxu0
      %v2217 = vadd.f32 0.0, %v2216
      %v2218 = vpop.f32.mrf.mxu0
      %2219 = vmatprep.mubr.f32.mxu0 0.0
      %2220 = vmatmul.mubr.f32.gmra.mxu0 %v2015
      %v2221 = vpop.f32.mrf.mxu0
      %v2222 = vadd.f32 0.0, %v2221
      %v2223 = vpop.f32.mrf.mxu0
      %2224 = vmatprep.mubr.f32.mxu0 0.0
      %2225 = vmatmul.mubr.f32.gmra.mxu0 %v2018
      %v2226 = vpop.f32.mrf.mxu0
      %v2227 = vadd.f32 0.0, %v2226
      %v2228 = vpop.f32.mrf.mxu0
      %2229 = vmatprep.mubr.f32.mxu0 0.0
      %2230 = vmatmul.mubr.f32.gmra.mxu0 %v2021
      %v2231 = vpop.f32.mrf.mxu0
      %v2232 = vadd.f32 0.0, %v2231
      %v2233 = vpop.f32.mrf.mxu0
      %2234 = vmatprep.mubr.f32.mxu0 0.0
      %2235 = vmatmul.mubr.f32.gmra.mxu0 %v2024
      %v2236 = vpop.f32.mrf.mxu0
      %v2237 = vadd.f32 0.0, %v2236
      %v2238 = vpop.f32.mrf.mxu0
      %2239 = vmatprep.mubr.f32.mxu0 0.0
      %2240 = vmatmul.mubr.f32.gmra.mxu0 %v2027
      %v2241 = vpop.f32.mrf.mxu0
      %v2242 = vadd.f32 0.0, %v2241
      %v2243 = vpop.f32.mrf.mxu0
      %2244 = vmatprep.mubr.f32.mxu0 0.0
      %2245 = vmatmul.mubr.f32.gmra.mxu0 %v2030
      %v2246 = vpop.f32.mrf.mxu0
      %v2247 = vadd.f32 0.0, %v2246
      %v2248 = vpop.f32.mrf.mxu0
      %2249 = vmatprep.mubr.f32.mxu0 0.0
      %2250 = vmatmul.mubr.f32.gmra.mxu0 %v2033
      %v2251 = vpop.f32.mrf.mxu0
      %v2252 = vadd.f32 0.0, %v2251
      %v2253 = vpop.f32.mrf.mxu0
      %2254 = vmatprep.mubr.f32.mxu0 0.0
      %2255 = vmatmul.mubr.f32.gmra.mxu0 %v2036
      %v2256 = vpop.f32.mrf.mxu0
      %v2257 = vadd.f32 0.0, %v2256
      %v2258 = vpop.f32.mrf.mxu0
      %2259 = vmatprep.mubr.f32.mxu0 0.0
      %2260 = vmatmul.mubr.f32.gmra.mxu0 %v2039
      %v2261 = vpop.f32.mrf.mxu0
      %v2262 = vadd.f32 0.0, %v2261
      %v2263 = vpop.f32.mrf.mxu0
      %2264 = vmatprep.mubr.f32.mxu0 0.0
      %2265 = vmatmul.mubr.f32.gmra.mxu0 %v2042
      %v2266 = vpop.f32.mrf.mxu0
      %v2267 = vadd.f32 0.0, %v2266
      %v2268 = vpop.f32.mrf.mxu0
      %2269 = vmatprep.mubr.f32.mxu0 0.0
      %2270 = vmatmul.mubr.f32.gmra.mxu0 %v2045
      %v2271 = vpop.f32.mrf.mxu0
      %v2272 = vadd.f32 0.0, %v2271
      %v2273 = vpop.f32.mrf.mxu0
      %2274 = vdwg.mxu0
      %v2275 = vadd.f32 %v1534, %v2117
      %v2276 = vadd.f32 %v1539, %v2122
      %v2277 = vadd.f32 %v1544, %v2127
      %v2278 = vadd.f32 %v1549, %v2132
      %v2279 = vadd.f32 %v1554, %v2137
      %v2280 = vadd.f32 %v1559, %v2142
      %v2281 = vadd.f32 %v1564, %v2147
      %v2282 = vadd.f32 %v1569, %v2152
      %v2283 = vadd.f32 %v1574, %v2157
      %v2284 = vadd.f32 %v1579, %v2162
      %v2285 = vadd.f32 %v1584, %v2167
      %v2286 = vadd.f32 %v1589, %v2172
      %v2287 = vadd.f32 %v1594, %v2177
      %v2288 = vadd.f32 %v1599, %v2182
      %v2289 = vadd.f32 %v1604, %v2187
      %v2290 = vadd.f32 %v1609, %v2192
      %v2291 = vadd.f32 %v1614, %v2197
      %v2292 = vadd.f32 %v1619, %v2202
      %v2293 = vadd.f32 %v1624, %v2207
      %v2294 = vadd.f32 %v1629, %v2212
      %v2295 = vadd.f32 %v1634, %v2217
      %v2296 = vadd.f32 %v1639, %v2222
      %v2297 = vadd.f32 %v1644, %v2227
      %v2298 = vadd.f32 %v1649, %v2232
      %v2299 = vadd.f32 %v1654, %v2237
      %v2300 = vadd.f32 %v1659, %v2242
      %v2301 = vadd.f32 %v1664, %v2247
      %v2302 = vadd.f32 %v1669, %v2252
      %v2303 = vadd.f32 %v1674, %v2257
      %v2304 = vadd.f32 %v1679, %v2262
      %v2305 = vadd.f32 %v1684, %v2267
      %v2306 = vadd.f32 %v1689, %v2272
      %v2307 = vld [vmem:[#allocation2 + $0x7f] sm:$0xff]
      %v2308 = vld [vmem:[#allocation2 + $0x87] sm:$0xff]
      %v2309 = vld [vmem:[#allocation2 + $0x8f] sm:$0xff]
      %v2310 = vld [vmem:[#allocation2 + $0x97] sm:$0xff]
      %v2311 = vld [vmem:[#allocation2 + $0x9f] sm:$0xff]
      %v2312 = vld [vmem:[#allocation2 + $0xa7] sm:$0xff]
      %v2313 = vld [vmem:[#allocation2 + $0xaf] sm:$0xff]
      %v2314 = vld [vmem:[#allocation2 + $0xb7] sm:$0xff]
      %v2315 = vld [vmem:[#allocation2 + $0xbf] sm:$0xff]
      %v2316 = vld [vmem:[#allocation2 + $0xc7] sm:$0xff]
      %v2317 = vld [vmem:[#allocation2 + $0xcf] sm:$0xff]
      %v2318 = vld [vmem:[#allocation2 + $0xd7] sm:$0xff]
      %v2319 = vld [vmem:[#allocation2 + $0xdf] sm:$0xff]
      %v2320 = vld [vmem:[#allocation2 + $0xe7] sm:$0xff]
      %v2321 = vld [vmem:[#allocation2 + $0xef] sm:$0xff]
      %v2322 = vld [vmem:[#allocation2 + $0xf7] sm:$0xff]
      %v2323 = vld [vmem:[#allocation2 + $0xff] sm:$0xff]
      %v2324 = vld [vmem:[#allocation2 + $0x107] sm:$0xff]
      %v2325 = vld [vmem:[#allocation2 + $0x10f] sm:$0xff]
      %v2326 = vld [vmem:[#allocation2 + $0x117] sm:$0xff]
      %v2327 = vld [vmem:[#allocation2 + $0x11f] sm:$0xff]
      %v2328 = vld [vmem:[#allocation2 + $0x127] sm:$0xff]
      %v2329 = vld [vmem:[#allocation2 + $0x12f] sm:$0xff]
      %v2330 = vld [vmem:[#allocation2 + $0x137] sm:$0xff]
      %v2331 = vld [vmem:[#allocation2 + $0x13f] sm:$0xff]
      %v2332 = vld [vmem:[#allocation2 + $0x147] sm:$0xff]
      %v2333 = vld [vmem:[#allocation2 + $0x14f] sm:$0xff]
      %v2334 = vld [vmem:[#allocation2 + $0x157] sm:$0xff]
      %v2335 = vld [vmem:[#allocation2 + $0x15f] sm:$0xff]
      %v2336 = vld [vmem:[#allocation2 + $0x167] sm:$0xff]
      %v2337 = vld [vmem:[#allocation2 + $0x16f] sm:$0xff]
      %v2338 = vld [vmem:[#allocation2 + $0x177] sm:$0xff]
      %s2339 = scalar_lea.vmem %s8, 768
      %v2340 = vld [vmem:[%s2339] sm:$0xff]
      %v2341 = vld [vmem:[%s2339 + $0x8] sm:$0xff]
      %v2342 = vld [vmem:[%s2339 + $0x10] sm:$0xff]
      %v2343 = vld [vmem:[%s2339 + $0x18] sm:$0xff]
      %v2344 = vld [vmem:[%s2339 + $0x20] sm:$0xff]
      %v2345 = vld [vmem:[%s2339 + $0x28] sm:$0xff]
      %v2346 = vld [vmem:[%s2339 + $0x30] sm:$0xff]
      %v2347 = vld [vmem:[%s2339 + $0x38] sm:$0xff]
      %v2348 = vld [vmem:[%s2339 + $0x40] sm:$0xff]
      %v2349 = vld [vmem:[%s2339 + $0x48] sm:$0xff]
      %v2350 = vld [vmem:[%s2339 + $0x50] sm:$0xff]
      %v2351 = vld [vmem:[%s2339 + $0x58] sm:$0xff]
      %v2352 = vld [vmem:[%s2339 + $0x60] sm:$0xff]
      %v2353 = vld [vmem:[%s2339 + $0x68] sm:$0xff]
      %v2354 = vld [vmem:[%s2339 + $0x70] sm:$0xff]
      %v2355 = vld [vmem:[%s2339 + $0x78] sm:$0xff]
      %v2356 = vld [vmem:[%s2339 + $0x80] sm:$0xff]
      %v2357 = vld [vmem:[%s2339 + $0x88] sm:$0xff]
      %v2358 = vld [vmem:[%s2339 + $0x90] sm:$0xff]
      %v2359 = vld [vmem:[%s2339 + $0x98] sm:$0xff]
      %v2360 = vld [vmem:[%s2339 + $0xa0] sm:$0xff]
      %v2361 = vld [vmem:[%s2339 + $0xa8] sm:$0xff]
      %v2362 = vld [vmem:[%s2339 + $0xb0] sm:$0xff]
      %v2363 = vld [vmem:[%s2339 + $0xb8] sm:$0xff]
      %v2364 = vld [vmem:[%s2339 + $0xc0] sm:$0xff]
      %v2365 = vld [vmem:[%s2339 + $0xc8] sm:$0xff]
      %v2366 = vld [vmem:[%s2339 + $0xd0] sm:$0xff]
      %v2367 = vld [vmem:[%s2339 + $0xd8] sm:$0xff]
      %v2368 = vld [vmem:[%s2339 + $0xe0] sm:$0xff]
      %v2369 = vld [vmem:[%s2339 + $0xe8] sm:$0xff]
      %v2370 = vld [vmem:[%s2339 + $0xf0] sm:$0xff]
      %v2371 = vld [vmem:[%s2339 + $0xf8] sm:$0xff]
      %2373 = vset.pattern.permute.xlu0 0
      %2374 = vperm.xlu0 %2373, %v2340
      %v2375 = vpop.permute.xlu0 %2374
      %2378 = vset.pattern.permute.xlu0 0
      %2379 = vperm.xlu0 %2378, %v2341
      %v2380 = vpop.permute.xlu0 %2379
      %2383 = vset.pattern.permute.xlu0 0
      %2384 = vperm.xlu0 %2383, %v2342
      %v2385 = vpop.permute.xlu0 %2384
      %2388 = vset.pattern.permute.xlu0 0
      %2389 = vperm.xlu0 %2388, %v2343
      %v2390 = vpop.permute.xlu0 %2389
      %2393 = vset.pattern.permute.xlu0 0
      %2394 = vperm.xlu0 %2393, %v2344
      %v2395 = vpop.permute.xlu0 %2394
      %2398 = vset.pattern.permute.xlu0 0
      %2399 = vperm.xlu0 %2398, %v2345
      %v2400 = vpop.permute.xlu0 %2399
      %2403 = vset.pattern.permute.xlu0 0
      %2404 = vperm.xlu0 %2403, %v2346
      %v2405 = vpop.permute.xlu0 %2404
      %2408 = vset.pattern.permute.xlu0 0
      %2409 = vperm.xlu0 %2408, %v2347
      %v2410 = vpop.permute.xlu0 %2409
      %2413 = vset.pattern.permute.xlu0 0
      %2414 = vperm.xlu0 %2413, %v2348
      %v2415 = vpop.permute.xlu0 %2414
      %2418 = vset.pattern.permute.xlu0 0
      %2419 = vperm.xlu0 %2418, %v2349
      %v2420 = vpop.permute.xlu0 %2419
      %2423 = vset.pattern.permute.xlu0 0
      %2424 = vperm.xlu0 %2423, %v2350
      %v2425 = vpop.permute.xlu0 %2424
      %2428 = vset.pattern.permute.xlu0 0
      %2429 = vperm.xlu0 %2428, %v2351
      %v2430 = vpop.permute.xlu0 %2429
      %2433 = vset.pattern.permute.xlu0 0
      %2434 = vperm.xlu0 %2433, %v2352
      %v2435 = vpop.permute.xlu0 %2434
      %2438 = vset.pattern.permute.xlu0 0
      %2439 = vperm.xlu0 %2438, %v2353
      %v2440 = vpop.permute.xlu0 %2439
      %2443 = vset.pattern.permute.xlu0 0
      %2444 = vperm.xlu0 %2443, %v2354
      %v2445 = vpop.permute.xlu0 %2444
      %2448 = vset.pattern.permute.xlu0 0
      %2449 = vperm.xlu0 %2448, %v2355
      %v2450 = vpop.permute.xlu0 %2449
      %2453 = vset.pattern.permute.xlu0 0
      %2454 = vperm.xlu0 %2453, %v2356
      %v2455 = vpop.permute.xlu0 %2454
      %2458 = vset.pattern.permute.xlu0 0
      %2459 = vperm.xlu0 %2458, %v2357
      %v2460 = vpop.permute.xlu0 %2459
      %2463 = vset.pattern.permute.xlu0 0
      %2464 = vperm.xlu0 %2463, %v2358
      %v2465 = vpop.permute.xlu0 %2464
      %2468 = vset.pattern.permute.xlu0 0
      %2469 = vperm.xlu0 %2468, %v2359
      %v2470 = vpop.permute.xlu0 %2469
      %2473 = vset.pattern.permute.xlu0 0
      %2474 = vperm.xlu0 %2473, %v2360
      %v2475 = vpop.permute.xlu0 %2474
      %2478 = vset.pattern.permute.xlu0 0
      %2479 = vperm.xlu0 %2478, %v2361
      %v2480 = vpop.permute.xlu0 %2479
      %2483 = vset.pattern.permute.xlu0 0
      %2484 = vperm.xlu0 %2483, %v2362
      %v2485 = vpop.permute.xlu0 %2484
      %2488 = vset.pattern.permute.xlu0 0
      %2489 = vperm.xlu0 %2488, %v2363
      %v2490 = vpop.permute.xlu0 %2489
      %2493 = vset.pattern.permute.xlu0 0
      %2494 = vperm.xlu0 %2493, %v2364
      %v2495 = vpop.permute.xlu0 %2494
      %2498 = vset.pattern.permute.xlu0 0
      %2499 = vperm.xlu0 %2498, %v2365
      %v2500 = vpop.permute.xlu0 %2499
      %2503 = vset.pattern.permute.xlu0 0
      %2504 = vperm.xlu0 %2503, %v2366
      %v2505 = vpop.permute.xlu0 %2504
      %2508 = vset.pattern.permute.xlu0 0
      %2509 = vperm.xlu0 %2508, %v2367
      %v2510 = vpop.permute.xlu0 %2509
      %2513 = vset.pattern.permute.xlu0 0
      %2514 = vperm.xlu0 %2513, %v2368
      %v2515 = vpop.permute.xlu0 %2514
      %2518 = vset.pattern.permute.xlu0 0
      %2519 = vperm.xlu0 %2518, %v2369
      %v2520 = vpop.permute.xlu0 %2519
      %2523 = vset.pattern.permute.xlu0 0
      %2524 = vperm.xlu0 %2523, %v2370
      %v2525 = vpop.permute.xlu0 %2524
      %2528 = vset.pattern.permute.xlu0 0
      %2529 = vperm.xlu0 %2528, %v2371
      %v2530 = vpop.permute.xlu0 %2529
      %v2532 = vmul.f32 %v2307, %v2375
      %v2533 = vmul.f32 %v2308, %v2380
      %v2534 = vmul.f32 %v2309, %v2385
      %v2535 = vmul.f32 %v2310, %v2390
      %v2536 = vmul.f32 %v2311, %v2395
      %v2537 = vmul.f32 %v2312, %v2400
      %v2538 = vmul.f32 %v2313, %v2405
      %v2539 = vmul.f32 %v2314, %v2410
      %v2540 = vmul.f32 %v2315, %v2415
      %v2541 = vmul.f32 %v2316, %v2420
      %v2542 = vmul.f32 %v2317, %v2425
      %v2543 = vmul.f32 %v2318, %v2430
      %v2544 = vmul.f32 %v2319, %v2435
      %v2545 = vmul.f32 %v2320, %v2440
      %v2546 = vmul.f32 %v2321, %v2445
      %v2547 = vmul.f32 %v2322, %v2450
      %v2548 = vmul.f32 %v2323, %v2455
      %v2549 = vmul.f32 %v2324, %v2460
      %v2550 = vmul.f32 %v2325, %v2465
      %v2551 = vmul.f32 %v2326, %v2470
      %v2552 = vmul.f32 %v2327, %v2475
      %v2553 = vmul.f32 %v2328, %v2480
      %v2554 = vmul.f32 %v2329, %v2485
      %v2555 = vmul.f32 %v2330, %v2490
      %v2556 = vmul.f32 %v2331, %v2495
      %v2557 = vmul.f32 %v2332, %v2500
      %v2558 = vmul.f32 %v2333, %v2505
      %v2559 = vmul.f32 %v2334, %v2510
      %v2560 = vmul.f32 %v2335, %v2515
      %v2561 = vmul.f32 %v2336, %v2520
      %v2562 = vmul.f32 %v2337, %v2525
      %v2563 = vmul.f32 %v2338, %v2530
      %s2564 = scalar_lea.vmem %s1, 12
      %v2565 = vld [vmem:[%s2564] sm:$0xf]
      %v2567 = vsel %vm333, %v2532, 0
      %v2570 = vsel %vm333, %v2533, 0
      %v2573 = vsel %vm333, %v2534, 0
      %v2576 = vsel %vm333, %v2535, 0
      %v2579 = vsel %vm333, %v2536, 0
      %v2582 = vsel %vm333, %v2537, 0
      %v2585 = vsel %vm333, %v2538, 0
      %v2588 = vsel %vm333, %v2539, 0
      %v2591 = vsel %vm333, %v2540, 0
      %v2594 = vsel %vm333, %v2541, 0
      %v2597 = vsel %vm333, %v2542, 0
      %v2600 = vsel %vm333, %v2543, 0
      %v2603 = vsel %vm333, %v2544, 0
      %v2606 = vsel %vm333, %v2545, 0
      %v2609 = vsel %vm333, %v2546, 0
      %v2612 = vsel %vm333, %v2547, 0
      %v2615 = vsel %vm333, %v2548, 0
      %v2618 = vsel %vm333, %v2549, 0
      %v2621 = vsel %vm333, %v2550, 0
      %v2624 = vsel %vm333, %v2551, 0
      %v2627 = vsel %vm333, %v2552, 0
      %v2630 = vsel %vm333, %v2553, 0
      %v2633 = vsel %vm333, %v2554, 0
      %v2636 = vsel %vm333, %v2555, 0
      %v2639 = vsel %vm333, %v2556, 0
      %v2642 = vsel %vm333, %v2557, 0
      %v2645 = vsel %vm333, %v2558, 0
      %v2648 = vsel %vm333, %v2559, 0
      %v2651 = vsel %vm333, %v2560, 0
      %v2654 = vsel %vm333, %v2561, 0
      %v2657 = vsel %vm333, %v2562, 0
      %v2660 = vsel %vm333, %v2563, 0
      %v2663 = vsel %vm1139, %v2565, 0
      %2665 = vmatprep.subr.mxu0 0.0
      %2666 = vmatpush1.msra.mxu0 0.0
      %2667 = vmatprep.subr.mxu0 0.0
      %2668 = vmatpush1.msra.mxu0 0.0
      %2669 = vmatprep.subr.mxu0 0.0
      %2670 = vmatpush1.msra.mxu0 0.0
      %2671 = vmatprep.subr.mxu0 0.0
      %2672 = vmatpush1.msra.mxu0 0.0
      %2673 = vmatprep.subr.mxu0 0.0
      %2674 = vmatpush1.msra.mxu0 0.0
      %2675 = vmatprep.subr.mxu0 0.0
      %2676 = vmatpush1.msra.mxu0 0.0
      %2677 = vmatprep.subr.mxu0 0.0
      %2678 = vmatpush1.msra.mxu0 0.0
      %2679 = vmatprep.subr.mxu0 0.0
      %2680 = vmatpush1.msra.mxu0 0.0
      %2681 = vmatprep.subr.mxu0 0.0
      %2682 = vmatpush1.msra.mxu0 0.0
      %2683 = vmatprep.subr.mxu0 0.0
      %2684 = vmatpush1.msra.mxu0 0.0
      %2685 = vmatprep.subr.mxu0 0.0
      %2686 = vmatpush1.msra.mxu0 0.0
      %2687 = vmatprep.subr.mxu0 0.0
      %2688 = vmatpush1.msra.mxu0 0.0
      %2689 = vmatprep.subr.mxu0 0.0
      %2690 = vmatpush1.msra.mxu0 0.0
      %2691 = vmatprep.subr.mxu0 0.0
      %2692 = vmatpush1.msra.mxu0 0.0
      %2693 = vmatprep.subr.mxu0 0.0
      %2694 = vmatpush1.msra.mxu0 0.0
      %2695 = vmatprep.subr.mxu0 0.0
      %2696 = vmatpush1.msra.mxu0 %v2663
      %2697 = vmatprep.subr.mxu0 0.0
      %2698 = vmatpush2.msra.mxu0 0.0
      %2699 = vmatprep.subr.mxu0 0.0
      %2700 = vmatpush2.msra.mxu0 0.0
      %2701 = vmatprep.subr.mxu0 0.0
      %2702 = vmatpush2.msra.mxu0 0.0
      %2703 = vmatprep.subr.mxu0 0.0
      %2704 = vmatpush2.msra.mxu0 0.0
      %2705 = vmatprep.subr.mxu0 0.0
      %2706 = vmatpush2.msra.mxu0 0.0
      %2707 = vmatprep.subr.mxu0 0.0
      %2708 = vmatpush2.msra.mxu0 0.0
      %2709 = vmatprep.subr.mxu0 0.0
      %2710 = vmatpush2.msra.mxu0 0.0
      %2711 = vmatprep.subr.mxu0 0.0
      %2712 = vmatpush2.msra.mxu0 0.0
      %2713 = vmatprep.subr.mxu0 0.0
      %2714 = vmatpush2.msra.mxu0 0.0
      %2715 = vmatprep.subr.mxu0 0.0
      %2716 = vmatpush2.msra.mxu0 0.0
      %2717 = vmatprep.subr.mxu0 0.0
      %2718 = vmatpush2.msra.mxu0 0.0
      %2719 = vmatprep.subr.mxu0 0.0
      %2720 = vmatpush2.msra.mxu0 0.0
      %2721 = vmatprep.subr.mxu0 0.0
      %2722 = vmatpush2.msra.mxu0 0.0
      %2723 = vmatprep.subr.mxu0 0.0
      %2724 = vmatpush2.msra.mxu0 0.0
      %2725 = vmatprep.subr.mxu0 0.0
      %2726 = vmatpush2.msra.mxu0 0.0
      %2727 = vmatprep.subr.mxu0 0.0
      %2728 = vmatpush2.msra.mxu0 0.0
      %2729 = vmatprep.mubr.f32.mxu0 0.0
      %2730 = vmatmul.mubr.f32.gmra.mxu0 %v2567
      %v2731 = vpop.f32.mrf.mxu0
      %v2732 = vadd.f32 0.0, %v2731
      %v2733 = vpop.f32.mrf.mxu0
      %2734 = vmatprep.mubr.f32.mxu0 0.0
      %2735 = vmatmul.mubr.f32.gmra.mxu0 %v2570
      %v2736 = vpop.f32.mrf.mxu0
      %v2737 = vadd.f32 0.0, %v2736
      %v2738 = vpop.f32.mrf.mxu0
      %2739 = vmatprep.mubr.f32.mxu0 0.0
      %2740 = vmatmul.mubr.f32.gmra.mxu0 %v2573
      %v2741 = vpop.f32.mrf.mxu0
      %v2742 = vadd.f32 0.0, %v2741
      %v2743 = vpop.f32.mrf.mxu0
      %2744 = vmatprep.mubr.f32.mxu0 0.0
      %2745 = vmatmul.mubr.f32.gmra.mxu0 %v2576
      %v2746 = vpop.f32.mrf.mxu0
      %v2747 = vadd.f32 0.0, %v2746
      %v2748 = vpop.f32.mrf.mxu0
      %2749 = vmatprep.mubr.f32.mxu0 0.0
      %2750 = vmatmul.mubr.f32.gmra.mxu0 %v2579
      %v2751 = vpop.f32.mrf.mxu0
      %v2752 = vadd.f32 0.0, %v2751
      %v2753 = vpop.f32.mrf.mxu0
      %2754 = vmatprep.mubr.f32.mxu0 0.0
      %2755 = vmatmul.mubr.f32.gmra.mxu0 %v2582
      %v2756 = vpop.f32.mrf.mxu0
      %v2757 = vadd.f32 0.0, %v2756
      %v2758 = vpop.f32.mrf.mxu0
      %2759 = vmatprep.mubr.f32.mxu0 0.0
      %2760 = vmatmul.mubr.f32.gmra.mxu0 %v2585
      %v2761 = vpop.f32.mrf.mxu0
      %v2762 = vadd.f32 0.0, %v2761
      %v2763 = vpop.f32.mrf.mxu0
      %2764 = vmatprep.mubr.f32.mxu0 0.0
      %2765 = vmatmul.mubr.f32.gmra.mxu0 %v2588
      %v2766 = vpop.f32.mrf.mxu0
      %v2767 = vadd.f32 0.0, %v2766
      %v2768 = vpop.f32.mrf.mxu0
      %2769 = vmatprep.mubr.f32.mxu0 0.0
      %2770 = vmatmul.mubr.f32.gmra.mxu0 %v2591
      %v2771 = vpop.f32.mrf.mxu0
      %v2772 = vadd.f32 0.0, %v2771
      %v2773 = vpop.f32.mrf.mxu0
      %2774 = vmatprep.mubr.f32.mxu0 0.0
      %2775 = vmatmul.mubr.f32.gmra.mxu0 %v2594
      %v2776 = vpop.f32.mrf.mxu0
      %v2777 = vadd.f32 0.0, %v2776
      %v2778 = vpop.f32.mrf.mxu0
      %2779 = vmatprep.mubr.f32.mxu0 0.0
      %2780 = vmatmul.mubr.f32.gmra.mxu0 %v2597
      %v2781 = vpop.f32.mrf.mxu0
      %v2782 = vadd.f32 0.0, %v2781
      %v2783 = vpop.f32.mrf.mxu0
      %2784 = vmatprep.mubr.f32.mxu0 0.0
      %2785 = vmatmul.mubr.f32.gmra.mxu0 %v2600
      %v2786 = vpop.f32.mrf.mxu0
      %v2787 = vadd.f32 0.0, %v2786
      %v2788 = vpop.f32.mrf.mxu0
      %2789 = vmatprep.mubr.f32.mxu0 0.0
      %2790 = vmatmul.mubr.f32.gmra.mxu0 %v2603
      %v2791 = vpop.f32.mrf.mxu0
      %v2792 = vadd.f32 0.0, %v2791
      %v2793 = vpop.f32.mrf.mxu0
      %2794 = vmatprep.mubr.f32.mxu0 0.0
      %2795 = vmatmul.mubr.f32.gmra.mxu0 %v2606
      %v2796 = vpop.f32.mrf.mxu0
      %v2797 = vadd.f32 0.0, %v2796
      %v2798 = vpop.f32.mrf.mxu0
      %2799 = vmatprep.mubr.f32.mxu0 0.0
      %2800 = vmatmul.mubr.f32.gmra.mxu0 %v2609
      %v2801 = vpop.f32.mrf.mxu0
      %v2802 = vadd.f32 0.0, %v2801
      %v2803 = vpop.f32.mrf.mxu0
      %2804 = vmatprep.mubr.f32.mxu0 0.0
      %2805 = vmatmul.mubr.f32.gmra.mxu0 %v2612
      %v2806 = vpop.f32.mrf.mxu0
      %v2807 = vadd.f32 0.0, %v2806
      %v2808 = vpop.f32.mrf.mxu0
      %2809 = vmatprep.mubr.f32.mxu0 0.0
      %2810 = vmatmul.mubr.f32.gmra.mxu0 %v2615
      %v2811 = vpop.f32.mrf.mxu0
      %v2812 = vadd.f32 0.0, %v2811
      %v2813 = vpop.f32.mrf.mxu0
      %2814 = vmatprep.mubr.f32.mxu0 0.0
      %2815 = vmatmul.mubr.f32.gmra.mxu0 %v2618
      %v2816 = vpop.f32.mrf.mxu0
      %v2817 = vadd.f32 0.0, %v2816
      %v2818 = vpop.f32.mrf.mxu0
      %2819 = vmatprep.mubr.f32.mxu0 0.0
      %2820 = vmatmul.mubr.f32.gmra.mxu0 %v2621
      %v2821 = vpop.f32.mrf.mxu0
      %v2822 = vadd.f32 0.0, %v2821
      %v2823 = vpop.f32.mrf.mxu0
      %2824 = vmatprep.mubr.f32.mxu0 0.0
      %2825 = vmatmul.mubr.f32.gmra.mxu0 %v2624
      %v2826 = vpop.f32.mrf.mxu0
      %v2827 = vadd.f32 0.0, %v2826
      %v2828 = vpop.f32.mrf.mxu0
      %2829 = vmatprep.mubr.f32.mxu0 0.0
      %2830 = vmatmul.mubr.f32.gmra.mxu0 %v2627
      %v2831 = vpop.f32.mrf.mxu0
      %v2832 = vadd.f32 0.0, %v2831
      %v2833 = vpop.f32.mrf.mxu0
      %2834 = vmatprep.mubr.f32.mxu0 0.0
      %2835 = vmatmul.mubr.f32.gmra.mxu0 %v2630
      %v2836 = vpop.f32.mrf.mxu0
      %v2837 = vadd.f32 0.0, %v2836
      %v2838 = vpop.f32.mrf.mxu0
      %2839 = vmatprep.mubr.f32.mxu0 0.0
      %2840 = vmatmul.mubr.f32.gmra.mxu0 %v2633
      %v2841 = vpop.f32.mrf.mxu0
      %v2842 = vadd.f32 0.0, %v2841
      %v2843 = vpop.f32.mrf.mxu0
      %2844 = vmatprep.mubr.f32.mxu0 0.0
      %2845 = vmatmul.mubr.f32.gmra.mxu0 %v2636
      %v2846 = vpop.f32.mrf.mxu0
      %v2847 = vadd.f32 0.0, %v2846
      %v2848 = vpop.f32.mrf.mxu0
      %2849 = vmatprep.mubr.f32.mxu0 0.0
      %2850 = vmatmul.mubr.f32.gmra.mxu0 %v2639
      %v2851 = vpop.f32.mrf.mxu0
      %v2852 = vadd.f32 0.0, %v2851
      %v2853 = vpop.f32.mrf.mxu0
      %2854 = vmatprep.mubr.f32.mxu0 0.0
      %2855 = vmatmul.mubr.f32.gmra.mxu0 %v2642
      %v2856 = vpop.f32.mrf.mxu0
      %v2857 = vadd.f32 0.0, %v2856
      %v2858 = vpop.f32.mrf.mxu0
      %2859 = vmatprep.mubr.f32.mxu0 0.0
      %2860 = vmatmul.mubr.f32.gmra.mxu0 %v2645
      %v2861 = vpop.f32.mrf.mxu0
      %v2862 = vadd.f32 0.0, %v2861
      %v2863 = vpop.f32.mrf.mxu0
      %2864 = vmatprep.mubr.f32.mxu0 0.0
      %2865 = vmatmul.mubr.f32.gmra.mxu0 %v2648
      %v2866 = vpop.f32.mrf.mxu0
      %v2867 = vadd.f32 0.0, %v2866
      %v2868 = vpop.f32.mrf.mxu0
      %2869 = vmatprep.mubr.f32.mxu0 0.0
      %2870 = vmatmul.mubr.f32.gmra.mxu0 %v2651
      %v2871 = vpop.f32.mrf.mxu0
      %v2872 = vadd.f32 0.0, %v2871
      %v2873 = vpop.f32.mrf.mxu0
      %2874 = vmatprep.mubr.f32.mxu0 0.0
      %2875 = vmatmul.mubr.f32.gmra.mxu0 %v2654
      %v2876 = vpop.f32.mrf.mxu0
      %v2877 = vadd.f32 0.0, %v2876
      %v2878 = vpop.f32.mrf.mxu0
      %2879 = vmatprep.mubr.f32.mxu0 0.0
      %2880 = vmatmul.mubr.f32.gmra.mxu0 %v2657
      %v2881 = vpop.f32.mrf.mxu0
      %v2882 = vadd.f32 0.0, %v2881
      %v2883 = vpop.f32.mrf.mxu0
      %2884 = vmatprep.mubr.f32.mxu0 0.0
      %2885 = vmatmul.mubr.f32.gmra.mxu0 %v2660
      %v2886 = vpop.f32.mrf.mxu0
      %v2887 = vadd.f32 0.0, %v2886
      %v2888 = vpop.f32.mrf.mxu0
      %2889 = vdwg.mxu0
      %v2890 = vadd.f32 %v2275, %v2732
      %v2891 = vadd.f32 %v2276, %v2737
      %v2892 = vadd.f32 %v2277, %v2742
      %v2893 = vadd.f32 %v2278, %v2747
      %v2894 = vadd.f32 %v2279, %v2752
      %v2895 = vadd.f32 %v2280, %v2757
      %v2896 = vadd.f32 %v2281, %v2762
      %v2897 = vadd.f32 %v2282, %v2767
      %v2898 = vadd.f32 %v2283, %v2772
      %v2899 = vadd.f32 %v2284, %v2777
      %v2900 = vadd.f32 %v2285, %v2782
      %v2901 = vadd.f32 %v2286, %v2787
      %v2902 = vadd.f32 %v2287, %v2792
      %v2903 = vadd.f32 %v2288, %v2797
      %v2904 = vadd.f32 %v2289, %v2802
      %v2905 = vadd.f32 %v2290, %v2807
      %v2906 = vadd.f32 %v2291, %v2812
      %v2907 = vadd.f32 %v2292, %v2817
      %v2908 = vadd.f32 %v2293, %v2822
      %v2909 = vadd.f32 %v2294, %v2827
      %v2910 = vadd.f32 %v2295, %v2832
      %v2911 = vadd.f32 %v2296, %v2837
      %v2912 = vadd.f32 %v2297, %v2842
      %v2913 = vadd.f32 %v2298, %v2847
      %v2914 = vadd.f32 %v2299, %v2852
      %v2915 = vadd.f32 %v2300, %v2857
      %v2916 = vadd.f32 %v2301, %v2862
      %v2917 = vadd.f32 %v2302, %v2867
      %v2918 = vadd.f32 %v2303, %v2872
      %v2919 = vadd.f32 %v2304, %v2877
      %v2920 = vadd.f32 %v2305, %v2882
      %v2921 = vadd.f32 %v2306, %v2887
      %v2922 = vld [vmem:[#allocation2 + $0x80] sm:$0xff]
      %v2923 = vld [vmem:[#allocation2 + $0x88] sm:$0xff]
      %v2924 = vld [vmem:[#allocation2 + $0x90] sm:$0xff]
      %v2925 = vld [vmem:[#allocation2 + $0x98] sm:$0xff]
      %v2926 = vld [vmem:[#allocation2 + $0xa0] sm:$0xff]
      %v2927 = vld [vmem:[#allocation2 + $0xa8] sm:$0xff]
      %v2928 = vld [vmem:[#allocation2 + $0xb0] sm:$0xff]
      %v2929 = vld [vmem:[#allocation2 + $0xb8] sm:$0xff]
      %v2930 = vld [vmem:[#allocation2 + $0xc0] sm:$0xff]
      %v2931 = vld [vmem:[#allocation2 + $0xc8] sm:$0xff]
      %v2932 = vld [vmem:[#allocation2 + $0xd0] sm:$0xff]
      %v2933 = vld [vmem:[#allocation2 + $0xd8] sm:$0xff]
      %v2934 = vld [vmem:[#allocation2 + $0xe0] sm:$0xff]
      %v2935 = vld [vmem:[#allocation2 + $0xe8] sm:$0xff]
      %v2936 = vld [vmem:[#allocation2 + $0xf0] sm:$0xff]
      %v2937 = vld [vmem:[#allocation2 + $0xf8] sm:$0xff]
      %v2938 = vld [vmem:[#allocation2 + $0x100] sm:$0xff]
      %v2939 = vld [vmem:[#allocation2 + $0x108] sm:$0xff]
      %v2940 = vld [vmem:[#allocation2 + $0x110] sm:$0xff]
      %v2941 = vld [vmem:[#allocation2 + $0x118] sm:$0xff]
      %v2942 = vld [vmem:[#allocation2 + $0x120] sm:$0xff]
      %v2943 = vld [vmem:[#allocation2 + $0x128] sm:$0xff]
      %v2944 = vld [vmem:[#allocation2 + $0x130] sm:$0xff]
      %v2945 = vld [vmem:[#allocation2 + $0x138] sm:$0xff]
      %v2946 = vld [vmem:[#allocation2 + $0x140] sm:$0xff]
      %v2947 = vld [vmem:[#allocation2 + $0x148] sm:$0xff]
      %v2948 = vld [vmem:[#allocation2 + $0x150] sm:$0xff]
      %v2949 = vld [vmem:[#allocation2 + $0x158] sm:$0xff]
      %v2950 = vld [vmem:[#allocation2 + $0x160] sm:$0xff]
      %v2951 = vld [vmem:[#allocation2 + $0x168] sm:$0xff]
      %v2952 = vld [vmem:[#allocation2 + $0x170] sm:$0xff]
      %v2953 = vld [vmem:[#allocation2 + $0x178] sm:$0xff]
      %s2954 = scalar_lea.vmem %s8, 1024
      %v2955 = vld [vmem:[%s2954] sm:$0xff]
      %v2956 = vld [vmem:[%s2954 + $0x8] sm:$0xff]
      %v2957 = vld [vmem:[%s2954 + $0x10] sm:$0xff]
      %v2958 = vld [vmem:[%s2954 + $0x18] sm:$0xff]
      %v2959 = vld [vmem:[%s2954 + $0x20] sm:$0xff]
      %v2960 = vld [vmem:[%s2954 + $0x28] sm:$0xff]
      %v2961 = vld [vmem:[%s2954 + $0x30] sm:$0xff]
      %v2962 = vld [vmem:[%s2954 + $0x38] sm:$0xff]
      %v2963 = vld [vmem:[%s2954 + $0x40] sm:$0xff]
      %v2964 = vld [vmem:[%s2954 + $0x48] sm:$0xff]
      %v2965 = vld [vmem:[%s2954 + $0x50] sm:$0xff]
      %v2966 = vld [vmem:[%s2954 + $0x58] sm:$0xff]
      %v2967 = vld [vmem:[%s2954 + $0x60] sm:$0xff]
      %v2968 = vld [vmem:[%s2954 + $0x68] sm:$0xff]
      %v2969 = vld [vmem:[%s2954 + $0x70] sm:$0xff]
      %v2970 = vld [vmem:[%s2954 + $0x78] sm:$0xff]
      %v2971 = vld [vmem:[%s2954 + $0x80] sm:$0xff]
      %v2972 = vld [vmem:[%s2954 + $0x88] sm:$0xff]
      %v2973 = vld [vmem:[%s2954 + $0x90] sm:$0xff]
      %v2974 = vld [vmem:[%s2954 + $0x98] sm:$0xff]
      %v2975 = vld [vmem:[%s2954 + $0xa0] sm:$0xff]
      %v2976 = vld [vmem:[%s2954 + $0xa8] sm:$0xff]
      %v2977 = vld [vmem:[%s2954 + $0xb0] sm:$0xff]
      %v2978 = vld [vmem:[%s2954 + $0xb8] sm:$0xff]
      %v2979 = vld [vmem:[%s2954 + $0xc0] sm:$0xff]
      %v2980 = vld [vmem:[%s2954 + $0xc8] sm:$0xff]
      %v2981 = vld [vmem:[%s2954 + $0xd0] sm:$0xff]
      %v2982 = vld [vmem:[%s2954 + $0xd8] sm:$0xff]
      %v2983 = vld [vmem:[%s2954 + $0xe0] sm:$0xff]
      %v2984 = vld [vmem:[%s2954 + $0xe8] sm:$0xff]
      %v2985 = vld [vmem:[%s2954 + $0xf0] sm:$0xff]
      %v2986 = vld [vmem:[%s2954 + $0xf8] sm:$0xff]
      %2988 = vset.pattern.permute.xlu0 0
      %2989 = vperm.xlu0 %2988, %v2955
      %v2990 = vpop.permute.xlu0 %2989
      %2993 = vset.pattern.permute.xlu0 0
      %2994 = vperm.xlu0 %2993, %v2956
      %v2995 = vpop.permute.xlu0 %2994
      %2998 = vset.pattern.permute.xlu0 0
      %2999 = vperm.xlu0 %2998, %v2957
      %v3000 = vpop.permute.xlu0 %2999
      %3003 = vset.pattern.permute.xlu0 0
      %3004 = vperm.xlu0 %3003, %v2958
      %v3005 = vpop.permute.xlu0 %3004
      %3008 = vset.pattern.permute.xlu0 0
      %3009 = vperm.xlu0 %3008, %v2959
      %v3010 = vpop.permute.xlu0 %3009
      %3013 = vset.pattern.permute.xlu0 0
      %3014 = vperm.xlu0 %3013, %v2960
      %v3015 = vpop.permute.xlu0 %3014
      %3018 = vset.pattern.permute.xlu0 0
      %3019 = vperm.xlu0 %3018, %v2961
      %v3020 = vpop.permute.xlu0 %3019
      %3023 = vset.pattern.permute.xlu0 0
      %3024 = vperm.xlu0 %3023, %v2962
      %v3025 = vpop.permute.xlu0 %3024
      %3028 = vset.pattern.permute.xlu0 0
      %3029 = vperm.xlu0 %3028, %v2963
      %v3030 = vpop.permute.xlu0 %3029
      %3033 = vset.pattern.permute.xlu0 0
      %3034 = vperm.xlu0 %3033, %v2964
      %v3035 = vpop.permute.xlu0 %3034
      %3038 = vset.pattern.permute.xlu0 0
      %3039 = vperm.xlu0 %3038, %v2965
      %v3040 = vpop.permute.xlu0 %3039
      %3043 = vset.pattern.permute.xlu0 0
      %3044 = vperm.xlu0 %3043, %v2966
      %v3045 = vpop.permute.xlu0 %3044
      %3048 = vset.pattern.permute.xlu0 0
      %3049 = vperm.xlu0 %3048, %v2967
      %v3050 = vpop.permute.xlu0 %3049
      %3053 = vset.pattern.permute.xlu0 0
      %3054 = vperm.xlu0 %3053, %v2968
      %v3055 = vpop.permute.xlu0 %3054
      %3058 = vset.pattern.permute.xlu0 0
      %3059 = vperm.xlu0 %3058, %v2969
      %v3060 = vpop.permute.xlu0 %3059
      %3063 = vset.pattern.permute.xlu0 0
      %3064 = vperm.xlu0 %3063, %v2970
      %v3065 = vpop.permute.xlu0 %3064
      %3068 = vset.pattern.permute.xlu0 0
      %3069 = vperm.xlu0 %3068, %v2971
      %v3070 = vpop.permute.xlu0 %3069
      %3073 = vset.pattern.permute.xlu0 0
      %3074 = vperm.xlu0 %3073, %v2972
      %v3075 = vpop.permute.xlu0 %3074
      %3078 = vset.pattern.permute.xlu0 0
      %3079 = vperm.xlu0 %3078, %v2973
      %v3080 = vpop.permute.xlu0 %3079
      %3083 = vset.pattern.permute.xlu0 0
      %3084 = vperm.xlu0 %3083, %v2974
      %v3085 = vpop.permute.xlu0 %3084
      %3088 = vset.pattern.permute.xlu0 0
      %3089 = vperm.xlu0 %3088, %v2975
      %v3090 = vpop.permute.xlu0 %3089
      %3093 = vset.pattern.permute.xlu0 0
      %3094 = vperm.xlu0 %3093, %v2976
      %v3095 = vpop.permute.xlu0 %3094
      %3098 = vset.pattern.permute.xlu0 0
      %3099 = vperm.xlu0 %3098, %v2977
      %v3100 = vpop.permute.xlu0 %3099
      %3103 = vset.pattern.permute.xlu0 0
      %3104 = vperm.xlu0 %3103, %v2978
      %v3105 = vpop.permute.xlu0 %3104
      %3108 = vset.pattern.permute.xlu0 0
      %3109 = vperm.xlu0 %3108, %v2979
      %v3110 = vpop.permute.xlu0 %3109
      %3113 = vset.pattern.permute.xlu0 0
      %3114 = vperm.xlu0 %3113, %v2980
      %v3115 = vpop.permute.xlu0 %3114
      %3118 = vset.pattern.permute.xlu0 0
      %3119 = vperm.xlu0 %3118, %v2981
      %v3120 = vpop.permute.xlu0 %3119
      %3123 = vset.pattern.permute.xlu0 0
      %3124 = vperm.xlu0 %3123, %v2982
      %v3125 = vpop.permute.xlu0 %3124
      %3128 = vset.pattern.permute.xlu0 0
      %3129 = vperm.xlu0 %3128, %v2983
      %v3130 = vpop.permute.xlu0 %3129
      %3133 = vset.pattern.permute.xlu0 0
      %3134 = vperm.xlu0 %3133, %v2984
      %v3135 = vpop.permute.xlu0 %3134
      %3138 = vset.pattern.permute.xlu0 0
      %3139 = vperm.xlu0 %3138, %v2985
      %v3140 = vpop.permute.xlu0 %3139
      %3143 = vset.pattern.permute.xlu0 0
      %3144 = vperm.xlu0 %3143, %v2986
      %v3145 = vpop.permute.xlu0 %3144
      %v3147 = vmul.f32 %v2922, %v2990
      %v3148 = vmul.f32 %v2923, %v2995
      %v3149 = vmul.f32 %v2924, %v3000
      %v3150 = vmul.f32 %v2925, %v3005
      %v3151 = vmul.f32 %v2926, %v3010
      %v3152 = vmul.f32 %v2927, %v3015
      %v3153 = vmul.f32 %v2928, %v3020
      %v3154 = vmul.f32 %v2929, %v3025
      %v3155 = vmul.f32 %v2930, %v3030
      %v3156 = vmul.f32 %v2931, %v3035
      %v3157 = vmul.f32 %v2932, %v3040
      %v3158 = vmul.f32 %v2933, %v3045
      %v3159 = vmul.f32 %v2934, %v3050
      %v3160 = vmul.f32 %v2935, %v3055
      %v3161 = vmul.f32 %v2936, %v3060
      %v3162 = vmul.f32 %v2937, %v3065
      %v3163 = vmul.f32 %v2938, %v3070
      %v3164 = vmul.f32 %v2939, %v3075
      %v3165 = vmul.f32 %v2940, %v3080
      %v3166 = vmul.f32 %v2941, %v3085
      %v3167 = vmul.f32 %v2942, %v3090
      %v3168 = vmul.f32 %v2943, %v3095
      %v3169 = vmul.f32 %v2944, %v3100
      %v3170 = vmul.f32 %v2945, %v3105
      %v3171 = vmul.f32 %v2946, %v3110
      %v3172 = vmul.f32 %v2947, %v3115
      %v3173 = vmul.f32 %v2948, %v3120
      %v3174 = vmul.f32 %v2949, %v3125
      %v3175 = vmul.f32 %v2950, %v3130
      %v3176 = vmul.f32 %v2951, %v3135
      %v3177 = vmul.f32 %v2952, %v3140
      %v3178 = vmul.f32 %v2953, %v3145
      %s3179 = scalar_lea.vmem %s1, 16
      %v3180 = vld [vmem:[%s3179] sm:$0xf]
      %v3182 = vsel %vm333, %v3147, 0
      %v3185 = vsel %vm333, %v3148, 0
      %v3188 = vsel %vm333, %v3149, 0
      %v3191 = vsel %vm333, %v3150, 0
      %v3194 = vsel %vm333, %v3151, 0
      %v3197 = vsel %vm333, %v3152, 0
      %v3200 = vsel %vm333, %v3153, 0
      %v3203 = vsel %vm333, %v3154, 0
      %v3206 = vsel %vm333, %v3155, 0
      %v3209 = vsel %vm333, %v3156, 0
      %v3212 = vsel %vm333, %v3157, 0
      %v3215 = vsel %vm333, %v3158, 0
      %v3218 = vsel %vm333, %v3159, 0
      %v3221 = vsel %vm333, %v3160, 0
      %v3224 = vsel %vm333, %v3161, 0
      %v3227 = vsel %vm333, %v3162, 0
      %v3230 = vsel %vm333, %v3163, 0
      %v3233 = vsel %vm333, %v3164, 0
      %v3236 = vsel %vm333, %v3165, 0
      %v3239 = vsel %vm333, %v3166, 0
      %v3242 = vsel %vm333, %v3167, 0
      %v3245 = vsel %vm333, %v3168, 0
      %v3248 = vsel %vm333, %v3169, 0
      %v3251 = vsel %vm333, %v3170, 0
      %v3254 = vsel %vm333, %v3171, 0
      %v3257 = vsel %vm333, %v3172, 0
      %v3260 = vsel %vm333, %v3173, 0
      %v3263 = vsel %vm333, %v3174, 0
      %v3266 = vsel %vm333, %v3175, 0
      %v3269 = vsel %vm333, %v3176, 0
      %v3272 = vsel %vm333, %v3177, 0
      %v3275 = vsel %vm333, %v3178, 0
      %v3278 = vsel %vm1139, %v3180, 0
      %3280 = vmatprep.subr.mxu0 0.0
      %3281 = vmatpush1.msra.mxu0 0.0
      %3282 = vmatprep.subr.mxu0 0.0
      %3283 = vmatpush1.msra.mxu0 0.0
      %3284 = vmatprep.subr.mxu0 0.0
      %3285 = vmatpush1.msra.mxu0 0.0
      %3286 = vmatprep.subr.mxu0 0.0
      %3287 = vmatpush1.msra.mxu0 0.0
      %3288 = vmatprep.subr.mxu0 0.0
      %3289 = vmatpush1.msra.mxu0 0.0
      %3290 = vmatprep.subr.mxu0 0.0
      %3291 = vmatpush1.msra.mxu0 0.0
      %3292 = vmatprep.subr.mxu0 0.0
      %3293 = vmatpush1.msra.mxu0 0.0
      %3294 = vmatprep.subr.mxu0 0.0
      %3295 = vmatpush1.msra.mxu0 0.0
      %3296 = vmatprep.subr.mxu0 0.0
      %3297 = vmatpush1.msra.mxu0 0.0
      %3298 = vmatprep.subr.mxu0 0.0
      %3299 = vmatpush1.msra.mxu0 0.0
      %3300 = vmatprep.subr.mxu0 0.0
      %3301 = vmatpush1.msra.mxu0 0.0
      %3302 = vmatprep.subr.mxu0 0.0
      %3303 = vmatpush1.msra.mxu0 0.0
      %3304 = vmatprep.subr.mxu0 0.0
      %3305 = vmatpush1.msra.mxu0 0.0
      %3306 = vmatprep.subr.mxu0 0.0
      %3307 = vmatpush1.msra.mxu0 0.0
      %3308 = vmatprep.subr.mxu0 0.0
      %3309 = vmatpush1.msra.mxu0 0.0
      %3310 = vmatprep.subr.mxu0 0.0
      %3311 = vmatpush1.msra.mxu0 %v3278
      %3312 = vmatprep.subr.mxu0 0.0
      %3313 = vmatpush2.msra.mxu0 0.0
      %3314 = vmatprep.subr.mxu0 0.0
      %3315 = vmatpush2.msra.mxu0 0.0
      %3316 = vmatprep.subr.mxu0 0.0
      %3317 = vmatpush2.msra.mxu0 0.0
      %3318 = vmatprep.subr.mxu0 0.0
      %3319 = vmatpush2.msra.mxu0 0.0
      %3320 = vmatprep.subr.mxu0 0.0
      %3321 = vmatpush2.msra.mxu0 0.0
      %3322 = vmatprep.subr.mxu0 0.0
      %3323 = vmatpush2.msra.mxu0 0.0
      %3324 = vmatprep.subr.mxu0 0.0
      %3325 = vmatpush2.msra.mxu0 0.0
      %3326 = vmatprep.subr.mxu0 0.0
      %3327 = vmatpush2.msra.mxu0 0.0
      %3328 = vmatprep.subr.mxu0 0.0
      %3329 = vmatpush2.msra.mxu0 0.0
      %3330 = vmatprep.subr.mxu0 0.0
      %3331 = vmatpush2.msra.mxu0 0.0
      %3332 = vmatprep.subr.mxu0 0.0
      %3333 = vmatpush2.msra.mxu0 0.0
      %3334 = vmatprep.subr.mxu0 0.0
      %3335 = vmatpush2.msra.mxu0 0.0
      %3336 = vmatprep.subr.mxu0 0.0
      %3337 = vmatpush2.msra.mxu0 0.0
      %3338 = vmatprep.subr.mxu0 0.0
      %3339 = vmatpush2.msra.mxu0 0.0
      %3340 = vmatprep.subr.mxu0 0.0
      %3341 = vmatpush2.msra.mxu0 0.0
      %3342 = vmatprep.subr.mxu0 0.0
      %3343 = vmatpush2.msra.mxu0 0.0
      %3344 = vmatprep.mubr.f32.mxu0 0.0
      %3345 = vmatmul.mubr.f32.gmra.mxu0 %v3182
      %v3346 = vpop.f32.mrf.mxu0
      %v3347 = vadd.f32 0.0, %v3346
      %v3348 = vpop.f32.mrf.mxu0
      %3349 = vmatprep.mubr.f32.mxu0 0.0
      %3350 = vmatmul.mubr.f32.gmra.mxu0 %v3185
      %v3351 = vpop.f32.mrf.mxu0
      %v3352 = vadd.f32 0.0, %v3351
      %v3353 = vpop.f32.mrf.mxu0
      %3354 = vmatprep.mubr.f32.mxu0 0.0
      %3355 = vmatmul.mubr.f32.gmra.mxu0 %v3188
      %v3356 = vpop.f32.mrf.mxu0
      %v3357 = vadd.f32 0.0, %v3356
      %v3358 = vpop.f32.mrf.mxu0
      %3359 = vmatprep.mubr.f32.mxu0 0.0
      %3360 = vmatmul.mubr.f32.gmra.mxu0 %v3191
      %v3361 = vpop.f32.mrf.mxu0
      %v3362 = vadd.f32 0.0, %v3361
      %v3363 = vpop.f32.mrf.mxu0
      %3364 = vmatprep.mubr.f32.mxu0 0.0
      %3365 = vmatmul.mubr.f32.gmra.mxu0 %v3194
      %v3366 = vpop.f32.mrf.mxu0
      %v3367 = vadd.f32 0.0, %v3366
      %v3368 = vpop.f32.mrf.mxu0
      %3369 = vmatprep.mubr.f32.mxu0 0.0
      %3370 = vmatmul.mubr.f32.gmra.mxu0 %v3197
      %v3371 = vpop.f32.mrf.mxu0
      %v3372 = vadd.f32 0.0, %v3371
      %v3373 = vpop.f32.mrf.mxu0
      %3374 = vmatprep.mubr.f32.mxu0 0.0
      %3375 = vmatmul.mubr.f32.gmra.mxu0 %v3200
      %v3376 = vpop.f32.mrf.mxu0
      %v3377 = vadd.f32 0.0, %v3376
      %v3378 = vpop.f32.mrf.mxu0
      %3379 = vmatprep.mubr.f32.mxu0 0.0
      %3380 = vmatmul.mubr.f32.gmra.mxu0 %v3203
      %v3381 = vpop.f32.mrf.mxu0
      %v3382 = vadd.f32 0.0, %v3381
      %v3383 = vpop.f32.mrf.mxu0
      %3384 = vmatprep.mubr.f32.mxu0 0.0
      %3385 = vmatmul.mubr.f32.gmra.mxu0 %v3206
      %v3386 = vpop.f32.mrf.mxu0
      %v3387 = vadd.f32 0.0, %v3386
      %v3388 = vpop.f32.mrf.mxu0
      %3389 = vmatprep.mubr.f32.mxu0 0.0
      %3390 = vmatmul.mubr.f32.gmra.mxu0 %v3209
      %v3391 = vpop.f32.mrf.mxu0
      %v3392 = vadd.f32 0.0, %v3391
      %v3393 = vpop.f32.mrf.mxu0
      %3394 = vmatprep.mubr.f32.mxu0 0.0
      %3395 = vmatmul.mubr.f32.gmra.mxu0 %v3212
      %v3396 = vpop.f32.mrf.mxu0
      %v3397 = vadd.f32 0.0, %v3396
      %v3398 = vpop.f32.mrf.mxu0
      %3399 = vmatprep.mubr.f32.mxu0 0.0
      %3400 = vmatmul.mubr.f32.gmra.mxu0 %v3215
      %v3401 = vpop.f32.mrf.mxu0
      %v3402 = vadd.f32 0.0, %v3401
      %v3403 = vpop.f32.mrf.mxu0
      %3404 = vmatprep.mubr.f32.mxu0 0.0
      %3405 = vmatmul.mubr.f32.gmra.mxu0 %v3218
      %v3406 = vpop.f32.mrf.mxu0
      %v3407 = vadd.f32 0.0, %v3406
      %v3408 = vpop.f32.mrf.mxu0
      %3409 = vmatprep.mubr.f32.mxu0 0.0
      %3410 = vmatmul.mubr.f32.gmra.mxu0 %v3221
      %v3411 = vpop.f32.mrf.mxu0
      %v3412 = vadd.f32 0.0, %v3411
      %v3413 = vpop.f32.mrf.mxu0
      %3414 = vmatprep.mubr.f32.mxu0 0.0
      %3415 = vmatmul.mubr.f32.gmra.mxu0 %v3224
      %v3416 = vpop.f32.mrf.mxu0
      %v3417 = vadd.f32 0.0, %v3416
      %v3418 = vpop.f32.mrf.mxu0
      %3419 = vmatprep.mubr.f32.mxu0 0.0
      %3420 = vmatmul.mubr.f32.gmra.mxu0 %v3227
      %v3421 = vpop.f32.mrf.mxu0
      %v3422 = vadd.f32 0.0, %v3421
      %v3423 = vpop.f32.mrf.mxu0
      %3424 = vmatprep.mubr.f32.mxu0 0.0
      %3425 = vmatmul.mubr.f32.gmra.mxu0 %v3230
      %v3426 = vpop.f32.mrf.mxu0
      %v3427 = vadd.f32 0.0, %v3426
      %v3428 = vpop.f32.mrf.mxu0
      %3429 = vmatprep.mubr.f32.mxu0 0.0
      %3430 = vmatmul.mubr.f32.gmra.mxu0 %v3233
      %v3431 = vpop.f32.mrf.mxu0
      %v3432 = vadd.f32 0.0, %v3431
      %v3433 = vpop.f32.mrf.mxu0
      %3434 = vmatprep.mubr.f32.mxu0 0.0
      %3435 = vmatmul.mubr.f32.gmra.mxu0 %v3236
      %v3436 = vpop.f32.mrf.mxu0
      %v3437 = vadd.f32 0.0, %v3436
      %v3438 = vpop.f32.mrf.mxu0
      %3439 = vmatprep.mubr.f32.mxu0 0.0
      %3440 = vmatmul.mubr.f32.gmra.mxu0 %v3239
      %v3441 = vpop.f32.mrf.mxu0
      %v3442 = vadd.f32 0.0, %v3441
      %v3443 = vpop.f32.mrf.mxu0
      %3444 = vmatprep.mubr.f32.mxu0 0.0
      %3445 = vmatmul.mubr.f32.gmra.mxu0 %v3242
      %v3446 = vpop.f32.mrf.mxu0
      %v3447 = vadd.f32 0.0, %v3446
      %v3448 = vpop.f32.mrf.mxu0
      %3449 = vmatprep.mubr.f32.mxu0 0.0
      %3450 = vmatmul.mubr.f32.gmra.mxu0 %v3245
      %v3451 = vpop.f32.mrf.mxu0
      %v3452 = vadd.f32 0.0, %v3451
      %v3453 = vpop.f32.mrf.mxu0
      %3454 = vmatprep.mubr.f32.mxu0 0.0
      %3455 = vmatmul.mubr.f32.gmra.mxu0 %v3248
      %v3456 = vpop.f32.mrf.mxu0
      %v3457 = vadd.f32 0.0, %v3456
      %v3458 = vpop.f32.mrf.mxu0
      %3459 = vmatprep.mubr.f32.mxu0 0.0
      %3460 = vmatmul.mubr.f32.gmra.mxu0 %v3251
      %v3461 = vpop.f32.mrf.mxu0
      %v3462 = vadd.f32 0.0, %v3461
      %v3463 = vpop.f32.mrf.mxu0
      %3464 = vmatprep.mubr.f32.mxu0 0.0
      %3465 = vmatmul.mubr.f32.gmra.mxu0 %v3254
      %v3466 = vpop.f32.mrf.mxu0
      %v3467 = vadd.f32 0.0, %v3466
      %v3468 = vpop.f32.mrf.mxu0
      %3469 = vmatprep.mubr.f32.mxu0 0.0
      %3470 = vmatmul.mubr.f32.gmra.mxu0 %v3257
      %v3471 = vpop.f32.mrf.mxu0
      %v3472 = vadd.f32 0.0, %v3471
      %v3473 = vpop.f32.mrf.mxu0
      %3474 = vmatprep.mubr.f32.mxu0 0.0
      %3475 = vmatmul.mubr.f32.gmra.mxu0 %v3260
      %v3476 = vpop.f32.mrf.mxu0
      %v3477 = vadd.f32 0.0, %v3476
      %v3478 = vpop.f32.mrf.mxu0
      %3479 = vmatprep.mubr.f32.mxu0 0.0
      %3480 = vmatmul.mubr.f32.gmra.mxu0 %v3263
      %v3481 = vpop.f32.mrf.mxu0
      %v3482 = vadd.f32 0.0, %v3481
      %v3483 = vpop.f32.mrf.mxu0
      %3484 = vmatprep.mubr.f32.mxu0 0.0
      %3485 = vmatmul.mubr.f32.gmra.mxu0 %v3266
      %v3486 = vpop.f32.mrf.mxu0
      %v3487 = vadd.f32 0.0, %v3486
      %v3488 = vpop.f32.mrf.mxu0
      %3489 = vmatprep.mubr.f32.mxu0 0.0
      %3490 = vmatmul.mubr.f32.gmra.mxu0 %v3269
      %v3491 = vpop.f32.mrf.mxu0
      %v3492 = vadd.f32 0.0, %v3491
      %v3493 = vpop.f32.mrf.mxu0
      %3494 = vmatprep.mubr.f32.mxu0 0.0
      %3495 = vmatmul.mubr.f32.gmra.mxu0 %v3272
      %v3496 = vpop.f32.mrf.mxu0
      %v3497 = vadd.f32 0.0, %v3496
      %v3498 = vpop.f32.mrf.mxu0
      %3499 = vmatprep.mubr.f32.mxu0 0.0
      %3500 = vmatmul.mubr.f32.gmra.mxu0 %v3275
      %v3501 = vpop.f32.mrf.mxu0
      %v3502 = vadd.f32 0.0, %v3501
      %v3503 = vpop.f32.mrf.mxu0
      %3504 = vdwg.mxu0
      %v3505 = vadd.f32 %v2890, %v3347
      %v3506 = vadd.f32 %v2891, %v3352
      %v3507 = vadd.f32 %v2892, %v3357
      %v3508 = vadd.f32 %v2893, %v3362
      %v3509 = vadd.f32 %v2894, %v3367
      %v3510 = vadd.f32 %v2895, %v3372
      %v3511 = vadd.f32 %v2896, %v3377
      %v3512 = vadd.f32 %v2897, %v3382
      %v3513 = vadd.f32 %v2898, %v3387
      %v3514 = vadd.f32 %v2899, %v3392
      %v3515 = vadd.f32 %v2900, %v3397
      %v3516 = vadd.f32 %v2901, %v3402
      %v3517 = vadd.f32 %v2902, %v3407
      %v3518 = vadd.f32 %v2903, %v3412
      %v3519 = vadd.f32 %v2904, %v3417
      %v3520 = vadd.f32 %v2905, %v3422
      %v3521 = vadd.f32 %v2906, %v3427
      %v3522 = vadd.f32 %v2907, %v3432
      %v3523 = vadd.f32 %v2908, %v3437
      %v3524 = vadd.f32 %v2909, %v3442
      %v3525 = vadd.f32 %v2910, %v3447
      %v3526 = vadd.f32 %v2911, %v3452
      %v3527 = vadd.f32 %v2912, %v3457
      %v3528 = vadd.f32 %v2913, %v3462
      %v3529 = vadd.f32 %v2914, %v3467
      %v3530 = vadd.f32 %v2915, %v3472
      %v3531 = vadd.f32 %v2916, %v3477
      %v3532 = vadd.f32 %v2917, %v3482
      %v3533 = vadd.f32 %v2918, %v3487
      %v3534 = vadd.f32 %v2919, %v3492
      %v3535 = vadd.f32 %v2920, %v3497
      %v3536 = vadd.f32 %v2921, %v3502
      %v3537 = vld [vmem:[#allocation2 + $0x81] sm:$0xff]
      %v3538 = vld [vmem:[#allocation2 + $0x89] sm:$0xff]
      %v3539 = vld [vmem:[#allocation2 + $0x91] sm:$0xff]
      %v3540 = vld [vmem:[#allocation2 + $0x99] sm:$0xff]
      %v3541 = vld [vmem:[#allocation2 + $0xa1] sm:$0xff]
      %v3542 = vld [vmem:[#allocation2 + $0xa9] sm:$0xff]
      %v3543 = vld [vmem:[#allocation2 + $0xb1] sm:$0xff]
      %v3544 = vld [vmem:[#allocation2 + $0xb9] sm:$0xff]
      %v3545 = vld [vmem:[#allocation2 + $0xc1] sm:$0xff]
      %v3546 = vld [vmem:[#allocation2 + $0xc9] sm:$0xff]
      %v3547 = vld [vmem:[#allocation2 + $0xd1] sm:$0xff]
      %v3548 = vld [vmem:[#allocation2 + $0xd9] sm:$0xff]
      %v3549 = vld [vmem:[#allocation2 + $0xe1] sm:$0xff]
      %v3550 = vld [vmem:[#allocation2 + $0xe9] sm:$0xff]
      %v3551 = vld [vmem:[#allocation2 + $0xf1] sm:$0xff]
      %v3552 = vld [vmem:[#allocation2 + $0xf9] sm:$0xff]
      %v3553 = vld [vmem:[#allocation2 + $0x101] sm:$0xff]
      %v3554 = vld [vmem:[#allocation2 + $0x109] sm:$0xff]
      %v3555 = vld [vmem:[#allocation2 + $0x111] sm:$0xff]
      %v3556 = vld [vmem:[#allocation2 + $0x119] sm:$0xff]
      %v3557 = vld [vmem:[#allocation2 + $0x121] sm:$0xff]
      %v3558 = vld [vmem:[#allocation2 + $0x129] sm:$0xff]
      %v3559 = vld [vmem:[#allocation2 + $0x131] sm:$0xff]
      %v3560 = vld [vmem:[#allocation2 + $0x139] sm:$0xff]
      %v3561 = vld [vmem:[#allocation2 + $0x141] sm:$0xff]
      %v3562 = vld [vmem:[#allocation2 + $0x149] sm:$0xff]
      %v3563 = vld [vmem:[#allocation2 + $0x151] sm:$0xff]
      %v3564 = vld [vmem:[#allocation2 + $0x159] sm:$0xff]
      %v3565 = vld [vmem:[#allocation2 + $0x161] sm:$0xff]
      %v3566 = vld [vmem:[#allocation2 + $0x169] sm:$0xff]
      %v3567 = vld [vmem:[#allocation2 + $0x171] sm:$0xff]
      %v3568 = vld [vmem:[#allocation2 + $0x179] sm:$0xff]
      %s3569 = scalar_lea.vmem %s8, 1280
      %v3570 = vld [vmem:[%s3569] sm:$0xff]
      %v3571 = vld [vmem:[%s3569 + $0x8] sm:$0xff]
      %v3572 = vld [vmem:[%s3569 + $0x10] sm:$0xff]
      %v3573 = vld [vmem:[%s3569 + $0x18] sm:$0xff]
      %v3574 = vld [vmem:[%s3569 + $0x20] sm:$0xff]
      %v3575 = vld [vmem:[%s3569 + $0x28] sm:$0xff]
      %v3576 = vld [vmem:[%s3569 + $0x30] sm:$0xff]
      %v3577 = vld [vmem:[%s3569 + $0x38] sm:$0xff]
      %v3578 = vld [vmem:[%s3569 + $0x40] sm:$0xff]
      %v3579 = vld [vmem:[%s3569 + $0x48] sm:$0xff]
      %v3580 = vld [vmem:[%s3569 + $0x50] sm:$0xff]
      %v3581 = vld [vmem:[%s3569 + $0x58] sm:$0xff]
      %v3582 = vld [vmem:[%s3569 + $0x60] sm:$0xff]
      %v3583 = vld [vmem:[%s3569 + $0x68] sm:$0xff]
      %v3584 = vld [vmem:[%s3569 + $0x70] sm:$0xff]
      %v3585 = vld [vmem:[%s3569 + $0x78] sm:$0xff]
      %v3586 = vld [vmem:[%s3569 + $0x80] sm:$0xff]
      %v3587 = vld [vmem:[%s3569 + $0x88] sm:$0xff]
      %v3588 = vld [vmem:[%s3569 + $0x90] sm:$0xff]
      %v3589 = vld [vmem:[%s3569 + $0x98] sm:$0xff]
      %v3590 = vld [vmem:[%s3569 + $0xa0] sm:$0xff]
      %v3591 = vld [vmem:[%s3569 + $0xa8] sm:$0xff]
      %v3592 = vld [vmem:[%s3569 + $0xb0] sm:$0xff]
      %v3593 = vld [vmem:[%s3569 + $0xb8] sm:$0xff]
      %v3594 = vld [vmem:[%s3569 + $0xc0] sm:$0xff]
      %v3595 = vld [vmem:[%s3569 + $0xc8] sm:$0xff]
      %v3596 = vld [vmem:[%s3569 + $0xd0] sm:$0xff]
      %v3597 = vld [vmem:[%s3569 + $0xd8] sm:$0xff]
      %v3598 = vld [vmem:[%s3569 + $0xe0] sm:$0xff]
      %v3599 = vld [vmem:[%s3569 + $0xe8] sm:$0xff]
      %v3600 = vld [vmem:[%s3569 + $0xf0] sm:$0xff]
      %v3601 = vld [vmem:[%s3569 + $0xf8] sm:$0xff]
      %3603 = vset.pattern.permute.xlu0 0
      %3604 = vperm.xlu0 %3603, %v3570
      %v3605 = vpop.permute.xlu0 %3604
      %3608 = vset.pattern.permute.xlu0 0
      %3609 = vperm.xlu0 %3608, %v3571
      %v3610 = vpop.permute.xlu0 %3609
      %3613 = vset.pattern.permute.xlu0 0
      %3614 = vperm.xlu0 %3613, %v3572
      %v3615 = vpop.permute.xlu0 %3614
      %3618 = vset.pattern.permute.xlu0 0
      %3619 = vperm.xlu0 %3618, %v3573
      %v3620 = vpop.permute.xlu0 %3619
      %3623 = vset.pattern.permute.xlu0 0
      %3624 = vperm.xlu0 %3623, %v3574
      %v3625 = vpop.permute.xlu0 %3624
      %3628 = vset.pattern.permute.xlu0 0
      %3629 = vperm.xlu0 %3628, %v3575
      %v3630 = vpop.permute.xlu0 %3629
      %3633 = vset.pattern.permute.xlu0 0
      %3634 = vperm.xlu0 %3633, %v3576
      %v3635 = vpop.permute.xlu0 %3634
      %3638 = vset.pattern.permute.xlu0 0
      %3639 = vperm.xlu0 %3638, %v3577
      %v3640 = vpop.permute.xlu0 %3639
      %3643 = vset.pattern.permute.xlu0 0
      %3644 = vperm.xlu0 %3643, %v3578
      %v3645 = vpop.permute.xlu0 %3644
      %3648 = vset.pattern.permute.xlu0 0
      %3649 = vperm.xlu0 %3648, %v3579
      %v3650 = vpop.permute.xlu0 %3649
      %3653 = vset.pattern.permute.xlu0 0
      %3654 = vperm.xlu0 %3653, %v3580
      %v3655 = vpop.permute.xlu0 %3654
      %3658 = vset.pattern.permute.xlu0 0
      %3659 = vperm.xlu0 %3658, %v3581
      %v3660 = vpop.permute.xlu0 %3659
      %3663 = vset.pattern.permute.xlu0 0
      %3664 = vperm.xlu0 %3663, %v3582
      %v3665 = vpop.permute.xlu0 %3664
      %3668 = vset.pattern.permute.xlu0 0
      %3669 = vperm.xlu0 %3668, %v3583
      %v3670 = vpop.permute.xlu0 %3669
      %3673 = vset.pattern.permute.xlu0 0
      %3674 = vperm.xlu0 %3673, %v3584
      %v3675 = vpop.permute.xlu0 %3674
      %3678 = vset.pattern.permute.xlu0 0
      %3679 = vperm.xlu0 %3678, %v3585
      %v3680 = vpop.permute.xlu0 %3679
      %3683 = vset.pattern.permute.xlu0 0
      %3684 = vperm.xlu0 %3683, %v3586
      %v3685 = vpop.permute.xlu0 %3684
      %3688 = vset.pattern.permute.xlu0 0
      %3689 = vperm.xlu0 %3688, %v3587
      %v3690 = vpop.permute.xlu0 %3689
      %3693 = vset.pattern.permute.xlu0 0
      %3694 = vperm.xlu0 %3693, %v3588
      %v3695 = vpop.permute.xlu0 %3694
      %3698 = vset.pattern.permute.xlu0 0
      %3699 = vperm.xlu0 %3698, %v3589
      %v3700 = vpop.permute.xlu0 %3699
      %3703 = vset.pattern.permute.xlu0 0
      %3704 = vperm.xlu0 %3703, %v3590
      %v3705 = vpop.permute.xlu0 %3704
      %3708 = vset.pattern.permute.xlu0 0
      %3709 = vperm.xlu0 %3708, %v3591
      %v3710 = vpop.permute.xlu0 %3709
      %3713 = vset.pattern.permute.xlu0 0
      %3714 = vperm.xlu0 %3713, %v3592
      %v3715 = vpop.permute.xlu0 %3714
      %3718 = vset.pattern.permute.xlu0 0
      %3719 = vperm.xlu0 %3718, %v3593
      %v3720 = vpop.permute.xlu0 %3719
      %3723 = vset.pattern.permute.xlu0 0
      %3724 = vperm.xlu0 %3723, %v3594
      %v3725 = vpop.permute.xlu0 %3724
      %3728 = vset.pattern.permute.xlu0 0
      %3729 = vperm.xlu0 %3728, %v3595
      %v3730 = vpop.permute.xlu0 %3729
      %3733 = vset.pattern.permute.xlu0 0
      %3734 = vperm.xlu0 %3733, %v3596
      %v3735 = vpop.permute.xlu0 %3734
      %3738 = vset.pattern.permute.xlu0 0
      %3739 = vperm.xlu0 %3738, %v3597
      %v3740 = vpop.permute.xlu0 %3739
      %3743 = vset.pattern.permute.xlu0 0
      %3744 = vperm.xlu0 %3743, %v3598
      %v3745 = vpop.permute.xlu0 %3744
      %3748 = vset.pattern.permute.xlu0 0
      %3749 = vperm.xlu0 %3748, %v3599
      %v3750 = vpop.permute.xlu0 %3749
      %3753 = vset.pattern.permute.xlu0 0
      %3754 = vperm.xlu0 %3753, %v3600
      %v3755 = vpop.permute.xlu0 %3754
      %3758 = vset.pattern.permute.xlu0 0
      %3759 = vperm.xlu0 %3758, %v3601
      %v3760 = vpop.permute.xlu0 %3759
      %v3762 = vmul.f32 %v3537, %v3605
      %v3763 = vmul.f32 %v3538, %v3610
      %v3764 = vmul.f32 %v3539, %v3615
      %v3765 = vmul.f32 %v3540, %v3620
      %v3766 = vmul.f32 %v3541, %v3625
      %v3767 = vmul.f32 %v3542, %v3630
      %v3768 = vmul.f32 %v3543, %v3635
      %v3769 = vmul.f32 %v3544, %v3640
      %v3770 = vmul.f32 %v3545, %v3645
      %v3771 = vmul.f32 %v3546, %v3650
      %v3772 = vmul.f32 %v3547, %v3655
      %v3773 = vmul.f32 %v3548, %v3660
      %v3774 = vmul.f32 %v3549, %v3665
      %v3775 = vmul.f32 %v3550, %v3670
      %v3776 = vmul.f32 %v3551, %v3675
      %v3777 = vmul.f32 %v3552, %v3680
      %v3778 = vmul.f32 %v3553, %v3685
      %v3779 = vmul.f32 %v3554, %v3690
      %v3780 = vmul.f32 %v3555, %v3695
      %v3781 = vmul.f32 %v3556, %v3700
      %v3782 = vmul.f32 %v3557, %v3705
      %v3783 = vmul.f32 %v3558, %v3710
      %v3784 = vmul.f32 %v3559, %v3715
      %v3785 = vmul.f32 %v3560, %v3720
      %v3786 = vmul.f32 %v3561, %v3725
      %v3787 = vmul.f32 %v3562, %v3730
      %v3788 = vmul.f32 %v3563, %v3735
      %v3789 = vmul.f32 %v3564, %v3740
      %v3790 = vmul.f32 %v3565, %v3745
      %v3791 = vmul.f32 %v3566, %v3750
      %v3792 = vmul.f32 %v3567, %v3755
      %v3793 = vmul.f32 %v3568, %v3760
      %s3794 = scalar_lea.vmem %s1, 20
      %v3795 = vld [vmem:[%s3794] sm:$0xf]
      %v3797 = vsel %vm333, %v3762, 0
      %v3800 = vsel %vm333, %v3763, 0
      %v3803 = vsel %vm333, %v3764, 0
      %v3806 = vsel %vm333, %v3765, 0
      %v3809 = vsel %vm333, %v3766, 0
      %v3812 = vsel %vm333, %v3767, 0
      %v3815 = vsel %vm333, %v3768, 0
      %v3818 = vsel %vm333, %v3769, 0
      %v3821 = vsel %vm333, %v3770, 0
      %v3824 = vsel %vm333, %v3771, 0
      %v3827 = vsel %vm333, %v3772, 0
      %v3830 = vsel %vm333, %v3773, 0
      %v3833 = vsel %vm333, %v3774, 0
      %v3836 = vsel %vm333, %v3775, 0
      %v3839 = vsel %vm333, %v3776, 0
      %v3842 = vsel %vm333, %v3777, 0
      %v3845 = vsel %vm333, %v3778, 0
      %v3848 = vsel %vm333, %v3779, 0
      %v3851 = vsel %vm333, %v3780, 0
      %v3854 = vsel %vm333, %v3781, 0
      %v3857 = vsel %vm333, %v3782, 0
      %v3860 = vsel %vm333, %v3783, 0
      %v3863 = vsel %vm333, %v3784, 0
      %v3866 = vsel %vm333, %v3785, 0
      %v3869 = vsel %vm333, %v3786, 0
      %v3872 = vsel %vm333, %v3787, 0
      %v3875 = vsel %vm333, %v3788, 0
      %v3878 = vsel %vm333, %v3789, 0
      %v3881 = vsel %vm333, %v3790, 0
      %v3884 = vsel %vm333, %v3791, 0
      %v3887 = vsel %vm333, %v3792, 0
      %v3890 = vsel %vm333, %v3793, 0
      %v3893 = vsel %vm1139, %v3795, 0
      %3895 = vmatprep.subr.mxu0 0.0
      %3896 = vmatpush1.msra.mxu0 0.0
      %3897 = vmatprep.subr.mxu0 0.0
      %3898 = vmatpush1.msra.mxu0 0.0
      %3899 = vmatprep.subr.mxu0 0.0
      %3900 = vmatpush1.msra.mxu0 0.0
      %3901 = vmatprep.subr.mxu0 0.0
      %3902 = vmatpush1.msra.mxu0 0.0
      %3903 = vmatprep.subr.mxu0 0.0
      %3904 = vmatpush1.msra.mxu0 0.0
      %3905 = vmatprep.subr.mxu0 0.0
      %3906 = vmatpush1.msra.mxu0 0.0
      %3907 = vmatprep.subr.mxu0 0.0
      %3908 = vmatpush1.msra.mxu0 0.0
      %3909 = vmatprep.subr.mxu0 0.0
      %3910 = vmatpush1.msra.mxu0 0.0
      %3911 = vmatprep.subr.mxu0 0.0
      %3912 = vmatpush1.msra.mxu0 0.0
      %3913 = vmatprep.subr.mxu0 0.0
      %3914 = vmatpush1.msra.mxu0 0.0
      %3915 = vmatprep.subr.mxu0 0.0
      %3916 = vmatpush1.msra.mxu0 0.0
      %3917 = vmatprep.subr.mxu0 0.0
      %3918 = vmatpush1.msra.mxu0 0.0
      %3919 = vmatprep.subr.mxu0 0.0
      %3920 = vmatpush1.msra.mxu0 0.0
      %3921 = vmatprep.subr.mxu0 0.0
      %3922 = vmatpush1.msra.mxu0 0.0
      %3923 = vmatprep.subr.mxu0 0.0
      %3924 = vmatpush1.msra.mxu0 0.0
      %3925 = vmatprep.subr.mxu0 0.0
      %3926 = vmatpush1.msra.mxu0 %v3893
      %3927 = vmatprep.subr.mxu0 0.0
      %3928 = vmatpush2.msra.mxu0 0.0
      %3929 = vmatprep.subr.mxu0 0.0
      %3930 = vmatpush2.msra.mxu0 0.0
      %3931 = vmatprep.subr.mxu0 0.0
      %3932 = vmatpush2.msra.mxu0 0.0
      %3933 = vmatprep.subr.mxu0 0.0
      %3934 = vmatpush2.msra.mxu0 0.0
      %3935 = vmatprep.subr.mxu0 0.0
      %3936 = vmatpush2.msra.mxu0 0.0
      %3937 = vmatprep.subr.mxu0 0.0
      %3938 = vmatpush2.msra.mxu0 0.0
      %3939 = vmatprep.subr.mxu0 0.0
      %3940 = vmatpush2.msra.mxu0 0.0
      %3941 = vmatprep.subr.mxu0 0.0
      %3942 = vmatpush2.msra.mxu0 0.0
      %3943 = vmatprep.subr.mxu0 0.0
      %3944 = vmatpush2.msra.mxu0 0.0
      %3945 = vmatprep.subr.mxu0 0.0
      %3946 = vmatpush2.msra.mxu0 0.0
      %3947 = vmatprep.subr.mxu0 0.0
      %3948 = vmatpush2.msra.mxu0 0.0
      %3949 = vmatprep.subr.mxu0 0.0
      %3950 = vmatpush2.msra.mxu0 0.0
      %3951 = vmatprep.subr.mxu0 0.0
      %3952 = vmatpush2.msra.mxu0 0.0
      %3953 = vmatprep.subr.mxu0 0.0
      %3954 = vmatpush2.msra.mxu0 0.0
      %3955 = vmatprep.subr.mxu0 0.0
      %3956 = vmatpush2.msra.mxu0 0.0
      %3957 = vmatprep.subr.mxu0 0.0
      %3958 = vmatpush2.msra.mxu0 0.0
      %3959 = vmatprep.mubr.f32.mxu0 0.0
      %3960 = vmatmul.mubr.f32.gmra.mxu0 %v3797
      %v3961 = vpop.f32.mrf.mxu0
      %v3962 = vadd.f32 0.0, %v3961
      %v3963 = vpop.f32.mrf.mxu0
      %3964 = vmatprep.mubr.f32.mxu0 0.0
      %3965 = vmatmul.mubr.f32.gmra.mxu0 %v3800
      %v3966 = vpop.f32.mrf.mxu0
      %v3967 = vadd.f32 0.0, %v3966
      %v3968 = vpop.f32.mrf.mxu0
      %3969 = vmatprep.mubr.f32.mxu0 0.0
      %3970 = vmatmul.mubr.f32.gmra.mxu0 %v3803
      %v3971 = vpop.f32.mrf.mxu0
      %v3972 = vadd.f32 0.0, %v3971
      %v3973 = vpop.f32.mrf.mxu0
      %3974 = vmatprep.mubr.f32.mxu0 0.0
      %3975 = vmatmul.mubr.f32.gmra.mxu0 %v3806
      %v3976 = vpop.f32.mrf.mxu0
      %v3977 = vadd.f32 0.0, %v3976
      %v3978 = vpop.f32.mrf.mxu0
      %3979 = vmatprep.mubr.f32.mxu0 0.0
      %3980 = vmatmul.mubr.f32.gmra.mxu0 %v3809
      %v3981 = vpop.f32.mrf.mxu0
      %v3982 = vadd.f32 0.0, %v3981
      %v3983 = vpop.f32.mrf.mxu0
      %3984 = vmatprep.mubr.f32.mxu0 0.0
      %3985 = vmatmul.mubr.f32.gmra.mxu0 %v3812
      %v3986 = vpop.f32.mrf.mxu0
      %v3987 = vadd.f32 0.0, %v3986
      %v3988 = vpop.f32.mrf.mxu0
      %3989 = vmatprep.mubr.f32.mxu0 0.0
      %3990 = vmatmul.mubr.f32.gmra.mxu0 %v3815
      %v3991 = vpop.f32.mrf.mxu0
      %v3992 = vadd.f32 0.0, %v3991
      %v3993 = vpop.f32.mrf.mxu0
      %3994 = vmatprep.mubr.f32.mxu0 0.0
      %3995 = vmatmul.mubr.f32.gmra.mxu0 %v3818
      %v3996 = vpop.f32.mrf.mxu0
      %v3997 = vadd.f32 0.0, %v3996
      %v3998 = vpop.f32.mrf.mxu0
      %3999 = vmatprep.mubr.f32.mxu0 0.0
      %4000 = vmatmul.mubr.f32.gmra.mxu0 %v3821
      %v4001 = vpop.f32.mrf.mxu0
      %v4002 = vadd.f32 0.0, %v4001
      %v4003 = vpop.f32.mrf.mxu0
      %4004 = vmatprep.mubr.f32.mxu0 0.0
      %4005 = vmatmul.mubr.f32.gmra.mxu0 %v3824
      %v4006 = vpop.f32.mrf.mxu0
      %v4007 = vadd.f32 0.0, %v4006
      %v4008 = vpop.f32.mrf.mxu0
      %4009 = vmatprep.mubr.f32.mxu0 0.0
      %4010 = vmatmul.mubr.f32.gmra.mxu0 %v3827
      %v4011 = vpop.f32.mrf.mxu0
      %v4012 = vadd.f32 0.0, %v4011
      %v4013 = vpop.f32.mrf.mxu0
      %4014 = vmatprep.mubr.f32.mxu0 0.0
      %4015 = vmatmul.mubr.f32.gmra.mxu0 %v3830
      %v4016 = vpop.f32.mrf.mxu0
      %v4017 = vadd.f32 0.0, %v4016
      %v4018 = vpop.f32.mrf.mxu0
      %4019 = vmatprep.mubr.f32.mxu0 0.0
      %4020 = vmatmul.mubr.f32.gmra.mxu0 %v3833
      %v4021 = vpop.f32.mrf.mxu0
      %v4022 = vadd.f32 0.0, %v4021
      %v4023 = vpop.f32.mrf.mxu0
      %4024 = vmatprep.mubr.f32.mxu0 0.0
      %4025 = vmatmul.mubr.f32.gmra.mxu0 %v3836
      %v4026 = vpop.f32.mrf.mxu0
      %v4027 = vadd.f32 0.0, %v4026
      %v4028 = vpop.f32.mrf.mxu0
      %4029 = vmatprep.mubr.f32.mxu0 0.0
      %4030 = vmatmul.mubr.f32.gmra.mxu0 %v3839
      %v4031 = vpop.f32.mrf.mxu0
      %v4032 = vadd.f32 0.0, %v4031
      %v4033 = vpop.f32.mrf.mxu0
      %4034 = vmatprep.mubr.f32.mxu0 0.0
      %4035 = vmatmul.mubr.f32.gmra.mxu0 %v3842
      %v4036 = vpop.f32.mrf.mxu0
      %v4037 = vadd.f32 0.0, %v4036
      %v4038 = vpop.f32.mrf.mxu0
      %4039 = vmatprep.mubr.f32.mxu0 0.0
      %4040 = vmatmul.mubr.f32.gmra.mxu0 %v3845
      %v4041 = vpop.f32.mrf.mxu0
      %v4042 = vadd.f32 0.0, %v4041
      %v4043 = vpop.f32.mrf.mxu0
      %4044 = vmatprep.mubr.f32.mxu0 0.0
      %4045 = vmatmul.mubr.f32.gmra.mxu0 %v3848
      %v4046 = vpop.f32.mrf.mxu0
      %v4047 = vadd.f32 0.0, %v4046
      %v4048 = vpop.f32.mrf.mxu0
      %4049 = vmatprep.mubr.f32.mxu0 0.0
      %4050 = vmatmul.mubr.f32.gmra.mxu0 %v3851
      %v4051 = vpop.f32.mrf.mxu0
      %v4052 = vadd.f32 0.0, %v4051
      %v4053 = vpop.f32.mrf.mxu0
      %4054 = vmatprep.mubr.f32.mxu0 0.0
      %4055 = vmatmul.mubr.f32.gmra.mxu0 %v3854
      %v4056 = vpop.f32.mrf.mxu0
      %v4057 = vadd.f32 0.0, %v4056
      %v4058 = vpop.f32.mrf.mxu0
      %4059 = vmatprep.mubr.f32.mxu0 0.0
      %4060 = vmatmul.mubr.f32.gmra.mxu0 %v3857
      %v4061 = vpop.f32.mrf.mxu0
      %v4062 = vadd.f32 0.0, %v4061
      %v4063 = vpop.f32.mrf.mxu0
      %4064 = vmatprep.mubr.f32.mxu0 0.0
      %4065 = vmatmul.mubr.f32.gmra.mxu0 %v3860
      %v4066 = vpop.f32.mrf.mxu0
      %v4067 = vadd.f32 0.0, %v4066
      %v4068 = vpop.f32.mrf.mxu0
      %4069 = vmatprep.mubr.f32.mxu0 0.0
      %4070 = vmatmul.mubr.f32.gmra.mxu0 %v3863
      %v4071 = vpop.f32.mrf.mxu0
      %v4072 = vadd.f32 0.0, %v4071
      %v4073 = vpop.f32.mrf.mxu0
      %4074 = vmatprep.mubr.f32.mxu0 0.0
      %4075 = vmatmul.mubr.f32.gmra.mxu0 %v3866
      %v4076 = vpop.f32.mrf.mxu0
      %v4077 = vadd.f32 0.0, %v4076
      %v4078 = vpop.f32.mrf.mxu0
      %4079 = vmatprep.mubr.f32.mxu0 0.0
      %4080 = vmatmul.mubr.f32.gmra.mxu0 %v3869
      %v4081 = vpop.f32.mrf.mxu0
      %v4082 = vadd.f32 0.0, %v4081
      %v4083 = vpop.f32.mrf.mxu0
      %4084 = vmatprep.mubr.f32.mxu0 0.0
      %4085 = vmatmul.mubr.f32.gmra.mxu0 %v3872
      %v4086 = vpop.f32.mrf.mxu0
      %v4087 = vadd.f32 0.0, %v4086
      %v4088 = vpop.f32.mrf.mxu0
      %4089 = vmatprep.mubr.f32.mxu0 0.0
      %4090 = vmatmul.mubr.f32.gmra.mxu0 %v3875
      %v4091 = vpop.f32.mrf.mxu0
      %v4092 = vadd.f32 0.0, %v4091
      %v4093 = vpop.f32.mrf.mxu0
      %4094 = vmatprep.mubr.f32.mxu0 0.0
      %4095 = vmatmul.mubr.f32.gmra.mxu0 %v3878
      %v4096 = vpop.f32.mrf.mxu0
      %v4097 = vadd.f32 0.0, %v4096
      %v4098 = vpop.f32.mrf.mxu0
      %4099 = vmatprep.mubr.f32.mxu0 0.0
      %4100 = vmatmul.mubr.f32.gmra.mxu0 %v3881
      %v4101 = vpop.f32.mrf.mxu0
      %v4102 = vadd.f32 0.0, %v4101
      %v4103 = vpop.f32.mrf.mxu0
      %4104 = vmatprep.mubr.f32.mxu0 0.0
      %4105 = vmatmul.mubr.f32.gmra.mxu0 %v3884
      %v4106 = vpop.f32.mrf.mxu0
      %v4107 = vadd.f32 0.0, %v4106
      %v4108 = vpop.f32.mrf.mxu0
      %4109 = vmatprep.mubr.f32.mxu0 0.0
      %4110 = vmatmul.mubr.f32.gmra.mxu0 %v3887
      %v4111 = vpop.f32.mrf.mxu0
      %v4112 = vadd.f32 0.0, %v4111
      %v4113 = vpop.f32.mrf.mxu0
      %4114 = vmatprep.mubr.f32.mxu0 0.0
      %4115 = vmatmul.mubr.f32.gmra.mxu0 %v3890
      %v4116 = vpop.f32.mrf.mxu0
      %v4117 = vadd.f32 0.0, %v4116
      %v4118 = vpop.f32.mrf.mxu0
      %4119 = vdwg.mxu0
      %v4120 = vadd.f32 %v3505, %v3962
      %v4121 = vadd.f32 %v3506, %v3967
      %v4122 = vadd.f32 %v3507, %v3972
      %v4123 = vadd.f32 %v3508, %v3977
      %v4124 = vadd.f32 %v3509, %v3982
      %v4125 = vadd.f32 %v3510, %v3987
      %v4126 = vadd.f32 %v3511, %v3992
      %v4127 = vadd.f32 %v3512, %v3997
      %v4128 = vadd.f32 %v3513, %v4002
      %v4129 = vadd.f32 %v3514, %v4007
      %v4130 = vadd.f32 %v3515, %v4012
      %v4131 = vadd.f32 %v3516, %v4017
      %v4132 = vadd.f32 %v3517, %v4022
      %v4133 = vadd.f32 %v3518, %v4027
      %v4134 = vadd.f32 %v3519, %v4032
      %v4135 = vadd.f32 %v3520, %v4037
      %v4136 = vadd.f32 %v3521, %v4042
      %v4137 = vadd.f32 %v3522, %v4047
      %v4138 = vadd.f32 %v3523, %v4052
      %v4139 = vadd.f32 %v3524, %v4057
      %v4140 = vadd.f32 %v3525, %v4062
      %v4141 = vadd.f32 %v3526, %v4067
      %v4142 = vadd.f32 %v3527, %v4072
      %v4143 = vadd.f32 %v3528, %v4077
      %v4144 = vadd.f32 %v3529, %v4082
      %v4145 = vadd.f32 %v3530, %v4087
      %v4146 = vadd.f32 %v3531, %v4092
      %v4147 = vadd.f32 %v3532, %v4097
      %v4148 = vadd.f32 %v3533, %v4102
      %v4149 = vadd.f32 %v3534, %v4107
      %v4150 = vadd.f32 %v3535, %v4112
      %v4151 = vadd.f32 %v3536, %v4117
      %v4152 = vld [vmem:[#allocation2 + $0x8f] sm:$0xff]
      %v4153 = vld [vmem:[#allocation2 + $0x97] sm:$0xff]
      %v4154 = vld [vmem:[#allocation2 + $0x9f] sm:$0xff]
      %v4155 = vld [vmem:[#allocation2 + $0xa7] sm:$0xff]
      %v4156 = vld [vmem:[#allocation2 + $0xaf] sm:$0xff]
      %v4157 = vld [vmem:[#allocation2 + $0xb7] sm:$0xff]
      %v4158 = vld [vmem:[#allocation2 + $0xbf] sm:$0xff]
      %v4159 = vld [vmem:[#allocation2 + $0xc7] sm:$0xff]
      %v4160 = vld [vmem:[#allocation2 + $0xcf] sm:$0xff]
      %v4161 = vld [vmem:[#allocation2 + $0xd7] sm:$0xff]
      %v4162 = vld [vmem:[#allocation2 + $0xdf] sm:$0xff]
      %v4163 = vld [vmem:[#allocation2 + $0xe7] sm:$0xff]
      %v4164 = vld [vmem:[#allocation2 + $0xef] sm:$0xff]
      %v4165 = vld [vmem:[#allocation2 + $0xf7] sm:$0xff]
      %v4166 = vld [vmem:[#allocation2 + $0xff] sm:$0xff]
      %v4167 = vld [vmem:[#allocation2 + $0x107] sm:$0xff]
      %v4168 = vld [vmem:[#allocation2 + $0x10f] sm:$0xff]
      %v4169 = vld [vmem:[#allocation2 + $0x117] sm:$0xff]
      %v4170 = vld [vmem:[#allocation2 + $0x11f] sm:$0xff]
      %v4171 = vld [vmem:[#allocation2 + $0x127] sm:$0xff]
      %v4172 = vld [vmem:[#allocation2 + $0x12f] sm:$0xff]
      %v4173 = vld [vmem:[#allocation2 + $0x137] sm:$0xff]
      %v4174 = vld [vmem:[#allocation2 + $0x13f] sm:$0xff]
      %v4175 = vld [vmem:[#allocation2 + $0x147] sm:$0xff]
      %v4176 = vld [vmem:[#allocation2 + $0x14f] sm:$0xff]
      %v4177 = vld [vmem:[#allocation2 + $0x157] sm:$0xff]
      %v4178 = vld [vmem:[#allocation2 + $0x15f] sm:$0xff]
      %v4179 = vld [vmem:[#allocation2 + $0x167] sm:$0xff]
      %v4180 = vld [vmem:[#allocation2 + $0x16f] sm:$0xff]
      %v4181 = vld [vmem:[#allocation2 + $0x177] sm:$0xff]
      %v4182 = vld [vmem:[#allocation2 + $0x17f] sm:$0xff]
      %v4183 = vld [vmem:[#allocation2 + $0x187] sm:$0xff]
      %s4184 = scalar_lea.vmem %s8, 1536
      %v4185 = vld [vmem:[%s4184] sm:$0xff]
      %v4186 = vld [vmem:[%s4184 + $0x8] sm:$0xff]
      %v4187 = vld [vmem:[%s4184 + $0x10] sm:$0xff]
      %v4188 = vld [vmem:[%s4184 + $0x18] sm:$0xff]
      %v4189 = vld [vmem:[%s4184 + $0x20] sm:$0xff]
      %v4190 = vld [vmem:[%s4184 + $0x28] sm:$0xff]
      %v4191 = vld [vmem:[%s4184 + $0x30] sm:$0xff]
      %v4192 = vld [vmem:[%s4184 + $0x38] sm:$0xff]
      %v4193 = vld [vmem:[%s4184 + $0x40] sm:$0xff]
      %v4194 = vld [vmem:[%s4184 + $0x48] sm:$0xff]
      %v4195 = vld [vmem:[%s4184 + $0x50] sm:$0xff]
      %v4196 = vld [vmem:[%s4184 + $0x58] sm:$0xff]
      %v4197 = vld [vmem:[%s4184 + $0x60] sm:$0xff]
      %v4198 = vld [vmem:[%s4184 + $0x68] sm:$0xff]
      %v4199 = vld [vmem:[%s4184 + $0x70] sm:$0xff]
      %v4200 = vld [vmem:[%s4184 + $0x78] sm:$0xff]
      %v4201 = vld [vmem:[%s4184 + $0x80] sm:$0xff]
      %v4202 = vld [vmem:[%s4184 + $0x88] sm:$0xff]
      %v4203 = vld [vmem:[%s4184 + $0x90] sm:$0xff]
      %v4204 = vld [vmem:[%s4184 + $0x98] sm:$0xff]
      %v4205 = vld [vmem:[%s4184 + $0xa0] sm:$0xff]
      %v4206 = vld [vmem:[%s4184 + $0xa8] sm:$0xff]
      %v4207 = vld [vmem:[%s4184 + $0xb0] sm:$0xff]
      %v4208 = vld [vmem:[%s4184 + $0xb8] sm:$0xff]
      %v4209 = vld [vmem:[%s4184 + $0xc0] sm:$0xff]
      %v4210 = vld [vmem:[%s4184 + $0xc8] sm:$0xff]
      %v4211 = vld [vmem:[%s4184 + $0xd0] sm:$0xff]
      %v4212 = vld [vmem:[%s4184 + $0xd8] sm:$0xff]
      %v4213 = vld [vmem:[%s4184 + $0xe0] sm:$0xff]
      %v4214 = vld [vmem:[%s4184 + $0xe8] sm:$0xff]
      %v4215 = vld [vmem:[%s4184 + $0xf0] sm:$0xff]
      %v4216 = vld [vmem:[%s4184 + $0xf8] sm:$0xff]
      %4218 = vset.pattern.permute.xlu0 0
      %4219 = vperm.xlu0 %4218, %v4185
      %v4220 = vpop.permute.xlu0 %4219
      %4223 = vset.pattern.permute.xlu0 0
      %4224 = vperm.xlu0 %4223, %v4186
      %v4225 = vpop.permute.xlu0 %4224
      %4228 = vset.pattern.permute.xlu0 0
      %4229 = vperm.xlu0 %4228, %v4187
      %v4230 = vpop.permute.xlu0 %4229
      %4233 = vset.pattern.permute.xlu0 0
      %4234 = vperm.xlu0 %4233, %v4188
      %v4235 = vpop.permute.xlu0 %4234
      %4238 = vset.pattern.permute.xlu0 0
      %4239 = vperm.xlu0 %4238, %v4189
      %v4240 = vpop.permute.xlu0 %4239
      %4243 = vset.pattern.permute.xlu0 0
      %4244 = vperm.xlu0 %4243, %v4190
      %v4245 = vpop.permute.xlu0 %4244
      %4248 = vset.pattern.permute.xlu0 0
      %4249 = vperm.xlu0 %4248, %v4191
      %v4250 = vpop.permute.xlu0 %4249
      %4253 = vset.pattern.permute.xlu0 0
      %4254 = vperm.xlu0 %4253, %v4192
      %v4255 = vpop.permute.xlu0 %4254
      %4258 = vset.pattern.permute.xlu0 0
      %4259 = vperm.xlu0 %4258, %v4193
      %v4260 = vpop.permute.xlu0 %4259
      %4263 = vset.pattern.permute.xlu0 0
      %4264 = vperm.xlu0 %4263, %v4194
      %v4265 = vpop.permute.xlu0 %4264
      %4268 = vset.pattern.permute.xlu0 0
      %4269 = vperm.xlu0 %4268, %v4195
      %v4270 = vpop.permute.xlu0 %4269
      %4273 = vset.pattern.permute.xlu0 0
      %4274 = vperm.xlu0 %4273, %v4196
      %v4275 = vpop.permute.xlu0 %4274
      %4278 = vset.pattern.permute.xlu0 0
      %4279 = vperm.xlu0 %4278, %v4197
      %v4280 = vpop.permute.xlu0 %4279
      %4283 = vset.pattern.permute.xlu0 0
      %4284 = vperm.xlu0 %4283, %v4198
      %v4285 = vpop.permute.xlu0 %4284
      %4288 = vset.pattern.permute.xlu0 0
      %4289 = vperm.xlu0 %4288, %v4199
      %v4290 = vpop.permute.xlu0 %4289
      %4293 = vset.pattern.permute.xlu0 0
      %4294 = vperm.xlu0 %4293, %v4200
      %v4295 = vpop.permute.xlu0 %4294
      %4298 = vset.pattern.permute.xlu0 0
      %4299 = vperm.xlu0 %4298, %v4201
      %v4300 = vpop.permute.xlu0 %4299
      %4303 = vset.pattern.permute.xlu0 0
      %4304 = vperm.xlu0 %4303, %v4202
      %v4305 = vpop.permute.xlu0 %4304
      %4308 = vset.pattern.permute.xlu0 0
      %4309 = vperm.xlu0 %4308, %v4203
      %v4310 = vpop.permute.xlu0 %4309
      %4313 = vset.pattern.permute.xlu0 0
      %4314 = vperm.xlu0 %4313, %v4204
      %v4315 = vpop.permute.xlu0 %4314
      %4318 = vset.pattern.permute.xlu0 0
      %4319 = vperm.xlu0 %4318, %v4205
      %v4320 = vpop.permute.xlu0 %4319
      %4323 = vset.pattern.permute.xlu0 0
      %4324 = vperm.xlu0 %4323, %v4206
      %v4325 = vpop.permute.xlu0 %4324
      %4328 = vset.pattern.permute.xlu0 0
      %4329 = vperm.xlu0 %4328, %v4207
      %v4330 = vpop.permute.xlu0 %4329
      %4333 = vset.pattern.permute.xlu0 0
      %4334 = vperm.xlu0 %4333, %v4208
      %v4335 = vpop.permute.xlu0 %4334
      %4338 = vset.pattern.permute.xlu0 0
      %4339 = vperm.xlu0 %4338, %v4209
      %v4340 = vpop.permute.xlu0 %4339
      %4343 = vset.pattern.permute.xlu0 0
      %4344 = vperm.xlu0 %4343, %v4210
      %v4345 = vpop.permute.xlu0 %4344
      %4348 = vset.pattern.permute.xlu0 0
      %4349 = vperm.xlu0 %4348, %v4211
      %v4350 = vpop.permute.xlu0 %4349
      %4353 = vset.pattern.permute.xlu0 0
      %4354 = vperm.xlu0 %4353, %v4212
      %v4355 = vpop.permute.xlu0 %4354
      %4358 = vset.pattern.permute.xlu0 0
      %4359 = vperm.xlu0 %4358, %v4213
      %v4360 = vpop.permute.xlu0 %4359
      %4363 = vset.pattern.permute.xlu0 0
      %4364 = vperm.xlu0 %4363, %v4214
      %v4365 = vpop.permute.xlu0 %4364
      %4368 = vset.pattern.permute.xlu0 0
      %4369 = vperm.xlu0 %4368, %v4215
      %v4370 = vpop.permute.xlu0 %4369
      %4373 = vset.pattern.permute.xlu0 0
      %4374 = vperm.xlu0 %4373, %v4216
      %v4375 = vpop.permute.xlu0 %4374
      %v4377 = vmul.f32 %v4152, %v4220
      %v4378 = vmul.f32 %v4153, %v4225
      %v4379 = vmul.f32 %v4154, %v4230
      %v4380 = vmul.f32 %v4155, %v4235
      %v4381 = vmul.f32 %v4156, %v4240
      %v4382 = vmul.f32 %v4157, %v4245
      %v4383 = vmul.f32 %v4158, %v4250
      %v4384 = vmul.f32 %v4159, %v4255
      %v4385 = vmul.f32 %v4160, %v4260
      %v4386 = vmul.f32 %v4161, %v4265
      %v4387 = vmul.f32 %v4162, %v4270
      %v4388 = vmul.f32 %v4163, %v4275
      %v4389 = vmul.f32 %v4164, %v4280
      %v4390 = vmul.f32 %v4165, %v4285
      %v4391 = vmul.f32 %v4166, %v4290
      %v4392 = vmul.f32 %v4167, %v4295
      %v4393 = vmul.f32 %v4168, %v4300
      %v4394 = vmul.f32 %v4169, %v4305
      %v4395 = vmul.f32 %v4170, %v4310
      %v4396 = vmul.f32 %v4171, %v4315
      %v4397 = vmul.f32 %v4172, %v4320
      %v4398 = vmul.f32 %v4173, %v4325
      %v4399 = vmul.f32 %v4174, %v4330
      %v4400 = vmul.f32 %v4175, %v4335
      %v4401 = vmul.f32 %v4176, %v4340
      %v4402 = vmul.f32 %v4177, %v4345
      %v4403 = vmul.f32 %v4178, %v4350
      %v4404 = vmul.f32 %v4179, %v4355
      %v4405 = vmul.f32 %v4180, %v4360
      %v4406 = vmul.f32 %v4181, %v4365
      %v4407 = vmul.f32 %v4182, %v4370
      %v4408 = vmul.f32 %v4183, %v4375
      %s4409 = scalar_lea.vmem %s1, 24
      %v4410 = vld [vmem:[%s4409] sm:$0xf]
      %v4412 = vsel %vm333, %v4377, 0
      %v4415 = vsel %vm333, %v4378, 0
      %v4418 = vsel %vm333, %v4379, 0
      %v4421 = vsel %vm333, %v4380, 0
      %v4424 = vsel %vm333, %v4381, 0
      %v4427 = vsel %vm333, %v4382, 0
      %v4430 = vsel %vm333, %v4383, 0
      %v4433 = vsel %vm333, %v4384, 0
      %v4436 = vsel %vm333, %v4385, 0
      %v4439 = vsel %vm333, %v4386, 0
      %v4442 = vsel %vm333, %v4387, 0
      %v4445 = vsel %vm333, %v4388, 0
      %v4448 = vsel %vm333, %v4389, 0
      %v4451 = vsel %vm333, %v4390, 0
      %v4454 = vsel %vm333, %v4391, 0
      %v4457 = vsel %vm333, %v4392, 0
      %v4460 = vsel %vm333, %v4393, 0
      %v4463 = vsel %vm333, %v4394, 0
      %v4466 = vsel %vm333, %v4395, 0
      %v4469 = vsel %vm333, %v4396, 0
      %v4472 = vsel %vm333, %v4397, 0
      %v4475 = vsel %vm333, %v4398, 0
      %v4478 = vsel %vm333, %v4399, 0
      %v4481 = vsel %vm333, %v4400, 0
      %v4484 = vsel %vm333, %v4401, 0
      %v4487 = vsel %vm333, %v4402, 0
      %v4490 = vsel %vm333, %v4403, 0
      %v4493 = vsel %vm333, %v4404, 0
      %v4496 = vsel %vm333, %v4405, 0
      %v4499 = vsel %vm333, %v4406, 0
      %v4502 = vsel %vm333, %v4407, 0
      %v4505 = vsel %vm333, %v4408, 0
      %v4508 = vsel %vm1139, %v4410, 0
      %4510 = vmatprep.subr.mxu0 0.0
      %4511 = vmatpush1.msra.mxu0 0.0
      %4512 = vmatprep.subr.mxu0 0.0
      %4513 = vmatpush1.msra.mxu0 0.0
      %4514 = vmatprep.subr.mxu0 0.0
      %4515 = vmatpush1.msra.mxu0 0.0
      %4516 = vmatprep.subr.mxu0 0.0
      %4517 = vmatpush1.msra.mxu0 0.0
      %4518 = vmatprep.subr.mxu0 0.0
      %4519 = vmatpush1.msra.mxu0 0.0
      %4520 = vmatprep.subr.mxu0 0.0
      %4521 = vmatpush1.msra.mxu0 0.0
      %4522 = vmatprep.subr.mxu0 0.0
      %4523 = vmatpush1.msra.mxu0 0.0
      %4524 = vmatprep.subr.mxu0 0.0
      %4525 = vmatpush1.msra.mxu0 0.0
      %4526 = vmatprep.subr.mxu0 0.0
      %4527 = vmatpush1.msra.mxu0 0.0
      %4528 = vmatprep.subr.mxu0 0.0
      %4529 = vmatpush1.msra.mxu0 0.0
      %4530 = vmatprep.subr.mxu0 0.0
      %4531 = vmatpush1.msra.mxu0 0.0
      %4532 = vmatprep.subr.mxu0 0.0
      %4533 = vmatpush1.msra.mxu0 0.0
      %4534 = vmatprep.subr.mxu0 0.0
      %4535 = vmatpush1.msra.mxu0 0.0
      %4536 = vmatprep.subr.mxu0 0.0
      %4537 = vmatpush1.msra.mxu0 0.0
      %4538 = vmatprep.subr.mxu0 0.0
      %4539 = vmatpush1.msra.mxu0 0.0
      %4540 = vmatprep.subr.mxu0 0.0
      %4541 = vmatpush1.msra.mxu0 %v4508
      %4542 = vmatprep.subr.mxu0 0.0
      %4543 = vmatpush2.msra.mxu0 0.0
      %4544 = vmatprep.subr.mxu0 0.0
      %4545 = vmatpush2.msra.mxu0 0.0
      %4546 = vmatprep.subr.mxu0 0.0
      %4547 = vmatpush2.msra.mxu0 0.0
      %4548 = vmatprep.subr.mxu0 0.0
      %4549 = vmatpush2.msra.mxu0 0.0
      %4550 = vmatprep.subr.mxu0 0.0
      %4551 = vmatpush2.msra.mxu0 0.0
      %4552 = vmatprep.subr.mxu0 0.0
      %4553 = vmatpush2.msra.mxu0 0.0
      %4554 = vmatprep.subr.mxu0 0.0
      %4555 = vmatpush2.msra.mxu0 0.0
      %4556 = vmatprep.subr.mxu0 0.0
      %4557 = vmatpush2.msra.mxu0 0.0
      %4558 = vmatprep.subr.mxu0 0.0
      %4559 = vmatpush2.msra.mxu0 0.0
      %4560 = vmatprep.subr.mxu0 0.0
      %4561 = vmatpush2.msra.mxu0 0.0
      %4562 = vmatprep.subr.mxu0 0.0
      %4563 = vmatpush2.msra.mxu0 0.0
      %4564 = vmatprep.subr.mxu0 0.0
      %4565 = vmatpush2.msra.mxu0 0.0
      %4566 = vmatprep.subr.mxu0 0.0
      %4567 = vmatpush2.msra.mxu0 0.0
      %4568 = vmatprep.subr.mxu0 0.0
      %4569 = vmatpush2.msra.mxu0 0.0
      %4570 = vmatprep.subr.mxu0 0.0
      %4571 = vmatpush2.msra.mxu0 0.0
      %4572 = vmatprep.subr.mxu0 0.0
      %4573 = vmatpush2.msra.mxu0 0.0
      %4574 = vmatprep.mubr.f32.mxu0 0.0
      %4575 = vmatmul.mubr.f32.gmra.mxu0 %v4412
      %v4576 = vpop.f32.mrf.mxu0
      %v4577 = vadd.f32 0.0, %v4576
      %v4578 = vpop.f32.mrf.mxu0
      %4579 = vmatprep.mubr.f32.mxu0 0.0
      %4580 = vmatmul.mubr.f32.gmra.mxu0 %v4415
      %v4581 = vpop.f32.mrf.mxu0
      %v4582 = vadd.f32 0.0, %v4581
      %v4583 = vpop.f32.mrf.mxu0
      %4584 = vmatprep.mubr.f32.mxu0 0.0
      %4585 = vmatmul.mubr.f32.gmra.mxu0 %v4418
      %v4586 = vpop.f32.mrf.mxu0
      %v4587 = vadd.f32 0.0, %v4586
      %v4588 = vpop.f32.mrf.mxu0
      %4589 = vmatprep.mubr.f32.mxu0 0.0
      %4590 = vmatmul.mubr.f32.gmra.mxu0 %v4421
      %v4591 = vpop.f32.mrf.mxu0
      %v4592 = vadd.f32 0.0, %v4591
      %v4593 = vpop.f32.mrf.mxu0
      %4594 = vmatprep.mubr.f32.mxu0 0.0
      %4595 = vmatmul.mubr.f32.gmra.mxu0 %v4424
      %v4596 = vpop.f32.mrf.mxu0
      %v4597 = vadd.f32 0.0, %v4596
      %v4598 = vpop.f32.mrf.mxu0
      %4599 = vmatprep.mubr.f32.mxu0 0.0
      %4600 = vmatmul.mubr.f32.gmra.mxu0 %v4427
      %v4601 = vpop.f32.mrf.mxu0
      %v4602 = vadd.f32 0.0, %v4601
      %v4603 = vpop.f32.mrf.mxu0
      %4604 = vmatprep.mubr.f32.mxu0 0.0
      %4605 = vmatmul.mubr.f32.gmra.mxu0 %v4430
      %v4606 = vpop.f32.mrf.mxu0
      %v4607 = vadd.f32 0.0, %v4606
      %v4608 = vpop.f32.mrf.mxu0
      %4609 = vmatprep.mubr.f32.mxu0 0.0
      %4610 = vmatmul.mubr.f32.gmra.mxu0 %v4433
      %v4611 = vpop.f32.mrf.mxu0
      %v4612 = vadd.f32 0.0, %v4611
      %v4613 = vpop.f32.mrf.mxu0
      %4614 = vmatprep.mubr.f32.mxu0 0.0
      %4615 = vmatmul.mubr.f32.gmra.mxu0 %v4436
      %v4616 = vpop.f32.mrf.mxu0
      %v4617 = vadd.f32 0.0, %v4616
      %v4618 = vpop.f32.mrf.mxu0
      %4619 = vmatprep.mubr.f32.mxu0 0.0
      %4620 = vmatmul.mubr.f32.gmra.mxu0 %v4439
      %v4621 = vpop.f32.mrf.mxu0
      %v4622 = vadd.f32 0.0, %v4621
      %v4623 = vpop.f32.mrf.mxu0
      %4624 = vmatprep.mubr.f32.mxu0 0.0
      %4625 = vmatmul.mubr.f32.gmra.mxu0 %v4442
      %v4626 = vpop.f32.mrf.mxu0
      %v4627 = vadd.f32 0.0, %v4626
      %v4628 = vpop.f32.mrf.mxu0
      %4629 = vmatprep.mubr.f32.mxu0 0.0
      %4630 = vmatmul.mubr.f32.gmra.mxu0 %v4445
      %v4631 = vpop.f32.mrf.mxu0
      %v4632 = vadd.f32 0.0, %v4631
      %v4633 = vpop.f32.mrf.mxu0
      %4634 = vmatprep.mubr.f32.mxu0 0.0
      %4635 = vmatmul.mubr.f32.gmra.mxu0 %v4448
      %v4636 = vpop.f32.mrf.mxu0
      %v4637 = vadd.f32 0.0, %v4636
      %v4638 = vpop.f32.mrf.mxu0
      %4639 = vmatprep.mubr.f32.mxu0 0.0
      %4640 = vmatmul.mubr.f32.gmra.mxu0 %v4451
      %v4641 = vpop.f32.mrf.mxu0
      %v4642 = vadd.f32 0.0, %v4641
      %v4643 = vpop.f32.mrf.mxu0
      %4644 = vmatprep.mubr.f32.mxu0 0.0
      %4645 = vmatmul.mubr.f32.gmra.mxu0 %v4454
      %v4646 = vpop.f32.mrf.mxu0
      %v4647 = vadd.f32 0.0, %v4646
      %v4648 = vpop.f32.mrf.mxu0
      %4649 = vmatprep.mubr.f32.mxu0 0.0
      %4650 = vmatmul.mubr.f32.gmra.mxu0 %v4457
      %v4651 = vpop.f32.mrf.mxu0
      %v4652 = vadd.f32 0.0, %v4651
      %v4653 = vpop.f32.mrf.mxu0
      %4654 = vmatprep.mubr.f32.mxu0 0.0
      %4655 = vmatmul.mubr.f32.gmra.mxu0 %v4460
      %v4656 = vpop.f32.mrf.mxu0
      %v4657 = vadd.f32 0.0, %v4656
      %v4658 = vpop.f32.mrf.mxu0
      %4659 = vmatprep.mubr.f32.mxu0 0.0
      %4660 = vmatmul.mubr.f32.gmra.mxu0 %v4463
      %v4661 = vpop.f32.mrf.mxu0
      %v4662 = vadd.f32 0.0, %v4661
      %v4663 = vpop.f32.mrf.mxu0
      %4664 = vmatprep.mubr.f32.mxu0 0.0
      %4665 = vmatmul.mubr.f32.gmra.mxu0 %v4466
      %v4666 = vpop.f32.mrf.mxu0
      %v4667 = vadd.f32 0.0, %v4666
      %v4668 = vpop.f32.mrf.mxu0
      %4669 = vmatprep.mubr.f32.mxu0 0.0
      %4670 = vmatmul.mubr.f32.gmra.mxu0 %v4469
      %v4671 = vpop.f32.mrf.mxu0
      %v4672 = vadd.f32 0.0, %v4671
      %v4673 = vpop.f32.mrf.mxu0
      %4674 = vmatprep.mubr.f32.mxu0 0.0
      %4675 = vmatmul.mubr.f32.gmra.mxu0 %v4472
      %v4676 = vpop.f32.mrf.mxu0
      %v4677 = vadd.f32 0.0, %v4676
      %v4678 = vpop.f32.mrf.mxu0
      %4679 = vmatprep.mubr.f32.mxu0 0.0
      %4680 = vmatmul.mubr.f32.gmra.mxu0 %v4475
      %v4681 = vpop.f32.mrf.mxu0
      %v4682 = vadd.f32 0.0, %v4681
      %v4683 = vpop.f32.mrf.mxu0
      %4684 = vmatprep.mubr.f32.mxu0 0.0
      %4685 = vmatmul.mubr.f32.gmra.mxu0 %v4478
      %v4686 = vpop.f32.mrf.mxu0
      %v4687 = vadd.f32 0.0, %v4686
      %v4688 = vpop.f32.mrf.mxu0
      %4689 = vmatprep.mubr.f32.mxu0 0.0
      %4690 = vmatmul.mubr.f32.gmra.mxu0 %v4481
      %v4691 = vpop.f32.mrf.mxu0
      %v4692 = vadd.f32 0.0, %v4691
      %v4693 = vpop.f32.mrf.mxu0
      %4694 = vmatprep.mubr.f32.mxu0 0.0
      %4695 = vmatmul.mubr.f32.gmra.mxu0 %v4484
      %v4696 = vpop.f32.mrf.mxu0
      %v4697 = vadd.f32 0.0, %v4696
      %v4698 = vpop.f32.mrf.mxu0
      %4699 = vmatprep.mubr.f32.mxu0 0.0
      %4700 = vmatmul.mubr.f32.gmra.mxu0 %v4487
      %v4701 = vpop.f32.mrf.mxu0
      %v4702 = vadd.f32 0.0, %v4701
      %v4703 = vpop.f32.mrf.mxu0
      %4704 = vmatprep.mubr.f32.mxu0 0.0
      %4705 = vmatmul.mubr.f32.gmra.mxu0 %v4490
      %v4706 = vpop.f32.mrf.mxu0
      %v4707 = vadd.f32 0.0, %v4706
      %v4708 = vpop.f32.mrf.mxu0
      %4709 = vmatprep.mubr.f32.mxu0 0.0
      %4710 = vmatmul.mubr.f32.gmra.mxu0 %v4493
      %v4711 = vpop.f32.mrf.mxu0
      %v4712 = vadd.f32 0.0, %v4711
      %v4713 = vpop.f32.mrf.mxu0
      %4714 = vmatprep.mubr.f32.mxu0 0.0
      %4715 = vmatmul.mubr.f32.gmra.mxu0 %v4496
      %v4716 = vpop.f32.mrf.mxu0
      %v4717 = vadd.f32 0.0, %v4716
      %v4718 = vpop.f32.mrf.mxu0
      %4719 = vmatprep.mubr.f32.mxu0 0.0
      %4720 = vmatmul.mubr.f32.gmra.mxu0 %v4499
      %v4721 = vpop.f32.mrf.mxu0
      %v4722 = vadd.f32 0.0, %v4721
      %v4723 = vpop.f32.mrf.mxu0
      %4724 = vmatprep.mubr.f32.mxu0 0.0
      %4725 = vmatmul.mubr.f32.gmra.mxu0 %v4502
      %v4726 = vpop.f32.mrf.mxu0
      %v4727 = vadd.f32 0.0, %v4726
      %v4728 = vpop.f32.mrf.mxu0
      %4729 = vmatprep.mubr.f32.mxu0 0.0
      %4730 = vmatmul.mubr.f32.gmra.mxu0 %v4505
      %v4731 = vpop.f32.mrf.mxu0
      %v4732 = vadd.f32 0.0, %v4731
      %v4733 = vpop.f32.mrf.mxu0
      %4734 = vdwg.mxu0
      %v4735 = vadd.f32 %v4120, %v4577
      %v4736 = vadd.f32 %v4121, %v4582
      %v4737 = vadd.f32 %v4122, %v4587
      %v4738 = vadd.f32 %v4123, %v4592
      %v4739 = vadd.f32 %v4124, %v4597
      %v4740 = vadd.f32 %v4125, %v4602
      %v4741 = vadd.f32 %v4126, %v4607
      %v4742 = vadd.f32 %v4127, %v4612
      %v4743 = vadd.f32 %v4128, %v4617
      %v4744 = vadd.f32 %v4129, %v4622
      %v4745 = vadd.f32 %v4130, %v4627
      %v4746 = vadd.f32 %v4131, %v4632
      %v4747 = vadd.f32 %v4132, %v4637
      %v4748 = vadd.f32 %v4133, %v4642
      %v4749 = vadd.f32 %v4134, %v4647
      %v4750 = vadd.f32 %v4135, %v4652
      %v4751 = vadd.f32 %v4136, %v4657
      %v4752 = vadd.f32 %v4137, %v4662
      %v4753 = vadd.f32 %v4138, %v4667
      %v4754 = vadd.f32 %v4139, %v4672
      %v4755 = vadd.f32 %v4140, %v4677
      %v4756 = vadd.f32 %v4141, %v4682
      %v4757 = vadd.f32 %v4142, %v4687
      %v4758 = vadd.f32 %v4143, %v4692
      %v4759 = vadd.f32 %v4144, %v4697
      %v4760 = vadd.f32 %v4145, %v4702
      %v4761 = vadd.f32 %v4146, %v4707
      %v4762 = vadd.f32 %v4147, %v4712
      %v4763 = vadd.f32 %v4148, %v4717
      %v4764 = vadd.f32 %v4149, %v4722
      %v4765 = vadd.f32 %v4150, %v4727
      %v4766 = vadd.f32 %v4151, %v4732
      %v4767 = vld [vmem:[#allocation2 + $0x90] sm:$0xff]
      %v4768 = vld [vmem:[#allocation2 + $0x98] sm:$0xff]
      %v4769 = vld [vmem:[#allocation2 + $0xa0] sm:$0xff]
      %v4770 = vld [vmem:[#allocation2 + $0xa8] sm:$0xff]
      %v4771 = vld [vmem:[#allocation2 + $0xb0] sm:$0xff]
      %v4772 = vld [vmem:[#allocation2 + $0xb8] sm:$0xff]
      %v4773 = vld [vmem:[#allocation2 + $0xc0] sm:$0xff]
      %v4774 = vld [vmem:[#allocation2 + $0xc8] sm:$0xff]
      %v4775 = vld [vmem:[#allocation2 + $0xd0] sm:$0xff]
      %v4776 = vld [vmem:[#allocation2 + $0xd8] sm:$0xff]
      %v4777 = vld [vmem:[#allocation2 + $0xe0] sm:$0xff]
      %v4778 = vld [vmem:[#allocation2 + $0xe8] sm:$0xff]
      %v4779 = vld [vmem:[#allocation2 + $0xf0] sm:$0xff]
      %v4780 = vld [vmem:[#allocation2 + $0xf8] sm:$0xff]
      %v4781 = vld [vmem:[#allocation2 + $0x100] sm:$0xff]
      %v4782 = vld [vmem:[#allocation2 + $0x108] sm:$0xff]
      %v4783 = vld [vmem:[#allocation2 + $0x110] sm:$0xff]
      %v4784 = vld [vmem:[#allocation2 + $0x118] sm:$0xff]
      %v4785 = vld [vmem:[#allocation2 + $0x120] sm:$0xff]
      %v4786 = vld [vmem:[#allocation2 + $0x128] sm:$0xff]
      %v4787 = vld [vmem:[#allocation2 + $0x130] sm:$0xff]
      %v4788 = vld [vmem:[#allocation2 + $0x138] sm:$0xff]
      %v4789 = vld [vmem:[#allocation2 + $0x140] sm:$0xff]
      %v4790 = vld [vmem:[#allocation2 + $0x148] sm:$0xff]
      %v4791 = vld [vmem:[#allocation2 + $0x150] sm:$0xff]
      %v4792 = vld [vmem:[#allocation2 + $0x158] sm:$0xff]
      %v4793 = vld [vmem:[#allocation2 + $0x160] sm:$0xff]
      %v4794 = vld [vmem:[#allocation2 + $0x168] sm:$0xff]
      %v4795 = vld [vmem:[#allocation2 + $0x170] sm:$0xff]
      %v4796 = vld [vmem:[#allocation2 + $0x178] sm:$0xff]
      %v4797 = vld [vmem:[#allocation2 + $0x180] sm:$0xff]
      %v4798 = vld [vmem:[#allocation2 + $0x188] sm:$0xff]
      %s4799 = scalar_lea.vmem %s8, 1792
      %v4800 = vld [vmem:[%s4799] sm:$0xff]
      %v4801 = vld [vmem:[%s4799 + $0x8] sm:$0xff]
      %v4802 = vld [vmem:[%s4799 + $0x10] sm:$0xff]
      %v4803 = vld [vmem:[%s4799 + $0x18] sm:$0xff]
      %v4804 = vld [vmem:[%s4799 + $0x20] sm:$0xff]
      %v4805 = vld [vmem:[%s4799 + $0x28] sm:$0xff]
      %v4806 = vld [vmem:[%s4799 + $0x30] sm:$0xff]
      %v4807 = vld [vmem:[%s4799 + $0x38] sm:$0xff]
      %v4808 = vld [vmem:[%s4799 + $0x40] sm:$0xff]
      %v4809 = vld [vmem:[%s4799 + $0x48] sm:$0xff]
      %v4810 = vld [vmem:[%s4799 + $0x50] sm:$0xff]
      %v4811 = vld [vmem:[%s4799 + $0x58] sm:$0xff]
      %v4812 = vld [vmem:[%s4799 + $0x60] sm:$0xff]
      %v4813 = vld [vmem:[%s4799 + $0x68] sm:$0xff]
      %v4814 = vld [vmem:[%s4799 + $0x70] sm:$0xff]
      %v4815 = vld [vmem:[%s4799 + $0x78] sm:$0xff]
      %v4816 = vld [vmem:[%s4799 + $0x80] sm:$0xff]
      %v4817 = vld [vmem:[%s4799 + $0x88] sm:$0xff]
      %v4818 = vld [vmem:[%s4799 + $0x90] sm:$0xff]
      %v4819 = vld [vmem:[%s4799 + $0x98] sm:$0xff]
      %v4820 = vld [vmem:[%s4799 + $0xa0] sm:$0xff]
      %v4821 = vld [vmem:[%s4799 + $0xa8] sm:$0xff]
      %v4822 = vld [vmem:[%s4799 + $0xb0] sm:$0xff]
      %v4823 = vld [vmem:[%s4799 + $0xb8] sm:$0xff]
      %v4824 = vld [vmem:[%s4799 + $0xc0] sm:$0xff]
      %v4825 = vld [vmem:[%s4799 + $0xc8] sm:$0xff]
      %v4826 = vld [vmem:[%s4799 + $0xd0] sm:$0xff]
      %v4827 = vld [vmem:[%s4799 + $0xd8] sm:$0xff]
      %v4828 = vld [vmem:[%s4799 + $0xe0] sm:$0xff]
      %v4829 = vld [vmem:[%s4799 + $0xe8] sm:$0xff]
      %v4830 = vld [vmem:[%s4799 + $0xf0] sm:$0xff]
      %v4831 = vld [vmem:[%s4799 + $0xf8] sm:$0xff]
      %4833 = vset.pattern.permute.xlu0 0
      %4834 = vperm.xlu0 %4833, %v4800
      %v4835 = vpop.permute.xlu0 %4834
      %4838 = vset.pattern.permute.xlu0 0
      %4839 = vperm.xlu0 %4838, %v4801
      %v4840 = vpop.permute.xlu0 %4839
      %4843 = vset.pattern.permute.xlu0 0
      %4844 = vperm.xlu0 %4843, %v4802
      %v4845 = vpop.permute.xlu0 %4844
      %4848 = vset.pattern.permute.xlu0 0
      %4849 = vperm.xlu0 %4848, %v4803
      %v4850 = vpop.permute.xlu0 %4849
      %4853 = vset.pattern.permute.xlu0 0
      %4854 = vperm.xlu0 %4853, %v4804
      %v4855 = vpop.permute.xlu0 %4854
      %4858 = vset.pattern.permute.xlu0 0
      %4859 = vperm.xlu0 %4858, %v4805
      %v4860 = vpop.permute.xlu0 %4859
      %4863 = vset.pattern.permute.xlu0 0
      %4864 = vperm.xlu0 %4863, %v4806
      %v4865 = vpop.permute.xlu0 %4864
      %4868 = vset.pattern.permute.xlu0 0
      %4869 = vperm.xlu0 %4868, %v4807
      %v4870 = vpop.permute.xlu0 %4869
      %4873 = vset.pattern.permute.xlu0 0
      %4874 = vperm.xlu0 %4873, %v4808
      %v4875 = vpop.permute.xlu0 %4874
      %4878 = vset.pattern.permute.xlu0 0
      %4879 = vperm.xlu0 %4878, %v4809
      %v4880 = vpop.permute.xlu0 %4879
      %4883 = vset.pattern.permute.xlu0 0
      %4884 = vperm.xlu0 %4883, %v4810
      %v4885 = vpop.permute.xlu0 %4884
      %4888 = vset.pattern.permute.xlu0 0
      %4889 = vperm.xlu0 %4888, %v4811
      %v4890 = vpop.permute.xlu0 %4889
      %4893 = vset.pattern.permute.xlu0 0
      %4894 = vperm.xlu0 %4893, %v4812
      %v4895 = vpop.permute.xlu0 %4894
      %4898 = vset.pattern.permute.xlu0 0
      %4899 = vperm.xlu0 %4898, %v4813
      %v4900 = vpop.permute.xlu0 %4899
      %4903 = vset.pattern.permute.xlu0 0
      %4904 = vperm.xlu0 %4903, %v4814
      %v4905 = vpop.permute.xlu0 %4904
      %4908 = vset.pattern.permute.xlu0 0
      %4909 = vperm.xlu0 %4908, %v4815
      %v4910 = vpop.permute.xlu0 %4909
      %4913 = vset.pattern.permute.xlu0 0
      %4914 = vperm.xlu0 %4913, %v4816
      %v4915 = vpop.permute.xlu0 %4914
      %4918 = vset.pattern.permute.xlu0 0
      %4919 = vperm.xlu0 %4918, %v4817
      %v4920 = vpop.permute.xlu0 %4919
      %4923 = vset.pattern.permute.xlu0 0
      %4924 = vperm.xlu0 %4923, %v4818
      %v4925 = vpop.permute.xlu0 %4924
      %4928 = vset.pattern.permute.xlu0 0
      %4929 = vperm.xlu0 %4928, %v4819
      %v4930 = vpop.permute.xlu0 %4929
      %4933 = vset.pattern.permute.xlu0 0
      %4934 = vperm.xlu0 %4933, %v4820
      %v4935 = vpop.permute.xlu0 %4934
      %4938 = vset.pattern.permute.xlu0 0
      %4939 = vperm.xlu0 %4938, %v4821
      %v4940 = vpop.permute.xlu0 %4939
      %4943 = vset.pattern.permute.xlu0 0
      %4944 = vperm.xlu0 %4943, %v4822
      %v4945 = vpop.permute.xlu0 %4944
      %4948 = vset.pattern.permute.xlu0 0
      %4949 = vperm.xlu0 %4948, %v4823
      %v4950 = vpop.permute.xlu0 %4949
      %4953 = vset.pattern.permute.xlu0 0
      %4954 = vperm.xlu0 %4953, %v4824
      %v4955 = vpop.permute.xlu0 %4954
      %4958 = vset.pattern.permute.xlu0 0
      %4959 = vperm.xlu0 %4958, %v4825
      %v4960 = vpop.permute.xlu0 %4959
      %4963 = vset.pattern.permute.xlu0 0
      %4964 = vperm.xlu0 %4963, %v4826
      %v4965 = vpop.permute.xlu0 %4964
      %4968 = vset.pattern.permute.xlu0 0
      %4969 = vperm.xlu0 %4968, %v4827
      %v4970 = vpop.permute.xlu0 %4969
      %4973 = vset.pattern.permute.xlu0 0
      %4974 = vperm.xlu0 %4973, %v4828
      %v4975 = vpop.permute.xlu0 %4974
      %4978 = vset.pattern.permute.xlu0 0
      %4979 = vperm.xlu0 %4978, %v4829
      %v4980 = vpop.permute.xlu0 %4979
      %4983 = vset.pattern.permute.xlu0 0
      %4984 = vperm.xlu0 %4983, %v4830
      %v4985 = vpop.permute.xlu0 %4984
      %4988 = vset.pattern.permute.xlu0 0
      %4989 = vperm.xlu0 %4988, %v4831
      %v4990 = vpop.permute.xlu0 %4989
      %v4992 = vmul.f32 %v4767, %v4835
      %v4993 = vmul.f32 %v4768, %v4840
      %v4994 = vmul.f32 %v4769, %v4845
      %v4995 = vmul.f32 %v4770, %v4850
      %v4996 = vmul.f32 %v4771, %v4855
      %v4997 = vmul.f32 %v4772, %v4860
      %v4998 = vmul.f32 %v4773, %v4865
      %v4999 = vmul.f32 %v4774, %v4870
      %v5000 = vmul.f32 %v4775, %v4875
      %v5001 = vmul.f32 %v4776, %v4880
      %v5002 = vmul.f32 %v4777, %v4885
      %v5003 = vmul.f32 %v4778, %v4890
      %v5004 = vmul.f32 %v4779, %v4895
      %v5005 = vmul.f32 %v4780, %v4900
      %v5006 = vmul.f32 %v4781, %v4905
      %v5007 = vmul.f32 %v4782, %v4910
      %v5008 = vmul.f32 %v4783, %v4915
      %v5009 = vmul.f32 %v4784, %v4920
      %v5010 = vmul.f32 %v4785, %v4925
      %v5011 = vmul.f32 %v4786, %v4930
      %v5012 = vmul.f32 %v4787, %v4935
      %v5013 = vmul.f32 %v4788, %v4940
      %v5014 = vmul.f32 %v4789, %v4945
      %v5015 = vmul.f32 %v4790, %v4950
      %v5016 = vmul.f32 %v4791, %v4955
      %v5017 = vmul.f32 %v4792, %v4960
      %v5018 = vmul.f32 %v4793, %v4965
      %v5019 = vmul.f32 %v4794, %v4970
      %v5020 = vmul.f32 %v4795, %v4975
      %v5021 = vmul.f32 %v4796, %v4980
      %v5022 = vmul.f32 %v4797, %v4985
      %v5023 = vmul.f32 %v4798, %v4990
      %s5024 = scalar_lea.vmem %s1, 28
      %v5025 = vld [vmem:[%s5024] sm:$0xf]
      %v5027 = vsel %vm333, %v4992, 0
      %v5030 = vsel %vm333, %v4993, 0
      %v5033 = vsel %vm333, %v4994, 0
      %v5036 = vsel %vm333, %v4995, 0
      %v5039 = vsel %vm333, %v4996, 0
      %v5042 = vsel %vm333, %v4997, 0
      %v5045 = vsel %vm333, %v4998, 0
      %v5048 = vsel %vm333, %v4999, 0
      %v5051 = vsel %vm333, %v5000, 0
      %v5054 = vsel %vm333, %v5001, 0
      %v5057 = vsel %vm333, %v5002, 0
      %v5060 = vsel %vm333, %v5003, 0
      %v5063 = vsel %vm333, %v5004, 0
      %v5066 = vsel %vm333, %v5005, 0
      %v5069 = vsel %vm333, %v5006, 0
      %v5072 = vsel %vm333, %v5007, 0
      %v5075 = vsel %vm333, %v5008, 0
      %v5078 = vsel %vm333, %v5009, 0
      %v5081 = vsel %vm333, %v5010, 0
      %v5084 = vsel %vm333, %v5011, 0
      %v5087 = vsel %vm333, %v5012, 0
      %v5090 = vsel %vm333, %v5013, 0
      %v5093 = vsel %vm333, %v5014, 0
      %v5096 = vsel %vm333, %v5015, 0
      %v5099 = vsel %vm333, %v5016, 0
      %v5102 = vsel %vm333, %v5017, 0
      %v5105 = vsel %vm333, %v5018, 0
      %v5108 = vsel %vm333, %v5019, 0
      %v5111 = vsel %vm333, %v5020, 0
      %v5114 = vsel %vm333, %v5021, 0
      %v5117 = vsel %vm333, %v5022, 0
      %v5120 = vsel %vm333, %v5023, 0
      %v5123 = vsel %vm1139, %v5025, 0
      %5125 = vmatprep.subr.mxu0 0.0
      %5126 = vmatpush1.msra.mxu0 0.0
      %5127 = vmatprep.subr.mxu0 0.0
      %5128 = vmatpush1.msra.mxu0 0.0
      %5129 = vmatprep.subr.mxu0 0.0
      %5130 = vmatpush1.msra.mxu0 0.0
      %5131 = vmatprep.subr.mxu0 0.0
      %5132 = vmatpush1.msra.mxu0 0.0
      %5133 = vmatprep.subr.mxu0 0.0
      %5134 = vmatpush1.msra.mxu0 0.0
      %5135 = vmatprep.subr.mxu0 0.0
      %5136 = vmatpush1.msra.mxu0 0.0
      %5137 = vmatprep.subr.mxu0 0.0
      %5138 = vmatpush1.msra.mxu0 0.0
      %5139 = vmatprep.subr.mxu0 0.0
      %5140 = vmatpush1.msra.mxu0 0.0
      %5141 = vmatprep.subr.mxu0 0.0
      %5142 = vmatpush1.msra.mxu0 0.0
      %5143 = vmatprep.subr.mxu0 0.0
      %5144 = vmatpush1.msra.mxu0 0.0
      %5145 = vmatprep.subr.mxu0 0.0
      %5146 = vmatpush1.msra.mxu0 0.0
      %5147 = vmatprep.subr.mxu0 0.0
      %5148 = vmatpush1.msra.mxu0 0.0
      %5149 = vmatprep.subr.mxu0 0.0
      %5150 = vmatpush1.msra.mxu0 0.0
      %5151 = vmatprep.subr.mxu0 0.0
      %5152 = vmatpush1.msra.mxu0 0.0
      %5153 = vmatprep.subr.mxu0 0.0
      %5154 = vmatpush1.msra.mxu0 0.0
      %5155 = vmatprep.subr.mxu0 0.0
      %5156 = vmatpush1.msra.mxu0 %v5123
      %5157 = vmatprep.subr.mxu0 0.0
      %5158 = vmatpush2.msra.mxu0 0.0
      %5159 = vmatprep.subr.mxu0 0.0
      %5160 = vmatpush2.msra.mxu0 0.0
      %5161 = vmatprep.subr.mxu0 0.0
      %5162 = vmatpush2.msra.mxu0 0.0
      %5163 = vmatprep.subr.mxu0 0.0
      %5164 = vmatpush2.msra.mxu0 0.0
      %5165 = vmatprep.subr.mxu0 0.0
      %5166 = vmatpush2.msra.mxu0 0.0
      %5167 = vmatprep.subr.mxu0 0.0
      %5168 = vmatpush2.msra.mxu0 0.0
      %5169 = vmatprep.subr.mxu0 0.0
      %5170 = vmatpush2.msra.mxu0 0.0
      %5171 = vmatprep.subr.mxu0 0.0
      %5172 = vmatpush2.msra.mxu0 0.0
      %5173 = vmatprep.subr.mxu0 0.0
      %5174 = vmatpush2.msra.mxu0 0.0
      %5175 = vmatprep.subr.mxu0 0.0
      %5176 = vmatpush2.msra.mxu0 0.0
      %5177 = vmatprep.subr.mxu0 0.0
      %5178 = vmatpush2.msra.mxu0 0.0
      %5179 = vmatprep.subr.mxu0 0.0
      %5180 = vmatpush2.msra.mxu0 0.0
      %5181 = vmatprep.subr.mxu0 0.0
      %5182 = vmatpush2.msra.mxu0 0.0
      %5183 = vmatprep.subr.mxu0 0.0
      %5184 = vmatpush2.msra.mxu0 0.0
      %5185 = vmatprep.subr.mxu0 0.0
      %5186 = vmatpush2.msra.mxu0 0.0
      %5187 = vmatprep.subr.mxu0 0.0
      %5188 = vmatpush2.msra.mxu0 0.0
      %5189 = vmatprep.mubr.f32.mxu0 0.0
      %5190 = vmatmul.mubr.f32.gmra.mxu0 %v5027
      %v5191 = vpop.f32.mrf.mxu0
      %v5192 = vadd.f32 0.0, %v5191
      %v5193 = vpop.f32.mrf.mxu0
      %5194 = vmatprep.mubr.f32.mxu0 0.0
      %5195 = vmatmul.mubr.f32.gmra.mxu0 %v5030
      %v5196 = vpop.f32.mrf.mxu0
      %v5197 = vadd.f32 0.0, %v5196
      %v5198 = vpop.f32.mrf.mxu0
      %5199 = vmatprep.mubr.f32.mxu0 0.0
      %5200 = vmatmul.mubr.f32.gmra.mxu0 %v5033
      %v5201 = vpop.f32.mrf.mxu0
      %v5202 = vadd.f32 0.0, %v5201
      %v5203 = vpop.f32.mrf.mxu0
      %5204 = vmatprep.mubr.f32.mxu0 0.0
      %5205 = vmatmul.mubr.f32.gmra.mxu0 %v5036
      %v5206 = vpop.f32.mrf.mxu0
      %v5207 = vadd.f32 0.0, %v5206
      %v5208 = vpop.f32.mrf.mxu0
      %5209 = vmatprep.mubr.f32.mxu0 0.0
      %5210 = vmatmul.mubr.f32.gmra.mxu0 %v5039
      %v5211 = vpop.f32.mrf.mxu0
      %v5212 = vadd.f32 0.0, %v5211
      %v5213 = vpop.f32.mrf.mxu0
      %5214 = vmatprep.mubr.f32.mxu0 0.0
      %5215 = vmatmul.mubr.f32.gmra.mxu0 %v5042
      %v5216 = vpop.f32.mrf.mxu0
      %v5217 = vadd.f32 0.0, %v5216
      %v5218 = vpop.f32.mrf.mxu0
      %5219 = vmatprep.mubr.f32.mxu0 0.0
      %5220 = vmatmul.mubr.f32.gmra.mxu0 %v5045
      %v5221 = vpop.f32.mrf.mxu0
      %v5222 = vadd.f32 0.0, %v5221
      %v5223 = vpop.f32.mrf.mxu0
      %5224 = vmatprep.mubr.f32.mxu0 0.0
      %5225 = vmatmul.mubr.f32.gmra.mxu0 %v5048
      %v5226 = vpop.f32.mrf.mxu0
      %v5227 = vadd.f32 0.0, %v5226
      %v5228 = vpop.f32.mrf.mxu0
      %5229 = vmatprep.mubr.f32.mxu0 0.0
      %5230 = vmatmul.mubr.f32.gmra.mxu0 %v5051
      %v5231 = vpop.f32.mrf.mxu0
      %v5232 = vadd.f32 0.0, %v5231
      %v5233 = vpop.f32.mrf.mxu0
      %5234 = vmatprep.mubr.f32.mxu0 0.0
      %5235 = vmatmul.mubr.f32.gmra.mxu0 %v5054
      %v5236 = vpop.f32.mrf.mxu0
      %v5237 = vadd.f32 0.0, %v5236
      %v5238 = vpop.f32.mrf.mxu0
      %5239 = vmatprep.mubr.f32.mxu0 0.0
      %5240 = vmatmul.mubr.f32.gmra.mxu0 %v5057
      %v5241 = vpop.f32.mrf.mxu0
      %v5242 = vadd.f32 0.0, %v5241
      %v5243 = vpop.f32.mrf.mxu0
      %5244 = vmatprep.mubr.f32.mxu0 0.0
      %5245 = vmatmul.mubr.f32.gmra.mxu0 %v5060
      %v5246 = vpop.f32.mrf.mxu0
      %v5247 = vadd.f32 0.0, %v5246
      %v5248 = vpop.f32.mrf.mxu0
      %5249 = vmatprep.mubr.f32.mxu0 0.0
      %5250 = vmatmul.mubr.f32.gmra.mxu0 %v5063
      %v5251 = vpop.f32.mrf.mxu0
      %v5252 = vadd.f32 0.0, %v5251
      %v5253 = vpop.f32.mrf.mxu0
      %5254 = vmatprep.mubr.f32.mxu0 0.0
      %5255 = vmatmul.mubr.f32.gmra.mxu0 %v5066
      %v5256 = vpop.f32.mrf.mxu0
      %v5257 = vadd.f32 0.0, %v5256
      %v5258 = vpop.f32.mrf.mxu0
      %5259 = vmatprep.mubr.f32.mxu0 0.0
      %5260 = vmatmul.mubr.f32.gmra.mxu0 %v5069
      %v5261 = vpop.f32.mrf.mxu0
      %v5262 = vadd.f32 0.0, %v5261
      %v5263 = vpop.f32.mrf.mxu0
      %5264 = vmatprep.mubr.f32.mxu0 0.0
      %5265 = vmatmul.mubr.f32.gmra.mxu0 %v5072
      %v5266 = vpop.f32.mrf.mxu0
      %v5267 = vadd.f32 0.0, %v5266
      %v5268 = vpop.f32.mrf.mxu0
      %5269 = vmatprep.mubr.f32.mxu0 0.0
      %5270 = vmatmul.mubr.f32.gmra.mxu0 %v5075
      %v5271 = vpop.f32.mrf.mxu0
      %v5272 = vadd.f32 0.0, %v5271
      %v5273 = vpop.f32.mrf.mxu0
      %5274 = vmatprep.mubr.f32.mxu0 0.0
      %5275 = vmatmul.mubr.f32.gmra.mxu0 %v5078
      %v5276 = vpop.f32.mrf.mxu0
      %v5277 = vadd.f32 0.0, %v5276
      %v5278 = vpop.f32.mrf.mxu0
      %5279 = vmatprep.mubr.f32.mxu0 0.0
      %5280 = vmatmul.mubr.f32.gmra.mxu0 %v5081
      %v5281 = vpop.f32.mrf.mxu0
      %v5282 = vadd.f32 0.0, %v5281
      %v5283 = vpop.f32.mrf.mxu0
      %5284 = vmatprep.mubr.f32.mxu0 0.0
      %5285 = vmatmul.mubr.f32.gmra.mxu0 %v5084
      %v5286 = vpop.f32.mrf.mxu0
      %v5287 = vadd.f32 0.0, %v5286
      %v5288 = vpop.f32.mrf.mxu0
      %5289 = vmatprep.mubr.f32.mxu0 0.0
      %5290 = vmatmul.mubr.f32.gmra.mxu0 %v5087
      %v5291 = vpop.f32.mrf.mxu0
      %v5292 = vadd.f32 0.0, %v5291
      %v5293 = vpop.f32.mrf.mxu0
      %5294 = vmatprep.mubr.f32.mxu0 0.0
      %5295 = vmatmul.mubr.f32.gmra.mxu0 %v5090
      %v5296 = vpop.f32.mrf.mxu0
      %v5297 = vadd.f32 0.0, %v5296
      %v5298 = vpop.f32.mrf.mxu0
      %5299 = vmatprep.mubr.f32.mxu0 0.0
      %5300 = vmatmul.mubr.f32.gmra.mxu0 %v5093
      %v5301 = vpop.f32.mrf.mxu0
      %v5302 = vadd.f32 0.0, %v5301
      %v5303 = vpop.f32.mrf.mxu0
      %5304 = vmatprep.mubr.f32.mxu0 0.0
      %5305 = vmatmul.mubr.f32.gmra.mxu0 %v5096
      %v5306 = vpop.f32.mrf.mxu0
      %v5307 = vadd.f32 0.0, %v5306
      %v5308 = vpop.f32.mrf.mxu0
      %5309 = vmatprep.mubr.f32.mxu0 0.0
      %5310 = vmatmul.mubr.f32.gmra.mxu0 %v5099
      %v5311 = vpop.f32.mrf.mxu0
      %v5312 = vadd.f32 0.0, %v5311
      %v5313 = vpop.f32.mrf.mxu0
      %5314 = vmatprep.mubr.f32.mxu0 0.0
      %5315 = vmatmul.mubr.f32.gmra.mxu0 %v5102
      %v5316 = vpop.f32.mrf.mxu0
      %v5317 = vadd.f32 0.0, %v5316
      %v5318 = vpop.f32.mrf.mxu0
      %5319 = vmatprep.mubr.f32.mxu0 0.0
      %5320 = vmatmul.mubr.f32.gmra.mxu0 %v5105
      %v5321 = vpop.f32.mrf.mxu0
      %v5322 = vadd.f32 0.0, %v5321
      %v5323 = vpop.f32.mrf.mxu0
      %5324 = vmatprep.mubr.f32.mxu0 0.0
      %5325 = vmatmul.mubr.f32.gmra.mxu0 %v5108
      %v5326 = vpop.f32.mrf.mxu0
      %v5327 = vadd.f32 0.0, %v5326
      %v5328 = vpop.f32.mrf.mxu0
      %5329 = vmatprep.mubr.f32.mxu0 0.0
      %5330 = vmatmul.mubr.f32.gmra.mxu0 %v5111
      %v5331 = vpop.f32.mrf.mxu0
      %v5332 = vadd.f32 0.0, %v5331
      %v5333 = vpop.f32.mrf.mxu0
      %5334 = vmatprep.mubr.f32.mxu0 0.0
      %5335 = vmatmul.mubr.f32.gmra.mxu0 %v5114
      %v5336 = vpop.f32.mrf.mxu0
      %v5337 = vadd.f32 0.0, %v5336
      %v5338 = vpop.f32.mrf.mxu0
      %5339 = vmatprep.mubr.f32.mxu0 0.0
      %5340 = vmatmul.mubr.f32.gmra.mxu0 %v5117
      %v5341 = vpop.f32.mrf.mxu0
      %v5342 = vadd.f32 0.0, %v5341
      %v5343 = vpop.f32.mrf.mxu0
      %5344 = vmatprep.mubr.f32.mxu0 0.0
      %5345 = vmatmul.mubr.f32.gmra.mxu0 %v5120
      %v5346 = vpop.f32.mrf.mxu0
      %v5347 = vadd.f32 0.0, %v5346
      %v5348 = vpop.f32.mrf.mxu0
      %5349 = vdwg.mxu0
      %v5350 = vadd.f32 %v4735, %v5192
      %v5351 = vadd.f32 %v4736, %v5197
      %v5352 = vadd.f32 %v4737, %v5202
      %v5353 = vadd.f32 %v4738, %v5207
      %v5354 = vadd.f32 %v4739, %v5212
      %v5355 = vadd.f32 %v4740, %v5217
      %v5356 = vadd.f32 %v4741, %v5222
      %v5357 = vadd.f32 %v4742, %v5227
      %v5358 = vadd.f32 %v4743, %v5232
      %v5359 = vadd.f32 %v4744, %v5237
      %v5360 = vadd.f32 %v4745, %v5242
      %v5361 = vadd.f32 %v4746, %v5247
      %v5362 = vadd.f32 %v4747, %v5252
      %v5363 = vadd.f32 %v4748, %v5257
      %v5364 = vadd.f32 %v4749, %v5262
      %v5365 = vadd.f32 %v4750, %v5267
      %v5366 = vadd.f32 %v4751, %v5272
      %v5367 = vadd.f32 %v4752, %v5277
      %v5368 = vadd.f32 %v4753, %v5282
      %v5369 = vadd.f32 %v4754, %v5287
      %v5370 = vadd.f32 %v4755, %v5292
      %v5371 = vadd.f32 %v4756, %v5297
      %v5372 = vadd.f32 %v4757, %v5302
      %v5373 = vadd.f32 %v4758, %v5307
      %v5374 = vadd.f32 %v4759, %v5312
      %v5375 = vadd.f32 %v4760, %v5317
      %v5376 = vadd.f32 %v4761, %v5322
      %v5377 = vadd.f32 %v4762, %v5327
      %v5378 = vadd.f32 %v4763, %v5332
      %v5379 = vadd.f32 %v4764, %v5337
      %v5380 = vadd.f32 %v4765, %v5342
      %v5381 = vadd.f32 %v4766, %v5347
      %v5382 = vld [vmem:[#allocation2 + $0x91] sm:$0xff]
      %v5383 = vld [vmem:[#allocation2 + $0x99] sm:$0xff]
      %v5384 = vld [vmem:[#allocation2 + $0xa1] sm:$0xff]
      %v5385 = vld [vmem:[#allocation2 + $0xa9] sm:$0xff]
      %v5386 = vld [vmem:[#allocation2 + $0xb1] sm:$0xff]
      %v5387 = vld [vmem:[#allocation2 + $0xb9] sm:$0xff]
      %v5388 = vld [vmem:[#allocation2 + $0xc1] sm:$0xff]
      %v5389 = vld [vmem:[#allocation2 + $0xc9] sm:$0xff]
      %v5390 = vld [vmem:[#allocation2 + $0xd1] sm:$0xff]
      %v5391 = vld [vmem:[#allocation2 + $0xd9] sm:$0xff]
      %v5392 = vld [vmem:[#allocation2 + $0xe1] sm:$0xff]
      %v5393 = vld [vmem:[#allocation2 + $0xe9] sm:$0xff]
      %v5394 = vld [vmem:[#allocation2 + $0xf1] sm:$0xff]
      %v5395 = vld [vmem:[#allocation2 + $0xf9] sm:$0xff]
      %v5396 = vld [vmem:[#allocation2 + $0x101] sm:$0xff]
      %v5397 = vld [vmem:[#allocation2 + $0x109] sm:$0xff]
      %v5398 = vld [vmem:[#allocation2 + $0x111] sm:$0xff]
      %v5399 = vld [vmem:[#allocation2 + $0x119] sm:$0xff]
      %v5400 = vld [vmem:[#allocation2 + $0x121] sm:$0xff]
      %v5401 = vld [vmem:[#allocation2 + $0x129] sm:$0xff]
      %v5402 = vld [vmem:[#allocation2 + $0x131] sm:$0xff]
      %v5403 = vld [vmem:[#allocation2 + $0x139] sm:$0xff]
      %v5404 = vld [vmem:[#allocation2 + $0x141] sm:$0xff]
      %v5405 = vld [vmem:[#allocation2 + $0x149] sm:$0xff]
      %v5406 = vld [vmem:[#allocation2 + $0x151] sm:$0xff]
      %v5407 = vld [vmem:[#allocation2 + $0x159] sm:$0xff]
      %v5408 = vld [vmem:[#allocation2 + $0x161] sm:$0xff]
      %v5409 = vld [vmem:[#allocation2 + $0x169] sm:$0xff]
      %v5410 = vld [vmem:[#allocation2 + $0x171] sm:$0xff]
      %v5411 = vld [vmem:[#allocation2 + $0x179] sm:$0xff]
      %v5412 = vld [vmem:[#allocation2 + $0x181] sm:$0xff]
      %v5413 = vld [vmem:[#allocation2 + $0x189] sm:$0xff]
      %s5414 = scalar_lea.vmem %s8, 2048
      %v5415 = vld [vmem:[%s5414] sm:$0xff]
      %v5416 = vld [vmem:[%s5414 + $0x8] sm:$0xff]
      %v5417 = vld [vmem:[%s5414 + $0x10] sm:$0xff]
      %v5418 = vld [vmem:[%s5414 + $0x18] sm:$0xff]
      %v5419 = vld [vmem:[%s5414 + $0x20] sm:$0xff]
      %v5420 = vld [vmem:[%s5414 + $0x28] sm:$0xff]
      %v5421 = vld [vmem:[%s5414 + $0x30] sm:$0xff]
      %v5422 = vld [vmem:[%s5414 + $0x38] sm:$0xff]
      %v5423 = vld [vmem:[%s5414 + $0x40] sm:$0xff]
      %v5424 = vld [vmem:[%s5414 + $0x48] sm:$0xff]
      %v5425 = vld [vmem:[%s5414 + $0x50] sm:$0xff]
      %v5426 = vld [vmem:[%s5414 + $0x58] sm:$0xff]
      %v5427 = vld [vmem:[%s5414 + $0x60] sm:$0xff]
      %v5428 = vld [vmem:[%s5414 + $0x68] sm:$0xff]
      %v5429 = vld [vmem:[%s5414 + $0x70] sm:$0xff]
      %v5430 = vld [vmem:[%s5414 + $0x78] sm:$0xff]
      %v5431 = vld [vmem:[%s5414 + $0x80] sm:$0xff]
      %v5432 = vld [vmem:[%s5414 + $0x88] sm:$0xff]
      %v5433 = vld [vmem:[%s5414 + $0x90] sm:$0xff]
      %v5434 = vld [vmem:[%s5414 + $0x98] sm:$0xff]
      %v5435 = vld [vmem:[%s5414 + $0xa0] sm:$0xff]
      %v5436 = vld [vmem:[%s5414 + $0xa8] sm:$0xff]
      %v5437 = vld [vmem:[%s5414 + $0xb0] sm:$0xff]
      %v5438 = vld [vmem:[%s5414 + $0xb8] sm:$0xff]
      %v5439 = vld [vmem:[%s5414 + $0xc0] sm:$0xff]
      %v5440 = vld [vmem:[%s5414 + $0xc8] sm:$0xff]
      %v5441 = vld [vmem:[%s5414 + $0xd0] sm:$0xff]
      %v5442 = vld [vmem:[%s5414 + $0xd8] sm:$0xff]
      %v5443 = vld [vmem:[%s5414 + $0xe0] sm:$0xff]
      %v5444 = vld [vmem:[%s5414 + $0xe8] sm:$0xff]
      %v5445 = vld [vmem:[%s5414 + $0xf0] sm:$0xff]
      %v5446 = vld [vmem:[%s5414 + $0xf8] sm:$0xff]
      %5448 = vset.pattern.permute.xlu0 0
      %5449 = vperm.xlu0 %5448, %v5415
      %v5450 = vpop.permute.xlu0 %5449
      %5453 = vset.pattern.permute.xlu0 0
      %5454 = vperm.xlu0 %5453, %v5416
      %v5455 = vpop.permute.xlu0 %5454
      %5458 = vset.pattern.permute.xlu0 0
      %5459 = vperm.xlu0 %5458, %v5417
      %v5460 = vpop.permute.xlu0 %5459
      %5463 = vset.pattern.permute.xlu0 0
      %5464 = vperm.xlu0 %5463, %v5418
      %v5465 = vpop.permute.xlu0 %5464
      %5468 = vset.pattern.permute.xlu0 0
      %5469 = vperm.xlu0 %5468, %v5419
      %v5470 = vpop.permute.xlu0 %5469
      %5473 = vset.pattern.permute.xlu0 0
      %5474 = vperm.xlu0 %5473, %v5420
      %v5475 = vpop.permute.xlu0 %5474
      %5478 = vset.pattern.permute.xlu0 0
      %5479 = vperm.xlu0 %5478, %v5421
      %v5480 = vpop.permute.xlu0 %5479
      %5483 = vset.pattern.permute.xlu0 0
      %5484 = vperm.xlu0 %5483, %v5422
      %v5485 = vpop.permute.xlu0 %5484
      %5488 = vset.pattern.permute.xlu0 0
      %5489 = vperm.xlu0 %5488, %v5423
      %v5490 = vpop.permute.xlu0 %5489
      %5493 = vset.pattern.permute.xlu0 0
      %5494 = vperm.xlu0 %5493, %v5424
      %v5495 = vpop.permute.xlu0 %5494
      %5498 = vset.pattern.permute.xlu0 0
      %5499 = vperm.xlu0 %5498, %v5425
      %v5500 = vpop.permute.xlu0 %5499
      %5503 = vset.pattern.permute.xlu0 0
      %5504 = vperm.xlu0 %5503, %v5426
      %v5505 = vpop.permute.xlu0 %5504
      %5508 = vset.pattern.permute.xlu0 0
      %5509 = vperm.xlu0 %5508, %v5427
      %v5510 = vpop.permute.xlu0 %5509
      %5513 = vset.pattern.permute.xlu0 0
      %5514 = vperm.xlu0 %5513, %v5428
      %v5515 = vpop.permute.xlu0 %5514
      %5518 = vset.pattern.permute.xlu0 0
      %5519 = vperm.xlu0 %5518, %v5429
      %v5520 = vpop.permute.xlu0 %5519
      %5523 = vset.pattern.permute.xlu0 0
      %5524 = vperm.xlu0 %5523, %v5430
      %v5525 = vpop.permute.xlu0 %5524
      %5528 = vset.pattern.permute.xlu0 0
      %5529 = vperm.xlu0 %5528, %v5431
      %v5530 = vpop.permute.xlu0 %5529
      %5533 = vset.pattern.permute.xlu0 0
      %5534 = vperm.xlu0 %5533, %v5432
      %v5535 = vpop.permute.xlu0 %5534
      %5538 = vset.pattern.permute.xlu0 0
      %5539 = vperm.xlu0 %5538, %v5433
      %v5540 = vpop.permute.xlu0 %5539
      %5543 = vset.pattern.permute.xlu0 0
      %5544 = vperm.xlu0 %5543, %v5434
      %v5545 = vpop.permute.xlu0 %5544
      %5548 = vset.pattern.permute.xlu0 0
      %5549 = vperm.xlu0 %5548, %v5435
      %v5550 = vpop.permute.xlu0 %5549
      %5553 = vset.pattern.permute.xlu0 0
      %5554 = vperm.xlu0 %5553, %v5436
      %v5555 = vpop.permute.xlu0 %5554
      %5558 = vset.pattern.permute.xlu0 0
      %5559 = vperm.xlu0 %5558, %v5437
      %v5560 = vpop.permute.xlu0 %5559
      %5563 = vset.pattern.permute.xlu0 0
      %5564 = vperm.xlu0 %5563, %v5438
      %v5565 = vpop.permute.xlu0 %5564
      %5568 = vset.pattern.permute.xlu0 0
      %5569 = vperm.xlu0 %5568, %v5439
      %v5570 = vpop.permute.xlu0 %5569
      %5573 = vset.pattern.permute.xlu0 0
      %5574 = vperm.xlu0 %5573, %v5440
      %v5575 = vpop.permute.xlu0 %5574
      %5578 = vset.pattern.permute.xlu0 0
      %5579 = vperm.xlu0 %5578, %v5441
      %v5580 = vpop.permute.xlu0 %5579
      %5583 = vset.pattern.permute.xlu0 0
      %5584 = vperm.xlu0 %5583, %v5442
      %v5585 = vpop.permute.xlu0 %5584
      %5588 = vset.pattern.permute.xlu0 0
      %5589 = vperm.xlu0 %5588, %v5443
      %v5590 = vpop.permute.xlu0 %5589
      %5593 = vset.pattern.permute.xlu0 0
      %5594 = vperm.xlu0 %5593, %v5444
      %v5595 = vpop.permute.xlu0 %5594
      %5598 = vset.pattern.permute.xlu0 0
      %5599 = vperm.xlu0 %5598, %v5445
      %v5600 = vpop.permute.xlu0 %5599
      %5603 = vset.pattern.permute.xlu0 0
      %5604 = vperm.xlu0 %5603, %v5446
      %v5605 = vpop.permute.xlu0 %5604
      %v5607 = vmul.f32 %v5382, %v5450
      %v5608 = vmul.f32 %v5383, %v5455
      %v5609 = vmul.f32 %v5384, %v5460
      %v5610 = vmul.f32 %v5385, %v5465
      %v5611 = vmul.f32 %v5386, %v5470
      %v5612 = vmul.f32 %v5387, %v5475
      %v5613 = vmul.f32 %v5388, %v5480
      %v5614 = vmul.f32 %v5389, %v5485
      %v5615 = vmul.f32 %v5390, %v5490
      %v5616 = vmul.f32 %v5391, %v5495
      %v5617 = vmul.f32 %v5392, %v5500
      %v5618 = vmul.f32 %v5393, %v5505
      %v5619 = vmul.f32 %v5394, %v5510
      %v5620 = vmul.f32 %v5395, %v5515
      %v5621 = vmul.f32 %v5396, %v5520
      %v5622 = vmul.f32 %v5397, %v5525
      %v5623 = vmul.f32 %v5398, %v5530
      %v5624 = vmul.f32 %v5399, %v5535
      %v5625 = vmul.f32 %v5400, %v5540
      %v5626 = vmul.f32 %v5401, %v5545
      %v5627 = vmul.f32 %v5402, %v5550
      %v5628 = vmul.f32 %v5403, %v5555
      %v5629 = vmul.f32 %v5404, %v5560
      %v5630 = vmul.f32 %v5405, %v5565
      %v5631 = vmul.f32 %v5406, %v5570
      %v5632 = vmul.f32 %v5407, %v5575
      %v5633 = vmul.f32 %v5408, %v5580
      %v5634 = vmul.f32 %v5409, %v5585
      %v5635 = vmul.f32 %v5410, %v5590
      %v5636 = vmul.f32 %v5411, %v5595
      %v5637 = vmul.f32 %v5412, %v5600
      %v5638 = vmul.f32 %v5413, %v5605
      %s5639 = scalar_lea.vmem %s1, 32
      %v5640 = vld [vmem:[%s5639] sm:$0xf]
      %v5642 = vsel %vm333, %v5607, 0
      %v5645 = vsel %vm333, %v5608, 0
      %v5648 = vsel %vm333, %v5609, 0
      %v5651 = vsel %vm333, %v5610, 0
      %v5654 = vsel %vm333, %v5611, 0
      %v5657 = vsel %vm333, %v5612, 0
      %v5660 = vsel %vm333, %v5613, 0
      %v5663 = vsel %vm333, %v5614, 0
      %v5666 = vsel %vm333, %v5615, 0
      %v5669 = vsel %vm333, %v5616, 0
      %v5672 = vsel %vm333, %v5617, 0
      %v5675 = vsel %vm333, %v5618, 0
      %v5678 = vsel %vm333, %v5619, 0
      %v5681 = vsel %vm333, %v5620, 0
      %v5684 = vsel %vm333, %v5621, 0
      %v5687 = vsel %vm333, %v5622, 0
      %v5690 = vsel %vm333, %v5623, 0
      %v5693 = vsel %vm333, %v5624, 0
      %v5696 = vsel %vm333, %v5625, 0
      %v5699 = vsel %vm333, %v5626, 0
      %v5702 = vsel %vm333, %v5627, 0
      %v5705 = vsel %vm333, %v5628, 0
      %v5708 = vsel %vm333, %v5629, 0
      %v5711 = vsel %vm333, %v5630, 0
      %v5714 = vsel %vm333, %v5631, 0
      %v5717 = vsel %vm333, %v5632, 0
      %v5720 = vsel %vm333, %v5633, 0
      %v5723 = vsel %vm333, %v5634, 0
      %v5726 = vsel %vm333, %v5635, 0
      %v5729 = vsel %vm333, %v5636, 0
      %v5732 = vsel %vm333, %v5637, 0
      %v5735 = vsel %vm333, %v5638, 0
      %v5738 = vsel %vm1139, %v5640, 0
      %5740 = vmatprep.subr.mxu0 0.0
      %5741 = vmatpush1.msra.mxu0 0.0
      %5742 = vmatprep.subr.mxu0 0.0
      %5743 = vmatpush1.msra.mxu0 0.0
      %5744 = vmatprep.subr.mxu0 0.0
      %5745 = vmatpush1.msra.mxu0 0.0
      %5746 = vmatprep.subr.mxu0 0.0
      %5747 = vmatpush1.msra.mxu0 0.0
      %5748 = vmatprep.subr.mxu0 0.0
      %5749 = vmatpush1.msra.mxu0 0.0
      %5750 = vmatprep.subr.mxu0 0.0
      %5751 = vmatpush1.msra.mxu0 0.0
      %5752 = vmatprep.subr.mxu0 0.0
      %5753 = vmatpush1.msra.mxu0 0.0
      %5754 = vmatprep.subr.mxu0 0.0
      %5755 = vmatpush1.msra.mxu0 0.0
      %5756 = vmatprep.subr.mxu0 0.0
      %5757 = vmatpush1.msra.mxu0 0.0
      %5758 = vmatprep.subr.mxu0 0.0
      %5759 = vmatpush1.msra.mxu0 0.0
      %5760 = vmatprep.subr.mxu0 0.0
      %5761 = vmatpush1.msra.mxu0 0.0
      %5762 = vmatprep.subr.mxu0 0.0
      %5763 = vmatpush1.msra.mxu0 0.0
      %5764 = vmatprep.subr.mxu0 0.0
      %5765 = vmatpush1.msra.mxu0 0.0
      %5766 = vmatprep.subr.mxu0 0.0
      %5767 = vmatpush1.msra.mxu0 0.0
      %5768 = vmatprep.subr.mxu0 0.0
      %5769 = vmatpush1.msra.mxu0 0.0
      %5770 = vmatprep.subr.mxu0 0.0
      %5771 = vmatpush1.msra.mxu0 %v5738
      %5772 = vmatprep.subr.mxu0 0.0
      %5773 = vmatpush2.msra.mxu0 0.0
      %5774 = vmatprep.subr.mxu0 0.0
      %5775 = vmatpush2.msra.mxu0 0.0
      %5776 = vmatprep.subr.mxu0 0.0
      %5777 = vmatpush2.msra.mxu0 0.0
      %5778 = vmatprep.subr.mxu0 0.0
      %5779 = vmatpush2.msra.mxu0 0.0
      %5780 = vmatprep.subr.mxu0 0.0
      %5781 = vmatpush2.msra.mxu0 0.0
      %5782 = vmatprep.subr.mxu0 0.0
      %5783 = vmatpush2.msra.mxu0 0.0
      %5784 = vmatprep.subr.mxu0 0.0
      %5785 = vmatpush2.msra.mxu0 0.0
      %5786 = vmatprep.subr.mxu0 0.0
      %5787 = vmatpush2.msra.mxu0 0.0
      %5788 = vmatprep.subr.mxu0 0.0
      %5789 = vmatpush2.msra.mxu0 0.0
      %5790 = vmatprep.subr.mxu0 0.0
      %5791 = vmatpush2.msra.mxu0 0.0
      %5792 = vmatprep.subr.mxu0 0.0
      %5793 = vmatpush2.msra.mxu0 0.0
      %5794 = vmatprep.subr.mxu0 0.0
      %5795 = vmatpush2.msra.mxu0 0.0
      %5796 = vmatprep.subr.mxu0 0.0
      %5797 = vmatpush2.msra.mxu0 0.0
      %5798 = vmatprep.subr.mxu0 0.0
      %5799 = vmatpush2.msra.mxu0 0.0
      %5800 = vmatprep.subr.mxu0 0.0
      %5801 = vmatpush2.msra.mxu0 0.0
      %5802 = vmatprep.subr.mxu0 0.0
      %5803 = vmatpush2.msra.mxu0 0.0
      %5804 = vmatprep.mubr.f32.mxu0 0.0
      %5805 = vmatmul.mubr.f32.gmra.mxu0 %v5642
      %v5806 = vpop.f32.mrf.mxu0
      %v5807 = vadd.f32 0.0, %v5806
      %v5808 = vpop.f32.mrf.mxu0
      %5809 = vmatprep.mubr.f32.mxu0 0.0
      %5810 = vmatmul.mubr.f32.gmra.mxu0 %v5645
      %v5811 = vpop.f32.mrf.mxu0
      %v5812 = vadd.f32 0.0, %v5811
      %v5813 = vpop.f32.mrf.mxu0
      %5814 = vmatprep.mubr.f32.mxu0 0.0
      %5815 = vmatmul.mubr.f32.gmra.mxu0 %v5648
      %v5816 = vpop.f32.mrf.mxu0
      %v5817 = vadd.f32 0.0, %v5816
      %v5818 = vpop.f32.mrf.mxu0
      %5819 = vmatprep.mubr.f32.mxu0 0.0
      %5820 = vmatmul.mubr.f32.gmra.mxu0 %v5651
      %v5821 = vpop.f32.mrf.mxu0
      %v5822 = vadd.f32 0.0, %v5821
      %v5823 = vpop.f32.mrf.mxu0
      %5824 = vmatprep.mubr.f32.mxu0 0.0
      %5825 = vmatmul.mubr.f32.gmra.mxu0 %v5654
      %v5826 = vpop.f32.mrf.mxu0
      %v5827 = vadd.f32 0.0, %v5826
      %v5828 = vpop.f32.mrf.mxu0
      %5829 = vmatprep.mubr.f32.mxu0 0.0
      %5830 = vmatmul.mubr.f32.gmra.mxu0 %v5657
      %v5831 = vpop.f32.mrf.mxu0
      %v5832 = vadd.f32 0.0, %v5831
      %v5833 = vpop.f32.mrf.mxu0
      %5834 = vmatprep.mubr.f32.mxu0 0.0
      %5835 = vmatmul.mubr.f32.gmra.mxu0 %v5660
      %v5836 = vpop.f32.mrf.mxu0
      %v5837 = vadd.f32 0.0, %v5836
      %v5838 = vpop.f32.mrf.mxu0
      %5839 = vmatprep.mubr.f32.mxu0 0.0
      %5840 = vmatmul.mubr.f32.gmra.mxu0 %v5663
      %v5841 = vpop.f32.mrf.mxu0
      %v5842 = vadd.f32 0.0, %v5841
      %v5843 = vpop.f32.mrf.mxu0
      %5844 = vmatprep.mubr.f32.mxu0 0.0
      %5845 = vmatmul.mubr.f32.gmra.mxu0 %v5666
      %v5846 = vpop.f32.mrf.mxu0
      %v5847 = vadd.f32 0.0, %v5846
      %v5848 = vpop.f32.mrf.mxu0
      %5849 = vmatprep.mubr.f32.mxu0 0.0
      %5850 = vmatmul.mubr.f32.gmra.mxu0 %v5669
      %v5851 = vpop.f32.mrf.mxu0
      %v5852 = vadd.f32 0.0, %v5851
      %v5853 = vpop.f32.mrf.mxu0
      %5854 = vmatprep.mubr.f32.mxu0 0.0
      %5855 = vmatmul.mubr.f32.gmra.mxu0 %v5672
      %v5856 = vpop.f32.mrf.mxu0
      %v5857 = vadd.f32 0.0, %v5856
      %v5858 = vpop.f32.mrf.mxu0
      %5859 = vmatprep.mubr.f32.mxu0 0.0
      %5860 = vmatmul.mubr.f32.gmra.mxu0 %v5675
      %v5861 = vpop.f32.mrf.mxu0
      %v5862 = vadd.f32 0.0, %v5861
      %v5863 = vpop.f32.mrf.mxu0
      %5864 = vmatprep.mubr.f32.mxu0 0.0
      %5865 = vmatmul.mubr.f32.gmra.mxu0 %v5678
      %v5866 = vpop.f32.mrf.mxu0
      %v5867 = vadd.f32 0.0, %v5866
      %v5868 = vpop.f32.mrf.mxu0
      %5869 = vmatprep.mubr.f32.mxu0 0.0
      %5870 = vmatmul.mubr.f32.gmra.mxu0 %v5681
      %v5871 = vpop.f32.mrf.mxu0
      %v5872 = vadd.f32 0.0, %v5871
      %v5873 = vpop.f32.mrf.mxu0
      %5874 = vmatprep.mubr.f32.mxu0 0.0
      %5875 = vmatmul.mubr.f32.gmra.mxu0 %v5684
      %v5876 = vpop.f32.mrf.mxu0
      %v5877 = vadd.f32 0.0, %v5876
      %v5878 = vpop.f32.mrf.mxu0
      %5879 = vmatprep.mubr.f32.mxu0 0.0
      %5880 = vmatmul.mubr.f32.gmra.mxu0 %v5687
      %v5881 = vpop.f32.mrf.mxu0
      %v5882 = vadd.f32 0.0, %v5881
      %v5883 = vpop.f32.mrf.mxu0
      %5884 = vmatprep.mubr.f32.mxu0 0.0
      %5885 = vmatmul.mubr.f32.gmra.mxu0 %v5690
      %v5886 = vpop.f32.mrf.mxu0
      %v5887 = vadd.f32 0.0, %v5886
      %v5888 = vpop.f32.mrf.mxu0
      %5889 = vmatprep.mubr.f32.mxu0 0.0
      %5890 = vmatmul.mubr.f32.gmra.mxu0 %v5693
      %v5891 = vpop.f32.mrf.mxu0
      %v5892 = vadd.f32 0.0, %v5891
      %v5893 = vpop.f32.mrf.mxu0
      %5894 = vmatprep.mubr.f32.mxu0 0.0
      %5895 = vmatmul.mubr.f32.gmra.mxu0 %v5696
      %v5896 = vpop.f32.mrf.mxu0
      %v5897 = vadd.f32 0.0, %v5896
      %v5898 = vpop.f32.mrf.mxu0
      %5899 = vmatprep.mubr.f32.mxu0 0.0
      %5900 = vmatmul.mubr.f32.gmra.mxu0 %v5699
      %v5901 = vpop.f32.mrf.mxu0
      %v5902 = vadd.f32 0.0, %v5901
      %v5903 = vpop.f32.mrf.mxu0
      %5904 = vmatprep.mubr.f32.mxu0 0.0
      %5905 = vmatmul.mubr.f32.gmra.mxu0 %v5702
      %v5906 = vpop.f32.mrf.mxu0
      %v5907 = vadd.f32 0.0, %v5906
      %v5908 = vpop.f32.mrf.mxu0
      %5909 = vmatprep.mubr.f32.mxu0 0.0
      %5910 = vmatmul.mubr.f32.gmra.mxu0 %v5705
      %v5911 = vpop.f32.mrf.mxu0
      %v5912 = vadd.f32 0.0, %v5911
      %v5913 = vpop.f32.mrf.mxu0
      %5914 = vmatprep.mubr.f32.mxu0 0.0
      %5915 = vmatmul.mubr.f32.gmra.mxu0 %v5708
      %v5916 = vpop.f32.mrf.mxu0
      %v5917 = vadd.f32 0.0, %v5916
      %v5918 = vpop.f32.mrf.mxu0
      %5919 = vmatprep.mubr.f32.mxu0 0.0
      %5920 = vmatmul.mubr.f32.gmra.mxu0 %v5711
      %v5921 = vpop.f32.mrf.mxu0
      %v5922 = vadd.f32 0.0, %v5921
      %v5923 = vpop.f32.mrf.mxu0
      %5924 = vmatprep.mubr.f32.mxu0 0.0
      %5925 = vmatmul.mubr.f32.gmra.mxu0 %v5714
      %v5926 = vpop.f32.mrf.mxu0
      %v5927 = vadd.f32 0.0, %v5926
      %v5928 = vpop.f32.mrf.mxu0
      %5929 = vmatprep.mubr.f32.mxu0 0.0
      %5930 = vmatmul.mubr.f32.gmra.mxu0 %v5717
      %v5931 = vpop.f32.mrf.mxu0
      %v5932 = vadd.f32 0.0, %v5931
      %v5933 = vpop.f32.mrf.mxu0
      %5934 = vmatprep.mubr.f32.mxu0 0.0
      %5935 = vmatmul.mubr.f32.gmra.mxu0 %v5720
      %v5936 = vpop.f32.mrf.mxu0
      %v5937 = vadd.f32 0.0, %v5936
      %v5938 = vpop.f32.mrf.mxu0
      %5939 = vmatprep.mubr.f32.mxu0 0.0
      %5940 = vmatmul.mubr.f32.gmra.mxu0 %v5723
      %v5941 = vpop.f32.mrf.mxu0
      %v5942 = vadd.f32 0.0, %v5941
      %v5943 = vpop.f32.mrf.mxu0
      %5944 = vmatprep.mubr.f32.mxu0 0.0
      %5945 = vmatmul.mubr.f32.gmra.mxu0 %v5726
      %v5946 = vpop.f32.mrf.mxu0
      %v5947 = vadd.f32 0.0, %v5946
      %v5948 = vpop.f32.mrf.mxu0
      %5949 = vmatprep.mubr.f32.mxu0 0.0
      %5950 = vmatmul.mubr.f32.gmra.mxu0 %v5729
      %v5951 = vpop.f32.mrf.mxu0
      %v5952 = vadd.f32 0.0, %v5951
      %v5953 = vpop.f32.mrf.mxu0
      %5954 = vmatprep.mubr.f32.mxu0 0.0
      %5955 = vmatmul.mubr.f32.gmra.mxu0 %v5732
      %v5956 = vpop.f32.mrf.mxu0
      %v5957 = vadd.f32 0.0, %v5956
      %v5958 = vpop.f32.mrf.mxu0
      %5959 = vmatprep.mubr.f32.mxu0 0.0
      %5960 = vmatmul.mubr.f32.gmra.mxu0 %v5735
      %v5961 = vpop.f32.mrf.mxu0
      %v5962 = vadd.f32 0.0, %v5961
      %v5963 = vpop.f32.mrf.mxu0
      %5964 = vdwg.mxu0
      %v5965 = vadd.f32 %v5350, %v5807
      %v5966 = vadd.f32 %v5351, %v5812
      %v5967 = vadd.f32 %v5352, %v5817
      %v5968 = vadd.f32 %v5353, %v5822
      %v5969 = vadd.f32 %v5354, %v5827
      %v5970 = vadd.f32 %v5355, %v5832
      %v5971 = vadd.f32 %v5356, %v5837
      %v5972 = vadd.f32 %v5357, %v5842
      %v5973 = vadd.f32 %v5358, %v5847
      %v5974 = vadd.f32 %v5359, %v5852
      %v5975 = vadd.f32 %v5360, %v5857
      %v5976 = vadd.f32 %v5361, %v5862
      %v5977 = vadd.f32 %v5362, %v5867
      %v5978 = vadd.f32 %v5363, %v5872
      %v5979 = vadd.f32 %v5364, %v5877
      %v5980 = vadd.f32 %v5365, %v5882
      %v5981 = vadd.f32 %v5366, %v5887
      %v5982 = vadd.f32 %v5367, %v5892
      %v5983 = vadd.f32 %v5368, %v5897
      %v5984 = vadd.f32 %v5369, %v5902
      %v5985 = vadd.f32 %v5370, %v5907
      %v5986 = vadd.f32 %v5371, %v5912
      %v5987 = vadd.f32 %v5372, %v5917
      %v5988 = vadd.f32 %v5373, %v5922
      %v5989 = vadd.f32 %v5374, %v5927
      %v5990 = vadd.f32 %v5375, %v5932
      %v5991 = vadd.f32 %v5376, %v5937
      %v5992 = vadd.f32 %v5377, %v5942
      %v5993 = vadd.f32 %v5378, %v5947
      %v5994 = vadd.f32 %v5379, %v5952
      %v5995 = vadd.f32 %v5380, %v5957
      %v5996 = vadd.f32 %v5381, %v5962
      %v5997 = vld [vmem:[%s2] sm:$0x1]
      %v5999 = vlaneseq
      %v6000 = vshrl.u32 %v5999, 7
      %v6001 = vsub.s32 0, %v6000
      %v6002 = vrot.slane %v5997, %v6001
      %v6004 = vadd.f32 %v5965, %v6002
      %v6005 = vadd.f32 %v5966, %v6002
      %v6006 = vadd.f32 %v5967, %v6002
      %v6007 = vadd.f32 %v5968, %v6002
      %v6008 = vadd.f32 %v5969, %v6002
      %v6009 = vadd.f32 %v5970, %v6002
      %v6010 = vadd.f32 %v5971, %v6002
      %v6011 = vadd.f32 %v5972, %v6002
      %v6012 = vadd.f32 %v5973, %v6002
      %v6013 = vadd.f32 %v5974, %v6002
      %v6014 = vadd.f32 %v5975, %v6002
      %v6015 = vadd.f32 %v5976, %v6002
      %v6016 = vadd.f32 %v5977, %v6002
      %v6017 = vadd.f32 %v5978, %v6002
      %v6018 = vadd.f32 %v5979, %v6002
      %v6019 = vadd.f32 %v5980, %v6002
      %v6020 = vadd.f32 %v5981, %v6002
      %v6021 = vadd.f32 %v5982, %v6002
      %v6022 = vadd.f32 %v5983, %v6002
      %v6023 = vadd.f32 %v5984, %v6002
      %v6024 = vadd.f32 %v5985, %v6002
      %v6025 = vadd.f32 %v5986, %v6002
      %v6026 = vadd.f32 %v5987, %v6002
      %v6027 = vadd.f32 %v5988, %v6002
      %v6028 = vadd.f32 %v5989, %v6002
      %v6029 = vadd.f32 %v5990, %v6002
      %v6030 = vadd.f32 %v5991, %v6002
      %v6031 = vadd.f32 %v5992, %v6002
      %v6032 = vadd.f32 %v5993, %v6002
      %v6033 = vadd.f32 %v5994, %v6002
      %v6034 = vadd.f32 %v5995, %v6002
      %v6035 = vadd.f32 %v5996, %v6002
      %v6036 = vmax.f32 %v6004, 0.0
      %v6037 = vmax.f32 %v6005, 0.0
      %v6038 = vmax.f32 %v6006, 0.0
      %v6039 = vmax.f32 %v6007, 0.0
      %v6040 = vmax.f32 %v6008, 0.0
      %v6041 = vmax.f32 %v6009, 0.0
      %v6042 = vmax.f32 %v6010, 0.0
      %v6043 = vmax.f32 %v6011, 0.0
      %v6044 = vmax.f32 %v6012, 0.0
      %v6045 = vmax.f32 %v6013, 0.0
      %v6046 = vmax.f32 %v6014, 0.0
      %v6047 = vmax.f32 %v6015, 0.0
      %v6048 = vmax.f32 %v6016, 0.0
      %v6049 = vmax.f32 %v6017, 0.0
      %v6050 = vmax.f32 %v6018, 0.0
      %v6051 = vmax.f32 %v6019, 0.0
      %v6052 = vmax.f32 %v6020, 0.0
      %v6053 = vmax.f32 %v6021, 0.0
      %v6054 = vmax.f32 %v6022, 0.0
      %v6055 = vmax.f32 %v6023, 0.0
      %v6056 = vmax.f32 %v6024, 0.0
      %v6057 = vmax.f32 %v6025, 0.0
      %v6058 = vmax.f32 %v6026, 0.0
      %v6059 = vmax.f32 %v6027, 0.0
      %v6060 = vmax.f32 %v6028, 0.0
      %v6061 = vmax.f32 %v6029, 0.0
      %v6062 = vmax.f32 %v6030, 0.0
      %v6063 = vmax.f32 %v6031, 0.0
      %v6064 = vmax.f32 %v6032, 0.0
      %v6065 = vmax.f32 %v6033, 0.0
      %v6066 = vmax.f32 %v6034, 0.0
      %v6067 = vmax.f32 %v6035, 0.0
      %v6068 = vsel %vm398, %v6036, 0.0
      %v6069 = vsel %vm398, %v6037, 0.0
      %v6070 = vadd.f32 %v6068, %v6069
      %v6071 = vsel %vm398, %v6038, 0.0
      %v6072 = vadd.f32 %v6070, %v6071
      %v6073 = vsel %vm398, %v6039, 0.0
      %v6074 = vadd.f32 %v6072, %v6073
      %v6075 = vsel %vm398, %v6040, 0.0
      %v6076 = vadd.f32 %v6074, %v6075
      %v6077 = vsel %vm398, %v6041, 0.0
      %v6078 = vadd.f32 %v6076, %v6077
      %v6079 = vsel %vm398, %v6042, 0.0
      %v6080 = vadd.f32 %v6078, %v6079
      %v6081 = vsel %vm398, %v6043, 0.0
      %v6082 = vadd.f32 %v6080, %v6081
      %v6083 = vsel %vm398, %v6044, 0.0
      %v6084 = vadd.f32 %v6082, %v6083
      %v6085 = vsel %vm398, %v6045, 0.0
      %v6086 = vadd.f32 %v6084, %v6085
      %v6087 = vsel %vm398, %v6046, 0.0
      %v6088 = vadd.f32 %v6086, %v6087
      %v6089 = vsel %vm398, %v6047, 0.0
      %v6090 = vadd.f32 %v6088, %v6089
      %v6091 = vsel %vm398, %v6048, 0.0
      %v6092 = vadd.f32 %v6090, %v6091
      %v6093 = vsel %vm398, %v6049, 0.0
      %v6094 = vadd.f32 %v6092, %v6093
      %v6095 = vsel %vm398, %v6050, 0.0
      %v6096 = vadd.f32 %v6094, %v6095
      %v6097 = vsel %vm398, %v6051, 0.0
      %v6098 = vadd.f32 %v6096, %v6097
      %v6099 = vsel %vm398, %v6052, 0.0
      %v6100 = vadd.f32 %v6098, %v6099
      %v6101 = vsel %vm398, %v6053, 0.0
      %v6102 = vadd.f32 %v6100, %v6101
      %v6103 = vsel %vm398, %v6054, 0.0
      %v6104 = vadd.f32 %v6102, %v6103
      %v6105 = vsel %vm398, %v6055, 0.0
      %v6106 = vadd.f32 %v6104, %v6105
      %v6107 = vsel %vm398, %v6056, 0.0
      %v6108 = vadd.f32 %v6106, %v6107
      %v6109 = vsel %vm398, %v6057, 0.0
      %v6110 = vadd.f32 %v6108, %v6109
      %v6111 = vsel %vm398, %v6058, 0.0
      %v6112 = vadd.f32 %v6110, %v6111
      %v6113 = vsel %vm398, %v6059, 0.0
      %v6114 = vadd.f32 %v6112, %v6113
      %v6115 = vsel %vm398, %v6060, 0.0
      %v6116 = vadd.f32 %v6114, %v6115
      %v6117 = vsel %vm398, %v6061, 0.0
      %v6118 = vadd.f32 %v6116, %v6117
      %v6119 = vsel %vm398, %v6062, 0.0
      %v6120 = vadd.f32 %v6118, %v6119
      %v6121 = vsel %vm398, %v6063, 0.0
      %v6122 = vadd.f32 %v6120, %v6121
      %v6123 = vsel %vm398, %v6064, 0.0
      %v6124 = vadd.f32 %v6122, %v6123
      %v6125 = vsel %vm398, %v6065, 0.0
      %v6126 = vadd.f32 %v6124, %v6125
      %v6127 = vsel %vm398, %v6066, 0.0
      %v6128 = vadd.f32 %v6126, %v6127
      %v6129 = vsel %vm398, %v6067, 0.0
      %v6130 = vadd.f32 %v6128, %v6129
      %v6131 = vrot.slane %v6130, 4
      %v6132 = vadd.f32 %v6130, %v6131
      %v6133 = vrot.slane %v6132, 2
      %v6134 = vadd.f32 %v6132, %v6133
      %v6135 = vrot.slane %v6134, 1
      %v6136 = vadd.f32 %v6134, %v6135
      %v6137 = vmul.f32 %v6136, 0.00390625
      %v6138 = vld [vmem:[%s3] sm:$0xff]
      %v6139 = vld [vmem:[%s4] sm:$0xff]
      %v6140 = vld [vmem:[%s4 + $0x8] sm:$0x3]
      %v6141 = vld [vmem:[%s5] sm:$0x1]
      %v6143 = vsel %vm398, %v6137, 0
      %6145 = vmatprep.subr.mxu0 0.0
      %6146 = vmatpush1.msra.mxu0 0.0
      %6147 = vmatprep.subr.mxu0 0.0
      %6148 = vmatpush1.msra.mxu0 0.0
      %6149 = vmatprep.subr.mxu0 0.0
      %6150 = vmatpush1.msra.mxu0 0.0
      %6151 = vmatprep.subr.mxu0 0.0
      %6152 = vmatpush1.msra.mxu0 0.0
      %6153 = vmatprep.subr.mxu0 0.0
      %6154 = vmatpush1.msra.mxu0 0.0
      %6155 = vmatprep.subr.mxu0 0.0
      %6156 = vmatpush1.msra.mxu0 0.0
      %6157 = vmatprep.subr.mxu0 0.0
      %6158 = vmatpush1.msra.mxu0 0.0
      %6159 = vmatprep.subr.mxu0 0.0
      %6160 = vmatpush1.msra.mxu0 0.0
      %6161 = vmatprep.subr.mxu0 0.0
      %6162 = vmatpush1.msra.mxu0 0.0
      %6163 = vmatprep.subr.mxu0 0.0
      %6164 = vmatpush1.msra.mxu0 0.0
      %6165 = vmatprep.subr.mxu0 0.0
      %6166 = vmatpush1.msra.mxu0 0.0
      %6167 = vmatprep.subr.mxu0 0.0
      %6168 = vmatpush1.msra.mxu0 0.0
      %6169 = vmatprep.subr.mxu0 0.0
      %6170 = vmatpush1.msra.mxu0 0.0
      %6171 = vmatprep.subr.mxu0 0.0
      %6172 = vmatpush1.msra.mxu0 0.0
      %6173 = vmatprep.subr.mxu0 0.0
      %6174 = vmatpush1.msra.mxu0 0.0
      %6175 = vmatprep.subr.mxu0 0.0
      %6176 = vmatpush1.msra.mxu0 %v6138
      %6177 = vmatprep.subr.mxu0 0.0
      %6178 = vmatpush2.msra.mxu0 0.0
      %6179 = vmatprep.subr.mxu0 0.0
      %6180 = vmatpush2.msra.mxu0 0.0
      %6181 = vmatprep.subr.mxu0 0.0
      %6182 = vmatpush2.msra.mxu0 0.0
      %6183 = vmatprep.subr.mxu0 0.0
      %6184 = vmatpush2.msra.mxu0 0.0
      %6185 = vmatprep.subr.mxu0 0.0
      %6186 = vmatpush2.msra.mxu0 0.0
      %6187 = vmatprep.subr.mxu0 0.0
      %6188 = vmatpush2.msra.mxu0 0.0
      %6189 = vmatprep.subr.mxu0 0.0
      %6190 = vmatpush2.msra.mxu0 0.0
      %6191 = vmatprep.subr.mxu0 0.0
      %6192 = vmatpush2.msra.mxu0 0.0
      %6193 = vmatprep.subr.mxu0 0.0
      %6194 = vmatpush2.msra.mxu0 0.0
      %6195 = vmatprep.subr.mxu0 0.0
      %6196 = vmatpush2.msra.mxu0 0.0
      %6197 = vmatprep.subr.mxu0 0.0
      %6198 = vmatpush2.msra.mxu0 0.0
      %6199 = vmatprep.subr.mxu0 0.0
      %6200 = vmatpush2.msra.mxu0 0.0
      %6201 = vmatprep.subr.mxu0 0.0
      %6202 = vmatpush2.msra.mxu0 0.0
      %6203 = vmatprep.subr.mxu0 0.0
      %6204 = vmatpush2.msra.mxu0 0.0
      %6205 = vmatprep.subr.mxu0 0.0
      %6206 = vmatpush2.msra.mxu0 0.0
      %6207 = vmatprep.subr.mxu0 0.0
      %6208 = vmatpush2.msra.mxu0 0.0
      %6209 = vmatprep.mubr.f32.mxu0 0.0
      %6210 = vmatmul.mubr.f32.gmra.mxu0 %v6143
      %v6211 = vpop.f32.mrf.mxu0
      %v6212 = vadd.f32 %v6141, %v6211
      %v6213 = vpop.f32.mrf.mxu0
      %6214 = vdwg.mxu0
      %vm6215 = vcmask 73728
      %v6216 = vsel %vm6215, %v6212, -inf
      %6217 = vmax.xlane.f32.xlu0 %v6216
      %v6218 = vpop.xlane.xlu0 %6217
      %v6219 = vsub.f32 %v6212, %v6218
      %v6220 = vmul.f32 %v6219, 1.442695
      %v6221 = vpow.pop %v6220
      %v6222 = vsel %vm6215, %v6221, 0.0
      %6223 = vadd.xlane.f32.xlu0 %v6222
      %v6224 = vpop.xlane.xlu0 %6223
      %v6225 = vrcp.pop %v6224
      %v6226 = vmul.f32 %v6221, %v6225
      %v6227 = vmax.f32 %v6138, 0.0
      %v6228 = vmax.f32 %v6139, 0.0
      %v6229 = vmax.f32 %v6140, 0.0
      %6230 = vmatprep.subr.mxu0 0.0
      %6231 = vmatpush1.msra.mxu0 0.0
      %6232 = vmatprep.subr.mxu0 0.0
      %6233 = vmatpush1.msra.mxu0 0.0
      %6234 = vmatprep.subr.mxu0 0.0
      %6235 = vmatpush1.msra.mxu0 0.0
      %6236 = vmatprep.subr.mxu0 0.0
      %6237 = vmatpush1.msra.mxu0 0.0
      %6238 = vmatprep.subr.mxu0 0.0
      %6239 = vmatpush1.msra.mxu0 0.0
      %6240 = vmatprep.subr.mxu0 0.0
      %6241 = vmatpush1.msra.mxu0 0.0
      %6242 = vmatprep.subr.mxu0 0.0
      %6243 = vmatpush1.msra.mxu0 0.0
      %6244 = vmatprep.subr.mxu0 0.0
      %6245 = vmatpush1.msra.mxu0 0.0
      %6246 = vmatprep.subr.mxu0 0.0
      %6247 = vmatpush1.msra.mxu0 0.0
      %6248 = vmatprep.subr.mxu0 0.0
      %6249 = vmatpush1.msra.mxu0 0.0
      %6250 = vmatprep.subr.mxu0 0.0
      %6251 = vmatpush1.msra.mxu0 0.0
      %6252 = vmatprep.subr.mxu0 0.0
      %6253 = vmatpush1.msra.mxu0 0.0
      %6254 = vmatprep.subr.mxu0 0.0
      %6255 = vmatpush1.msra.mxu0 0.0
      %6256 = vmatprep.subr.mxu0 0.0
      %6257 = vmatpush1.msra.mxu0 0.0
      %6258 = vmatprep.subr.mxu0 0.0
      %6259 = vmatpush1.msra.mxu0 0.0
      %6260 = vmatprep.subr.mxu0 0.0
      %6261 = vmatpush1.msra.mxu0 %v6227
      %6262 = vmatprep.subr.mxu0 0.0
      %6263 = vmatpush2.msra.mxu0 0.0
      %6264 = vmatprep.subr.mxu0 0.0
      %6265 = vmatpush2.msra.mxu0 0.0
      %6266 = vmatprep.subr.mxu0 0.0
      %6267 = vmatpush2.msra.mxu0 0.0
      %6268 = vmatprep.subr.mxu0 0.0
      %6269 = vmatpush2.msra.mxu0 0.0
      %6270 = vmatprep.subr.mxu0 0.0
      %6271 = vmatpush2.msra.mxu0 0.0
      %6272 = vmatprep.subr.mxu0 0.0
      %6273 = vmatpush2.msra.mxu0 0.0
      %6274 = vmatprep.subr.mxu0 0.0
      %6275 = vmatpush2.msra.mxu0 0.0
      %6276 = vmatprep.subr.mxu0 0.0
      %6277 = vmatpush2.msra.mxu0 0.0
      %6278 = vmatprep.subr.mxu0 0.0
      %6279 = vmatpush2.msra.mxu0 0.0
      %6280 = vmatprep.subr.mxu0 0.0
      %6281 = vmatpush2.msra.mxu0 0.0
      %6282 = vmatprep.subr.mxu0 0.0
      %6283 = vmatpush2.msra.mxu0 0.0
      %6284 = vmatprep.subr.mxu0 0.0
      %6285 = vmatpush2.msra.mxu0 0.0
      %6286 = vmatprep.subr.mxu0 0.0
      %6287 = vmatpush2.msra.mxu0 0.0
      %6288 = vmatprep.subr.mxu0 0.0
      %6289 = vmatpush2.msra.mxu0 0.0
      %6290 = vmatprep.subr.mxu0 0.0
      %6291 = vmatpush2.msra.mxu0 0.0
      %6292 = vmatprep.subr.mxu0 0.0
      %6293 = vmatpush2.msra.mxu0 0.0
      %6294 = vmatprep.mubr.f32.mxu0 0.0
      %6295 = vmatmul.mubr.f32.gmra.mxu0 %v6143
      %v6296 = vpop.f32.mrf.mxu0
      %v6297 = vadd.f32 0.0, %v6296
      %v6298 = vpop.f32.mrf.mxu0
      %6299 = vdwg.mxu0
      %vm6300 = vcmp.ge.f32.partialorder %v6297, 0.0
      %v6301 = vsel %vm6300, 1.0, -1.0
      %v6302 = vmul.f32 %v6301, 1e-06
      %v6303 = vadd.f32 %v6297, %v6302
      %v6304 = vrcp.pop %v6303
      %v6305 = vmul.f32 %v6226, %v6304
      %vm6306 = vcmask 80896
      %v6308 = vsel %vm6306, %v6305, 0
      %vm6310 = vcmask 1041408
      %v6312 = vsel %vm6310, %v6229, 0
      %6314 = vmatprep.subr.mxu0 0.0
      %6315 = vmatpush1.msra.mxu0 0.0
      %6316 = vmatprep.subr.mxu0 0.0
      %6317 = vmatpush1.msra.mxu0 0.0
      %6318 = vmatprep.subr.mxu0 0.0
      %6319 = vmatpush1.msra.mxu0 0.0
      %6320 = vmatprep.subr.mxu0 0.0
      %6321 = vmatpush1.msra.mxu0 0.0
      %6322 = vmatprep.subr.mxu0 0.0
      %6323 = vmatpush1.msra.mxu0 0.0
      %6324 = vmatprep.subr.mxu0 0.0
      %6325 = vmatpush1.msra.mxu0 0.0
      %6326 = vmatprep.subr.mxu0 0.0
      %6327 = vmatpush1.msra.mxu0 0.0
      %6328 = vmatprep.subr.mxu0 0.0
      %6329 = vmatpush1.msra.mxu0 0.0
      %6330 = vmatprep.subr.mxu0 0.0
      %6331 = vmatpush1.msra.mxu0 0.0
      %6332 = vmatprep.subr.mxu0 0.0
      %6333 = vmatpush1.msra.mxu0 0.0
      %6334 = vmatprep.subr.mxu0 0.0
      %6335 = vmatpush1.msra.mxu0 0.0
      %6336 = vmatprep.subr.mxu0 0.0
      %6337 = vmatpush1.msra.mxu0 0.0
      %6338 = vmatprep.subr.mxu0 0.0
      %6339 = vmatpush1.msra.mxu0 0.0
      %6340 = vmatprep.subr.mxu0 0.0
      %6341 = vmatpush1.msra.mxu0 0.0
      %6342 = vmatprep.subr.mxu0 0.0
      %6343 = vmatpush1.msra.mxu0 %v6312
      %6344 = vmatprep.subr.mxu0 0.0
      %6345 = vmatpush1.msra.mxu0 %v6228
      %6346 = vmatprep.subr.mxu0 0.0
      %6347 = vmatpush2.msra.mxu0 0.0
      %6348 = vmatprep.subr.mxu0 0.0
      %6349 = vmatpush2.msra.mxu0 0.0
      %6350 = vmatprep.subr.mxu0 0.0
      %6351 = vmatpush2.msra.mxu0 0.0
      %6352 = vmatprep.subr.mxu0 0.0
      %6353 = vmatpush2.msra.mxu0 0.0
      %6354 = vmatprep.subr.mxu0 0.0
      %6355 = vmatpush2.msra.mxu0 0.0
      %6356 = vmatprep.subr.mxu0 0.0
      %6357 = vmatpush2.msra.mxu0 0.0
      %6358 = vmatprep.subr.mxu0 0.0
      %6359 = vmatpush2.msra.mxu0 0.0
      %6360 = vmatprep.subr.mxu0 0.0
      %6361 = vmatpush2.msra.mxu0 0.0
      %6362 = vmatprep.subr.mxu0 0.0
      %6363 = vmatpush2.msra.mxu0 0.0
      %6364 = vmatprep.subr.mxu0 0.0
      %6365 = vmatpush2.msra.mxu0 0.0
      %6366 = vmatprep.subr.mxu0 0.0
      %6367 = vmatpush2.msra.mxu0 0.0
      %6368 = vmatprep.subr.mxu0 0.0
      %6369 = vmatpush2.msra.mxu0 0.0
      %6370 = vmatprep.subr.mxu0 0.0
      %6371 = vmatpush2.msra.mxu0 0.0
      %6372 = vmatprep.subr.mxu0 0.0
      %6373 = vmatpush2.msra.mxu0 0.0
      %6374 = vmatprep.subr.mxu0 0.0
      %6375 = vmatpush2.msra.mxu0 0.0
      %6376 = vmatprep.subr.mxu0 0.0
      %6377 = vmatpush2.msra.mxu0 0.0
      %6378 = vmatprep.mubr.f32.mxu0 0.0
      %6379 = vmatmul.mubr.f32.gmra.mxu0 %v6308
      %v6380 = vpop.f32.mrf.mxu0
      %v6381 = vadd.f32 0.0, %v6380
      %v6382 = vpop.f32.mrf.mxu0
      %6383 = vdwg.mxu0
      %v6384 = vmul.f32 %v6137, %v6381
      %vm6385 = vcmp.ge.f32.partialorder %v6137, 0.0
      %v6386 = vsel %vm6385, 1.0, -1.0
      %v6387 = vmul.f32 %v6386, 1e-06
      %v6388 = vadd.f32 %v6137, %v6387
      %v6389 = vrcp.pop %v6388
      %v6390 = vmul.f32 %v6384, %v6389
      %v6391 = vlaneseq
      %v6392 = vshrl.u32 %v6391, 7
      %v6393 = vsub.s32 0, %v6392
      %v6394 = vrot.slane %v6390, %v6393
      %v6395 = vmul.f32 %v6036, %v6394
      %v6396 = vmul.f32 %v6037, %v6394
      %v6397 = vmul.f32 %v6038, %v6394
      %v6398 = vmul.f32 %v6039, %v6394
      %v6399 = vmul.f32 %v6040, %v6394
      %v6400 = vmul.f32 %v6041, %v6394
      %v6401 = vmul.f32 %v6042, %v6394
      %v6402 = vmul.f32 %v6043, %v6394
      %v6403 = vmul.f32 %v6044, %v6394
      %v6404 = vmul.f32 %v6045, %v6394
      %v6405 = vmul.f32 %v6046, %v6394
      %v6406 = vmul.f32 %v6047, %v6394
      %v6407 = vmul.f32 %v6048, %v6394
      %v6408 = vmul.f32 %v6049, %v6394
      %v6409 = vmul.f32 %v6050, %v6394
      %v6410 = vmul.f32 %v6051, %v6394
      %v6411 = vmul.f32 %v6052, %v6394
      %v6412 = vmul.f32 %v6053, %v6394
      %v6413 = vmul.f32 %v6054, %v6394
      %v6414 = vmul.f32 %v6055, %v6394
      %v6415 = vmul.f32 %v6056, %v6394
      %v6416 = vmul.f32 %v6057, %v6394
      %v6417 = vmul.f32 %v6058, %v6394
      %v6418 = vmul.f32 %v6059, %v6394
      %v6419 = vmul.f32 %v6060, %v6394
      %v6420 = vmul.f32 %v6061, %v6394
      %v6421 = vmul.f32 %v6062, %v6394
      %v6422 = vmul.f32 %v6063, %v6394
      %v6423 = vmul.f32 %v6064, %v6394
      %v6424 = vmul.f32 %v6065, %v6394
      %v6425 = vmul.f32 %v6066, %v6394
      %v6426 = vmul.f32 %v6067, %v6394
      %v6427 = vld [vmem:[%s6] sm:$0xff]
      %v6428 = vld [vmem:[%s6 + $0x8] sm:$0xff]
      %v6429 = vld [vmem:[%s6 + $0x10] sm:$0xff]
      %v6430 = vld [vmem:[%s6 + $0x18] sm:$0xff]
      %v6431 = vld [vmem:[%s6 + $0x20] sm:$0xff]
      %v6432 = vld [vmem:[%s6 + $0x28] sm:$0xff]
      %v6433 = vld [vmem:[%s6 + $0x30] sm:$0xff]
      %v6434 = vld [vmem:[%s6 + $0x38] sm:$0xff]
      %v6435 = vld [vmem:[%s6 + $0x40] sm:$0xff]
      %v6436 = vld [vmem:[%s6 + $0x48] sm:$0xff]
      %v6437 = vld [vmem:[%s6 + $0x50] sm:$0xff]
      %v6438 = vld [vmem:[%s6 + $0x58] sm:$0xff]
      %v6439 = vld [vmem:[%s6 + $0x60] sm:$0xff]
      %v6440 = vld [vmem:[%s6 + $0x68] sm:$0xff]
      %v6441 = vld [vmem:[%s6 + $0x70] sm:$0xff]
      %v6442 = vld [vmem:[%s6 + $0x78] sm:$0xff]
      %v6443 = vld [vmem:[%s6 + $0x80] sm:$0xff]
      %v6444 = vld [vmem:[%s6 + $0x88] sm:$0xff]
      %v6445 = vld [vmem:[%s6 + $0x90] sm:$0xff]
      %v6446 = vld [vmem:[%s6 + $0x98] sm:$0xff]
      %v6447 = vld [vmem:[%s6 + $0xa0] sm:$0xff]
      %v6448 = vld [vmem:[%s6 + $0xa8] sm:$0xff]
      %v6449 = vld [vmem:[%s6 + $0xb0] sm:$0xff]
      %v6450 = vld [vmem:[%s6 + $0xb8] sm:$0xff]
      %v6451 = vld [vmem:[%s6 + $0xc0] sm:$0xff]
      %v6452 = vld [vmem:[%s6 + $0xc8] sm:$0xff]
      %v6453 = vld [vmem:[%s6 + $0xd0] sm:$0xff]
      %v6454 = vld [vmem:[%s6 + $0xd8] sm:$0xff]
      %v6455 = vld [vmem:[%s6 + $0xe0] sm:$0xff]
      %v6456 = vld [vmem:[%s6 + $0xe8] sm:$0xff]
      %v6457 = vld [vmem:[%s6 + $0xf0] sm:$0xff]
      %v6458 = vld [vmem:[%s6 + $0xf8] sm:$0xff]
      %v6459 = vmul.f32 %v6395, %v6427
      %v6460 = vmul.f32 %v6396, %v6428
      %v6461 = vmul.f32 %v6397, %v6429
      %v6462 = vmul.f32 %v6398, %v6430
      %v6463 = vmul.f32 %v6399, %v6431
      %v6464 = vmul.f32 %v6400, %v6432
      %v6465 = vmul.f32 %v6401, %v6433
      %v6466 = vmul.f32 %v6402, %v6434
      %v6467 = vmul.f32 %v6403, %v6435
      %v6468 = vmul.f32 %v6404, %v6436
      %v6469 = vmul.f32 %v6405, %v6437
      %v6470 = vmul.f32 %v6406, %v6438
      %v6471 = vmul.f32 %v6407, %v6439
      %v6472 = vmul.f32 %v6408, %v6440
      %v6473 = vmul.f32 %v6409, %v6441
      %v6474 = vmul.f32 %v6410, %v6442
      %v6475 = vmul.f32 %v6411, %v6443
      %v6476 = vmul.f32 %v6412, %v6444
      %v6477 = vmul.f32 %v6413, %v6445
      %v6478 = vmul.f32 %v6414, %v6446
      %v6479 = vmul.f32 %v6415, %v6447
      %v6480 = vmul.f32 %v6416, %v6448
      %v6481 = vmul.f32 %v6417, %v6449
      %v6482 = vmul.f32 %v6418, %v6450
      %v6483 = vmul.f32 %v6419, %v6451
      %v6484 = vmul.f32 %v6420, %v6452
      %v6485 = vmul.f32 %v6421, %v6453
      %v6486 = vmul.f32 %v6422, %v6454
      %v6487 = vmul.f32 %v6423, %v6455
      %v6488 = vmul.f32 %v6424, %v6456
      %v6489 = vmul.f32 %v6425, %v6457
      %v6490 = vmul.f32 %v6426, %v6458
      %6491 = vst.msk [vmem:[#allocation3 + $0x80] sm:$0xff] %vm398, %v6459
      %6492 = vst.msk [vmem:[#allocation3 + $0x88] sm:$0xff] %vm398, %v6460
      %6493 = vst.msk [vmem:[#allocation3 + $0x90] sm:$0xff] %vm398, %v6461
      %6494 = vst.msk [vmem:[#allocation3 + $0x98] sm:$0xff] %vm398, %v6462
      %6495 = vst.msk [vmem:[#allocation3 + $0xa0] sm:$0xff] %vm398, %v6463
      %6496 = vst.msk [vmem:[#allocation3 + $0xa8] sm:$0xff] %vm398, %v6464
      %6497 = vst.msk [vmem:[#allocation3 + $0xb0] sm:$0xff] %vm398, %v6465
      %6498 = vst.msk [vmem:[#allocation3 + $0xb8] sm:$0xff] %vm398, %v6466
      %6499 = vst.msk [vmem:[#allocation3 + $0xc0] sm:$0xff] %vm398, %v6467
      %6500 = vst.msk [vmem:[#allocation3 + $0xc8] sm:$0xff] %vm398, %v6468
      %6501 = vst.msk [vmem:[#allocation3 + $0xd0] sm:$0xff] %vm398, %v6469
      %6502 = vst.msk [vmem:[#allocation3 + $0xd8] sm:$0xff] %vm398, %v6470
      %6503 = vst.msk [vmem:[#allocation3 + $0xe0] sm:$0xff] %vm398, %v6471
      %6504 = vst.msk [vmem:[#allocation3 + $0xe8] sm:$0xff] %vm398, %v6472
      %6505 = vst.msk [vmem:[#allocation3 + $0xf0] sm:$0xff] %vm398, %v6473
      %6506 = vst.msk [vmem:[#allocation3 + $0xf8] sm:$0xff] %vm398, %v6474
      %6507 = vst.msk [vmem:[#allocation3 + $0x100] sm:$0xff] %vm398, %v6475
      %6508 = vst.msk [vmem:[#allocation3 + $0x108] sm:$0xff] %vm398, %v6476
      %6509 = vst.msk [vmem:[#allocation3 + $0x110] sm:$0xff] %vm398, %v6477
      %6510 = vst.msk [vmem:[#allocation3 + $0x118] sm:$0xff] %vm398, %v6478
      %6511 = vst.msk [vmem:[#allocation3 + $0x120] sm:$0xff] %vm398, %v6479
      %6512 = vst.msk [vmem:[#allocation3 + $0x128] sm:$0xff] %vm398, %v6480
      %6513 = vst.msk [vmem:[#allocation3 + $0x130] sm:$0xff] %vm398, %v6481
      %6514 = vst.msk [vmem:[#allocation3 + $0x138] sm:$0xff] %vm398, %v6482
      %6515 = vst.msk [vmem:[#allocation3 + $0x140] sm:$0xff] %vm398, %v6483
      %6516 = vst.msk [vmem:[#allocation3 + $0x148] sm:$0xff] %vm398, %v6484
      %6517 = vst.msk [vmem:[#allocation3 + $0x150] sm:$0xff] %vm398, %v6485
      %6518 = vst.msk [vmem:[#allocation3 + $0x158] sm:$0xff] %vm398, %v6486
      %6519 = vst.msk [vmem:[#allocation3 + $0x160] sm:$0xff] %vm398, %v6487
      %6520 = vst.msk [vmem:[#allocation3 + $0x168] sm:$0xff] %vm398, %v6488
      %6521 = vst.msk [vmem:[#allocation3 + $0x170] sm:$0xff] %vm398, %v6489
      %6522 = vst.msk [vmem:[#allocation3 + $0x178] sm:$0xff] %vm398, %v6490
      %v6523 = vld [vmem:[#allocation3 + $0x6f] sm:$0xff]
      %v6524 = vld [vmem:[#allocation3 + $0x77] sm:$0xff]
      %v6525 = vld [vmem:[#allocation3 + $0x7f] sm:$0xff]
      %v6526 = vld [vmem:[#allocation3 + $0x87] sm:$0xff]
      %v6527 = vld [vmem:[#allocation3 + $0x8f] sm:$0xff]
      %v6528 = vld [vmem:[#allocation3 + $0x97] sm:$0xff]
      %v6529 = vld [vmem:[#allocation3 + $0x9f] sm:$0xff]
      %v6530 = vld [vmem:[#allocation3 + $0xa7] sm:$0xff]
      %v6531 = vld [vmem:[#allocation3 + $0xaf] sm:$0xff]
      %v6532 = vld [vmem:[#allocation3 + $0xb7] sm:$0xff]
      %v6533 = vld [vmem:[#allocation3 + $0xbf] sm:$0xff]
      %v6534 = vld [vmem:[#allocation3 + $0xc7] sm:$0xff]
      %v6535 = vld [vmem:[#allocation3 + $0xcf] sm:$0xff]
      %v6536 = vld [vmem:[#allocation3 + $0xd7] sm:$0xff]
      %v6537 = vld [vmem:[#allocation3 + $0xdf] sm:$0xff]
      %v6538 = vld [vmem:[#allocation3 + $0xe7] sm:$0xff]
      %v6539 = vld [vmem:[#allocation3 + $0xef] sm:$0xff]
      %v6540 = vld [vmem:[#allocation3 + $0xf7] sm:$0xff]
      %v6541 = vld [vmem:[#allocation3 + $0xff] sm:$0xff]
      %v6542 = vld [vmem:[#allocation3 + $0x107] sm:$0xff]
      %v6543 = vld [vmem:[#allocation3 + $0x10f] sm:$0xff]
      %v6544 = vld [vmem:[#allocation3 + $0x117] sm:$0xff]
      %v6545 = vld [vmem:[#allocation3 + $0x11f] sm:$0xff]
      %v6546 = vld [vmem:[#allocation3 + $0x127] sm:$0xff]
      %v6547 = vld [vmem:[#allocation3 + $0x12f] sm:$0xff]
      %v6548 = vld [vmem:[#allocation3 + $0x137] sm:$0xff]
      %v6549 = vld [vmem:[#allocation3 + $0x13f] sm:$0xff]
      %v6550 = vld [vmem:[#allocation3 + $0x147] sm:$0xff]
      %v6551 = vld [vmem:[#allocation3 + $0x14f] sm:$0xff]
      %v6552 = vld [vmem:[#allocation3 + $0x157] sm:$0xff]
      %v6553 = vld [vmem:[#allocation3 + $0x15f] sm:$0xff]
      %v6554 = vld [vmem:[#allocation3 + $0x167] sm:$0xff]
      %v6555 = vld [vmem:[%s7] sm:$0xff]
      %v6557 = vsel %vm398, %v6523, 0
      %v6560 = vsel %vm398, %v6524, 0
      %v6563 = vsel %vm398, %v6525, 0
      %v6566 = vsel %vm398, %v6526, 0
      %v6569 = vsel %vm398, %v6527, 0
      %v6572 = vsel %vm398, %v6528, 0
      %v6575 = vsel %vm398, %v6529, 0
      %v6578 = vsel %vm398, %v6530, 0
      %v6581 = vsel %vm398, %v6531, 0
      %v6584 = vsel %vm398, %v6532, 0
      %v6587 = vsel %vm398, %v6533, 0
      %v6590 = vsel %vm398, %v6534, 0
      %v6593 = vsel %vm398, %v6535, 0
      %v6596 = vsel %vm398, %v6536, 0
      %v6599 = vsel %vm398, %v6537, 0
      %v6602 = vsel %vm398, %v6538, 0
      %v6605 = vsel %vm398, %v6539, 0
      %v6608 = vsel %vm398, %v6540, 0
      %v6611 = vsel %vm398, %v6541, 0
      %v6614 = vsel %vm398, %v6542, 0
      %v6617 = vsel %vm398, %v6543, 0
      %v6620 = vsel %vm398, %v6544, 0
      %v6623 = vsel %vm398, %v6545, 0
      %v6626 = vsel %vm398, %v6546, 0
      %v6629 = vsel %vm398, %v6547, 0
      %v6632 = vsel %vm398, %v6548, 0
      %v6635 = vsel %vm398, %v6549, 0
      %v6638 = vsel %vm398, %v6550, 0
      %v6641 = vsel %vm398, %v6551, 0
      %v6644 = vsel %vm398, %v6552, 0
      %v6647 = vsel %vm398, %v6553, 0
      %v6650 = vsel %vm398, %v6554, 0
      %6652 = vmatprep.subr.mxu0 0.0
      %6653 = vmatpush1.msra.mxu0 0.0
      %6654 = vmatprep.subr.mxu0 0.0
      %6655 = vmatpush1.msra.mxu0 0.0
      %6656 = vmatprep.subr.mxu0 0.0
      %6657 = vmatpush1.msra.mxu0 0.0
      %6658 = vmatprep.subr.mxu0 0.0
      %6659 = vmatpush1.msra.mxu0 0.0
      %6660 = vmatprep.subr.mxu0 0.0
      %6661 = vmatpush1.msra.mxu0 0.0
      %6662 = vmatprep.subr.mxu0 0.0
      %6663 = vmatpush1.msra.mxu0 0.0
      %6664 = vmatprep.subr.mxu0 0.0
      %6665 = vmatpush1.msra.mxu0 0.0
      %6666 = vmatprep.subr.mxu0 0.0
      %6667 = vmatpush1.msra.mxu0 0.0
      %6668 = vmatprep.subr.mxu0 0.0
      %6669 = vmatpush1.msra.mxu0 0.0
      %6670 = vmatprep.subr.mxu0 0.0
      %6671 = vmatpush1.msra.mxu0 0.0
      %6672 = vmatprep.subr.mxu0 0.0
      %6673 = vmatpush1.msra.mxu0 0.0
      %6674 = vmatprep.subr.mxu0 0.0
      %6675 = vmatpush1.msra.mxu0 0.0
      %6676 = vmatprep.subr.mxu0 0.0
      %6677 = vmatpush1.msra.mxu0 0.0
      %6678 = vmatprep.subr.mxu0 0.0
      %6679 = vmatpush1.msra.mxu0 0.0
      %6680 = vmatprep.subr.mxu0 0.0
      %6681 = vmatpush1.msra.mxu0 0.0
      %6682 = vmatprep.subr.mxu0 0.0
      %6683 = vmatpush1.msra.mxu0 %v6555
      %6684 = vmatprep.subr.mxu0 0.0
      %6685 = vmatpush2.msra.mxu0 0.0
      %6686 = vmatprep.subr.mxu0 0.0
      %6687 = vmatpush2.msra.mxu0 0.0
      %6688 = vmatprep.subr.mxu0 0.0
      %6689 = vmatpush2.msra.mxu0 0.0
      %6690 = vmatprep.subr.mxu0 0.0
      %6691 = vmatpush2.msra.mxu0 0.0
      %6692 = vmatprep.subr.mxu0 0.0
      %6693 = vmatpush2.msra.mxu0 0.0
      %6694 = vmatprep.subr.mxu0 0.0
      %6695 = vmatpush2.msra.mxu0 0.0
      %6696 = vmatprep.subr.mxu0 0.0
      %6697 = vmatpush2.msra.mxu0 0.0
      %6698 = vmatprep.subr.mxu0 0.0
      %6699 = vmatpush2.msra.mxu0 0.0
      %6700 = vmatprep.subr.mxu0 0.0
      %6701 = vmatpush2.msra.mxu0 0.0
      %6702 = vmatprep.subr.mxu0 0.0
      %6703 = vmatpush2.msra.mxu0 0.0
      %6704 = vmatprep.subr.mxu0 0.0
      %6705 = vmatpush2.msra.mxu0 0.0
      %6706 = vmatprep.subr.mxu0 0.0
      %6707 = vmatpush2.msra.mxu0 0.0
      %6708 = vmatprep.subr.mxu0 0.0
      %6709 = vmatpush2.msra.mxu0 0.0
      %6710 = vmatprep.subr.mxu0 0.0
      %6711 = vmatpush2.msra.mxu0 0.0
      %6712 = vmatprep.subr.mxu0 0.0
      %6713 = vmatpush2.msra.mxu0 0.0
      %6714 = vmatprep.subr.mxu0 0.0
      %6715 = vmatpush2.msra.mxu0 0.0
      %6716 = vmatprep.mubr.f32.mxu0 0.0
      %6717 = vmatmul.mubr.f32.gmra.mxu0 %v6557
      %v6718 = vpop.f32.mrf.mxu0
      %v6719 = vadd.f32 0.0, %v6718
      %v6720 = vpop.f32.mrf.mxu0
      %6721 = vmatprep.mubr.f32.mxu0 0.0
      %6722 = vmatmul.mubr.f32.gmra.mxu0 %v6560
      %v6723 = vpop.f32.mrf.mxu0
      %v6724 = vadd.f32 0.0, %v6723
      %v6725 = vpop.f32.mrf.mxu0
      %6726 = vmatprep.mubr.f32.mxu0 0.0
      %6727 = vmatmul.mubr.f32.gmra.mxu0 %v6563
      %v6728 = vpop.f32.mrf.mxu0
      %v6729 = vadd.f32 0.0, %v6728
      %v6730 = vpop.f32.mrf.mxu0
      %6731 = vmatprep.mubr.f32.mxu0 0.0
      %6732 = vmatmul.mubr.f32.gmra.mxu0 %v6566
      %v6733 = vpop.f32.mrf.mxu0
      %v6734 = vadd.f32 0.0, %v6733
      %v6735 = vpop.f32.mrf.mxu0
      %6736 = vmatprep.mubr.f32.mxu0 0.0
      %6737 = vmatmul.mubr.f32.gmra.mxu0 %v6569
      %v6738 = vpop.f32.mrf.mxu0
      %v6739 = vadd.f32 0.0, %v6738
      %v6740 = vpop.f32.mrf.mxu0
      %6741 = vmatprep.mubr.f32.mxu0 0.0
      %6742 = vmatmul.mubr.f32.gmra.mxu0 %v6572
      %v6743 = vpop.f32.mrf.mxu0
      %v6744 = vadd.f32 0.0, %v6743
      %v6745 = vpop.f32.mrf.mxu0
      %6746 = vmatprep.mubr.f32.mxu0 0.0
      %6747 = vmatmul.mubr.f32.gmra.mxu0 %v6575
      %v6748 = vpop.f32.mrf.mxu0
      %v6749 = vadd.f32 0.0, %v6748
      %v6750 = vpop.f32.mrf.mxu0
      %6751 = vmatprep.mubr.f32.mxu0 0.0
      %6752 = vmatmul.mubr.f32.gmra.mxu0 %v6578
      %v6753 = vpop.f32.mrf.mxu0
      %v6754 = vadd.f32 0.0, %v6753
      %v6755 = vpop.f32.mrf.mxu0
      %6756 = vmatprep.mubr.f32.mxu0 0.0
      %6757 = vmatmul.mubr.f32.gmra.mxu0 %v6581
      %v6758 = vpop.f32.mrf.mxu0
      %v6759 = vadd.f32 0.0, %v6758
      %v6760 = vpop.f32.mrf.mxu0
      %6761 = vmatprep.mubr.f32.mxu0 0.0
      %6762 = vmatmul.mubr.f32.gmra.mxu0 %v6584
      %v6763 = vpop.f32.mrf.mxu0
      %v6764 = vadd.f32 0.0, %v6763
      %v6765 = vpop.f32.mrf.mxu0
      %6766 = vmatprep.mubr.f32.mxu0 0.0
      %6767 = vmatmul.mubr.f32.gmra.mxu0 %v6587
      %v6768 = vpop.f32.mrf.mxu0
      %v6769 = vadd.f32 0.0, %v6768
      %v6770 = vpop.f32.mrf.mxu0
      %6771 = vmatprep.mubr.f32.mxu0 0.0
      %6772 = vmatmul.mubr.f32.gmra.mxu0 %v6590
      %v6773 = vpop.f32.mrf.mxu0
      %v6774 = vadd.f32 0.0, %v6773
      %v6775 = vpop.f32.mrf.mxu0
      %6776 = vmatprep.mubr.f32.mxu0 0.0
      %6777 = vmatmul.mubr.f32.gmra.mxu0 %v6593
      %v6778 = vpop.f32.mrf.mxu0
      %v6779 = vadd.f32 0.0, %v6778
      %v6780 = vpop.f32.mrf.mxu0
      %6781 = vmatprep.mubr.f32.mxu0 0.0
      %6782 = vmatmul.mubr.f32.gmra.mxu0 %v6596
      %v6783 = vpop.f32.mrf.mxu0
      %v6784 = vadd.f32 0.0, %v6783
      %v6785 = vpop.f32.mrf.mxu0
      %6786 = vmatprep.mubr.f32.mxu0 0.0
      %6787 = vmatmul.mubr.f32.gmra.mxu0 %v6599
      %v6788 = vpop.f32.mrf.mxu0
      %v6789 = vadd.f32 0.0, %v6788
      %v6790 = vpop.f32.mrf.mxu0
      %6791 = vmatprep.mubr.f32.mxu0 0.0
      %6792 = vmatmul.mubr.f32.gmra.mxu0 %v6602
      %v6793 = vpop.f32.mrf.mxu0
      %v6794 = vadd.f32 0.0, %v6793
      %v6795 = vpop.f32.mrf.mxu0
      %6796 = vmatprep.mubr.f32.mxu0 0.0
      %6797 = vmatmul.mubr.f32.gmra.mxu0 %v6605
      %v6798 = vpop.f32.mrf.mxu0
      %v6799 = vadd.f32 0.0, %v6798
      %v6800 = vpop.f32.mrf.mxu0
      %6801 = vmatprep.mubr.f32.mxu0 0.0
      %6802 = vmatmul.mubr.f32.gmra.mxu0 %v6608
      %v6803 = vpop.f32.mrf.mxu0
      %v6804 = vadd.f32 0.0, %v6803
      %v6805 = vpop.f32.mrf.mxu0
      %6806 = vmatprep.mubr.f32.mxu0 0.0
      %6807 = vmatmul.mubr.f32.gmra.mxu0 %v6611
      %v6808 = vpop.f32.mrf.mxu0
      %v6809 = vadd.f32 0.0, %v6808
      %v6810 = vpop.f32.mrf.mxu0
      %6811 = vmatprep.mubr.f32.mxu0 0.0
      %6812 = vmatmul.mubr.f32.gmra.mxu0 %v6614
      %v6813 = vpop.f32.mrf.mxu0
      %v6814 = vadd.f32 0.0, %v6813
      %v6815 = vpop.f32.mrf.mxu0
      %6816 = vmatprep.mubr.f32.mxu0 0.0
      %6817 = vmatmul.mubr.f32.gmra.mxu0 %v6617
      %v6818 = vpop.f32.mrf.mxu0
      %v6819 = vadd.f32 0.0, %v6818
      %v6820 = vpop.f32.mrf.mxu0
      %6821 = vmatprep.mubr.f32.mxu0 0.0
      %6822 = vmatmul.mubr.f32.gmra.mxu0 %v6620
      %v6823 = vpop.f32.mrf.mxu0
      %v6824 = vadd.f32 0.0, %v6823
      %v6825 = vpop.f32.mrf.mxu0
      %6826 = vmatprep.mubr.f32.mxu0 0.0
      %6827 = vmatmul.mubr.f32.gmra.mxu0 %v6623
      %v6828 = vpop.f32.mrf.mxu0
      %v6829 = vadd.f32 0.0, %v6828
      %v6830 = vpop.f32.mrf.mxu0
      %6831 = vmatprep.mubr.f32.mxu0 0.0
      %6832 = vmatmul.mubr.f32.gmra.mxu0 %v6626
      %v6833 = vpop.f32.mrf.mxu0
      %v6834 = vadd.f32 0.0, %v6833
      %v6835 = vpop.f32.mrf.mxu0
      %6836 = vmatprep.mubr.f32.mxu0 0.0
      %6837 = vmatmul.mubr.f32.gmra.mxu0 %v6629
      %v6838 = vpop.f32.mrf.mxu0
      %v6839 = vadd.f32 0.0, %v6838
      %v6840 = vpop.f32.mrf.mxu0
      %6841 = vmatprep.mubr.f32.mxu0 0.0
      %6842 = vmatmul.mubr.f32.gmra.mxu0 %v6632
      %v6843 = vpop.f32.mrf.mxu0
      %v6844 = vadd.f32 0.0, %v6843
      %v6845 = vpop.f32.mrf.mxu0
      %6846 = vmatprep.mubr.f32.mxu0 0.0
      %6847 = vmatmul.mubr.f32.gmra.mxu0 %v6635
      %v6848 = vpop.f32.mrf.mxu0
      %v6849 = vadd.f32 0.0, %v6848
      %v6850 = vpop.f32.mrf.mxu0
      %6851 = vmatprep.mubr.f32.mxu0 0.0
      %6852 = vmatmul.mubr.f32.gmra.mxu0 %v6638
      %v6853 = vpop.f32.mrf.mxu0
      %v6854 = vadd.f32 0.0, %v6853
      %v6855 = vpop.f32.mrf.mxu0
      %6856 = vmatprep.mubr.f32.mxu0 0.0
      %6857 = vmatmul.mubr.f32.gmra.mxu0 %v6641
      %v6858 = vpop.f32.mrf.mxu0
      %v6859 = vadd.f32 0.0, %v6858
      %v6860 = vpop.f32.mrf.mxu0
      %6861 = vmatprep.mubr.f32.mxu0 0.0
      %6862 = vmatmul.mubr.f32.gmra.mxu0 %v6644
      %v6863 = vpop.f32.mrf.mxu0
      %v6864 = vadd.f32 0.0, %v6863
      %v6865 = vpop.f32.mrf.mxu0
      %6866 = vmatprep.mubr.f32.mxu0 0.0
      %6867 = vmatmul.mubr.f32.gmra.mxu0 %v6647
      %v6868 = vpop.f32.mrf.mxu0
      %v6869 = vadd.f32 0.0, %v6868
      %v6870 = vpop.f32.mrf.mxu0
      %6871 = vmatprep.mubr.f32.mxu0 0.0
      %6872 = vmatmul.mubr.f32.gmra.mxu0 %v6650
      %v6873 = vpop.f32.mrf.mxu0
      %v6874 = vadd.f32 0.0, %v6873
      %v6875 = vpop.f32.mrf.mxu0
      %6876 = vdwg.mxu0
      %v6877 = vld [vmem:[%s8] sm:$0xff]
      %v6878 = vld [vmem:[%s8 + $0x8] sm:$0xff]
      %v6879 = vld [vmem:[%s8 + $0x10] sm:$0xff]
      %v6880 = vld [vmem:[%s8 + $0x18] sm:$0xff]
      %v6881 = vld [vmem:[%s8 + $0x20] sm:$0xff]
      %v6882 = vld [vmem:[%s8 + $0x28] sm:$0xff]
      %v6883 = vld [vmem:[%s8 + $0x30] sm:$0xff]
      %v6884 = vld [vmem:[%s8 + $0x38] sm:$0xff]
      %v6885 = vld [vmem:[%s8 + $0x40] sm:$0xff]
      %v6886 = vld [vmem:[%s8 + $0x48] sm:$0xff]
      %v6887 = vld [vmem:[%s8 + $0x50] sm:$0xff]
      %v6888 = vld [vmem:[%s8 + $0x58] sm:$0xff]
      %v6889 = vld [vmem:[%s8 + $0x60] sm:$0xff]
      %v6890 = vld [vmem:[%s8 + $0x68] sm:$0xff]
      %v6891 = vld [vmem:[%s8 + $0x70] sm:$0xff]
      %v6892 = vld [vmem:[%s8 + $0x78] sm:$0xff]
      %v6893 = vld [vmem:[%s8 + $0x80] sm:$0xff]
      %v6894 = vld [vmem:[%s8 + $0x88] sm:$0xff]
      %v6895 = vld [vmem:[%s8 + $0x90] sm:$0xff]
      %v6896 = vld [vmem:[%s8 + $0x98] sm:$0xff]
      %v6897 = vld [vmem:[%s8 + $0xa0] sm:$0xff]
      %v6898 = vld [vmem:[%s8 + $0xa8] sm:$0xff]
      %v6899 = vld [vmem:[%s8 + $0xb0] sm:$0xff]
      %v6900 = vld [vmem:[%s8 + $0xb8] sm:$0xff]
      %v6901 = vld [vmem:[%s8 + $0xc0] sm:$0xff]
      %v6902 = vld [vmem:[%s8 + $0xc8] sm:$0xff]
      %v6903 = vld [vmem:[%s8 + $0xd0] sm:$0xff]
      %v6904 = vld [vmem:[%s8 + $0xd8] sm:$0xff]
      %v6905 = vld [vmem:[%s8 + $0xe0] sm:$0xff]
      %v6906 = vld [vmem:[%s8 + $0xe8] sm:$0xff]
      %v6907 = vld [vmem:[%s8 + $0xf0] sm:$0xff]
      %v6908 = vld [vmem:[%s8 + $0xf8] sm:$0xff]
      %v6909 = vmul.f32 %v6719, %v6877
      %v6910 = vmul.f32 %v6724, %v6878
      %v6911 = vmul.f32 %v6729, %v6879
      %v6912 = vmul.f32 %v6734, %v6880
      %v6913 = vmul.f32 %v6739, %v6881
      %v6914 = vmul.f32 %v6744, %v6882
      %v6915 = vmul.f32 %v6749, %v6883
      %v6916 = vmul.f32 %v6754, %v6884
      %v6917 = vmul.f32 %v6759, %v6885
      %v6918 = vmul.f32 %v6764, %v6886
      %v6919 = vmul.f32 %v6769, %v6887
      %v6920 = vmul.f32 %v6774, %v6888
      %v6921 = vmul.f32 %v6779, %v6889
      %v6922 = vmul.f32 %v6784, %v6890
      %v6923 = vmul.f32 %v6789, %v6891
      %v6924 = vmul.f32 %v6794, %v6892
      %v6925 = vmul.f32 %v6799, %v6893
      %v6926 = vmul.f32 %v6804, %v6894
      %v6927 = vmul.f32 %v6809, %v6895
      %v6928 = vmul.f32 %v6814, %v6896
      %v6929 = vmul.f32 %v6819, %v6897
      %v6930 = vmul.f32 %v6824, %v6898
      %v6931 = vmul.f32 %v6829, %v6899
      %v6932 = vmul.f32 %v6834, %v6900
      %v6933 = vmul.f32 %v6839, %v6901
      %v6934 = vmul.f32 %v6844, %v6902
      %v6935 = vmul.f32 %v6849, %v6903
      %v6936 = vmul.f32 %v6854, %v6904
      %v6937 = vmul.f32 %v6859, %v6905
      %v6938 = vmul.f32 %v6864, %v6906
      %v6939 = vmul.f32 %v6869, %v6907
      %v6940 = vmul.f32 %v6874, %v6908
      %v6941 = vadd.f32 %v6909, 0.0
      %v6942 = vadd.f32 %v6910, 0.0
      %v6943 = vadd.f32 %v6911, 0.0
      %v6944 = vadd.f32 %v6912, 0.0
      %v6945 = vadd.f32 %v6913, 0.0
      %v6946 = vadd.f32 %v6914, 0.0
      %v6947 = vadd.f32 %v6915, 0.0
      %v6948 = vadd.f32 %v6916, 0.0
      %v6949 = vadd.f32 %v6917, 0.0
      %v6950 = vadd.f32 %v6918, 0.0
      %v6951 = vadd.f32 %v6919, 0.0
      %v6952 = vadd.f32 %v6920, 0.0
      %v6953 = vadd.f32 %v6921, 0.0
      %v6954 = vadd.f32 %v6922, 0.0
      %v6955 = vadd.f32 %v6923, 0.0
      %v6956 = vadd.f32 %v6924, 0.0
      %v6957 = vadd.f32 %v6925, 0.0
      %v6958 = vadd.f32 %v6926, 0.0
      %v6959 = vadd.f32 %v6927, 0.0
      %v6960 = vadd.f32 %v6928, 0.0
      %v6961 = vadd.f32 %v6929, 0.0
      %v6962 = vadd.f32 %v6930, 0.0
      %v6963 = vadd.f32 %v6931, 0.0
      %v6964 = vadd.f32 %v6932, 0.0
      %v6965 = vadd.f32 %v6933, 0.0
      %v6966 = vadd.f32 %v6934, 0.0
      %v6967 = vadd.f32 %v6935, 0.0
      %v6968 = vadd.f32 %v6936, 0.0
      %v6969 = vadd.f32 %v6937, 0.0
      %v6970 = vadd.f32 %v6938, 0.0
      %v6971 = vadd.f32 %v6939, 0.0
      %v6972 = vadd.f32 %v6940, 0.0
      %v6973 = vld [vmem:[#allocation3 + $0x70] sm:$0xff]
      %v6974 = vld [vmem:[#allocation3 + $0x78] sm:$0xff]
      %v6975 = vld [vmem:[#allocation3 + $0x80] sm:$0xff]
      %v6976 = vld [vmem:[#allocation3 + $0x88] sm:$0xff]
      %v6977 = vld [vmem:[#allocation3 + $0x90] sm:$0xff]
      %v6978 = vld [vmem:[#allocation3 + $0x98] sm:$0xff]
      %v6979 = vld [vmem:[#allocation3 + $0xa0] sm:$0xff]
      %v6980 = vld [vmem:[#allocation3 + $0xa8] sm:$0xff]
      %v6981 = vld [vmem:[#allocation3 + $0xb0] sm:$0xff]
      %v6982 = vld [vmem:[#allocation3 + $0xb8] sm:$0xff]
      %v6983 = vld [vmem:[#allocation3 + $0xc0] sm:$0xff]
      %v6984 = vld [vmem:[#allocation3 + $0xc8] sm:$0xff]
      %v6985 = vld [vmem:[#allocation3 + $0xd0] sm:$0xff]
      %v6986 = vld [vmem:[#allocation3 + $0xd8] sm:$0xff]
      %v6987 = vld [vmem:[#allocation3 + $0xe0] sm:$0xff]
      %v6988 = vld [vmem:[#allocation3 + $0xe8] sm:$0xff]
      %v6989 = vld [vmem:[#allocation3 + $0xf0] sm:$0xff]
      %v6990 = vld [vmem:[#allocation3 + $0xf8] sm:$0xff]
      %v6991 = vld [vmem:[#allocation3 + $0x100] sm:$0xff]
      %v6992 = vld [vmem:[#allocation3 + $0x108] sm:$0xff]
      %v6993 = vld [vmem:[#allocation3 + $0x110] sm:$0xff]
      %v6994 = vld [vmem:[#allocation3 + $0x118] sm:$0xff]
      %v6995 = vld [vmem:[#allocation3 + $0x120] sm:$0xff]
      %v6996 = vld [vmem:[#allocation3 + $0x128] sm:$0xff]
      %v6997 = vld [vmem:[#allocation3 + $0x130] sm:$0xff]
      %v6998 = vld [vmem:[#allocation3 + $0x138] sm:$0xff]
      %v6999 = vld [vmem:[#allocation3 + $0x140] sm:$0xff]
      %v7000 = vld [vmem:[#allocation3 + $0x148] sm:$0xff]
      %v7001 = vld [vmem:[#allocation3 + $0x150] sm:$0xff]
      %v7002 = vld [vmem:[#allocation3 + $0x158] sm:$0xff]
      %v7003 = vld [vmem:[#allocation3 + $0x160] sm:$0xff]
      %v7004 = vld [vmem:[#allocation3 + $0x168] sm:$0xff]
      %s7005 = scalar_lea.vmem %s7, 8
      %v7006 = vld [vmem:[%s7005] sm:$0xff]
      %v7008 = vsel %vm398, %v6973, 0
      %v7011 = vsel %vm398, %v6974, 0
      %v7014 = vsel %vm398, %v6975, 0
      %v7017 = vsel %vm398, %v6976, 0
      %v7020 = vsel %vm398, %v6977, 0
      %v7023 = vsel %vm398, %v6978, 0
      %v7026 = vsel %vm398, %v6979, 0
      %v7029 = vsel %vm398, %v6980, 0
      %v7032 = vsel %vm398, %v6981, 0
      %v7035 = vsel %vm398, %v6982, 0
      %v7038 = vsel %vm398, %v6983, 0
      %v7041 = vsel %vm398, %v6984, 0
      %v7044 = vsel %vm398, %v6985, 0
      %v7047 = vsel %vm398, %v6986, 0
      %v7050 = vsel %vm398, %v6987, 0
      %v7053 = vsel %vm398, %v6988, 0
      %v7056 = vsel %vm398, %v6989, 0
      %v7059 = vsel %vm398, %v6990, 0
      %v7062 = vsel %vm398, %v6991, 0
      %v7065 = vsel %vm398, %v6992, 0
      %v7068 = vsel %vm398, %v6993, 0
      %v7071 = vsel %vm398, %v6994, 0
      %v7074 = vsel %vm398, %v6995, 0
      %v7077 = vsel %vm398, %v6996, 0
      %v7080 = vsel %vm398, %v6997, 0
      %v7083 = vsel %vm398, %v6998, 0
      %v7086 = vsel %vm398, %v6999, 0
      %v7089 = vsel %vm398, %v7000, 0
      %v7092 = vsel %vm398, %v7001, 0
      %v7095 = vsel %vm398, %v7002, 0
      %v7098 = vsel %vm398, %v7003, 0
      %v7101 = vsel %vm398, %v7004, 0
      %7103 = vmatprep.subr.mxu0 0.0
      %7104 = vmatpush1.msra.mxu0 0.0
      %7105 = vmatprep.subr.mxu0 0.0
      %7106 = vmatpush1.msra.mxu0 0.0
      %7107 = vmatprep.subr.mxu0 0.0
      %7108 = vmatpush1.msra.mxu0 0.0
      %7109 = vmatprep.subr.mxu0 0.0
      %7110 = vmatpush1.msra.mxu0 0.0
      %7111 = vmatprep.subr.mxu0 0.0
      %7112 = vmatpush1.msra.mxu0 0.0
      %7113 = vmatprep.subr.mxu0 0.0
      %7114 = vmatpush1.msra.mxu0 0.0
      %7115 = vmatprep.subr.mxu0 0.0
      %7116 = vmatpush1.msra.mxu0 0.0
      %7117 = vmatprep.subr.mxu0 0.0
      %7118 = vmatpush1.msra.mxu0 0.0
      %7119 = vmatprep.subr.mxu0 0.0
      %7120 = vmatpush1.msra.mxu0 0.0
      %7121 = vmatprep.subr.mxu0 0.0
      %7122 = vmatpush1.msra.mxu0 0.0
      %7123 = vmatprep.subr.mxu0 0.0
      %7124 = vmatpush1.msra.mxu0 0.0
      %7125 = vmatprep.subr.mxu0 0.0
      %7126 = vmatpush1.msra.mxu0 0.0
      %7127 = vmatprep.subr.mxu0 0.0
      %7128 = vmatpush1.msra.mxu0 0.0
      %7129 = vmatprep.subr.mxu0 0.0
      %7130 = vmatpush1.msra.mxu0 0.0
      %7131 = vmatprep.subr.mxu0 0.0
      %7132 = vmatpush1.msra.mxu0 0.0
      %7133 = vmatprep.subr.mxu0 0.0
      %7134 = vmatpush1.msra.mxu0 %v7006
      %7135 = vmatprep.subr.mxu0 0.0
      %7136 = vmatpush2.msra.mxu0 0.0
      %7137 = vmatprep.subr.mxu0 0.0
      %7138 = vmatpush2.msra.mxu0 0.0
      %7139 = vmatprep.subr.mxu0 0.0
      %7140 = vmatpush2.msra.mxu0 0.0
      %7141 = vmatprep.subr.mxu0 0.0
      %7142 = vmatpush2.msra.mxu0 0.0
      %7143 = vmatprep.subr.mxu0 0.0
      %7144 = vmatpush2.msra.mxu0 0.0
      %7145 = vmatprep.subr.mxu0 0.0
      %7146 = vmatpush2.msra.mxu0 0.0
      %7147 = vmatprep.subr.mxu0 0.0
      %7148 = vmatpush2.msra.mxu0 0.0
      %7149 = vmatprep.subr.mxu0 0.0
      %7150 = vmatpush2.msra.mxu0 0.0
      %7151 = vmatprep.subr.mxu0 0.0
      %7152 = vmatpush2.msra.mxu0 0.0
      %7153 = vmatprep.subr.mxu0 0.0
      %7154 = vmatpush2.msra.mxu0 0.0
      %7155 = vmatprep.subr.mxu0 0.0
      %7156 = vmatpush2.msra.mxu0 0.0
      %7157 = vmatprep.subr.mxu0 0.0
      %7158 = vmatpush2.msra.mxu0 0.0
      %7159 = vmatprep.subr.mxu0 0.0
      %7160 = vmatpush2.msra.mxu0 0.0
      %7161 = vmatprep.subr.mxu0 0.0
      %7162 = vmatpush2.msra.mxu0 0.0
      %7163 = vmatprep.subr.mxu0 0.0
      %7164 = vmatpush2.msra.mxu0 0.0
      %7165 = vmatprep.subr.mxu0 0.0
      %7166 = vmatpush2.msra.mxu0 0.0
      %7167 = vmatprep.mubr.f32.mxu0 0.0
      %7168 = vmatmul.mubr.f32.gmra.mxu0 %v7008
      %v7169 = vpop.f32.mrf.mxu0
      %v7170 = vadd.f32 0.0, %v7169
      %v7171 = vpop.f32.mrf.mxu0
      %7172 = vmatprep.mubr.f32.mxu0 0.0
      %7173 = vmatmul.mubr.f32.gmra.mxu0 %v7011
      %v7174 = vpop.f32.mrf.mxu0
      %v7175 = vadd.f32 0.0, %v7174
      %v7176 = vpop.f32.mrf.mxu0
      %7177 = vmatprep.mubr.f32.mxu0 0.0
      %7178 = vmatmul.mubr.f32.gmra.mxu0 %v7014
      %v7179 = vpop.f32.mrf.mxu0
      %v7180 = vadd.f32 0.0, %v7179
      %v7181 = vpop.f32.mrf.mxu0
      %7182 = vmatprep.mubr.f32.mxu0 0.0
      %7183 = vmatmul.mubr.f32.gmra.mxu0 %v7017
      %v7184 = vpop.f32.mrf.mxu0
      %v7185 = vadd.f32 0.0, %v7184
      %v7186 = vpop.f32.mrf.mxu0
      %7187 = vmatprep.mubr.f32.mxu0 0.0
      %7188 = vmatmul.mubr.f32.gmra.mxu0 %v7020
      %v7189 = vpop.f32.mrf.mxu0
      %v7190 = vadd.f32 0.0, %v7189
      %v7191 = vpop.f32.mrf.mxu0
      %7192 = vmatprep.mubr.f32.mxu0 0.0
      %7193 = vmatmul.mubr.f32.gmra.mxu0 %v7023
      %v7194 = vpop.f32.mrf.mxu0
      %v7195 = vadd.f32 0.0, %v7194
      %v7196 = vpop.f32.mrf.mxu0
      %7197 = vmatprep.mubr.f32.mxu0 0.0
      %7198 = vmatmul.mubr.f32.gmra.mxu0 %v7026
      %v7199 = vpop.f32.mrf.mxu0
      %v7200 = vadd.f32 0.0, %v7199
      %v7201 = vpop.f32.mrf.mxu0
      %7202 = vmatprep.mubr.f32.mxu0 0.0
      %7203 = vmatmul.mubr.f32.gmra.mxu0 %v7029
      %v7204 = vpop.f32.mrf.mxu0
      %v7205 = vadd.f32 0.0, %v7204
      %v7206 = vpop.f32.mrf.mxu0
      %7207 = vmatprep.mubr.f32.mxu0 0.0
      %7208 = vmatmul.mubr.f32.gmra.mxu0 %v7032
      %v7209 = vpop.f32.mrf.mxu0
      %v7210 = vadd.f32 0.0, %v7209
      %v7211 = vpop.f32.mrf.mxu0
      %7212 = vmatprep.mubr.f32.mxu0 0.0
      %7213 = vmatmul.mubr.f32.gmra.mxu0 %v7035
      %v7214 = vpop.f32.mrf.mxu0
      %v7215 = vadd.f32 0.0, %v7214
      %v7216 = vpop.f32.mrf.mxu0
      %7217 = vmatprep.mubr.f32.mxu0 0.0
      %7218 = vmatmul.mubr.f32.gmra.mxu0 %v7038
      %v7219 = vpop.f32.mrf.mxu0
      %v7220 = vadd.f32 0.0, %v7219
      %v7221 = vpop.f32.mrf.mxu0
      %7222 = vmatprep.mubr.f32.mxu0 0.0
      %7223 = vmatmul.mubr.f32.gmra.mxu0 %v7041
      %v7224 = vpop.f32.mrf.mxu0
      %v7225 = vadd.f32 0.0, %v7224
      %v7226 = vpop.f32.mrf.mxu0
      %7227 = vmatprep.mubr.f32.mxu0 0.0
      %7228 = vmatmul.mubr.f32.gmra.mxu0 %v7044
      %v7229 = vpop.f32.mrf.mxu0
      %v7230 = vadd.f32 0.0, %v7229
      %v7231 = vpop.f32.mrf.mxu0
      %7232 = vmatprep.mubr.f32.mxu0 0.0
      %7233 = vmatmul.mubr.f32.gmra.mxu0 %v7047
      %v7234 = vpop.f32.mrf.mxu0
      %v7235 = vadd.f32 0.0, %v7234
      %v7236 = vpop.f32.mrf.mxu0
      %7237 = vmatprep.mubr.f32.mxu0 0.0
      %7238 = vmatmul.mubr.f32.gmra.mxu0 %v7050
      %v7239 = vpop.f32.mrf.mxu0
      %v7240 = vadd.f32 0.0, %v7239
      %v7241 = vpop.f32.mrf.mxu0
      %7242 = vmatprep.mubr.f32.mxu0 0.0
      %7243 = vmatmul.mubr.f32.gmra.mxu0 %v7053
      %v7244 = vpop.f32.mrf.mxu0
      %v7245 = vadd.f32 0.0, %v7244
      %v7246 = vpop.f32.mrf.mxu0
      %7247 = vmatprep.mubr.f32.mxu0 0.0
      %7248 = vmatmul.mubr.f32.gmra.mxu0 %v7056
      %v7249 = vpop.f32.mrf.mxu0
      %v7250 = vadd.f32 0.0, %v7249
      %v7251 = vpop.f32.mrf.mxu0
      %7252 = vmatprep.mubr.f32.mxu0 0.0
      %7253 = vmatmul.mubr.f32.gmra.mxu0 %v7059
      %v7254 = vpop.f32.mrf.mxu0
      %v7255 = vadd.f32 0.0, %v7254
      %v7256 = vpop.f32.mrf.mxu0
      %7257 = vmatprep.mubr.f32.mxu0 0.0
      %7258 = vmatmul.mubr.f32.gmra.mxu0 %v7062
      %v7259 = vpop.f32.mrf.mxu0
      %v7260 = vadd.f32 0.0, %v7259
      %v7261 = vpop.f32.mrf.mxu0
      %7262 = vmatprep.mubr.f32.mxu0 0.0
      %7263 = vmatmul.mubr.f32.gmra.mxu0 %v7065
      %v7264 = vpop.f32.mrf.mxu0
      %v7265 = vadd.f32 0.0, %v7264
      %v7266 = vpop.f32.mrf.mxu0
      %7267 = vmatprep.mubr.f32.mxu0 0.0
      %7268 = vmatmul.mubr.f32.gmra.mxu0 %v7068
      %v7269 = vpop.f32.mrf.mxu0
      %v7270 = vadd.f32 0.0, %v7269
      %v7271 = vpop.f32.mrf.mxu0
      %7272 = vmatprep.mubr.f32.mxu0 0.0
      %7273 = vmatmul.mubr.f32.gmra.mxu0 %v7071
      %v7274 = vpop.f32.mrf.mxu0
      %v7275 = vadd.f32 0.0, %v7274
      %v7276 = vpop.f32.mrf.mxu0
      %7277 = vmatprep.mubr.f32.mxu0 0.0
      %7278 = vmatmul.mubr.f32.gmra.mxu0 %v7074
      %v7279 = vpop.f32.mrf.mxu0
      %v7280 = vadd.f32 0.0, %v7279
      %v7281 = vpop.f32.mrf.mxu0
      %7282 = vmatprep.mubr.f32.mxu0 0.0
      %7283 = vmatmul.mubr.f32.gmra.mxu0 %v7077
      %v7284 = vpop.f32.mrf.mxu0
      %v7285 = vadd.f32 0.0, %v7284
      %v7286 = vpop.f32.mrf.mxu0
      %7287 = vmatprep.mubr.f32.mxu0 0.0
      %7288 = vmatmul.mubr.f32.gmra.mxu0 %v7080
      %v7289 = vpop.f32.mrf.mxu0
      %v7290 = vadd.f32 0.0, %v7289
      %v7291 = vpop.f32.mrf.mxu0
      %7292 = vmatprep.mubr.f32.mxu0 0.0
      %7293 = vmatmul.mubr.f32.gmra.mxu0 %v7083
      %v7294 = vpop.f32.mrf.mxu0
      %v7295 = vadd.f32 0.0, %v7294
      %v7296 = vpop.f32.mrf.mxu0
      %7297 = vmatprep.mubr.f32.mxu0 0.0
      %7298 = vmatmul.mubr.f32.gmra.mxu0 %v7086
      %v7299 = vpop.f32.mrf.mxu0
      %v7300 = vadd.f32 0.0, %v7299
      %v7301 = vpop.f32.mrf.mxu0
      %7302 = vmatprep.mubr.f32.mxu0 0.0
      %7303 = vmatmul.mubr.f32.gmra.mxu0 %v7089
      %v7304 = vpop.f32.mrf.mxu0
      %v7305 = vadd.f32 0.0, %v7304
      %v7306 = vpop.f32.mrf.mxu0
      %7307 = vmatprep.mubr.f32.mxu0 0.0
      %7308 = vmatmul.mubr.f32.gmra.mxu0 %v7092
      %v7309 = vpop.f32.mrf.mxu0
      %v7310 = vadd.f32 0.0, %v7309
      %v7311 = vpop.f32.mrf.mxu0
      %7312 = vmatprep.mubr.f32.mxu0 0.0
      %7313 = vmatmul.mubr.f32.gmra.mxu0 %v7095
      %v7314 = vpop.f32.mrf.mxu0
      %v7315 = vadd.f32 0.0, %v7314
      %v7316 = vpop.f32.mrf.mxu0
      %7317 = vmatprep.mubr.f32.mxu0 0.0
      %7318 = vmatmul.mubr.f32.gmra.mxu0 %v7098
      %v7319 = vpop.f32.mrf.mxu0
      %v7320 = vadd.f32 0.0, %v7319
      %v7321 = vpop.f32.mrf.mxu0
      %7322 = vmatprep.mubr.f32.mxu0 0.0
      %7323 = vmatmul.mubr.f32.gmra.mxu0 %v7101
      %v7324 = vpop.f32.mrf.mxu0
      %v7325 = vadd.f32 0.0, %v7324
      %v7326 = vpop.f32.mrf.mxu0
      %7327 = vdwg.mxu0
      %v7328 = vld [vmem:[%s816] sm:$0xff]
      %v7329 = vld [vmem:[%s816 + $0x8] sm:$0xff]
      %v7330 = vld [vmem:[%s816 + $0x10] sm:$0xff]
      %v7331 = vld [vmem:[%s816 + $0x18] sm:$0xff]
      %v7332 = vld [vmem:[%s816 + $0x20] sm:$0xff]
      %v7333 = vld [vmem:[%s816 + $0x28] sm:$0xff]
      %v7334 = vld [vmem:[%s816 + $0x30] sm:$0xff]
      %v7335 = vld [vmem:[%s816 + $0x38] sm:$0xff]
      %v7336 = vld [vmem:[%s816 + $0x40] sm:$0xff]
      %v7337 = vld [vmem:[%s816 + $0x48] sm:$0xff]
      %v7338 = vld [vmem:[%s816 + $0x50] sm:$0xff]
      %v7339 = vld [vmem:[%s816 + $0x58] sm:$0xff]
      %v7340 = vld [vmem:[%s816 + $0x60] sm:$0xff]
      %v7341 = vld [vmem:[%s816 + $0x68] sm:$0xff]
      %v7342 = vld [vmem:[%s816 + $0x70] sm:$0xff]
      %v7343 = vld [vmem:[%s816 + $0x78] sm:$0xff]
      %v7344 = vld [vmem:[%s816 + $0x80] sm:$0xff]
      %v7345 = vld [vmem:[%s816 + $0x88] sm:$0xff]
      %v7346 = vld [vmem:[%s816 + $0x90] sm:$0xff]
      %v7347 = vld [vmem:[%s816 + $0x98] sm:$0xff]
      %v7348 = vld [vmem:[%s816 + $0xa0] sm:$0xff]
      %v7349 = vld [vmem:[%s816 + $0xa8] sm:$0xff]
      %v7350 = vld [vmem:[%s816 + $0xb0] sm:$0xff]
      %v7351 = vld [vmem:[%s816 + $0xb8] sm:$0xff]
      %v7352 = vld [vmem:[%s816 + $0xc0] sm:$0xff]
      %v7353 = vld [vmem:[%s816 + $0xc8] sm:$0xff]
      %v7354 = vld [vmem:[%s816 + $0xd0] sm:$0xff]
      %v7355 = vld [vmem:[%s816 + $0xd8] sm:$0xff]
      %v7356 = vld [vmem:[%s816 + $0xe0] sm:$0xff]
      %v7357 = vld [vmem:[%s816 + $0xe8] sm:$0xff]
      %v7358 = vld [vmem:[%s816 + $0xf0] sm:$0xff]
      %v7359 = vld [vmem:[%s816 + $0xf8] sm:$0xff]
      %v7360 = vmul.f32 %v7170, %v7328
      %v7361 = vmul.f32 %v7175, %v7329
      %v7362 = vmul.f32 %v7180, %v7330
      %v7363 = vmul.f32 %v7185, %v7331
      %v7364 = vmul.f32 %v7190, %v7332
      %v7365 = vmul.f32 %v7195, %v7333
      %v7366 = vmul.f32 %v7200, %v7334
      %v7367 = vmul.f32 %v7205, %v7335
      %v7368 = vmul.f32 %v7210, %v7336
      %v7369 = vmul.f32 %v7215, %v7337
      %v7370 = vmul.f32 %v7220, %v7338
      %v7371 = vmul.f32 %v7225, %v7339
      %v7372 = vmul.f32 %v7230, %v7340
      %v7373 = vmul.f32 %v7235, %v7341
      %v7374 = vmul.f32 %v7240, %v7342
      %v7375 = vmul.f32 %v7245, %v7343
      %v7376 = vmul.f32 %v7250, %v7344
      %v7377 = vmul.f32 %v7255, %v7345
      %v7378 = vmul.f32 %v7260, %v7346
      %v7379 = vmul.f32 %v7265, %v7347
      %v7380 = vmul.f32 %v7270, %v7348
      %v7381 = vmul.f32 %v7275, %v7349
      %v7382 = vmul.f32 %v7280, %v7350
      %v7383 = vmul.f32 %v7285, %v7351
      %v7384 = vmul.f32 %v7290, %v7352
      %v7385 = vmul.f32 %v7295, %v7353
      %v7386 = vmul.f32 %v7300, %v7354
      %v7387 = vmul.f32 %v7305, %v7355
      %v7388 = vmul.f32 %v7310, %v7356
      %v7389 = vmul.f32 %v7315, %v7357
      %v7390 = vmul.f32 %v7320, %v7358
      %v7391 = vmul.f32 %v7325, %v7359
      %v7392 = vadd.f32 %v6941, %v7360
      %v7393 = vadd.f32 %v6942, %v7361
      %v7394 = vadd.f32 %v6943, %v7362
      %v7395 = vadd.f32 %v6944, %v7363
      %v7396 = vadd.f32 %v6945, %v7364
      %v7397 = vadd.f32 %v6946, %v7365
      %v7398 = vadd.f32 %v6947, %v7366
      %v7399 = vadd.f32 %v6948, %v7367
      %v7400 = vadd.f32 %v6949, %v7368
      %v7401 = vadd.f32 %v6950, %v7369
      %v7402 = vadd.f32 %v6951, %v7370
      %v7403 = vadd.f32 %v6952, %v7371
      %v7404 = vadd.f32 %v6953, %v7372
      %v7405 = vadd.f32 %v6954, %v7373
      %v7406 = vadd.f32 %v6955, %v7374
      %v7407 = vadd.f32 %v6956, %v7375
      %v7408 = vadd.f32 %v6957, %v7376
      %v7409 = vadd.f32 %v6958, %v7377
      %v7410 = vadd.f32 %v6959, %v7378
      %v7411 = vadd.f32 %v6960, %v7379
      %v7412 = vadd.f32 %v6961, %v7380
      %v7413 = vadd.f32 %v6962, %v7381
      %v7414 = vadd.f32 %v6963, %v7382
      %v7415 = vadd.f32 %v6964, %v7383
      %v7416 = vadd.f32 %v6965, %v7384
      %v7417 = vadd.f32 %v6966, %v7385
      %v7418 = vadd.f32 %v6967, %v7386
      %v7419 = vadd.f32 %v6968, %v7387
      %v7420 = vadd.f32 %v6969, %v7388
      %v7421 = vadd.f32 %v6970, %v7389
      %v7422 = vadd.f32 %v6971, %v7390
      %v7423 = vadd.f32 %v6972, %v7391
      %v7424 = vld [vmem:[#allocation3 + $0x71] sm:$0xff]
      %v7425 = vld [vmem:[#allocation3 + $0x79] sm:$0xff]
      %v7426 = vld [vmem:[#allocation3 + $0x81] sm:$0xff]
      %v7427 = vld [vmem:[#allocation3 + $0x89] sm:$0xff]
      %v7428 = vld [vmem:[#allocation3 + $0x91] sm:$0xff]
      %v7429 = vld [vmem:[#allocation3 + $0x99] sm:$0xff]
      %v7430 = vld [vmem:[#allocation3 + $0xa1] sm:$0xff]
      %v7431 = vld [vmem:[#allocation3 + $0xa9] sm:$0xff]
      %v7432 = vld [vmem:[#allocation3 + $0xb1] sm:$0xff]
      %v7433 = vld [vmem:[#allocation3 + $0xb9] sm:$0xff]
      %v7434 = vld [vmem:[#allocation3 + $0xc1] sm:$0xff]
      %v7435 = vld [vmem:[#allocation3 + $0xc9] sm:$0xff]
      %v7436 = vld [vmem:[#allocation3 + $0xd1] sm:$0xff]
      %v7437 = vld [vmem:[#allocation3 + $0xd9] sm:$0xff]
      %v7438 = vld [vmem:[#allocation3 + $0xe1] sm:$0xff]
      %v7439 = vld [vmem:[#allocation3 + $0xe9] sm:$0xff]
      %v7440 = vld [vmem:[#allocation3 + $0xf1] sm:$0xff]
      %v7441 = vld [vmem:[#allocation3 + $0xf9] sm:$0xff]
      %v7442 = vld [vmem:[#allocation3 + $0x101] sm:$0xff]
      %v7443 = vld [vmem:[#allocation3 + $0x109] sm:$0xff]
      %v7444 = vld [vmem:[#allocation3 + $0x111] sm:$0xff]
      %v7445 = vld [vmem:[#allocation3 + $0x119] sm:$0xff]
      %v7446 = vld [vmem:[#allocation3 + $0x121] sm:$0xff]
      %v7447 = vld [vmem:[#allocation3 + $0x129] sm:$0xff]
      %v7448 = vld [vmem:[#allocation3 + $0x131] sm:$0xff]
      %v7449 = vld [vmem:[#allocation3 + $0x139] sm:$0xff]
      %v7450 = vld [vmem:[#allocation3 + $0x141] sm:$0xff]
      %v7451 = vld [vmem:[#allocation3 + $0x149] sm:$0xff]
      %v7452 = vld [vmem:[#allocation3 + $0x151] sm:$0xff]
      %v7453 = vld [vmem:[#allocation3 + $0x159] sm:$0xff]
      %v7454 = vld [vmem:[#allocation3 + $0x161] sm:$0xff]
      %v7455 = vld [vmem:[#allocation3 + $0x169] sm:$0xff]
      %s7456 = scalar_lea.vmem %s7, 16
      %v7457 = vld [vmem:[%s7456] sm:$0xff]
      %v7459 = vsel %vm398, %v7424, 0
      %v7462 = vsel %vm398, %v7425, 0
      %v7465 = vsel %vm398, %v7426, 0
      %v7468 = vsel %vm398, %v7427, 0
      %v7471 = vsel %vm398, %v7428, 0
      %v7474 = vsel %vm398, %v7429, 0
      %v7477 = vsel %vm398, %v7430, 0
      %v7480 = vsel %vm398, %v7431, 0
      %v7483 = vsel %vm398, %v7432, 0
      %v7486 = vsel %vm398, %v7433, 0
      %v7489 = vsel %vm398, %v7434, 0
      %v7492 = vsel %vm398, %v7435, 0
      %v7495 = vsel %vm398, %v7436, 0
      %v7498 = vsel %vm398, %v7437, 0
      %v7501 = vsel %vm398, %v7438, 0
      %v7504 = vsel %vm398, %v7439, 0
      %v7507 = vsel %vm398, %v7440, 0
      %v7510 = vsel %vm398, %v7441, 0
      %v7513 = vsel %vm398, %v7442, 0
      %v7516 = vsel %vm398, %v7443, 0
      %v7519 = vsel %vm398, %v7444, 0
      %v7522 = vsel %vm398, %v7445, 0
      %v7525 = vsel %vm398, %v7446, 0
      %v7528 = vsel %vm398, %v7447, 0
      %v7531 = vsel %vm398, %v7448, 0
      %v7534 = vsel %vm398, %v7449, 0
      %v7537 = vsel %vm398, %v7450, 0
      %v7540 = vsel %vm398, %v7451, 0
      %v7543 = vsel %vm398, %v7452, 0
      %v7546 = vsel %vm398, %v7453, 0
      %v7549 = vsel %vm398, %v7454, 0
      %v7552 = vsel %vm398, %v7455, 0
      %7554 = vmatprep.subr.mxu0 0.0
      %7555 = vmatpush1.msra.mxu0 0.0
      %7556 = vmatprep.subr.mxu0 0.0
      %7557 = vmatpush1.msra.mxu0 0.0
      %7558 = vmatprep.subr.mxu0 0.0
      %7559 = vmatpush1.msra.mxu0 0.0
      %7560 = vmatprep.subr.mxu0 0.0
      %7561 = vmatpush1.msra.mxu0 0.0
      %7562 = vmatprep.subr.mxu0 0.0
      %7563 = vmatpush1.msra.mxu0 0.0
      %7564 = vmatprep.subr.mxu0 0.0
      %7565 = vmatpush1.msra.mxu0 0.0
      %7566 = vmatprep.subr.mxu0 0.0
      %7567 = vmatpush1.msra.mxu0 0.0
      %7568 = vmatprep.subr.mxu0 0.0
      %7569 = vmatpush1.msra.mxu0 0.0
      %7570 = vmatprep.subr.mxu0 0.0
      %7571 = vmatpush1.msra.mxu0 0.0
      %7572 = vmatprep.subr.mxu0 0.0
      %7573 = vmatpush1.msra.mxu0 0.0
      %7574 = vmatprep.subr.mxu0 0.0
      %7575 = vmatpush1.msra.mxu0 0.0
      %7576 = vmatprep.subr.mxu0 0.0
      %7577 = vmatpush1.msra.mxu0 0.0
      %7578 = vmatprep.subr.mxu0 0.0
      %7579 = vmatpush1.msra.mxu0 0.0
      %7580 = vmatprep.subr.mxu0 0.0
      %7581 = vmatpush1.msra.mxu0 0.0
      %7582 = vmatprep.subr.mxu0 0.0
      %7583 = vmatpush1.msra.mxu0 0.0
      %7584 = vmatprep.subr.mxu0 0.0
      %7585 = vmatpush1.msra.mxu0 %v7457
      %7586 = vmatprep.subr.mxu0 0.0
      %7587 = vmatpush2.msra.mxu0 0.0
      %7588 = vmatprep.subr.mxu0 0.0
      %7589 = vmatpush2.msra.mxu0 0.0
      %7590 = vmatprep.subr.mxu0 0.0
      %7591 = vmatpush2.msra.mxu0 0.0
      %7592 = vmatprep.subr.mxu0 0.0
      %7593 = vmatpush2.msra.mxu0 0.0
      %7594 = vmatprep.subr.mxu0 0.0
      %7595 = vmatpush2.msra.mxu0 0.0
      %7596 = vmatprep.subr.mxu0 0.0
      %7597 = vmatpush2.msra.mxu0 0.0
      %7598 = vmatprep.subr.mxu0 0.0
      %7599 = vmatpush2.msra.mxu0 0.0
      %7600 = vmatprep.subr.mxu0 0.0
      %7601 = vmatpush2.msra.mxu0 0.0
      %7602 = vmatprep.subr.mxu0 0.0
      %7603 = vmatpush2.msra.mxu0 0.0
      %7604 = vmatprep.subr.mxu0 0.0
      %7605 = vmatpush2.msra.mxu0 0.0
      %7606 = vmatprep.subr.mxu0 0.0
      %7607 = vmatpush2.msra.mxu0 0.0
      %7608 = vmatprep.subr.mxu0 0.0
      %7609 = vmatpush2.msra.mxu0 0.0
      %7610 = vmatprep.subr.mxu0 0.0
      %7611 = vmatpush2.msra.mxu0 0.0
      %7612 = vmatprep.subr.mxu0 0.0
      %7613 = vmatpush2.msra.mxu0 0.0
      %7614 = vmatprep.subr.mxu0 0.0
      %7615 = vmatpush2.msra.mxu0 0.0
      %7616 = vmatprep.subr.mxu0 0.0
      %7617 = vmatpush2.msra.mxu0 0.0
      %7618 = vmatprep.mubr.f32.mxu0 0.0
      %7619 = vmatmul.mubr.f32.gmra.mxu0 %v7459
      %v7620 = vpop.f32.mrf.mxu0
      %v7621 = vadd.f32 0.0, %v7620
      %v7622 = vpop.f32.mrf.mxu0
      %7623 = vmatprep.mubr.f32.mxu0 0.0
      %7624 = vmatmul.mubr.f32.gmra.mxu0 %v7462
      %v7625 = vpop.f32.mrf.mxu0
      %v7626 = vadd.f32 0.0, %v7625
      %v7627 = vpop.f32.mrf.mxu0
      %7628 = vmatprep.mubr.f32.mxu0 0.0
      %7629 = vmatmul.mubr.f32.gmra.mxu0 %v7465
      %v7630 = vpop.f32.mrf.mxu0
      %v7631 = vadd.f32 0.0, %v7630
      %v7632 = vpop.f32.mrf.mxu0
      %7633 = vmatprep.mubr.f32.mxu0 0.0
      %7634 = vmatmul.mubr.f32.gmra.mxu0 %v7468
      %v7635 = vpop.f32.mrf.mxu0
      %v7636 = vadd.f32 0.0, %v7635
      %v7637 = vpop.f32.mrf.mxu0
      %7638 = vmatprep.mubr.f32.mxu0 0.0
      %7639 = vmatmul.mubr.f32.gmra.mxu0 %v7471
      %v7640 = vpop.f32.mrf.mxu0
      %v7641 = vadd.f32 0.0, %v7640
      %v7642 = vpop.f32.mrf.mxu0
      %7643 = vmatprep.mubr.f32.mxu0 0.0
      %7644 = vmatmul.mubr.f32.gmra.mxu0 %v7474
      %v7645 = vpop.f32.mrf.mxu0
      %v7646 = vadd.f32 0.0, %v7645
      %v7647 = vpop.f32.mrf.mxu0
      %7648 = vmatprep.mubr.f32.mxu0 0.0
      %7649 = vmatmul.mubr.f32.gmra.mxu0 %v7477
      %v7650 = vpop.f32.mrf.mxu0
      %v7651 = vadd.f32 0.0, %v7650
      %v7652 = vpop.f32.mrf.mxu0
      %7653 = vmatprep.mubr.f32.mxu0 0.0
      %7654 = vmatmul.mubr.f32.gmra.mxu0 %v7480
      %v7655 = vpop.f32.mrf.mxu0
      %v7656 = vadd.f32 0.0, %v7655
      %v7657 = vpop.f32.mrf.mxu0
      %7658 = vmatprep.mubr.f32.mxu0 0.0
      %7659 = vmatmul.mubr.f32.gmra.mxu0 %v7483
      %v7660 = vpop.f32.mrf.mxu0
      %v7661 = vadd.f32 0.0, %v7660
      %v7662 = vpop.f32.mrf.mxu0
      %7663 = vmatprep.mubr.f32.mxu0 0.0
      %7664 = vmatmul.mubr.f32.gmra.mxu0 %v7486
      %v7665 = vpop.f32.mrf.mxu0
      %v7666 = vadd.f32 0.0, %v7665
      %v7667 = vpop.f32.mrf.mxu0
      %7668 = vmatprep.mubr.f32.mxu0 0.0
      %7669 = vmatmul.mubr.f32.gmra.mxu0 %v7489
      %v7670 = vpop.f32.mrf.mxu0
      %v7671 = vadd.f32 0.0, %v7670
      %v7672 = vpop.f32.mrf.mxu0
      %7673 = vmatprep.mubr.f32.mxu0 0.0
      %7674 = vmatmul.mubr.f32.gmra.mxu0 %v7492
      %v7675 = vpop.f32.mrf.mxu0
      %v7676 = vadd.f32 0.0, %v7675
      %v7677 = vpop.f32.mrf.mxu0
      %7678 = vmatprep.mubr.f32.mxu0 0.0
      %7679 = vmatmul.mubr.f32.gmra.mxu0 %v7495
      %v7680 = vpop.f32.mrf.mxu0
      %v7681 = vadd.f32 0.0, %v7680
      %v7682 = vpop.f32.mrf.mxu0
      %7683 = vmatprep.mubr.f32.mxu0 0.0
      %7684 = vmatmul.mubr.f32.gmra.mxu0 %v7498
      %v7685 = vpop.f32.mrf.mxu0
      %v7686 = vadd.f32 0.0, %v7685
      %v7687 = vpop.f32.mrf.mxu0
      %7688 = vmatprep.mubr.f32.mxu0 0.0
      %7689 = vmatmul.mubr.f32.gmra.mxu0 %v7501
      %v7690 = vpop.f32.mrf.mxu0
      %v7691 = vadd.f32 0.0, %v7690
      %v7692 = vpop.f32.mrf.mxu0
      %7693 = vmatprep.mubr.f32.mxu0 0.0
      %7694 = vmatmul.mubr.f32.gmra.mxu0 %v7504
      %v7695 = vpop.f32.mrf.mxu0
      %v7696 = vadd.f32 0.0, %v7695
      %v7697 = vpop.f32.mrf.mxu0
      %7698 = vmatprep.mubr.f32.mxu0 0.0
      %7699 = vmatmul.mubr.f32.gmra.mxu0 %v7507
      %v7700 = vpop.f32.mrf.mxu0
      %v7701 = vadd.f32 0.0, %v7700
      %v7702 = vpop.f32.mrf.mxu0
      %7703 = vmatprep.mubr.f32.mxu0 0.0
      %7704 = vmatmul.mubr.f32.gmra.mxu0 %v7510
      %v7705 = vpop.f32.mrf.mxu0
      %v7706 = vadd.f32 0.0, %v7705
      %v7707 = vpop.f32.mrf.mxu0
      %7708 = vmatprep.mubr.f32.mxu0 0.0
      %7709 = vmatmul.mubr.f32.gmra.mxu0 %v7513
      %v7710 = vpop.f32.mrf.mxu0
      %v7711 = vadd.f32 0.0, %v7710
      %v7712 = vpop.f32.mrf.mxu0
      %7713 = vmatprep.mubr.f32.mxu0 0.0
      %7714 = vmatmul.mubr.f32.gmra.mxu0 %v7516
      %v7715 = vpop.f32.mrf.mxu0
      %v7716 = vadd.f32 0.0, %v7715
      %v7717 = vpop.f32.mrf.mxu0
      %7718 = vmatprep.mubr.f32.mxu0 0.0
      %7719 = vmatmul.mubr.f32.gmra.mxu0 %v7519
      %v7720 = vpop.f32.mrf.mxu0
      %v7721 = vadd.f32 0.0, %v7720
      %v7722 = vpop.f32.mrf.mxu0
      %7723 = vmatprep.mubr.f32.mxu0 0.0
      %7724 = vmatmul.mubr.f32.gmra.mxu0 %v7522
      %v7725 = vpop.f32.mrf.mxu0
      %v7726 = vadd.f32 0.0, %v7725
      %v7727 = vpop.f32.mrf.mxu0
      %7728 = vmatprep.mubr.f32.mxu0 0.0
      %7729 = vmatmul.mubr.f32.gmra.mxu0 %v7525
      %v7730 = vpop.f32.mrf.mxu0
      %v7731 = vadd.f32 0.0, %v7730
      %v7732 = vpop.f32.mrf.mxu0
      %7733 = vmatprep.mubr.f32.mxu0 0.0
      %7734 = vmatmul.mubr.f32.gmra.mxu0 %v7528
      %v7735 = vpop.f32.mrf.mxu0
      %v7736 = vadd.f32 0.0, %v7735
      %v7737 = vpop.f32.mrf.mxu0
      %7738 = vmatprep.mubr.f32.mxu0 0.0
      %7739 = vmatmul.mubr.f32.gmra.mxu0 %v7531
      %v7740 = vpop.f32.mrf.mxu0
      %v7741 = vadd.f32 0.0, %v7740
      %v7742 = vpop.f32.mrf.mxu0
      %7743 = vmatprep.mubr.f32.mxu0 0.0
      %7744 = vmatmul.mubr.f32.gmra.mxu0 %v7534
      %v7745 = vpop.f32.mrf.mxu0
      %v7746 = vadd.f32 0.0, %v7745
      %v7747 = vpop.f32.mrf.mxu0
      %7748 = vmatprep.mubr.f32.mxu0 0.0
      %7749 = vmatmul.mubr.f32.gmra.mxu0 %v7537
      %v7750 = vpop.f32.mrf.mxu0
      %v7751 = vadd.f32 0.0, %v7750
      %v7752 = vpop.f32.mrf.mxu0
      %7753 = vmatprep.mubr.f32.mxu0 0.0
      %7754 = vmatmul.mubr.f32.gmra.mxu0 %v7540
      %v7755 = vpop.f32.mrf.mxu0
      %v7756 = vadd.f32 0.0, %v7755
      %v7757 = vpop.f32.mrf.mxu0
      %7758 = vmatprep.mubr.f32.mxu0 0.0
      %7759 = vmatmul.mubr.f32.gmra.mxu0 %v7543
      %v7760 = vpop.f32.mrf.mxu0
      %v7761 = vadd.f32 0.0, %v7760
      %v7762 = vpop.f32.mrf.mxu0
      %7763 = vmatprep.mubr.f32.mxu0 0.0
      %7764 = vmatmul.mubr.f32.gmra.mxu0 %v7546
      %v7765 = vpop.f32.mrf.mxu0
      %v7766 = vadd.f32 0.0, %v7765
      %v7767 = vpop.f32.mrf.mxu0
      %7768 = vmatprep.mubr.f32.mxu0 0.0
      %7769 = vmatmul.mubr.f32.gmra.mxu0 %v7549
      %v7770 = vpop.f32.mrf.mxu0
      %v7771 = vadd.f32 0.0, %v7770
      %v7772 = vpop.f32.mrf.mxu0
      %7773 = vmatprep.mubr.f32.mxu0 0.0
      %7774 = vmatmul.mubr.f32.gmra.mxu0 %v7552
      %v7775 = vpop.f32.mrf.mxu0
      %v7776 = vadd.f32 0.0, %v7775
      %v7777 = vpop.f32.mrf.mxu0
      %7778 = vdwg.mxu0
      %v7779 = vld [vmem:[%s1724] sm:$0xff]
      %v7780 = vld [vmem:[%s1724 + $0x8] sm:$0xff]
      %v7781 = vld [vmem:[%s1724 + $0x10] sm:$0xff]
      %v7782 = vld [vmem:[%s1724 + $0x18] sm:$0xff]
      %v7783 = vld [vmem:[%s1724 + $0x20] sm:$0xff]
      %v7784 = vld [vmem:[%s1724 + $0x28] sm:$0xff]
      %v7785 = vld [vmem:[%s1724 + $0x30] sm:$0xff]
      %v7786 = vld [vmem:[%s1724 + $0x38] sm:$0xff]
      %v7787 = vld [vmem:[%s1724 + $0x40] sm:$0xff]
      %v7788 = vld [vmem:[%s1724 + $0x48] sm:$0xff]
      %v7789 = vld [vmem:[%s1724 + $0x50] sm:$0xff]
      %v7790 = vld [vmem:[%s1724 + $0x58] sm:$0xff]
      %v7791 = vld [vmem:[%s1724 + $0x60] sm:$0xff]
      %v7792 = vld [vmem:[%s1724 + $0x68] sm:$0xff]
      %v7793 = vld [vmem:[%s1724 + $0x70] sm:$0xff]
      %v7794 = vld [vmem:[%s1724 + $0x78] sm:$0xff]
      %v7795 = vld [vmem:[%s1724 + $0x80] sm:$0xff]
      %v7796 = vld [vmem:[%s1724 + $0x88] sm:$0xff]
      %v7797 = vld [vmem:[%s1724 + $0x90] sm:$0xff]
      %v7798 = vld [vmem:[%s1724 + $0x98] sm:$0xff]
      %v7799 = vld [vmem:[%s1724 + $0xa0] sm:$0xff]
      %v7800 = vld [vmem:[%s1724 + $0xa8] sm:$0xff]
      %v7801 = vld [vmem:[%s1724 + $0xb0] sm:$0xff]
      %v7802 = vld [vmem:[%s1724 + $0xb8] sm:$0xff]
      %v7803 = vld [vmem:[%s1724 + $0xc0] sm:$0xff]
      %v7804 = vld [vmem:[%s1724 + $0xc8] sm:$0xff]
      %v7805 = vld [vmem:[%s1724 + $0xd0] sm:$0xff]
      %v7806 = vld [vmem:[%s1724 + $0xd8] sm:$0xff]
      %v7807 = vld [vmem:[%s1724 + $0xe0] sm:$0xff]
      %v7808 = vld [vmem:[%s1724 + $0xe8] sm:$0xff]
      %v7809 = vld [vmem:[%s1724 + $0xf0] sm:$0xff]
      %v7810 = vld [vmem:[%s1724 + $0xf8] sm:$0xff]
      %v7811 = vmul.f32 %v7621, %v7779
      %v7812 = vmul.f32 %v7626, %v7780
      %v7813 = vmul.f32 %v7631, %v7781
      %v7814 = vmul.f32 %v7636, %v7782
      %v7815 = vmul.f32 %v7641, %v7783
      %v7816 = vmul.f32 %v7646, %v7784
      %v7817 = vmul.f32 %v7651, %v7785
      %v7818 = vmul.f32 %v7656, %v7786
      %v7819 = vmul.f32 %v7661, %v7787
      %v7820 = vmul.f32 %v7666, %v7788
      %v7821 = vmul.f32 %v7671, %v7789
      %v7822 = vmul.f32 %v7676, %v7790
      %v7823 = vmul.f32 %v7681, %v7791
      %v7824 = vmul.f32 %v7686, %v7792
      %v7825 = vmul.f32 %v7691, %v7793
      %v7826 = vmul.f32 %v7696, %v7794
      %v7827 = vmul.f32 %v7701, %v7795
      %v7828 = vmul.f32 %v7706, %v7796
      %v7829 = vmul.f32 %v7711, %v7797
      %v7830 = vmul.f32 %v7716, %v7798
      %v7831 = vmul.f32 %v7721, %v7799
      %v7832 = vmul.f32 %v7726, %v7800
      %v7833 = vmul.f32 %v7731, %v7801
      %v7834 = vmul.f32 %v7736, %v7802
      %v7835 = vmul.f32 %v7741, %v7803
      %v7836 = vmul.f32 %v7746, %v7804
      %v7837 = vmul.f32 %v7751, %v7805
      %v7838 = vmul.f32 %v7756, %v7806
      %v7839 = vmul.f32 %v7761, %v7807
      %v7840 = vmul.f32 %v7766, %v7808
      %v7841 = vmul.f32 %v7771, %v7809
      %v7842 = vmul.f32 %v7776, %v7810
      %v7843 = vadd.f32 %v7392, %v7811
      %v7844 = vadd.f32 %v7393, %v7812
      %v7845 = vadd.f32 %v7394, %v7813
      %v7846 = vadd.f32 %v7395, %v7814
      %v7847 = vadd.f32 %v7396, %v7815
      %v7848 = vadd.f32 %v7397, %v7816
      %v7849 = vadd.f32 %v7398, %v7817
      %v7850 = vadd.f32 %v7399, %v7818
      %v7851 = vadd.f32 %v7400, %v7819
      %v7852 = vadd.f32 %v7401, %v7820
      %v7853 = vadd.f32 %v7402, %v7821
      %v7854 = vadd.f32 %v7403, %v7822
      %v7855 = vadd.f32 %v7404, %v7823
      %v7856 = vadd.f32 %v7405, %v7824
      %v7857 = vadd.f32 %v7406, %v7825
      %v7858 = vadd.f32 %v7407, %v7826
      %v7859 = vadd.f32 %v7408, %v7827
      %v7860 = vadd.f32 %v7409, %v7828
      %v7861 = vadd.f32 %v7410, %v7829
      %v7862 = vadd.f32 %v7411, %v7830
      %v7863 = vadd.f32 %v7412, %v7831
      %v7864 = vadd.f32 %v7413, %v7832
      %v7865 = vadd.f32 %v7414, %v7833
      %v7866 = vadd.f32 %v7415, %v7834
      %v7867 = vadd.f32 %v7416, %v7835
      %v7868 = vadd.f32 %v7417, %v7836
      %v7869 = vadd.f32 %v7418, %v7837
      %v7870 = vadd.f32 %v7419, %v7838
      %v7871 = vadd.f32 %v7420, %v7839
      %v7872 = vadd.f32 %v7421, %v7840
      %v7873 = vadd.f32 %v7422, %v7841
      %v7874 = vadd.f32 %v7423, %v7842
      %v7875 = vld [vmem:[#allocation3 + $0x7f] sm:$0xff]
      %v7876 = vld [vmem:[#allocation3 + $0x87] sm:$0xff]
      %v7877 = vld [vmem:[#allocation3 + $0x8f] sm:$0xff]
      %v7878 = vld [vmem:[#allocation3 + $0x97] sm:$0xff]
      %v7879 = vld [vmem:[#allocation3 + $0x9f] sm:$0xff]
      %v7880 = vld [vmem:[#allocation3 + $0xa7] sm:$0xff]
      %v7881 = vld [vmem:[#allocation3 + $0xaf] sm:$0xff]
      %v7882 = vld [vmem:[#allocation3 + $0xb7] sm:$0xff]
      %v7883 = vld [vmem:[#allocation3 + $0xbf] sm:$0xff]
      %v7884 = vld [vmem:[#allocation3 + $0xc7] sm:$0xff]
      %v7885 = vld [vmem:[#allocation3 + $0xcf] sm:$0xff]
      %v7886 = vld [vmem:[#allocation3 + $0xd7] sm:$0xff]
      %v7887 = vld [vmem:[#allocation3 + $0xdf] sm:$0xff]
      %v7888 = vld [vmem:[#allocation3 + $0xe7] sm:$0xff]
      %v7889 = vld [vmem:[#allocation3 + $0xef] sm:$0xff]
      %v7890 = vld [vmem:[#allocation3 + $0xf7] sm:$0xff]
      %v7891 = vld [vmem:[#allocation3 + $0xff] sm:$0xff]
      %v7892 = vld [vmem:[#allocation3 + $0x107] sm:$0xff]
      %v7893 = vld [vmem:[#allocation3 + $0x10f] sm:$0xff]
      %v7894 = vld [vmem:[#allocation3 + $0x117] sm:$0xff]
      %v7895 = vld [vmem:[#allocation3 + $0x11f] sm:$0xff]
      %v7896 = vld [vmem:[#allocation3 + $0x127] sm:$0xff]
      %v7897 = vld [vmem:[#allocation3 + $0x12f] sm:$0xff]
      %v7898 = vld [vmem:[#allocation3 + $0x137] sm:$0xff]
      %v7899 = vld [vmem:[#allocation3 + $0x13f] sm:$0xff]
      %v7900 = vld [vmem:[#allocation3 + $0x147] sm:$0xff]
      %v7901 = vld [vmem:[#allocation3 + $0x14f] sm:$0xff]
      %v7902 = vld [vmem:[#allocation3 + $0x157] sm:$0xff]
      %v7903 = vld [vmem:[#allocation3 + $0x15f] sm:$0xff]
      %v7904 = vld [vmem:[#allocation3 + $0x167] sm:$0xff]
      %v7905 = vld [vmem:[#allocation3 + $0x16f] sm:$0xff]
      %v7906 = vld [vmem:[#allocation3 + $0x177] sm:$0xff]
      %s7907 = scalar_lea.vmem %s7, 24
      %v7908 = vld [vmem:[%s7907] sm:$0xff]
      %v7910 = vsel %vm398, %v7875, 0
      %v7913 = vsel %vm398, %v7876, 0
      %v7916 = vsel %vm398, %v7877, 0
      %v7919 = vsel %vm398, %v7878, 0
      %v7922 = vsel %vm398, %v7879, 0
      %v7925 = vsel %vm398, %v7880, 0
      %v7928 = vsel %vm398, %v7881, 0
      %v7931 = vsel %vm398, %v7882, 0
      %v7934 = vsel %vm398, %v7883, 0
      %v7937 = vsel %vm398, %v7884, 0
      %v7940 = vsel %vm398, %v7885, 0
      %v7943 = vsel %vm398, %v7886, 0
      %v7946 = vsel %vm398, %v7887, 0
      %v7949 = vsel %vm398, %v7888, 0
      %v7952 = vsel %vm398, %v7889, 0
      %v7955 = vsel %vm398, %v7890, 0
      %v7958 = vsel %vm398, %v7891, 0
      %v7961 = vsel %vm398, %v7892, 0
      %v7964 = vsel %vm398, %v7893, 0
      %v7967 = vsel %vm398, %v7894, 0
      %v7970 = vsel %vm398, %v7895, 0
      %v7973 = vsel %vm398, %v7896, 0
      %v7976 = vsel %vm398, %v7897, 0
      %v7979 = vsel %vm398, %v7898, 0
      %v7982 = vsel %vm398, %v7899, 0
      %v7985 = vsel %vm398, %v7900, 0
      %v7988 = vsel %vm398, %v7901, 0
      %v7991 = vsel %vm398, %v7902, 0
      %v7994 = vsel %vm398, %v7903, 0
      %v7997 = vsel %vm398, %v7904, 0
      %v8000 = vsel %vm398, %v7905, 0
      %v8003 = vsel %vm398, %v7906, 0
      %8005 = vmatprep.subr.mxu0 0.0
      %8006 = vmatpush1.msra.mxu0 0.0
      %8007 = vmatprep.subr.mxu0 0.0
      %8008 = vmatpush1.msra.mxu0 0.0
      %8009 = vmatprep.subr.mxu0 0.0
      %8010 = vmatpush1.msra.mxu0 0.0
      %8011 = vmatprep.subr.mxu0 0.0
      %8012 = vmatpush1.msra.mxu0 0.0
      %8013 = vmatprep.subr.mxu0 0.0
      %8014 = vmatpush1.msra.mxu0 0.0
      %8015 = vmatprep.subr.mxu0 0.0
      %8016 = vmatpush1.msra.mxu0 0.0
      %8017 = vmatprep.subr.mxu0 0.0
      %8018 = vmatpush1.msra.mxu0 0.0
      %8019 = vmatprep.subr.mxu0 0.0
      %8020 = vmatpush1.msra.mxu0 0.0
      %8021 = vmatprep.subr.mxu0 0.0
      %8022 = vmatpush1.msra.mxu0 0.0
      %8023 = vmatprep.subr.mxu0 0.0
      %8024 = vmatpush1.msra.mxu0 0.0
      %8025 = vmatprep.subr.mxu0 0.0
      %8026 = vmatpush1.msra.mxu0 0.0
      %8027 = vmatprep.subr.mxu0 0.0
      %8028 = vmatpush1.msra.mxu0 0.0
      %8029 = vmatprep.subr.mxu0 0.0
      %8030 = vmatpush1.msra.mxu0 0.0
      %8031 = vmatprep.subr.mxu0 0.0
      %8032 = vmatpush1.msra.mxu0 0.0
      %8033 = vmatprep.subr.mxu0 0.0
      %8034 = vmatpush1.msra.mxu0 0.0
      %8035 = vmatprep.subr.mxu0 0.0
      %8036 = vmatpush1.msra.mxu0 %v7908
      %8037 = vmatprep.subr.mxu0 0.0
      %8038 = vmatpush2.msra.mxu0 0.0
      %8039 = vmatprep.subr.mxu0 0.0
      %8040 = vmatpush2.msra.mxu0 0.0
      %8041 = vmatprep.subr.mxu0 0.0
      %8042 = vmatpush2.msra.mxu0 0.0
      %8043 = vmatprep.subr.mxu0 0.0
      %8044 = vmatpush2.msra.mxu0 0.0
      %8045 = vmatprep.subr.mxu0 0.0
      %8046 = vmatpush2.msra.mxu0 0.0
      %8047 = vmatprep.subr.mxu0 0.0
      %8048 = vmatpush2.msra.mxu0 0.0
      %8049 = vmatprep.subr.mxu0 0.0
      %8050 = vmatpush2.msra.mxu0 0.0
      %8051 = vmatprep.subr.mxu0 0.0
      %8052 = vmatpush2.msra.mxu0 0.0
      %8053 = vmatprep.subr.mxu0 0.0
      %8054 = vmatpush2.msra.mxu0 0.0
      %8055 = vmatprep.subr.mxu0 0.0
      %8056 = vmatpush2.msra.mxu0 0.0
      %8057 = vmatprep.subr.mxu0 0.0
      %8058 = vmatpush2.msra.mxu0 0.0
      %8059 = vmatprep.subr.mxu0 0.0
      %8060 = vmatpush2.msra.mxu0 0.0
      %8061 = vmatprep.subr.mxu0 0.0
      %8062 = vmatpush2.msra.mxu0 0.0
      %8063 = vmatprep.subr.mxu0 0.0
      %8064 = vmatpush2.msra.mxu0 0.0
      %8065 = vmatprep.subr.mxu0 0.0
      %8066 = vmatpush2.msra.mxu0 0.0
      %8067 = vmatprep.subr.mxu0 0.0
      %8068 = vmatpush2.msra.mxu0 0.0
      %8069 = vmatprep.mubr.f32.mxu0 0.0
      %8070 = vmatmul.mubr.f32.gmra.mxu0 %v7910
      %v8071 = vpop.f32.mrf.mxu0
      %v8072 = vadd.f32 0.0, %v8071
      %v8073 = vpop.f32.mrf.mxu0
      %8074 = vmatprep.mubr.f32.mxu0 0.0
      %8075 = vmatmul.mubr.f32.gmra.mxu0 %v7913
      %v8076 = vpop.f32.mrf.mxu0
      %v8077 = vadd.f32 0.0, %v8076
      %v8078 = vpop.f32.mrf.mxu0
      %8079 = vmatprep.mubr.f32.mxu0 0.0
      %8080 = vmatmul.mubr.f32.gmra.mxu0 %v7916
      %v8081 = vpop.f32.mrf.mxu0
      %v8082 = vadd.f32 0.0, %v8081
      %v8083 = vpop.f32.mrf.mxu0
      %8084 = vmatprep.mubr.f32.mxu0 0.0
      %8085 = vmatmul.mubr.f32.gmra.mxu0 %v7919
      %v8086 = vpop.f32.mrf.mxu0
      %v8087 = vadd.f32 0.0, %v8086
      %v8088 = vpop.f32.mrf.mxu0
      %8089 = vmatprep.mubr.f32.mxu0 0.0
      %8090 = vmatmul.mubr.f32.gmra.mxu0 %v7922
      %v8091 = vpop.f32.mrf.mxu0
      %v8092 = vadd.f32 0.0, %v8091
      %v8093 = vpop.f32.mrf.mxu0
      %8094 = vmatprep.mubr.f32.mxu0 0.0
      %8095 = vmatmul.mubr.f32.gmra.mxu0 %v7925
      %v8096 = vpop.f32.mrf.mxu0
      %v8097 = vadd.f32 0.0, %v8096
      %v8098 = vpop.f32.mrf.mxu0
      %8099 = vmatprep.mubr.f32.mxu0 0.0
      %8100 = vmatmul.mubr.f32.gmra.mxu0 %v7928
      %v8101 = vpop.f32.mrf.mxu0
      %v8102 = vadd.f32 0.0, %v8101
      %v8103 = vpop.f32.mrf.mxu0
      %8104 = vmatprep.mubr.f32.mxu0 0.0
      %8105 = vmatmul.mubr.f32.gmra.mxu0 %v7931
      %v8106 = vpop.f32.mrf.mxu0
      %v8107 = vadd.f32 0.0, %v8106
      %v8108 = vpop.f32.mrf.mxu0
      %8109 = vmatprep.mubr.f32.mxu0 0.0
      %8110 = vmatmul.mubr.f32.gmra.mxu0 %v7934
      %v8111 = vpop.f32.mrf.mxu0
      %v8112 = vadd.f32 0.0, %v8111
      %v8113 = vpop.f32.mrf.mxu0
      %8114 = vmatprep.mubr.f32.mxu0 0.0
      %8115 = vmatmul.mubr.f32.gmra.mxu0 %v7937
      %v8116 = vpop.f32.mrf.mxu0
      %v8117 = vadd.f32 0.0, %v8116
      %v8118 = vpop.f32.mrf.mxu0
      %8119 = vmatprep.mubr.f32.mxu0 0.0
      %8120 = vmatmul.mubr.f32.gmra.mxu0 %v7940
      %v8121 = vpop.f32.mrf.mxu0
      %v8122 = vadd.f32 0.0, %v8121
      %v8123 = vpop.f32.mrf.mxu0
      %8124 = vmatprep.mubr.f32.mxu0 0.0
      %8125 = vmatmul.mubr.f32.gmra.mxu0 %v7943
      %v8126 = vpop.f32.mrf.mxu0
      %v8127 = vadd.f32 0.0, %v8126
      %v8128 = vpop.f32.mrf.mxu0
      %8129 = vmatprep.mubr.f32.mxu0 0.0
      %8130 = vmatmul.mubr.f32.gmra.mxu0 %v7946
      %v8131 = vpop.f32.mrf.mxu0
      %v8132 = vadd.f32 0.0, %v8131
      %v8133 = vpop.f32.mrf.mxu0
      %8134 = vmatprep.mubr.f32.mxu0 0.0
      %8135 = vmatmul.mubr.f32.gmra.mxu0 %v7949
      %v8136 = vpop.f32.mrf.mxu0
      %v8137 = vadd.f32 0.0, %v8136
      %v8138 = vpop.f32.mrf.mxu0
      %8139 = vmatprep.mubr.f32.mxu0 0.0
      %8140 = vmatmul.mubr.f32.gmra.mxu0 %v7952
      %v8141 = vpop.f32.mrf.mxu0
      %v8142 = vadd.f32 0.0, %v8141
      %v8143 = vpop.f32.mrf.mxu0
      %8144 = vmatprep.mubr.f32.mxu0 0.0
      %8145 = vmatmul.mubr.f32.gmra.mxu0 %v7955
      %v8146 = vpop.f32.mrf.mxu0
      %v8147 = vadd.f32 0.0, %v8146
      %v8148 = vpop.f32.mrf.mxu0
      %8149 = vmatprep.mubr.f32.mxu0 0.0
      %8150 = vmatmul.mubr.f32.gmra.mxu0 %v7958
      %v8151 = vpop.f32.mrf.mxu0
      %v8152 = vadd.f32 0.0, %v8151
      %v8153 = vpop.f32.mrf.mxu0
      %8154 = vmatprep.mubr.f32.mxu0 0.0
      %8155 = vmatmul.mubr.f32.gmra.mxu0 %v7961
      %v8156 = vpop.f32.mrf.mxu0
      %v8157 = vadd.f32 0.0, %v8156
      %v8158 = vpop.f32.mrf.mxu0
      %8159 = vmatprep.mubr.f32.mxu0 0.0
      %8160 = vmatmul.mubr.f32.gmra.mxu0 %v7964
      %v8161 = vpop.f32.mrf.mxu0
      %v8162 = vadd.f32 0.0, %v8161
      %v8163 = vpop.f32.mrf.mxu0
      %8164 = vmatprep.mubr.f32.mxu0 0.0
      %8165 = vmatmul.mubr.f32.gmra.mxu0 %v7967
      %v8166 = vpop.f32.mrf.mxu0
      %v8167 = vadd.f32 0.0, %v8166
      %v8168 = vpop.f32.mrf.mxu0
      %8169 = vmatprep.mubr.f32.mxu0 0.0
      %8170 = vmatmul.mubr.f32.gmra.mxu0 %v7970
      %v8171 = vpop.f32.mrf.mxu0
      %v8172 = vadd.f32 0.0, %v8171
      %v8173 = vpop.f32.mrf.mxu0
      %8174 = vmatprep.mubr.f32.mxu0 0.0
      %8175 = vmatmul.mubr.f32.gmra.mxu0 %v7973
      %v8176 = vpop.f32.mrf.mxu0
      %v8177 = vadd.f32 0.0, %v8176
      %v8178 = vpop.f32.mrf.mxu0
      %8179 = vmatprep.mubr.f32.mxu0 0.0
      %8180 = vmatmul.mubr.f32.gmra.mxu0 %v7976
      %v8181 = vpop.f32.mrf.mxu0
      %v8182 = vadd.f32 0.0, %v8181
      %v8183 = vpop.f32.mrf.mxu0
      %8184 = vmatprep.mubr.f32.mxu0 0.0
      %8185 = vmatmul.mubr.f32.gmra.mxu0 %v7979
      %v8186 = vpop.f32.mrf.mxu0
      %v8187 = vadd.f32 0.0, %v8186
      %v8188 = vpop.f32.mrf.mxu0
      %8189 = vmatprep.mubr.f32.mxu0 0.0
      %8190 = vmatmul.mubr.f32.gmra.mxu0 %v7982
      %v8191 = vpop.f32.mrf.mxu0
      %v8192 = vadd.f32 0.0, %v8191
      %v8193 = vpop.f32.mrf.mxu0
      %8194 = vmatprep.mubr.f32.mxu0 0.0
      %8195 = vmatmul.mubr.f32.gmra.mxu0 %v7985
      %v8196 = vpop.f32.mrf.mxu0
      %v8197 = vadd.f32 0.0, %v8196
      %v8198 = vpop.f32.mrf.mxu0
      %8199 = vmatprep.mubr.f32.mxu0 0.0
      %8200 = vmatmul.mubr.f32.gmra.mxu0 %v7988
      %v8201 = vpop.f32.mrf.mxu0
      %v8202 = vadd.f32 0.0, %v8201
      %v8203 = vpop.f32.mrf.mxu0
      %8204 = vmatprep.mubr.f32.mxu0 0.0
      %8205 = vmatmul.mubr.f32.gmra.mxu0 %v7991
      %v8206 = vpop.f32.mrf.mxu0
      %v8207 = vadd.f32 0.0, %v8206
      %v8208 = vpop.f32.mrf.mxu0
      %8209 = vmatprep.mubr.f32.mxu0 0.0
      %8210 = vmatmul.mubr.f32.gmra.mxu0 %v7994
      %v8211 = vpop.f32.mrf.mxu0
      %v8212 = vadd.f32 0.0, %v8211
      %v8213 = vpop.f32.mrf.mxu0
      %8214 = vmatprep.mubr.f32.mxu0 0.0
      %8215 = vmatmul.mubr.f32.gmra.mxu0 %v7997
      %v8216 = vpop.f32.mrf.mxu0
      %v8217 = vadd.f32 0.0, %v8216
      %v8218 = vpop.f32.mrf.mxu0
      %8219 = vmatprep.mubr.f32.mxu0 0.0
      %8220 = vmatmul.mubr.f32.gmra.mxu0 %v8000
      %v8221 = vpop.f32.mrf.mxu0
      %v8222 = vadd.f32 0.0, %v8221
      %v8223 = vpop.f32.mrf.mxu0
      %8224 = vmatprep.mubr.f32.mxu0 0.0
      %8225 = vmatmul.mubr.f32.gmra.mxu0 %v8003
      %v8226 = vpop.f32.mrf.mxu0
      %v8227 = vadd.f32 0.0, %v8226
      %v8228 = vpop.f32.mrf.mxu0
      %8229 = vdwg.mxu0
      %v8230 = vld [vmem:[%s2339] sm:$0xff]
      %v8231 = vld [vmem:[%s2339 + $0x8] sm:$0xff]
      %v8232 = vld [vmem:[%s2339 + $0x10] sm:$0xff]
      %v8233 = vld [vmem:[%s2339 + $0x18] sm:$0xff]
      %v8234 = vld [vmem:[%s2339 + $0x20] sm:$0xff]
      %v8235 = vld [vmem:[%s2339 + $0x28] sm:$0xff]
      %v8236 = vld [vmem:[%s2339 + $0x30] sm:$0xff]
      %v8237 = vld [vmem:[%s2339 + $0x38] sm:$0xff]
      %v8238 = vld [vmem:[%s2339 + $0x40] sm:$0xff]
      %v8239 = vld [vmem:[%s2339 + $0x48] sm:$0xff]
      %v8240 = vld [vmem:[%s2339 + $0x50] sm:$0xff]
      %v8241 = vld [vmem:[%s2339 + $0x58] sm:$0xff]
      %v8242 = vld [vmem:[%s2339 + $0x60] sm:$0xff]
      %v8243 = vld [vmem:[%s2339 + $0x68] sm:$0xff]
      %v8244 = vld [vmem:[%s2339 + $0x70] sm:$0xff]
      %v8245 = vld [vmem:[%s2339 + $0x78] sm:$0xff]
      %v8246 = vld [vmem:[%s2339 + $0x80] sm:$0xff]
      %v8247 = vld [vmem:[%s2339 + $0x88] sm:$0xff]
      %v8248 = vld [vmem:[%s2339 + $0x90] sm:$0xff]
      %v8249 = vld [vmem:[%s2339 + $0x98] sm:$0xff]
      %v8250 = vld [vmem:[%s2339 + $0xa0] sm:$0xff]
      %v8251 = vld [vmem:[%s2339 + $0xa8] sm:$0xff]
      %v8252 = vld [vmem:[%s2339 + $0xb0] sm:$0xff]
      %v8253 = vld [vmem:[%s2339 + $0xb8] sm:$0xff]
      %v8254 = vld [vmem:[%s2339 + $0xc0] sm:$0xff]
      %v8255 = vld [vmem:[%s2339 + $0xc8] sm:$0xff]
      %v8256 = vld [vmem:[%s2339 + $0xd0] sm:$0xff]
      %v8257 = vld [vmem:[%s2339 + $0xd8] sm:$0xff]
      %v8258 = vld [vmem:[%s2339 + $0xe0] sm:$0xff]
      %v8259 = vld [vmem:[%s2339 + $0xe8] sm:$0xff]
      %v8260 = vld [vmem:[%s2339 + $0xf0] sm:$0xff]
      %v8261 = vld [vmem:[%s2339 + $0xf8] sm:$0xff]
      %v8262 = vmul.f32 %v8072, %v8230
      %v8263 = vmul.f32 %v8077, %v8231
      %v8264 = vmul.f32 %v8082, %v8232
      %v8265 = vmul.f32 %v8087, %v8233
      %v8266 = vmul.f32 %v8092, %v8234
      %v8267 = vmul.f32 %v8097, %v8235
      %v8268 = vmul.f32 %v8102, %v8236
      %v8269 = vmul.f32 %v8107, %v8237
      %v8270 = vmul.f32 %v8112, %v8238
      %v8271 = vmul.f32 %v8117, %v8239
      %v8272 = vmul.f32 %v8122, %v8240
      %v8273 = vmul.f32 %v8127, %v8241
      %v8274 = vmul.f32 %v8132, %v8242
      %v8275 = vmul.f32 %v8137, %v8243
      %v8276 = vmul.f32 %v8142, %v8244
      %v8277 = vmul.f32 %v8147, %v8245
      %v8278 = vmul.f32 %v8152, %v8246
      %v8279 = vmul.f32 %v8157, %v8247
      %v8280 = vmul.f32 %v8162, %v8248
      %v8281 = vmul.f32 %v8167, %v8249
      %v8282 = vmul.f32 %v8172, %v8250
      %v8283 = vmul.f32 %v8177, %v8251
      %v8284 = vmul.f32 %v8182, %v8252
      %v8285 = vmul.f32 %v8187, %v8253
      %v8286 = vmul.f32 %v8192, %v8254
      %v8287 = vmul.f32 %v8197, %v8255
      %v8288 = vmul.f32 %v8202, %v8256
      %v8289 = vmul.f32 %v8207, %v8257
      %v8290 = vmul.f32 %v8212, %v8258
      %v8291 = vmul.f32 %v8217, %v8259
      %v8292 = vmul.f32 %v8222, %v8260
      %v8293 = vmul.f32 %v8227, %v8261
      %v8294 = vadd.f32 %v7843, %v8262
      %v8295 = vadd.f32 %v7844, %v8263
      %v8296 = vadd.f32 %v7845, %v8264
      %v8297 = vadd.f32 %v7846, %v8265
      %v8298 = vadd.f32 %v7847, %v8266
      %v8299 = vadd.f32 %v7848, %v8267
      %v8300 = vadd.f32 %v7849, %v8268
      %v8301 = vadd.f32 %v7850, %v8269
      %v8302 = vadd.f32 %v7851, %v8270
      %v8303 = vadd.f32 %v7852, %v8271
      %v8304 = vadd.f32 %v7853, %v8272
      %v8305 = vadd.f32 %v7854, %v8273
      %v8306 = vadd.f32 %v7855, %v8274
      %v8307 = vadd.f32 %v7856, %v8275
      %v8308 = vadd.f32 %v7857, %v8276
      %v8309 = vadd.f32 %v7858, %v8277
      %v8310 = vadd.f32 %v7859, %v8278
      %v8311 = vadd.f32 %v7860, %v8279
      %v8312 = vadd.f32 %v7861, %v8280
      %v8313 = vadd.f32 %v7862, %v8281
      %v8314 = vadd.f32 %v7863, %v8282
      %v8315 = vadd.f32 %v7864, %v8283
      %v8316 = vadd.f32 %v7865, %v8284
      %v8317 = vadd.f32 %v7866, %v8285
      %v8318 = vadd.f32 %v7867, %v8286
      %v8319 = vadd.f32 %v7868, %v8287
      %v8320 = vadd.f32 %v7869, %v8288
      %v8321 = vadd.f32 %v7870, %v8289
      %v8322 = vadd.f32 %v7871, %v8290
      %v8323 = vadd.f32 %v7872, %v8291
      %v8324 = vadd.f32 %v7873, %v8292
      %v8325 = vadd.f32 %v7874, %v8293
      %v8326 = vld [vmem:[#allocation3 + $0x80] sm:$0xff]
      %v8327 = vld [vmem:[#allocation3 + $0x88] sm:$0xff]
      %v8328 = vld [vmem:[#allocation3 + $0x90] sm:$0xff]
      %v8329 = vld [vmem:[#allocation3 + $0x98] sm:$0xff]
      %v8330 = vld [vmem:[#allocation3 + $0xa0] sm:$0xff]
      %v8331 = vld [vmem:[#allocation3 + $0xa8] sm:$0xff]
      %v8332 = vld [vmem:[#allocation3 + $0xb0] sm:$0xff]
      %v8333 = vld [vmem:[#allocation3 + $0xb8] sm:$0xff]
      %v8334 = vld [vmem:[#allocation3 + $0xc0] sm:$0xff]
      %v8335 = vld [vmem:[#allocation3 + $0xc8] sm:$0xff]
      %v8336 = vld [vmem:[#allocation3 + $0xd0] sm:$0xff]
      %v8337 = vld [vmem:[#allocation3 + $0xd8] sm:$0xff]
      %v8338 = vld [vmem:[#allocation3 + $0xe0] sm:$0xff]
      %v8339 = vld [vmem:[#allocation3 + $0xe8] sm:$0xff]
      %v8340 = vld [vmem:[#allocation3 + $0xf0] sm:$0xff]
      %v8341 = vld [vmem:[#allocation3 + $0xf8] sm:$0xff]
      %v8342 = vld [vmem:[#allocation3 + $0x100] sm:$0xff]
      %v8343 = vld [vmem:[#allocation3 + $0x108] sm:$0xff]
      %v8344 = vld [vmem:[#allocation3 + $0x110] sm:$0xff]
      %v8345 = vld [vmem:[#allocation3 + $0x118] sm:$0xff]
      %v8346 = vld [vmem:[#allocation3 + $0x120] sm:$0xff]
      %v8347 = vld [vmem:[#allocation3 + $0x128] sm:$0xff]
      %v8348 = vld [vmem:[#allocation3 + $0x130] sm:$0xff]
      %v8349 = vld [vmem:[#allocation3 + $0x138] sm:$0xff]
      %v8350 = vld [vmem:[#allocation3 + $0x140] sm:$0xff]
      %v8351 = vld [vmem:[#allocation3 + $0x148] sm:$0xff]
      %v8352 = vld [vmem:[#allocation3 + $0x150] sm:$0xff]
      %v8353 = vld [vmem:[#allocation3 + $0x158] sm:$0xff]
      %v8354 = vld [vmem:[#allocation3 + $0x160] sm:$0xff]
      %v8355 = vld [vmem:[#allocation3 + $0x168] sm:$0xff]
      %v8356 = vld [vmem:[#allocation3 + $0x170] sm:$0xff]
      %v8357 = vld [vmem:[#allocation3 + $0x178] sm:$0xff]
      %s8358 = scalar_lea.vmem %s7, 32
      %v8359 = vld [vmem:[%s8358] sm:$0xff]
      %v8361 = vsel %vm398, %v8326, 0
      %v8364 = vsel %vm398, %v8327, 0
      %v8367 = vsel %vm398, %v8328, 0
      %v8370 = vsel %vm398, %v8329, 0
      %v8373 = vsel %vm398, %v8330, 0
      %v8376 = vsel %vm398, %v8331, 0
      %v8379 = vsel %vm398, %v8332, 0
      %v8382 = vsel %vm398, %v8333, 0
      %v8385 = vsel %vm398, %v8334, 0
      %v8388 = vsel %vm398, %v8335, 0
      %v8391 = vsel %vm398, %v8336, 0
      %v8394 = vsel %vm398, %v8337, 0
      %v8397 = vsel %vm398, %v8338, 0
      %v8400 = vsel %vm398, %v8339, 0
      %v8403 = vsel %vm398, %v8340, 0
      %v8406 = vsel %vm398, %v8341, 0
      %v8409 = vsel %vm398, %v8342, 0
      %v8412 = vsel %vm398, %v8343, 0
      %v8415 = vsel %vm398, %v8344, 0
      %v8418 = vsel %vm398, %v8345, 0
      %v8421 = vsel %vm398, %v8346, 0
      %v8424 = vsel %vm398, %v8347, 0
      %v8427 = vsel %vm398, %v8348, 0
      %v8430 = vsel %vm398, %v8349, 0
      %v8433 = vsel %vm398, %v8350, 0
      %v8436 = vsel %vm398, %v8351, 0
      %v8439 = vsel %vm398, %v8352, 0
      %v8442 = vsel %vm398, %v8353, 0
      %v8445 = vsel %vm398, %v8354, 0
      %v8448 = vsel %vm398, %v8355, 0
      %v8451 = vsel %vm398, %v8356, 0
      %v8454 = vsel %vm398, %v8357, 0
      %8456 = vmatprep.subr.mxu0 0.0
      %8457 = vmatpush1.msra.mxu0 0.0
      %8458 = vmatprep.subr.mxu0 0.0
      %8459 = vmatpush1.msra.mxu0 0.0
      %8460 = vmatprep.subr.mxu0 0.0
      %8461 = vmatpush1.msra.mxu0 0.0
      %8462 = vmatprep.subr.mxu0 0.0
      %8463 = vmatpush1.msra.mxu0 0.0
      %8464 = vmatprep.subr.mxu0 0.0
      %8465 = vmatpush1.msra.mxu0 0.0
      %8466 = vmatprep.subr.mxu0 0.0
      %8467 = vmatpush1.msra.mxu0 0.0
      %8468 = vmatprep.subr.mxu0 0.0
      %8469 = vmatpush1.msra.mxu0 0.0
      %8470 = vmatprep.subr.mxu0 0.0
      %8471 = vmatpush1.msra.mxu0 0.0
      %8472 = vmatprep.subr.mxu0 0.0
      %8473 = vmatpush1.msra.mxu0 0.0
      %8474 = vmatprep.subr.mxu0 0.0
      %8475 = vmatpush1.msra.mxu0 0.0
      %8476 = vmatprep.subr.mxu0 0.0
      %8477 = vmatpush1.msra.mxu0 0.0
      %8478 = vmatprep.subr.mxu0 0.0
      %8479 = vmatpush1.msra.mxu0 0.0
      %8480 = vmatprep.subr.mxu0 0.0
      %8481 = vmatpush1.msra.mxu0 0.0
      %8482 = vmatprep.subr.mxu0 0.0
      %8483 = vmatpush1.msra.mxu0 0.0
      %8484 = vmatprep.subr.mxu0 0.0
      %8485 = vmatpush1.msra.mxu0 0.0
      %8486 = vmatprep.subr.mxu0 0.0
      %8487 = vmatpush1.msra.mxu0 %v8359
      %8488 = vmatprep.subr.mxu0 0.0
      %8489 = vmatpush2.msra.mxu0 0.0
      %8490 = vmatprep.subr.mxu0 0.0
      %8491 = vmatpush2.msra.mxu0 0.0
      %8492 = vmatprep.subr.mxu0 0.0
      %8493 = vmatpush2.msra.mxu0 0.0
      %8494 = vmatprep.subr.mxu0 0.0
      %8495 = vmatpush2.msra.mxu0 0.0
      %8496 = vmatprep.subr.mxu0 0.0
      %8497 = vmatpush2.msra.mxu0 0.0
      %8498 = vmatprep.subr.mxu0 0.0
      %8499 = vmatpush2.msra.mxu0 0.0
      %8500 = vmatprep.subr.mxu0 0.0
      %8501 = vmatpush2.msra.mxu0 0.0
      %8502 = vmatprep.subr.mxu0 0.0
      %8503 = vmatpush2.msra.mxu0 0.0
      %8504 = vmatprep.subr.mxu0 0.0
      %8505 = vmatpush2.msra.mxu0 0.0
      %8506 = vmatprep.subr.mxu0 0.0
      %8507 = vmatpush2.msra.mxu0 0.0
      %8508 = vmatprep.subr.mxu0 0.0
      %8509 = vmatpush2.msra.mxu0 0.0
      %8510 = vmatprep.subr.mxu0 0.0
      %8511 = vmatpush2.msra.mxu0 0.0
      %8512 = vmatprep.subr.mxu0 0.0
      %8513 = vmatpush2.msra.mxu0 0.0
      %8514 = vmatprep.subr.mxu0 0.0
      %8515 = vmatpush2.msra.mxu0 0.0
      %8516 = vmatprep.subr.mxu0 0.0
      %8517 = vmatpush2.msra.mxu0 0.0
      %8518 = vmatprep.subr.mxu0 0.0
      %8519 = vmatpush2.msra.mxu0 0.0
      %8520 = vmatprep.mubr.f32.mxu0 0.0
      %8521 = vmatmul.mubr.f32.gmra.mxu0 %v8361
      %v8522 = vpop.f32.mrf.mxu0
      %v8523 = vadd.f32 0.0, %v8522
      %v8524 = vpop.f32.mrf.mxu0
      %8525 = vmatprep.mubr.f32.mxu0 0.0
      %8526 = vmatmul.mubr.f32.gmra.mxu0 %v8364
      %v8527 = vpop.f32.mrf.mxu0
      %v8528 = vadd.f32 0.0, %v8527
      %v8529 = vpop.f32.mrf.mxu0
      %8530 = vmatprep.mubr.f32.mxu0 0.0
      %8531 = vmatmul.mubr.f32.gmra.mxu0 %v8367
      %v8532 = vpop.f32.mrf.mxu0
      %v8533 = vadd.f32 0.0, %v8532
      %v8534 = vpop.f32.mrf.mxu0
      %8535 = vmatprep.mubr.f32.mxu0 0.0
      %8536 = vmatmul.mubr.f32.gmra.mxu0 %v8370
      %v8537 = vpop.f32.mrf.mxu0
      %v8538 = vadd.f32 0.0, %v8537
      %v8539 = vpop.f32.mrf.mxu0
      %8540 = vmatprep.mubr.f32.mxu0 0.0
      %8541 = vmatmul.mubr.f32.gmra.mxu0 %v8373
      %v8542 = vpop.f32.mrf.mxu0
      %v8543 = vadd.f32 0.0, %v8542
      %v8544 = vpop.f32.mrf.mxu0
      %8545 = vmatprep.mubr.f32.mxu0 0.0
      %8546 = vmatmul.mubr.f32.gmra.mxu0 %v8376
      %v8547 = vpop.f32.mrf.mxu0
      %v8548 = vadd.f32 0.0, %v8547
      %v8549 = vpop.f32.mrf.mxu0
      %8550 = vmatprep.mubr.f32.mxu0 0.0
      %8551 = vmatmul.mubr.f32.gmra.mxu0 %v8379
      %v8552 = vpop.f32.mrf.mxu0
      %v8553 = vadd.f32 0.0, %v8552
      %v8554 = vpop.f32.mrf.mxu0
      %8555 = vmatprep.mubr.f32.mxu0 0.0
      %8556 = vmatmul.mubr.f32.gmra.mxu0 %v8382
      %v8557 = vpop.f32.mrf.mxu0
      %v8558 = vadd.f32 0.0, %v8557
      %v8559 = vpop.f32.mrf.mxu0
      %8560 = vmatprep.mubr.f32.mxu0 0.0
      %8561 = vmatmul.mubr.f32.gmra.mxu0 %v8385
      %v8562 = vpop.f32.mrf.mxu0
      %v8563 = vadd.f32 0.0, %v8562
      %v8564 = vpop.f32.mrf.mxu0
      %8565 = vmatprep.mubr.f32.mxu0 0.0
      %8566 = vmatmul.mubr.f32.gmra.mxu0 %v8388
      %v8567 = vpop.f32.mrf.mxu0
      %v8568 = vadd.f32 0.0, %v8567
      %v8569 = vpop.f32.mrf.mxu0
      %8570 = vmatprep.mubr.f32.mxu0 0.0
      %8571 = vmatmul.mubr.f32.gmra.mxu0 %v8391
      %v8572 = vpop.f32.mrf.mxu0
      %v8573 = vadd.f32 0.0, %v8572
      %v8574 = vpop.f32.mrf.mxu0
      %8575 = vmatprep.mubr.f32.mxu0 0.0
      %8576 = vmatmul.mubr.f32.gmra.mxu0 %v8394
      %v8577 = vpop.f32.mrf.mxu0
      %v8578 = vadd.f32 0.0, %v8577
      %v8579 = vpop.f32.mrf.mxu0
      %8580 = vmatprep.mubr.f32.mxu0 0.0
      %8581 = vmatmul.mubr.f32.gmra.mxu0 %v8397
      %v8582 = vpop.f32.mrf.mxu0
      %v8583 = vadd.f32 0.0, %v8582
      %v8584 = vpop.f32.mrf.mxu0
      %8585 = vmatprep.mubr.f32.mxu0 0.0
      %8586 = vmatmul.mubr.f32.gmra.mxu0 %v8400
      %v8587 = vpop.f32.mrf.mxu0
      %v8588 = vadd.f32 0.0, %v8587
      %v8589 = vpop.f32.mrf.mxu0
      %8590 = vmatprep.mubr.f32.mxu0 0.0
      %8591 = vmatmul.mubr.f32.gmra.mxu0 %v8403
      %v8592 = vpop.f32.mrf.mxu0
      %v8593 = vadd.f32 0.0, %v8592
      %v8594 = vpop.f32.mrf.mxu0
      %8595 = vmatprep.mubr.f32.mxu0 0.0
      %8596 = vmatmul.mubr.f32.gmra.mxu0 %v8406
      %v8597 = vpop.f32.mrf.mxu0
      %v8598 = vadd.f32 0.0, %v8597
      %v8599 = vpop.f32.mrf.mxu0
      %8600 = vmatprep.mubr.f32.mxu0 0.0
      %8601 = vmatmul.mubr.f32.gmra.mxu0 %v8409
      %v8602 = vpop.f32.mrf.mxu0
      %v8603 = vadd.f32 0.0, %v8602
      %v8604 = vpop.f32.mrf.mxu0
      %8605 = vmatprep.mubr.f32.mxu0 0.0
      %8606 = vmatmul.mubr.f32.gmra.mxu0 %v8412
      %v8607 = vpop.f32.mrf.mxu0
      %v8608 = vadd.f32 0.0, %v8607
      %v8609 = vpop.f32.mrf.mxu0
      %8610 = vmatprep.mubr.f32.mxu0 0.0
      %8611 = vmatmul.mubr.f32.gmra.mxu0 %v8415
      %v8612 = vpop.f32.mrf.mxu0
      %v8613 = vadd.f32 0.0, %v8612
      %v8614 = vpop.f32.mrf.mxu0
      %8615 = vmatprep.mubr.f32.mxu0 0.0
      %8616 = vmatmul.mubr.f32.gmra.mxu0 %v8418
      %v8617 = vpop.f32.mrf.mxu0
      %v8618 = vadd.f32 0.0, %v8617
      %v8619 = vpop.f32.mrf.mxu0
      %8620 = vmatprep.mubr.f32.mxu0 0.0
      %8621 = vmatmul.mubr.f32.gmra.mxu0 %v8421
      %v8622 = vpop.f32.mrf.mxu0
      %v8623 = vadd.f32 0.0, %v8622
      %v8624 = vpop.f32.mrf.mxu0
      %8625 = vmatprep.mubr.f32.mxu0 0.0
      %8626 = vmatmul.mubr.f32.gmra.mxu0 %v8424
      %v8627 = vpop.f32.mrf.mxu0
      %v8628 = vadd.f32 0.0, %v8627
      %v8629 = vpop.f32.mrf.mxu0
      %8630 = vmatprep.mubr.f32.mxu0 0.0
      %8631 = vmatmul.mubr.f32.gmra.mxu0 %v8427
      %v8632 = vpop.f32.mrf.mxu0
      %v8633 = vadd.f32 0.0, %v8632
      %v8634 = vpop.f32.mrf.mxu0
      %8635 = vmatprep.mubr.f32.mxu0 0.0
      %8636 = vmatmul.mubr.f32.gmra.mxu0 %v8430
      %v8637 = vpop.f32.mrf.mxu0
      %v8638 = vadd.f32 0.0, %v8637
      %v8639 = vpop.f32.mrf.mxu0
      %8640 = vmatprep.mubr.f32.mxu0 0.0
      %8641 = vmatmul.mubr.f32.gmra.mxu0 %v8433
      %v8642 = vpop.f32.mrf.mxu0
      %v8643 = vadd.f32 0.0, %v8642
      %v8644 = vpop.f32.mrf.mxu0
      %8645 = vmatprep.mubr.f32.mxu0 0.0
      %8646 = vmatmul.mubr.f32.gmra.mxu0 %v8436
      %v8647 = vpop.f32.mrf.mxu0
      %v8648 = vadd.f32 0.0, %v8647
      %v8649 = vpop.f32.mrf.mxu0
      %8650 = vmatprep.mubr.f32.mxu0 0.0
      %8651 = vmatmul.mubr.f32.gmra.mxu0 %v8439
      %v8652 = vpop.f32.mrf.mxu0
      %v8653 = vadd.f32 0.0, %v8652
      %v8654 = vpop.f32.mrf.mxu0
      %8655 = vmatprep.mubr.f32.mxu0 0.0
      %8656 = vmatmul.mubr.f32.gmra.mxu0 %v8442
      %v8657 = vpop.f32.mrf.mxu0
      %v8658 = vadd.f32 0.0, %v8657
      %v8659 = vpop.f32.mrf.mxu0
      %8660 = vmatprep.mubr.f32.mxu0 0.0
      %8661 = vmatmul.mubr.f32.gmra.mxu0 %v8445
      %v8662 = vpop.f32.mrf.mxu0
      %v8663 = vadd.f32 0.0, %v8662
      %v8664 = vpop.f32.mrf.mxu0
      %8665 = vmatprep.mubr.f32.mxu0 0.0
      %8666 = vmatmul.mubr.f32.gmra.mxu0 %v8448
      %v8667 = vpop.f32.mrf.mxu0
      %v8668 = vadd.f32 0.0, %v8667
      %v8669 = vpop.f32.mrf.mxu0
      %8670 = vmatprep.mubr.f32.mxu0 0.0
      %8671 = vmatmul.mubr.f32.gmra.mxu0 %v8451
      %v8672 = vpop.f32.mrf.mxu0
      %v8673 = vadd.f32 0.0, %v8672
      %v8674 = vpop.f32.mrf.mxu0
      %8675 = vmatprep.mubr.f32.mxu0 0.0
      %8676 = vmatmul.mubr.f32.gmra.mxu0 %v8454
      %v8677 = vpop.f32.mrf.mxu0
      %v8678 = vadd.f32 0.0, %v8677
      %v8679 = vpop.f32.mrf.mxu0
      %8680 = vdwg.mxu0
      %v8681 = vld [vmem:[%s2954] sm:$0xff]
      %v8682 = vld [vmem:[%s2954 + $0x8] sm:$0xff]
      %v8683 = vld [vmem:[%s2954 + $0x10] sm:$0xff]
      %v8684 = vld [vmem:[%s2954 + $0x18] sm:$0xff]
      %v8685 = vld [vmem:[%s2954 + $0x20] sm:$0xff]
      %v8686 = vld [vmem:[%s2954 + $0x28] sm:$0xff]
      %v8687 = vld [vmem:[%s2954 + $0x30] sm:$0xff]
      %v8688 = vld [vmem:[%s2954 + $0x38] sm:$0xff]
      %v8689 = vld [vmem:[%s2954 + $0x40] sm:$0xff]
      %v8690 = vld [vmem:[%s2954 + $0x48] sm:$0xff]
      %v8691 = vld [vmem:[%s2954 + $0x50] sm:$0xff]
      %v8692 = vld [vmem:[%s2954 + $0x58] sm:$0xff]
      %v8693 = vld [vmem:[%s2954 + $0x60] sm:$0xff]
      %v8694 = vld [vmem:[%s2954 + $0x68] sm:$0xff]
      %v8695 = vld [vmem:[%s2954 + $0x70] sm:$0xff]
      %v8696 = vld [vmem:[%s2954 + $0x78] sm:$0xff]
      %v8697 = vld [vmem:[%s2954 + $0x80] sm:$0xff]
      %v8698 = vld [vmem:[%s2954 + $0x88] sm:$0xff]
      %v8699 = vld [vmem:[%s2954 + $0x90] sm:$0xff]
      %v8700 = vld [vmem:[%s2954 + $0x98] sm:$0xff]
      %v8701 = vld [vmem:[%s2954 + $0xa0] sm:$0xff]
      %v8702 = vld [vmem:[%s2954 + $0xa8] sm:$0xff]
      %v8703 = vld [vmem:[%s2954 + $0xb0] sm:$0xff]
      %v8704 = vld [vmem:[%s2954 + $0xb8] sm:$0xff]
      %v8705 = vld [vmem:[%s2954 + $0xc0] sm:$0xff]
      %v8706 = vld [vmem:[%s2954 + $0xc8] sm:$0xff]
      %v8707 = vld [vmem:[%s2954 + $0xd0] sm:$0xff]
      %v8708 = vld [vmem:[%s2954 + $0xd8] sm:$0xff]
      %v8709 = vld [vmem:[%s2954 + $0xe0] sm:$0xff]
      %v8710 = vld [vmem:[%s2954 + $0xe8] sm:$0xff]
      %v8711 = vld [vmem:[%s2954 + $0xf0] sm:$0xff]
      %v8712 = vld [vmem:[%s2954 + $0xf8] sm:$0xff]
      %v8713 = vmul.f32 %v8523, %v8681
      %v8714 = vmul.f32 %v8528, %v8682
      %v8715 = vmul.f32 %v8533, %v8683
      %v8716 = vmul.f32 %v8538, %v8684
      %v8717 = vmul.f32 %v8543, %v8685
      %v8718 = vmul.f32 %v8548, %v8686
      %v8719 = vmul.f32 %v8553, %v8687
      %v8720 = vmul.f32 %v8558, %v8688
      %v8721 = vmul.f32 %v8563, %v8689
      %v8722 = vmul.f32 %v8568, %v8690
      %v8723 = vmul.f32 %v8573, %v8691
      %v8724 = vmul.f32 %v8578, %v8692
      %v8725 = vmul.f32 %v8583, %v8693
      %v8726 = vmul.f32 %v8588, %v8694
      %v8727 = vmul.f32 %v8593, %v8695
      %v8728 = vmul.f32 %v8598, %v8696
      %v8729 = vmul.f32 %v8603, %v8697
      %v8730 = vmul.f32 %v8608, %v8698
      %v8731 = vmul.f32 %v8613, %v8699
      %v8732 = vmul.f32 %v8618, %v8700
      %v8733 = vmul.f32 %v8623, %v8701
      %v8734 = vmul.f32 %v8628, %v8702
      %v8735 = vmul.f32 %v8633, %v8703
      %v8736 = vmul.f32 %v8638, %v8704
      %v8737 = vmul.f32 %v8643, %v8705
      %v8738 = vmul.f32 %v8648, %v8706
      %v8739 = vmul.f32 %v8653, %v8707
      %v8740 = vmul.f32 %v8658, %v8708
      %v8741 = vmul.f32 %v8663, %v8709
      %v8742 = vmul.f32 %v8668, %v8710
      %v8743 = vmul.f32 %v8673, %v8711
      %v8744 = vmul.f32 %v8678, %v8712
      %v8745 = vadd.f32 %v8294, %v8713
      %v8746 = vadd.f32 %v8295, %v8714
      %v8747 = vadd.f32 %v8296, %v8715
      %v8748 = vadd.f32 %v8297, %v8716
      %v8749 = vadd.f32 %v8298, %v8717
      %v8750 = vadd.f32 %v8299, %v8718
      %v8751 = vadd.f32 %v8300, %v8719
      %v8752 = vadd.f32 %v8301, %v8720
      %v8753 = vadd.f32 %v8302, %v8721
      %v8754 = vadd.f32 %v8303, %v8722
      %v8755 = vadd.f32 %v8304, %v8723
      %v8756 = vadd.f32 %v8305, %v8724
      %v8757 = vadd.f32 %v8306, %v8725
      %v8758 = vadd.f32 %v8307, %v8726
      %v8759 = vadd.f32 %v8308, %v8727
      %v8760 = vadd.f32 %v8309, %v8728
      %v8761 = vadd.f32 %v8310, %v8729
      %v8762 = vadd.f32 %v8311, %v8730
      %v8763 = vadd.f32 %v8312, %v8731
      %v8764 = vadd.f32 %v8313, %v8732
      %v8765 = vadd.f32 %v8314, %v8733
      %v8766 = vadd.f32 %v8315, %v8734
      %v8767 = vadd.f32 %v8316, %v8735
      %v8768 = vadd.f32 %v8317, %v8736
      %v8769 = vadd.f32 %v8318, %v8737
      %v8770 = vadd.f32 %v8319, %v8738
      %v8771 = vadd.f32 %v8320, %v8739
      %v8772 = vadd.f32 %v8321, %v8740
      %v8773 = vadd.f32 %v8322, %v8741
      %v8774 = vadd.f32 %v8323, %v8742
      %v8775 = vadd.f32 %v8324, %v8743
      %v8776 = vadd.f32 %v8325, %v8744
      %v8777 = vld [vmem:[#allocation3 + $0x81] sm:$0xff]
      %v8778 = vld [vmem:[#allocation3 + $0x89] sm:$0xff]
      %v8779 = vld [vmem:[#allocation3 + $0x91] sm:$0xff]
      %v8780 = vld [vmem:[#allocation3 + $0x99] sm:$0xff]
      %v8781 = vld [vmem:[#allocation3 + $0xa1] sm:$0xff]
      %v8782 = vld [vmem:[#allocation3 + $0xa9] sm:$0xff]
      %v8783 = vld [vmem:[#allocation3 + $0xb1] sm:$0xff]
      %v8784 = vld [vmem:[#allocation3 + $0xb9] sm:$0xff]
      %v8785 = vld [vmem:[#allocation3 + $0xc1] sm:$0xff]
      %v8786 = vld [vmem:[#allocation3 + $0xc9] sm:$0xff]
      %v8787 = vld [vmem:[#allocation3 + $0xd1] sm:$0xff]
      %v8788 = vld [vmem:[#allocation3 + $0xd9] sm:$0xff]
      %v8789 = vld [vmem:[#allocation3 + $0xe1] sm:$0xff]
      %v8790 = vld [vmem:[#allocation3 + $0xe9] sm:$0xff]
      %v8791 = vld [vmem:[#allocation3 + $0xf1] sm:$0xff]
      %v8792 = vld [vmem:[#allocation3 + $0xf9] sm:$0xff]
      %v8793 = vld [vmem:[#allocation3 + $0x101] sm:$0xff]
      %v8794 = vld [vmem:[#allocation3 + $0x109] sm:$0xff]
      %v8795 = vld [vmem:[#allocation3 + $0x111] sm:$0xff]
      %v8796 = vld [vmem:[#allocation3 + $0x119] sm:$0xff]
      %v8797 = vld [vmem:[#allocation3 + $0x121] sm:$0xff]
      %v8798 = vld [vmem:[#allocation3 + $0x129] sm:$0xff]
      %v8799 = vld [vmem:[#allocation3 + $0x131] sm:$0xff]
      %v8800 = vld [vmem:[#allocation3 + $0x139] sm:$0xff]
      %v8801 = vld [vmem:[#allocation3 + $0x141] sm:$0xff]
      %v8802 = vld [vmem:[#allocation3 + $0x149] sm:$0xff]
      %v8803 = vld [vmem:[#allocation3 + $0x151] sm:$0xff]
      %v8804 = vld [vmem:[#allocation3 + $0x159] sm:$0xff]
      %v8805 = vld [vmem:[#allocation3 + $0x161] sm:$0xff]
      %v8806 = vld [vmem:[#allocation3 + $0x169] sm:$0xff]
      %v8807 = vld [vmem:[#allocation3 + $0x171] sm:$0xff]
      %v8808 = vld [vmem:[#allocation3 + $0x179] sm:$0xff]
      %s8809 = scalar_lea.vmem %s7, 40
      %v8810 = vld [vmem:[%s8809] sm:$0xff]
      %v8812 = vsel %vm398, %v8777, 0
      %v8815 = vsel %vm398, %v8778, 0
      %v8818 = vsel %vm398, %v8779, 0
      %v8821 = vsel %vm398, %v8780, 0
      %v8824 = vsel %vm398, %v8781, 0
      %v8827 = vsel %vm398, %v8782, 0
      %v8830 = vsel %vm398, %v8783, 0
      %v8833 = vsel %vm398, %v8784, 0
      %v8836 = vsel %vm398, %v8785, 0
      %v8839 = vsel %vm398, %v8786, 0
      %v8842 = vsel %vm398, %v8787, 0
      %v8845 = vsel %vm398, %v8788, 0
      %v8848 = vsel %vm398, %v8789, 0
      %v8851 = vsel %vm398, %v8790, 0
      %v8854 = vsel %vm398, %v8791, 0
      %v8857 = vsel %vm398, %v8792, 0
      %v8860 = vsel %vm398, %v8793, 0
      %v8863 = vsel %vm398, %v8794, 0
      %v8866 = vsel %vm398, %v8795, 0
      %v8869 = vsel %vm398, %v8796, 0
      %v8872 = vsel %vm398, %v8797, 0
      %v8875 = vsel %vm398, %v8798, 0
      %v8878 = vsel %vm398, %v8799, 0
      %v8881 = vsel %vm398, %v8800, 0
      %v8884 = vsel %vm398, %v8801, 0
      %v8887 = vsel %vm398, %v8802, 0
      %v8890 = vsel %vm398, %v8803, 0
      %v8893 = vsel %vm398, %v8804, 0
      %v8896 = vsel %vm398, %v8805, 0
      %v8899 = vsel %vm398, %v8806, 0
      %v8902 = vsel %vm398, %v8807, 0
      %v8905 = vsel %vm398, %v8808, 0
      %8907 = vmatprep.subr.mxu0 0.0
      %8908 = vmatpush1.msra.mxu0 0.0
      %8909 = vmatprep.subr.mxu0 0.0
      %8910 = vmatpush1.msra.mxu0 0.0
      %8911 = vmatprep.subr.mxu0 0.0
      %8912 = vmatpush1.msra.mxu0 0.0
      %8913 = vmatprep.subr.mxu0 0.0
      %8914 = vmatpush1.msra.mxu0 0.0
      %8915 = vmatprep.subr.mxu0 0.0
      %8916 = vmatpush1.msra.mxu0 0.0
      %8917 = vmatprep.subr.mxu0 0.0
      %8918 = vmatpush1.msra.mxu0 0.0
      %8919 = vmatprep.subr.mxu0 0.0
      %8920 = vmatpush1.msra.mxu0 0.0
      %8921 = vmatprep.subr.mxu0 0.0
      %8922 = vmatpush1.msra.mxu0 0.0
      %8923 = vmatprep.subr.mxu0 0.0
      %8924 = vmatpush1.msra.mxu0 0.0
      %8925 = vmatprep.subr.mxu0 0.0
      %8926 = vmatpush1.msra.mxu0 0.0
      %8927 = vmatprep.subr.mxu0 0.0
      %8928 = vmatpush1.msra.mxu0 0.0
      %8929 = vmatprep.subr.mxu0 0.0
      %8930 = vmatpush1.msra.mxu0 0.0
      %8931 = vmatprep.subr.mxu0 0.0
      %8932 = vmatpush1.msra.mxu0 0.0
      %8933 = vmatprep.subr.mxu0 0.0
      %8934 = vmatpush1.msra.mxu0 0.0
      %8935 = vmatprep.subr.mxu0 0.0
      %8936 = vmatpush1.msra.mxu0 0.0
      %8937 = vmatprep.subr.mxu0 0.0
      %8938 = vmatpush1.msra.mxu0 %v8810
      %8939 = vmatprep.subr.mxu0 0.0
      %8940 = vmatpush2.msra.mxu0 0.0
      %8941 = vmatprep.subr.mxu0 0.0
      %8942 = vmatpush2.msra.mxu0 0.0
      %8943 = vmatprep.subr.mxu0 0.0
      %8944 = vmatpush2.msra.mxu0 0.0
      %8945 = vmatprep.subr.mxu0 0.0
      %8946 = vmatpush2.msra.mxu0 0.0
      %8947 = vmatprep.subr.mxu0 0.0
      %8948 = vmatpush2.msra.mxu0 0.0
      %8949 = vmatprep.subr.mxu0 0.0
      %8950 = vmatpush2.msra.mxu0 0.0
      %8951 = vmatprep.subr.mxu0 0.0
      %8952 = vmatpush2.msra.mxu0 0.0
      %8953 = vmatprep.subr.mxu0 0.0
      %8954 = vmatpush2.msra.mxu0 0.0
      %8955 = vmatprep.subr.mxu0 0.0
      %8956 = vmatpush2.msra.mxu0 0.0
      %8957 = vmatprep.subr.mxu0 0.0
      %8958 = vmatpush2.msra.mxu0 0.0
      %8959 = vmatprep.subr.mxu0 0.0
      %8960 = vmatpush2.msra.mxu0 0.0
      %8961 = vmatprep.subr.mxu0 0.0
      %8962 = vmatpush2.msra.mxu0 0.0
      %8963 = vmatprep.subr.mxu0 0.0
      %8964 = vmatpush2.msra.mxu0 0.0
      %8965 = vmatprep.subr.mxu0 0.0
      %8966 = vmatpush2.msra.mxu0 0.0
      %8967 = vmatprep.subr.mxu0 0.0
      %8968 = vmatpush2.msra.mxu0 0.0
      %8969 = vmatprep.subr.mxu0 0.0
      %8970 = vmatpush2.msra.mxu0 0.0
      %8971 = vmatprep.mubr.f32.mxu0 0.0
      %8972 = vmatmul.mubr.f32.gmra.mxu0 %v8812
      %v8973 = vpop.f32.mrf.mxu0
      %v8974 = vadd.f32 0.0, %v8973
      %v8975 = vpop.f32.mrf.mxu0
      %8976 = vmatprep.mubr.f32.mxu0 0.0
      %8977 = vmatmul.mubr.f32.gmra.mxu0 %v8815
      %v8978 = vpop.f32.mrf.mxu0
      %v8979 = vadd.f32 0.0, %v8978
      %v8980 = vpop.f32.mrf.mxu0
      %8981 = vmatprep.mubr.f32.mxu0 0.0
      %8982 = vmatmul.mubr.f32.gmra.mxu0 %v8818
      %v8983 = vpop.f32.mrf.mxu0
      %v8984 = vadd.f32 0.0, %v8983
      %v8985 = vpop.f32.mrf.mxu0
      %8986 = vmatprep.mubr.f32.mxu0 0.0
      %8987 = vmatmul.mubr.f32.gmra.mxu0 %v8821
      %v8988 = vpop.f32.mrf.mxu0
      %v8989 = vadd.f32 0.0, %v8988
      %v8990 = vpop.f32.mrf.mxu0
      %8991 = vmatprep.mubr.f32.mxu0 0.0
      %8992 = vmatmul.mubr.f32.gmra.mxu0 %v8824
      %v8993 = vpop.f32.mrf.mxu0
      %v8994 = vadd.f32 0.0, %v8993
      %v8995 = vpop.f32.mrf.mxu0
      %8996 = vmatprep.mubr.f32.mxu0 0.0
      %8997 = vmatmul.mubr.f32.gmra.mxu0 %v8827
      %v8998 = vpop.f32.mrf.mxu0
      %v8999 = vadd.f32 0.0, %v8998
      %v9000 = vpop.f32.mrf.mxu0
      %9001 = vmatprep.mubr.f32.mxu0 0.0
      %9002 = vmatmul.mubr.f32.gmra.mxu0 %v8830
      %v9003 = vpop.f32.mrf.mxu0
      %v9004 = vadd.f32 0.0, %v9003
      %v9005 = vpop.f32.mrf.mxu0
      %9006 = vmatprep.mubr.f32.mxu0 0.0
      %9007 = vmatmul.mubr.f32.gmra.mxu0 %v8833
      %v9008 = vpop.f32.mrf.mxu0
      %v9009 = vadd.f32 0.0, %v9008
      %v9010 = vpop.f32.mrf.mxu0
      %9011 = vmatprep.mubr.f32.mxu0 0.0
      %9012 = vmatmul.mubr.f32.gmra.mxu0 %v8836
      %v9013 = vpop.f32.mrf.mxu0
      %v9014 = vadd.f32 0.0, %v9013
      %v9015 = vpop.f32.mrf.mxu0
      %9016 = vmatprep.mubr.f32.mxu0 0.0
      %9017 = vmatmul.mubr.f32.gmra.mxu0 %v8839
      %v9018 = vpop.f32.mrf.mxu0
      %v9019 = vadd.f32 0.0, %v9018
      %v9020 = vpop.f32.mrf.mxu0
      %9021 = vmatprep.mubr.f32.mxu0 0.0
      %9022 = vmatmul.mubr.f32.gmra.mxu0 %v8842
      %v9023 = vpop.f32.mrf.mxu0
      %v9024 = vadd.f32 0.0, %v9023
      %v9025 = vpop.f32.mrf.mxu0
      %9026 = vmatprep.mubr.f32.mxu0 0.0
      %9027 = vmatmul.mubr.f32.gmra.mxu0 %v8845
      %v9028 = vpop.f32.mrf.mxu0
      %v9029 = vadd.f32 0.0, %v9028
      %v9030 = vpop.f32.mrf.mxu0
      %9031 = vmatprep.mubr.f32.mxu0 0.0
      %9032 = vmatmul.mubr.f32.gmra.mxu0 %v8848
      %v9033 = vpop.f32.mrf.mxu0
      %v9034 = vadd.f32 0.0, %v9033
      %v9035 = vpop.f32.mrf.mxu0
      %9036 = vmatprep.mubr.f32.mxu0 0.0
      %9037 = vmatmul.mubr.f32.gmra.mxu0 %v8851
      %v9038 = vpop.f32.mrf.mxu0
      %v9039 = vadd.f32 0.0, %v9038
      %v9040 = vpop.f32.mrf.mxu0
      %9041 = vmatprep.mubr.f32.mxu0 0.0
      %9042 = vmatmul.mubr.f32.gmra.mxu0 %v8854
      %v9043 = vpop.f32.mrf.mxu0
      %v9044 = vadd.f32 0.0, %v9043
      %v9045 = vpop.f32.mrf.mxu0
      %9046 = vmatprep.mubr.f32.mxu0 0.0
      %9047 = vmatmul.mubr.f32.gmra.mxu0 %v8857
      %v9048 = vpop.f32.mrf.mxu0
      %v9049 = vadd.f32 0.0, %v9048
      %v9050 = vpop.f32.mrf.mxu0
      %9051 = vmatprep.mubr.f32.mxu0 0.0
      %9052 = vmatmul.mubr.f32.gmra.mxu0 %v8860
      %v9053 = vpop.f32.mrf.mxu0
      %v9054 = vadd.f32 0.0, %v9053
      %v9055 = vpop.f32.mrf.mxu0
      %9056 = vmatprep.mubr.f32.mxu0 0.0
      %9057 = vmatmul.mubr.f32.gmra.mxu0 %v8863
      %v9058 = vpop.f32.mrf.mxu0
      %v9059 = vadd.f32 0.0, %v9058
      %v9060 = vpop.f32.mrf.mxu0
      %9061 = vmatprep.mubr.f32.mxu0 0.0
      %9062 = vmatmul.mubr.f32.gmra.mxu0 %v8866
      %v9063 = vpop.f32.mrf.mxu0
      %v9064 = vadd.f32 0.0, %v9063
      %v9065 = vpop.f32.mrf.mxu0
      %9066 = vmatprep.mubr.f32.mxu0 0.0
      %9067 = vmatmul.mubr.f32.gmra.mxu0 %v8869
      %v9068 = vpop.f32.mrf.mxu0
      %v9069 = vadd.f32 0.0, %v9068
      %v9070 = vpop.f32.mrf.mxu0
      %9071 = vmatprep.mubr.f32.mxu0 0.0
      %9072 = vmatmul.mubr.f32.gmra.mxu0 %v8872
      %v9073 = vpop.f32.mrf.mxu0
      %v9074 = vadd.f32 0.0, %v9073
      %v9075 = vpop.f32.mrf.mxu0
      %9076 = vmatprep.mubr.f32.mxu0 0.0
      %9077 = vmatmul.mubr.f32.gmra.mxu0 %v8875
      %v9078 = vpop.f32.mrf.mxu0
      %v9079 = vadd.f32 0.0, %v9078
      %v9080 = vpop.f32.mrf.mxu0
      %9081 = vmatprep.mubr.f32.mxu0 0.0
      %9082 = vmatmul.mubr.f32.gmra.mxu0 %v8878
      %v9083 = vpop.f32.mrf.mxu0
      %v9084 = vadd.f32 0.0, %v9083
      %v9085 = vpop.f32.mrf.mxu0
      %9086 = vmatprep.mubr.f32.mxu0 0.0
      %9087 = vmatmul.mubr.f32.gmra.mxu0 %v8881
      %v9088 = vpop.f32.mrf.mxu0
      %v9089 = vadd.f32 0.0, %v9088
      %v9090 = vpop.f32.mrf.mxu0
      %9091 = vmatprep.mubr.f32.mxu0 0.0
      %9092 = vmatmul.mubr.f32.gmra.mxu0 %v8884
      %v9093 = vpop.f32.mrf.mxu0
      %v9094 = vadd.f32 0.0, %v9093
      %v9095 = vpop.f32.mrf.mxu0
      %9096 = vmatprep.mubr.f32.mxu0 0.0
      %9097 = vmatmul.mubr.f32.gmra.mxu0 %v8887
      %v9098 = vpop.f32.mrf.mxu0
      %v9099 = vadd.f32 0.0, %v9098
      %v9100 = vpop.f32.mrf.mxu0
      %9101 = vmatprep.mubr.f32.mxu0 0.0
      %9102 = vmatmul.mubr.f32.gmra.mxu0 %v8890
      %v9103 = vpop.f32.mrf.mxu0
      %v9104 = vadd.f32 0.0, %v9103
      %v9105 = vpop.f32.mrf.mxu0
      %9106 = vmatprep.mubr.f32.mxu0 0.0
      %9107 = vmatmul.mubr.f32.gmra.mxu0 %v8893
      %v9108 = vpop.f32.mrf.mxu0
      %v9109 = vadd.f32 0.0, %v9108
      %v9110 = vpop.f32.mrf.mxu0
      %9111 = vmatprep.mubr.f32.mxu0 0.0
      %9112 = vmatmul.mubr.f32.gmra.mxu0 %v8896
      %v9113 = vpop.f32.mrf.mxu0
      %v9114 = vadd.f32 0.0, %v9113
      %v9115 = vpop.f32.mrf.mxu0
      %9116 = vmatprep.mubr.f32.mxu0 0.0
      %9117 = vmatmul.mubr.f32.gmra.mxu0 %v8899
      %v9118 = vpop.f32.mrf.mxu0
      %v9119 = vadd.f32 0.0, %v9118
      %v9120 = vpop.f32.mrf.mxu0
      %9121 = vmatprep.mubr.f32.mxu0 0.0
      %9122 = vmatmul.mubr.f32.gmra.mxu0 %v8902
      %v9123 = vpop.f32.mrf.mxu0
      %v9124 = vadd.f32 0.0, %v9123
      %v9125 = vpop.f32.mrf.mxu0
      %9126 = vmatprep.mubr.f32.mxu0 0.0
      %9127 = vmatmul.mubr.f32.gmra.mxu0 %v8905
      %v9128 = vpop.f32.mrf.mxu0
      %v9129 = vadd.f32 0.0, %v9128
      %v9130 = vpop.f32.mrf.mxu0
      %9131 = vdwg.mxu0
      %v9132 = vld [vmem:[%s3569] sm:$0xff]
      %v9133 = vld [vmem:[%s3569 + $0x8] sm:$0xff]
      %v9134 = vld [vmem:[%s3569 + $0x10] sm:$0xff]
      %v9135 = vld [vmem:[%s3569 + $0x18] sm:$0xff]
      %v9136 = vld [vmem:[%s3569 + $0x20] sm:$0xff]
      %v9137 = vld [vmem:[%s3569 + $0x28] sm:$0xff]
      %v9138 = vld [vmem:[%s3569 + $0x30] sm:$0xff]
      %v9139 = vld [vmem:[%s3569 + $0x38] sm:$0xff]
      %v9140 = vld [vmem:[%s3569 + $0x40] sm:$0xff]
      %v9141 = vld [vmem:[%s3569 + $0x48] sm:$0xff]
      %v9142 = vld [vmem:[%s3569 + $0x50] sm:$0xff]
      %v9143 = vld [vmem:[%s3569 + $0x58] sm:$0xff]
      %v9144 = vld [vmem:[%s3569 + $0x60] sm:$0xff]
      %v9145 = vld [vmem:[%s3569 + $0x68] sm:$0xff]
      %v9146 = vld [vmem:[%s3569 + $0x70] sm:$0xff]
      %v9147 = vld [vmem:[%s3569 + $0x78] sm:$0xff]
      %v9148 = vld [vmem:[%s3569 + $0x80] sm:$0xff]
      %v9149 = vld [vmem:[%s3569 + $0x88] sm:$0xff]
      %v9150 = vld [vmem:[%s3569 + $0x90] sm:$0xff]
      %v9151 = vld [vmem:[%s3569 + $0x98] sm:$0xff]
      %v9152 = vld [vmem:[%s3569 + $0xa0] sm:$0xff]
      %v9153 = vld [vmem:[%s3569 + $0xa8] sm:$0xff]
      %v9154 = vld [vmem:[%s3569 + $0xb0] sm:$0xff]
      %v9155 = vld [vmem:[%s3569 + $0xb8] sm:$0xff]
      %v9156 = vld [vmem:[%s3569 + $0xc0] sm:$0xff]
      %v9157 = vld [vmem:[%s3569 + $0xc8] sm:$0xff]
      %v9158 = vld [vmem:[%s3569 + $0xd0] sm:$0xff]
      %v9159 = vld [vmem:[%s3569 + $0xd8] sm:$0xff]
      %v9160 = vld [vmem:[%s3569 + $0xe0] sm:$0xff]
      %v9161 = vld [vmem:[%s3569 + $0xe8] sm:$0xff]
      %v9162 = vld [vmem:[%s3569 + $0xf0] sm:$0xff]
      %v9163 = vld [vmem:[%s3569 + $0xf8] sm:$0xff]
      %v9164 = vmul.f32 %v8974, %v9132
      %v9165 = vmul.f32 %v8979, %v9133
      %v9166 = vmul.f32 %v8984, %v9134
      %v9167 = vmul.f32 %v8989, %v9135
      %v9168 = vmul.f32 %v8994, %v9136
      %v9169 = vmul.f32 %v8999, %v9137
      %v9170 = vmul.f32 %v9004, %v9138
      %v9171 = vmul.f32 %v9009, %v9139
      %v9172 = vmul.f32 %v9014, %v9140
      %v9173 = vmul.f32 %v9019, %v9141
      %v9174 = vmul.f32 %v9024, %v9142
      %v9175 = vmul.f32 %v9029, %v9143
      %v9176 = vmul.f32 %v9034, %v9144
      %v9177 = vmul.f32 %v9039, %v9145
      %v9178 = vmul.f32 %v9044, %v9146
      %v9179 = vmul.f32 %v9049, %v9147
      %v9180 = vmul.f32 %v9054, %v9148
      %v9181 = vmul.f32 %v9059, %v9149
      %v9182 = vmul.f32 %v9064, %v9150
      %v9183 = vmul.f32 %v9069, %v9151
      %v9184 = vmul.f32 %v9074, %v9152
      %v9185 = vmul.f32 %v9079, %v9153
      %v9186 = vmul.f32 %v9084, %v9154
      %v9187 = vmul.f32 %v9089, %v9155
      %v9188 = vmul.f32 %v9094, %v9156
      %v9189 = vmul.f32 %v9099, %v9157
      %v9190 = vmul.f32 %v9104, %v9158
      %v9191 = vmul.f32 %v9109, %v9159
      %v9192 = vmul.f32 %v9114, %v9160
      %v9193 = vmul.f32 %v9119, %v9161
      %v9194 = vmul.f32 %v9124, %v9162
      %v9195 = vmul.f32 %v9129, %v9163
      %v9196 = vadd.f32 %v8745, %v9164
      %v9197 = vadd.f32 %v8746, %v9165
      %v9198 = vadd.f32 %v8747, %v9166
      %v9199 = vadd.f32 %v8748, %v9167
      %v9200 = vadd.f32 %v8749, %v9168
      %v9201 = vadd.f32 %v8750, %v9169
      %v9202 = vadd.f32 %v8751, %v9170
      %v9203 = vadd.f32 %v8752, %v9171
      %v9204 = vadd.f32 %v8753, %v9172
      %v9205 = vadd.f32 %v8754, %v9173
      %v9206 = vadd.f32 %v8755, %v9174
      %v9207 = vadd.f32 %v8756, %v9175
      %v9208 = vadd.f32 %v8757, %v9176
      %v9209 = vadd.f32 %v8758, %v9177
      %v9210 = vadd.f32 %v8759, %v9178
      %v9211 = vadd.f32 %v8760, %v9179
      %v9212 = vadd.f32 %v8761, %v9180
      %v9213 = vadd.f32 %v8762, %v9181
      %v9214 = vadd.f32 %v8763, %v9182
      %v9215 = vadd.f32 %v8764, %v9183
      %v9216 = vadd.f32 %v8765, %v9184
      %v9217 = vadd.f32 %v8766, %v9185
      %v9218 = vadd.f32 %v8767, %v9186
      %v9219 = vadd.f32 %v8768, %v9187
      %v9220 = vadd.f32 %v8769, %v9188
      %v9221 = vadd.f32 %v8770, %v9189
      %v9222 = vadd.f32 %v8771, %v9190
      %v9223 = vadd.f32 %v8772, %v9191
      %v9224 = vadd.f32 %v8773, %v9192
      %v9225 = vadd.f32 %v8774, %v9193
      %v9226 = vadd.f32 %v8775, %v9194
      %v9227 = vadd.f32 %v8776, %v9195
      %v9228 = vld [vmem:[#allocation3 + $0x8f] sm:$0xff]
      %v9229 = vld [vmem:[#allocation3 + $0x97] sm:$0xff]
      %v9230 = vld [vmem:[#allocation3 + $0x9f] sm:$0xff]
      %v9231 = vld [vmem:[#allocation3 + $0xa7] sm:$0xff]
      %v9232 = vld [vmem:[#allocation3 + $0xaf] sm:$0xff]
      %v9233 = vld [vmem:[#allocation3 + $0xb7] sm:$0xff]
      %v9234 = vld [vmem:[#allocation3 + $0xbf] sm:$0xff]
      %v9235 = vld [vmem:[#allocation3 + $0xc7] sm:$0xff]
      %v9236 = vld [vmem:[#allocation3 + $0xcf] sm:$0xff]
      %v9237 = vld [vmem:[#allocation3 + $0xd7] sm:$0xff]
      %v9238 = vld [vmem:[#allocation3 + $0xdf] sm:$0xff]
      %v9239 = vld [vmem:[#allocation3 + $0xe7] sm:$0xff]
      %v9240 = vld [vmem:[#allocation3 + $0xef] sm:$0xff]
      %v9241 = vld [vmem:[#allocation3 + $0xf7] sm:$0xff]
      %v9242 = vld [vmem:[#allocation3 + $0xff] sm:$0xff]
      %v9243 = vld [vmem:[#allocation3 + $0x107] sm:$0xff]
      %v9244 = vld [vmem:[#allocation3 + $0x10f] sm:$0xff]
      %v9245 = vld [vmem:[#allocation3 + $0x117] sm:$0xff]
      %v9246 = vld [vmem:[#allocation3 + $0x11f] sm:$0xff]
      %v9247 = vld [vmem:[#allocation3 + $0x127] sm:$0xff]
      %v9248 = vld [vmem:[#allocation3 + $0x12f] sm:$0xff]
      %v9249 = vld [vmem:[#allocation3 + $0x137] sm:$0xff]
      %v9250 = vld [vmem:[#allocation3 + $0x13f] sm:$0xff]
      %v9251 = vld [vmem:[#allocation3 + $0x147] sm:$0xff]
      %v9252 = vld [vmem:[#allocation3 + $0x14f] sm:$0xff]
      %v9253 = vld [vmem:[#allocation3 + $0x157] sm:$0xff]
      %v9254 = vld [vmem:[#allocation3 + $0x15f] sm:$0xff]
      %v9255 = vld [vmem:[#allocation3 + $0x167] sm:$0xff]
      %v9256 = vld [vmem:[#allocation3 + $0x16f] sm:$0xff]
      %v9257 = vld [vmem:[#allocation3 + $0x177] sm:$0xff]
      %v9258 = vld [vmem:[#allocation3 + $0x17f] sm:$0xff]
      %v9259 = vld [vmem:[#allocation3 + $0x187] sm:$0xff]
      %s9260 = scalar_lea.vmem %s7, 48
      %v9261 = vld [vmem:[%s9260] sm:$0xff]
      %v9263 = vsel %vm398, %v9228, 0
      %v9266 = vsel %vm398, %v9229, 0
      %v9269 = vsel %vm398, %v9230, 0
      %v9272 = vsel %vm398, %v9231, 0
      %v9275 = vsel %vm398, %v9232, 0
      %v9278 = vsel %vm398, %v9233, 0
      %v9281 = vsel %vm398, %v9234, 0
      %v9284 = vsel %vm398, %v9235, 0
      %v9287 = vsel %vm398, %v9236, 0
      %v9290 = vsel %vm398, %v9237, 0
      %v9293 = vsel %vm398, %v9238, 0
      %v9296 = vsel %vm398, %v9239, 0
      %v9299 = vsel %vm398, %v9240, 0
      %v9302 = vsel %vm398, %v9241, 0
      %v9305 = vsel %vm398, %v9242, 0
      %v9308 = vsel %vm398, %v9243, 0
      %v9311 = vsel %vm398, %v9244, 0
      %v9314 = vsel %vm398, %v9245, 0
      %v9317 = vsel %vm398, %v9246, 0
      %v9320 = vsel %vm398, %v9247, 0
      %v9323 = vsel %vm398, %v9248, 0
      %v9326 = vsel %vm398, %v9249, 0
      %v9329 = vsel %vm398, %v9250, 0
      %v9332 = vsel %vm398, %v9251, 0
      %v9335 = vsel %vm398, %v9252, 0
      %v9338 = vsel %vm398, %v9253, 0
      %v9341 = vsel %vm398, %v9254, 0
      %v9344 = vsel %vm398, %v9255, 0
      %v9347 = vsel %vm398, %v9256, 0
      %v9350 = vsel %vm398, %v9257, 0
      %v9353 = vsel %vm398, %v9258, 0
      %v9356 = vsel %vm398, %v9259, 0
      %9358 = vmatprep.subr.mxu0 0.0
      %9359 = vmatpush1.msra.mxu0 0.0
      %9360 = vmatprep.subr.mxu0 0.0
      %9361 = vmatpush1.msra.mxu0 0.0
      %9362 = vmatprep.subr.mxu0 0.0
      %9363 = vmatpush1.msra.mxu0 0.0
      %9364 = vmatprep.subr.mxu0 0.0
      %9365 = vmatpush1.msra.mxu0 0.0
      %9366 = vmatprep.subr.mxu0 0.0
      %9367 = vmatpush1.msra.mxu0 0.0
      %9368 = vmatprep.subr.mxu0 0.0
      %9369 = vmatpush1.msra.mxu0 0.0
      %9370 = vmatprep.subr.mxu0 0.0
      %9371 = vmatpush1.msra.mxu0 0.0
      %9372 = vmatprep.subr.mxu0 0.0
      %9373 = vmatpush1.msra.mxu0 0.0
      %9374 = vmatprep.subr.mxu0 0.0
      %9375 = vmatpush1.msra.mxu0 0.0
      %9376 = vmatprep.subr.mxu0 0.0
      %9377 = vmatpush1.msra.mxu0 0.0
      %9378 = vmatprep.subr.mxu0 0.0
      %9379 = vmatpush1.msra.mxu0 0.0
      %9380 = vmatprep.subr.mxu0 0.0
      %9381 = vmatpush1.msra.mxu0 0.0
      %9382 = vmatprep.subr.mxu0 0.0
      %9383 = vmatpush1.msra.mxu0 0.0
      %9384 = vmatprep.subr.mxu0 0.0
      %9385 = vmatpush1.msra.mxu0 0.0
      %9386 = vmatprep.subr.mxu0 0.0
      %9387 = vmatpush1.msra.mxu0 0.0
      %9388 = vmatprep.subr.mxu0 0.0
      %9389 = vmatpush1.msra.mxu0 %v9261
      %9390 = vmatprep.subr.mxu0 0.0
      %9391 = vmatpush2.msra.mxu0 0.0
      %9392 = vmatprep.subr.mxu0 0.0
      %9393 = vmatpush2.msra.mxu0 0.0
      %9394 = vmatprep.subr.mxu0 0.0
      %9395 = vmatpush2.msra.mxu0 0.0
      %9396 = vmatprep.subr.mxu0 0.0
      %9397 = vmatpush2.msra.mxu0 0.0
      %9398 = vmatprep.subr.mxu0 0.0
      %9399 = vmatpush2.msra.mxu0 0.0
      %9400 = vmatprep.subr.mxu0 0.0
      %9401 = vmatpush2.msra.mxu0 0.0
      %9402 = vmatprep.subr.mxu0 0.0
      %9403 = vmatpush2.msra.mxu0 0.0
      %9404 = vmatprep.subr.mxu0 0.0
      %9405 = vmatpush2.msra.mxu0 0.0
      %9406 = vmatprep.subr.mxu0 0.0
      %9407 = vmatpush2.msra.mxu0 0.0
      %9408 = vmatprep.subr.mxu0 0.0
      %9409 = vmatpush2.msra.mxu0 0.0
      %9410 = vmatprep.subr.mxu0 0.0
      %9411 = vmatpush2.msra.mxu0 0.0
      %9412 = vmatprep.subr.mxu0 0.0
      %9413 = vmatpush2.msra.mxu0 0.0
      %9414 = vmatprep.subr.mxu0 0.0
      %9415 = vmatpush2.msra.mxu0 0.0
      %9416 = vmatprep.subr.mxu0 0.0
      %9417 = vmatpush2.msra.mxu0 0.0
      %9418 = vmatprep.subr.mxu0 0.0
      %9419 = vmatpush2.msra.mxu0 0.0
      %9420 = vmatprep.subr.mxu0 0.0
      %9421 = vmatpush2.msra.mxu0 0.0
      %9422 = vmatprep.mubr.f32.mxu0 0.0
      %9423 = vmatmul.mubr.f32.gmra.mxu0 %v9263
      %v9424 = vpop.f32.mrf.mxu0
      %v9425 = vadd.f32 0.0, %v9424
      %v9426 = vpop.f32.mrf.mxu0
      %9427 = vmatprep.mubr.f32.mxu0 0.0
      %9428 = vmatmul.mubr.f32.gmra.mxu0 %v9266
      %v9429 = vpop.f32.mrf.mxu0
      %v9430 = vadd.f32 0.0, %v9429
      %v9431 = vpop.f32.mrf.mxu0
      %9432 = vmatprep.mubr.f32.mxu0 0.0
      %9433 = vmatmul.mubr.f32.gmra.mxu0 %v9269
      %v9434 = vpop.f32.mrf.mxu0
      %v9435 = vadd.f32 0.0, %v9434
      %v9436 = vpop.f32.mrf.mxu0
      %9437 = vmatprep.mubr.f32.mxu0 0.0
      %9438 = vmatmul.mubr.f32.gmra.mxu0 %v9272
      %v9439 = vpop.f32.mrf.mxu0
      %v9440 = vadd.f32 0.0, %v9439
      %v9441 = vpop.f32.mrf.mxu0
      %9442 = vmatprep.mubr.f32.mxu0 0.0
      %9443 = vmatmul.mubr.f32.gmra.mxu0 %v9275
      %v9444 = vpop.f32.mrf.mxu0
      %v9445 = vadd.f32 0.0, %v9444
      %v9446 = vpop.f32.mrf.mxu0
      %9447 = vmatprep.mubr.f32.mxu0 0.0
      %9448 = vmatmul.mubr.f32.gmra.mxu0 %v9278
      %v9449 = vpop.f32.mrf.mxu0
      %v9450 = vadd.f32 0.0, %v9449
      %v9451 = vpop.f32.mrf.mxu0
      %9452 = vmatprep.mubr.f32.mxu0 0.0
      %9453 = vmatmul.mubr.f32.gmra.mxu0 %v9281
      %v9454 = vpop.f32.mrf.mxu0
      %v9455 = vadd.f32 0.0, %v9454
      %v9456 = vpop.f32.mrf.mxu0
      %9457 = vmatprep.mubr.f32.mxu0 0.0
      %9458 = vmatmul.mubr.f32.gmra.mxu0 %v9284
      %v9459 = vpop.f32.mrf.mxu0
      %v9460 = vadd.f32 0.0, %v9459
      %v9461 = vpop.f32.mrf.mxu0
      %9462 = vmatprep.mubr.f32.mxu0 0.0
      %9463 = vmatmul.mubr.f32.gmra.mxu0 %v9287
      %v9464 = vpop.f32.mrf.mxu0
      %v9465 = vadd.f32 0.0, %v9464
      %v9466 = vpop.f32.mrf.mxu0
      %9467 = vmatprep.mubr.f32.mxu0 0.0
      %9468 = vmatmul.mubr.f32.gmra.mxu0 %v9290
      %v9469 = vpop.f32.mrf.mxu0
      %v9470 = vadd.f32 0.0, %v9469
      %v9471 = vpop.f32.mrf.mxu0
      %9472 = vmatprep.mubr.f32.mxu0 0.0
      %9473 = vmatmul.mubr.f32.gmra.mxu0 %v9293
      %v9474 = vpop.f32.mrf.mxu0
      %v9475 = vadd.f32 0.0, %v9474
      %v9476 = vpop.f32.mrf.mxu0
      %9477 = vmatprep.mubr.f32.mxu0 0.0
      %9478 = vmatmul.mubr.f32.gmra.mxu0 %v9296
      %v9479 = vpop.f32.mrf.mxu0
      %v9480 = vadd.f32 0.0, %v9479
      %v9481 = vpop.f32.mrf.mxu0
      %9482 = vmatprep.mubr.f32.mxu0 0.0
      %9483 = vmatmul.mubr.f32.gmra.mxu0 %v9299
      %v9484 = vpop.f32.mrf.mxu0
      %v9485 = vadd.f32 0.0, %v9484
      %v9486 = vpop.f32.mrf.mxu0
      %9487 = vmatprep.mubr.f32.mxu0 0.0
      %9488 = vmatmul.mubr.f32.gmra.mxu0 %v9302
      %v9489 = vpop.f32.mrf.mxu0
      %v9490 = vadd.f32 0.0, %v9489
      %v9491 = vpop.f32.mrf.mxu0
      %9492 = vmatprep.mubr.f32.mxu0 0.0
      %9493 = vmatmul.mubr.f32.gmra.mxu0 %v9305
      %v9494 = vpop.f32.mrf.mxu0
      %v9495 = vadd.f32 0.0, %v9494
      %v9496 = vpop.f32.mrf.mxu0
      %9497 = vmatprep.mubr.f32.mxu0 0.0
      %9498 = vmatmul.mubr.f32.gmra.mxu0 %v9308
      %v9499 = vpop.f32.mrf.mxu0
      %v9500 = vadd.f32 0.0, %v9499
      %v9501 = vpop.f32.mrf.mxu0
      %9502 = vmatprep.mubr.f32.mxu0 0.0
      %9503 = vmatmul.mubr.f32.gmra.mxu0 %v9311
      %v9504 = vpop.f32.mrf.mxu0
      %v9505 = vadd.f32 0.0, %v9504
      %v9506 = vpop.f32.mrf.mxu0
      %9507 = vmatprep.mubr.f32.mxu0 0.0
      %9508 = vmatmul.mubr.f32.gmra.mxu0 %v9314
      %v9509 = vpop.f32.mrf.mxu0
      %v9510 = vadd.f32 0.0, %v9509
      %v9511 = vpop.f32.mrf.mxu0
      %9512 = vmatprep.mubr.f32.mxu0 0.0
      %9513 = vmatmul.mubr.f32.gmra.mxu0 %v9317
      %v9514 = vpop.f32.mrf.mxu0
      %v9515 = vadd.f32 0.0, %v9514
      %v9516 = vpop.f32.mrf.mxu0
      %9517 = vmatprep.mubr.f32.mxu0 0.0
      %9518 = vmatmul.mubr.f32.gmra.mxu0 %v9320
      %v9519 = vpop.f32.mrf.mxu0
      %v9520 = vadd.f32 0.0, %v9519
      %v9521 = vpop.f32.mrf.mxu0
      %9522 = vmatprep.mubr.f32.mxu0 0.0
      %9523 = vmatmul.mubr.f32.gmra.mxu0 %v9323
      %v9524 = vpop.f32.mrf.mxu0
      %v9525 = vadd.f32 0.0, %v9524
      %v9526 = vpop.f32.mrf.mxu0
      %9527 = vmatprep.mubr.f32.mxu0 0.0
      %9528 = vmatmul.mubr.f32.gmra.mxu0 %v9326
      %v9529 = vpop.f32.mrf.mxu0
      %v9530 = vadd.f32 0.0, %v9529
      %v9531 = vpop.f32.mrf.mxu0
      %9532 = vmatprep.mubr.f32.mxu0 0.0
      %9533 = vmatmul.mubr.f32.gmra.mxu0 %v9329
      %v9534 = vpop.f32.mrf.mxu0
      %v9535 = vadd.f32 0.0, %v9534
      %v9536 = vpop.f32.mrf.mxu0
      %9537 = vmatprep.mubr.f32.mxu0 0.0
      %9538 = vmatmul.mubr.f32.gmra.mxu0 %v9332
      %v9539 = vpop.f32.mrf.mxu0
      %v9540 = vadd.f32 0.0, %v9539
      %v9541 = vpop.f32.mrf.mxu0
      %9542 = vmatprep.mubr.f32.mxu0 0.0
      %9543 = vmatmul.mubr.f32.gmra.mxu0 %v9335
      %v9544 = vpop.f32.mrf.mxu0
      %v9545 = vadd.f32 0.0, %v9544
      %v9546 = vpop.f32.mrf.mxu0
      %9547 = vmatprep.mubr.f32.mxu0 0.0
      %9548 = vmatmul.mubr.f32.gmra.mxu0 %v9338
      %v9549 = vpop.f32.mrf.mxu0
      %v9550 = vadd.f32 0.0, %v9549
      %v9551 = vpop.f32.mrf.mxu0
      %9552 = vmatprep.mubr.f32.mxu0 0.0
      %9553 = vmatmul.mubr.f32.gmra.mxu0 %v9341
      %v9554 = vpop.f32.mrf.mxu0
      %v9555 = vadd.f32 0.0, %v9554
      %v9556 = vpop.f32.mrf.mxu0
      %9557 = vmatprep.mubr.f32.mxu0 0.0
      %9558 = vmatmul.mubr.f32.gmra.mxu0 %v9344
      %v9559 = vpop.f32.mrf.mxu0
      %v9560 = vadd.f32 0.0, %v9559
      %v9561 = vpop.f32.mrf.mxu0
      %9562 = vmatprep.mubr.f32.mxu0 0.0
      %9563 = vmatmul.mubr.f32.gmra.mxu0 %v9347
      %v9564 = vpop.f32.mrf.mxu0
      %v9565 = vadd.f32 0.0, %v9564
      %v9566 = vpop.f32.mrf.mxu0
      %9567 = vmatprep.mubr.f32.mxu0 0.0
      %9568 = vmatmul.mubr.f32.gmra.mxu0 %v9350
      %v9569 = vpop.f32.mrf.mxu0
      %v9570 = vadd.f32 0.0, %v9569
      %v9571 = vpop.f32.mrf.mxu0
      %9572 = vmatprep.mubr.f32.mxu0 0.0
      %9573 = vmatmul.mubr.f32.gmra.mxu0 %v9353
      %v9574 = vpop.f32.mrf.mxu0
      %v9575 = vadd.f32 0.0, %v9574
      %v9576 = vpop.f32.mrf.mxu0
      %9577 = vmatprep.mubr.f32.mxu0 0.0
      %9578 = vmatmul.mubr.f32.gmra.mxu0 %v9356
      %v9579 = vpop.f32.mrf.mxu0
      %v9580 = vadd.f32 0.0, %v9579
      %v9581 = vpop.f32.mrf.mxu0
      %9582 = vdwg.mxu0
      %v9583 = vld [vmem:[%s4184] sm:$0xff]
      %v9584 = vld [vmem:[%s4184 + $0x8] sm:$0xff]
      %v9585 = vld [vmem:[%s4184 + $0x10] sm:$0xff]
      %v9586 = vld [vmem:[%s4184 + $0x18] sm:$0xff]
      %v9587 = vld [vmem:[%s4184 + $0x20] sm:$0xff]
      %v9588 = vld [vmem:[%s4184 + $0x28] sm:$0xff]
      %v9589 = vld [vmem:[%s4184 + $0x30] sm:$0xff]
      %v9590 = vld [vmem:[%s4184 + $0x38] sm:$0xff]
      %v9591 = vld [vmem:[%s4184 + $0x40] sm:$0xff]
      %v9592 = vld [vmem:[%s4184 + $0x48] sm:$0xff]
      %v9593 = vld [vmem:[%s4184 + $0x50] sm:$0xff]
      %v9594 = vld [vmem:[%s4184 + $0x58] sm:$0xff]
      %v9595 = vld [vmem:[%s4184 + $0x60] sm:$0xff]
      %v9596 = vld [vmem:[%s4184 + $0x68] sm:$0xff]
      %v9597 = vld [vmem:[%s4184 + $0x70] sm:$0xff]
      %v9598 = vld [vmem:[%s4184 + $0x78] sm:$0xff]
      %v9599 = vld [vmem:[%s4184 + $0x80] sm:$0xff]
      %v9600 = vld [vmem:[%s4184 + $0x88] sm:$0xff]
      %v9601 = vld [vmem:[%s4184 + $0x90] sm:$0xff]
      %v9602 = vld [vmem:[%s4184 + $0x98] sm:$0xff]
      %v9603 = vld [vmem:[%s4184 + $0xa0] sm:$0xff]
      %v9604 = vld [vmem:[%s4184 + $0xa8] sm:$0xff]
      %v9605 = vld [vmem:[%s4184 + $0xb0] sm:$0xff]
      %v9606 = vld [vmem:[%s4184 + $0xb8] sm:$0xff]
      %v9607 = vld [vmem:[%s4184 + $0xc0] sm:$0xff]
      %v9608 = vld [vmem:[%s4184 + $0xc8] sm:$0xff]
      %v9609 = vld [vmem:[%s4184 + $0xd0] sm:$0xff]
      %v9610 = vld [vmem:[%s4184 + $0xd8] sm:$0xff]
      %v9611 = vld [vmem:[%s4184 + $0xe0] sm:$0xff]
      %v9612 = vld [vmem:[%s4184 + $0xe8] sm:$0xff]
      %v9613 = vld [vmem:[%s4184 + $0xf0] sm:$0xff]
      %v9614 = vld [vmem:[%s4184 + $0xf8] sm:$0xff]
      %v9615 = vmul.f32 %v9425, %v9583
      %v9616 = vmul.f32 %v9430, %v9584
      %v9617 = vmul.f32 %v9435, %v9585
      %v9618 = vmul.f32 %v9440, %v9586
      %v9619 = vmul.f32 %v9445, %v9587
      %v9620 = vmul.f32 %v9450, %v9588
      %v9621 = vmul.f32 %v9455, %v9589
      %v9622 = vmul.f32 %v9460, %v9590
      %v9623 = vmul.f32 %v9465, %v9591
      %v9624 = vmul.f32 %v9470, %v9592
      %v9625 = vmul.f32 %v9475, %v9593
      %v9626 = vmul.f32 %v9480, %v9594
      %v9627 = vmul.f32 %v9485, %v9595
      %v9628 = vmul.f32 %v9490, %v9596
      %v9629 = vmul.f32 %v9495, %v9597
      %v9630 = vmul.f32 %v9500, %v9598
      %v9631 = vmul.f32 %v9505, %v9599
      %v9632 = vmul.f32 %v9510, %v9600
      %v9633 = vmul.f32 %v9515, %v9601
      %v9634 = vmul.f32 %v9520, %v9602
      %v9635 = vmul.f32 %v9525, %v9603
      %v9636 = vmul.f32 %v9530, %v9604
      %v9637 = vmul.f32 %v9535, %v9605
      %v9638 = vmul.f32 %v9540, %v9606
      %v9639 = vmul.f32 %v9545, %v9607
      %v9640 = vmul.f32 %v9550, %v9608
      %v9641 = vmul.f32 %v9555, %v9609
      %v9642 = vmul.f32 %v9560, %v9610
      %v9643 = vmul.f32 %v9565, %v9611
      %v9644 = vmul.f32 %v9570, %v9612
      %v9645 = vmul.f32 %v9575, %v9613
      %v9646 = vmul.f32 %v9580, %v9614
      %v9647 = vadd.f32 %v9196, %v9615
      %v9648 = vadd.f32 %v9197, %v9616
      %v9649 = vadd.f32 %v9198, %v9617
      %v9650 = vadd.f32 %v9199, %v9618
      %v9651 = vadd.f32 %v9200, %v9619
      %v9652 = vadd.f32 %v9201, %v9620
      %v9653 = vadd.f32 %v9202, %v9621
      %v9654 = vadd.f32 %v9203, %v9622
      %v9655 = vadd.f32 %v9204, %v9623
      %v9656 = vadd.f32 %v9205, %v9624
      %v9657 = vadd.f32 %v9206, %v9625
      %v9658 = vadd.f32 %v9207, %v9626
      %v9659 = vadd.f32 %v9208, %v9627
      %v9660 = vadd.f32 %v9209, %v9628
      %v9661 = vadd.f32 %v9210, %v9629
      %v9662 = vadd.f32 %v9211, %v9630
      %v9663 = vadd.f32 %v9212, %v9631
      %v9664 = vadd.f32 %v9213, %v9632
      %v9665 = vadd.f32 %v9214, %v9633
      %v9666 = vadd.f32 %v9215, %v9634
      %v9667 = vadd.f32 %v9216, %v9635
      %v9668 = vadd.f32 %v9217, %v9636
      %v9669 = vadd.f32 %v9218, %v9637
      %v9670 = vadd.f32 %v9219, %v9638
      %v9671 = vadd.f32 %v9220, %v9639
      %v9672 = vadd.f32 %v9221, %v9640
      %v9673 = vadd.f32 %v9222, %v9641
      %v9674 = vadd.f32 %v9223, %v9642
      %v9675 = vadd.f32 %v9224, %v9643
      %v9676 = vadd.f32 %v9225, %v9644
      %v9677 = vadd.f32 %v9226, %v9645
      %v9678 = vadd.f32 %v9227, %v9646
      %v9679 = vld [vmem:[#allocation3 + $0x90] sm:$0xff]
      %v9680 = vld [vmem:[#allocation3 + $0x98] sm:$0xff]
      %v9681 = vld [vmem:[#allocation3 + $0xa0] sm:$0xff]
      %v9682 = vld [vmem:[#allocation3 + $0xa8] sm:$0xff]
      %v9683 = vld [vmem:[#allocation3 + $0xb0] sm:$0xff]
      %v9684 = vld [vmem:[#allocation3 + $0xb8] sm:$0xff]
      %v9685 = vld [vmem:[#allocation3 + $0xc0] sm:$0xff]
      %v9686 = vld [vmem:[#allocation3 + $0xc8] sm:$0xff]
      %v9687 = vld [vmem:[#allocation3 + $0xd0] sm:$0xff]
      %v9688 = vld [vmem:[#allocation3 + $0xd8] sm:$0xff]
      %v9689 = vld [vmem:[#allocation3 + $0xe0] sm:$0xff]
      %v9690 = vld [vmem:[#allocation3 + $0xe8] sm:$0xff]
      %v9691 = vld [vmem:[#allocation3 + $0xf0] sm:$0xff]
      %v9692 = vld [vmem:[#allocation3 + $0xf8] sm:$0xff]
      %v9693 = vld [vmem:[#allocation3 + $0x100] sm:$0xff]
      %v9694 = vld [vmem:[#allocation3 + $0x108] sm:$0xff]
      %v9695 = vld [vmem:[#allocation3 + $0x110] sm:$0xff]
      %v9696 = vld [vmem:[#allocation3 + $0x118] sm:$0xff]
      %v9697 = vld [vmem:[#allocation3 + $0x120] sm:$0xff]
      %v9698 = vld [vmem:[#allocation3 + $0x128] sm:$0xff]
      %v9699 = vld [vmem:[#allocation3 + $0x130] sm:$0xff]
      %v9700 = vld [vmem:[#allocation3 + $0x138] sm:$0xff]
      %v9701 = vld [vmem:[#allocation3 + $0x140] sm:$0xff]
      %v9702 = vld [vmem:[#allocation3 + $0x148] sm:$0xff]
      %v9703 = vld [vmem:[#allocation3 + $0x150] sm:$0xff]
      %v9704 = vld [vmem:[#allocation3 + $0x158] sm:$0xff]
      %v9705 = vld [vmem:[#allocation3 + $0x160] sm:$0xff]
      %v9706 = vld [vmem:[#allocation3 + $0x168] sm:$0xff]
      %v9707 = vld [vmem:[#allocation3 + $0x170] sm:$0xff]
      %v9708 = vld [vmem:[#allocation3 + $0x178] sm:$0xff]
      %v9709 = vld [vmem:[#allocation3 + $0x180] sm:$0xff]
      %v9710 = vld [vmem:[#allocation3 + $0x188] sm:$0xff]
      %s9711 = scalar_lea.vmem %s7, 56
      %v9712 = vld [vmem:[%s9711] sm:$0xff]
      %v9714 = vsel %vm398, %v9679, 0
      %v9717 = vsel %vm398, %v9680, 0
      %v9720 = vsel %vm398, %v9681, 0
      %v9723 = vsel %vm398, %v9682, 0
      %v9726 = vsel %vm398, %v9683, 0
      %v9729 = vsel %vm398, %v9684, 0
      %v9732 = vsel %vm398, %v9685, 0
      %v9735 = vsel %vm398, %v9686, 0
      %v9738 = vsel %vm398, %v9687, 0
      %v9741 = vsel %vm398, %v9688, 0
      %v9744 = vsel %vm398, %v9689, 0
      %v9747 = vsel %vm398, %v9690, 0
      %v9750 = vsel %vm398, %v9691, 0
      %v9753 = vsel %vm398, %v9692, 0
      %v9756 = vsel %vm398, %v9693, 0
      %v9759 = vsel %vm398, %v9694, 0
      %v9762 = vsel %vm398, %v9695, 0
      %v9765 = vsel %vm398, %v9696, 0
      %v9768 = vsel %vm398, %v9697, 0
      %v9771 = vsel %vm398, %v9698, 0
      %v9774 = vsel %vm398, %v9699, 0
      %v9777 = vsel %vm398, %v9700, 0
      %v9780 = vsel %vm398, %v9701, 0
      %v9783 = vsel %vm398, %v9702, 0
      %v9786 = vsel %vm398, %v9703, 0
      %v9789 = vsel %vm398, %v9704, 0
      %v9792 = vsel %vm398, %v9705, 0
      %v9795 = vsel %vm398, %v9706, 0
      %v9798 = vsel %vm398, %v9707, 0
      %v9801 = vsel %vm398, %v9708, 0
      %v9804 = vsel %vm398, %v9709, 0
      %v9807 = vsel %vm398, %v9710, 0
      %9809 = vmatprep.subr.mxu0 0.0
      %9810 = vmatpush1.msra.mxu0 0.0
      %9811 = vmatprep.subr.mxu0 0.0
      %9812 = vmatpush1.msra.mxu0 0.0
      %9813 = vmatprep.subr.mxu0 0.0
      %9814 = vmatpush1.msra.mxu0 0.0
      %9815 = vmatprep.subr.mxu0 0.0
      %9816 = vmatpush1.msra.mxu0 0.0
      %9817 = vmatprep.subr.mxu0 0.0
      %9818 = vmatpush1.msra.mxu0 0.0
      %9819 = vmatprep.subr.mxu0 0.0
      %9820 = vmatpush1.msra.mxu0 0.0
      %9821 = vmatprep.subr.mxu0 0.0
      %9822 = vmatpush1.msra.mxu0 0.0
      %9823 = vmatprep.subr.mxu0 0.0
      %9824 = vmatpush1.msra.mxu0 0.0
      %9825 = vmatprep.subr.mxu0 0.0
      %9826 = vmatpush1.msra.mxu0 0.0
      %9827 = vmatprep.subr.mxu0 0.0
      %9828 = vmatpush1.msra.mxu0 0.0
      %9829 = vmatprep.subr.mxu0 0.0
      %9830 = vmatpush1.msra.mxu0 0.0
      %9831 = vmatprep.subr.mxu0 0.0
      %9832 = vmatpush1.msra.mxu0 0.0
      %9833 = vmatprep.subr.mxu0 0.0
      %9834 = vmatpush1.msra.mxu0 0.0
      %9835 = vmatprep.subr.mxu0 0.0
      %9836 = vmatpush1.msra.mxu0 0.0
      %9837 = vmatprep.subr.mxu0 0.0
      %9838 = vmatpush1.msra.mxu0 0.0
      %9839 = vmatprep.subr.mxu0 0.0
      %9840 = vmatpush1.msra.mxu0 %v9712
      %9841 = vmatprep.subr.mxu0 0.0
      %9842 = vmatpush2.msra.mxu0 0.0
      %9843 = vmatprep.subr.mxu0 0.0
      %9844 = vmatpush2.msra.mxu0 0.0
      %9845 = vmatprep.subr.mxu0 0.0
      %9846 = vmatpush2.msra.mxu0 0.0
      %9847 = vmatprep.subr.mxu0 0.0
      %9848 = vmatpush2.msra.mxu0 0.0
      %9849 = vmatprep.subr.mxu0 0.0
      %9850 = vmatpush2.msra.mxu0 0.0
      %9851 = vmatprep.subr.mxu0 0.0
      %9852 = vmatpush2.msra.mxu0 0.0
      %9853 = vmatprep.subr.mxu0 0.0
      %9854 = vmatpush2.msra.mxu0 0.0
      %9855 = vmatprep.subr.mxu0 0.0
      %9856 = vmatpush2.msra.mxu0 0.0
      %9857 = vmatprep.subr.mxu0 0.0
      %9858 = vmatpush2.msra.mxu0 0.0
      %9859 = vmatprep.subr.mxu0 0.0
      %9860 = vmatpush2.msra.mxu0 0.0
      %9861 = vmatprep.subr.mxu0 0.0
      %9862 = vmatpush2.msra.mxu0 0.0
      %9863 = vmatprep.subr.mxu0 0.0
      %9864 = vmatpush2.msra.mxu0 0.0
      %9865 = vmatprep.subr.mxu0 0.0
      %9866 = vmatpush2.msra.mxu0 0.0
      %9867 = vmatprep.subr.mxu0 0.0
      %9868 = vmatpush2.msra.mxu0 0.0
      %9869 = vmatprep.subr.mxu0 0.0
      %9870 = vmatpush2.msra.mxu0 0.0
      %9871 = vmatprep.subr.mxu0 0.0
      %9872 = vmatpush2.msra.mxu0 0.0
      %9873 = vmatprep.mubr.f32.mxu0 0.0
      %9874 = vmatmul.mubr.f32.gmra.mxu0 %v9714
      %v9875 = vpop.f32.mrf.mxu0
      %v9876 = vadd.f32 0.0, %v9875
      %v9877 = vpop.f32.mrf.mxu0
      %9878 = vmatprep.mubr.f32.mxu0 0.0
      %9879 = vmatmul.mubr.f32.gmra.mxu0 %v9717
      %v9880 = vpop.f32.mrf.mxu0
      %v9881 = vadd.f32 0.0, %v9880
      %v9882 = vpop.f32.mrf.mxu0
      %9883 = vmatprep.mubr.f32.mxu0 0.0
      %9884 = vmatmul.mubr.f32.gmra.mxu0 %v9720
      %v9885 = vpop.f32.mrf.mxu0
      %v9886 = vadd.f32 0.0, %v9885
      %v9887 = vpop.f32.mrf.mxu0
      %9888 = vmatprep.mubr.f32.mxu0 0.0
      %9889 = vmatmul.mubr.f32.gmra.mxu0 %v9723
      %v9890 = vpop.f32.mrf.mxu0
      %v9891 = vadd.f32 0.0, %v9890
      %v9892 = vpop.f32.mrf.mxu0
      %9893 = vmatprep.mubr.f32.mxu0 0.0
      %9894 = vmatmul.mubr.f32.gmra.mxu0 %v9726
      %v9895 = vpop.f32.mrf.mxu0
      %v9896 = vadd.f32 0.0, %v9895
      %v9897 = vpop.f32.mrf.mxu0
      %9898 = vmatprep.mubr.f32.mxu0 0.0
      %9899 = vmatmul.mubr.f32.gmra.mxu0 %v9729
      %v9900 = vpop.f32.mrf.mxu0
      %v9901 = vadd.f32 0.0, %v9900
      %v9902 = vpop.f32.mrf.mxu0
      %9903 = vmatprep.mubr.f32.mxu0 0.0
      %9904 = vmatmul.mubr.f32.gmra.mxu0 %v9732
      %v9905 = vpop.f32.mrf.mxu0
      %v9906 = vadd.f32 0.0, %v9905
      %v9907 = vpop.f32.mrf.mxu0
      %9908 = vmatprep.mubr.f32.mxu0 0.0
      %9909 = vmatmul.mubr.f32.gmra.mxu0 %v9735
      %v9910 = vpop.f32.mrf.mxu0
      %v9911 = vadd.f32 0.0, %v9910
      %v9912 = vpop.f32.mrf.mxu0
      %9913 = vmatprep.mubr.f32.mxu0 0.0
      %9914 = vmatmul.mubr.f32.gmra.mxu0 %v9738
      %v9915 = vpop.f32.mrf.mxu0
      %v9916 = vadd.f32 0.0, %v9915
      %v9917 = vpop.f32.mrf.mxu0
      %9918 = vmatprep.mubr.f32.mxu0 0.0
      %9919 = vmatmul.mubr.f32.gmra.mxu0 %v9741
      %v9920 = vpop.f32.mrf.mxu0
      %v9921 = vadd.f32 0.0, %v9920
      %v9922 = vpop.f32.mrf.mxu0
      %9923 = vmatprep.mubr.f32.mxu0 0.0
      %9924 = vmatmul.mubr.f32.gmra.mxu0 %v9744
      %v9925 = vpop.f32.mrf.mxu0
      %v9926 = vadd.f32 0.0, %v9925
      %v9927 = vpop.f32.mrf.mxu0
      %9928 = vmatprep.mubr.f32.mxu0 0.0
      %9929 = vmatmul.mubr.f32.gmra.mxu0 %v9747
      %v9930 = vpop.f32.mrf.mxu0
      %v9931 = vadd.f32 0.0, %v9930
      %v9932 = vpop.f32.mrf.mxu0
      %9933 = vmatprep.mubr.f32.mxu0 0.0
      %9934 = vmatmul.mubr.f32.gmra.mxu0 %v9750
      %v9935 = vpop.f32.mrf.mxu0
      %v9936 = vadd.f32 0.0, %v9935
      %v9937 = vpop.f32.mrf.mxu0
      %9938 = vmatprep.mubr.f32.mxu0 0.0
      %9939 = vmatmul.mubr.f32.gmra.mxu0 %v9753
      %v9940 = vpop.f32.mrf.mxu0
      %v9941 = vadd.f32 0.0, %v9940
      %v9942 = vpop.f32.mrf.mxu0
      %9943 = vmatprep.mubr.f32.mxu0 0.0
      %9944 = vmatmul.mubr.f32.gmra.mxu0 %v9756
      %v9945 = vpop.f32.mrf.mxu0
      %v9946 = vadd.f32 0.0, %v9945
      %v9947 = vpop.f32.mrf.mxu0
      %9948 = vmatprep.mubr.f32.mxu0 0.0
      %9949 = vmatmul.mubr.f32.gmra.mxu0 %v9759
      %v9950 = vpop.f32.mrf.mxu0
      %v9951 = vadd.f32 0.0, %v9950
      %v9952 = vpop.f32.mrf.mxu0
      %9953 = vmatprep.mubr.f32.mxu0 0.0
      %9954 = vmatmul.mubr.f32.gmra.mxu0 %v9762
      %v9955 = vpop.f32.mrf.mxu0
      %v9956 = vadd.f32 0.0, %v9955
      %v9957 = vpop.f32.mrf.mxu0
      %9958 = vmatprep.mubr.f32.mxu0 0.0
      %9959 = vmatmul.mubr.f32.gmra.mxu0 %v9765
      %v9960 = vpop.f32.mrf.mxu0
      %v9961 = vadd.f32 0.0, %v9960
      %v9962 = vpop.f32.mrf.mxu0
      %9963 = vmatprep.mubr.f32.mxu0 0.0
      %9964 = vmatmul.mubr.f32.gmra.mxu0 %v9768
      %v9965 = vpop.f32.mrf.mxu0
      %v9966 = vadd.f32 0.0, %v9965
      %v9967 = vpop.f32.mrf.mxu0
      %9968 = vmatprep.mubr.f32.mxu0 0.0
      %9969 = vmatmul.mubr.f32.gmra.mxu0 %v9771
      %v9970 = vpop.f32.mrf.mxu0
      %v9971 = vadd.f32 0.0, %v9970
      %v9972 = vpop.f32.mrf.mxu0
      %9973 = vmatprep.mubr.f32.mxu0 0.0
      %9974 = vmatmul.mubr.f32.gmra.mxu0 %v9774
      %v9975 = vpop.f32.mrf.mxu0
      %v9976 = vadd.f32 0.0, %v9975
      %v9977 = vpop.f32.mrf.mxu0
      %9978 = vmatprep.mubr.f32.mxu0 0.0
      %9979 = vmatmul.mubr.f32.gmra.mxu0 %v9777
      %v9980 = vpop.f32.mrf.mxu0
      %v9981 = vadd.f32 0.0, %v9980
      %v9982 = vpop.f32.mrf.mxu0
      %9983 = vmatprep.mubr.f32.mxu0 0.0
      %9984 = vmatmul.mubr.f32.gmra.mxu0 %v9780
      %v9985 = vpop.f32.mrf.mxu0
      %v9986 = vadd.f32 0.0, %v9985
      %v9987 = vpop.f32.mrf.mxu0
      %9988 = vmatprep.mubr.f32.mxu0 0.0
      %9989 = vmatmul.mubr.f32.gmra.mxu0 %v9783
      %v9990 = vpop.f32.mrf.mxu0
      %v9991 = vadd.f32 0.0, %v9990
      %v9992 = vpop.f32.mrf.mxu0
      %9993 = vmatprep.mubr.f32.mxu0 0.0
      %9994 = vmatmul.mubr.f32.gmra.mxu0 %v9786
      %v9995 = vpop.f32.mrf.mxu0
      %v9996 = vadd.f32 0.0, %v9995
      %v9997 = vpop.f32.mrf.mxu0
      %9998 = vmatprep.mubr.f32.mxu0 0.0
      %9999 = vmatmul.mubr.f32.gmra.mxu0 %v9789
      %v10000 = vpop.f32.mrf.mxu0
      %v10001 = vadd.f32 0.0, %v10000
      %v10002 = vpop.f32.mrf.mxu0
      %10003 = vmatprep.mubr.f32.mxu0 0.0
      %10004 = vmatmul.mubr.f32.gmra.mxu0 %v9792
      %v10005 = vpop.f32.mrf.mxu0
      %v10006 = vadd.f32 0.0, %v10005
      %v10007 = vpop.f32.mrf.mxu0
      %10008 = vmatprep.mubr.f32.mxu0 0.0
      %10009 = vmatmul.mubr.f32.gmra.mxu0 %v9795
      %v10010 = vpop.f32.mrf.mxu0
      %v10011 = vadd.f32 0.0, %v10010
      %v10012 = vpop.f32.mrf.mxu0
      %10013 = vmatprep.mubr.f32.mxu0 0.0
      %10014 = vmatmul.mubr.f32.gmra.mxu0 %v9798
      %v10015 = vpop.f32.mrf.mxu0
      %v10016 = vadd.f32 0.0, %v10015
      %v10017 = vpop.f32.mrf.mxu0
      %10018 = vmatprep.mubr.f32.mxu0 0.0
      %10019 = vmatmul.mubr.f32.gmra.mxu0 %v9801
      %v10020 = vpop.f32.mrf.mxu0
      %v10021 = vadd.f32 0.0, %v10020
      %v10022 = vpop.f32.mrf.mxu0
      %10023 = vmatprep.mubr.f32.mxu0 0.0
      %10024 = vmatmul.mubr.f32.gmra.mxu0 %v9804
      %v10025 = vpop.f32.mrf.mxu0
      %v10026 = vadd.f32 0.0, %v10025
      %v10027 = vpop.f32.mrf.mxu0
      %10028 = vmatprep.mubr.f32.mxu0 0.0
      %10029 = vmatmul.mubr.f32.gmra.mxu0 %v9807
      %v10030 = vpop.f32.mrf.mxu0
      %v10031 = vadd.f32 0.0, %v10030
      %v10032 = vpop.f32.mrf.mxu0
      %10033 = vdwg.mxu0
      %v10034 = vld [vmem:[%s4799] sm:$0xff]
      %v10035 = vld [vmem:[%s4799 + $0x8] sm:$0xff]
      %v10036 = vld [vmem:[%s4799 + $0x10] sm:$0xff]
      %v10037 = vld [vmem:[%s4799 + $0x18] sm:$0xff]
      %v10038 = vld [vmem:[%s4799 + $0x20] sm:$0xff]
      %v10039 = vld [vmem:[%s4799 + $0x28] sm:$0xff]
      %v10040 = vld [vmem:[%s4799 + $0x30] sm:$0xff]
      %v10041 = vld [vmem:[%s4799 + $0x38] sm:$0xff]
      %v10042 = vld [vmem:[%s4799 + $0x40] sm:$0xff]
      %v10043 = vld [vmem:[%s4799 + $0x48] sm:$0xff]
      %v10044 = vld [vmem:[%s4799 + $0x50] sm:$0xff]
      %v10045 = vld [vmem:[%s4799 + $0x58] sm:$0xff]
      %v10046 = vld [vmem:[%s4799 + $0x60] sm:$0xff]
      %v10047 = vld [vmem:[%s4799 + $0x68] sm:$0xff]
      %v10048 = vld [vmem:[%s4799 + $0x70] sm:$0xff]
      %v10049 = vld [vmem:[%s4799 + $0x78] sm:$0xff]
      %v10050 = vld [vmem:[%s4799 + $0x80] sm:$0xff]
      %v10051 = vld [vmem:[%s4799 + $0x88] sm:$0xff]
      %v10052 = vld [vmem:[%s4799 + $0x90] sm:$0xff]
      %v10053 = vld [vmem:[%s4799 + $0x98] sm:$0xff]
      %v10054 = vld [vmem:[%s4799 + $0xa0] sm:$0xff]
      %v10055 = vld [vmem:[%s4799 + $0xa8] sm:$0xff]
      %v10056 = vld [vmem:[%s4799 + $0xb0] sm:$0xff]
      %v10057 = vld [vmem:[%s4799 + $0xb8] sm:$0xff]
      %v10058 = vld [vmem:[%s4799 + $0xc0] sm:$0xff]
      %v10059 = vld [vmem:[%s4799 + $0xc8] sm:$0xff]
      %v10060 = vld [vmem:[%s4799 + $0xd0] sm:$0xff]
      %v10061 = vld [vmem:[%s4799 + $0xd8] sm:$0xff]
      %v10062 = vld [vmem:[%s4799 + $0xe0] sm:$0xff]
      %v10063 = vld [vmem:[%s4799 + $0xe8] sm:$0xff]
      %v10064 = vld [vmem:[%s4799 + $0xf0] sm:$0xff]
      %v10065 = vld [vmem:[%s4799 + $0xf8] sm:$0xff]
      %v10066 = vmul.f32 %v9876, %v10034
      %v10067 = vmul.f32 %v9881, %v10035
      %v10068 = vmul.f32 %v9886, %v10036
      %v10069 = vmul.f32 %v9891, %v10037
      %v10070 = vmul.f32 %v9896, %v10038
      %v10071 = vmul.f32 %v9901, %v10039
      %v10072 = vmul.f32 %v9906, %v10040
      %v10073 = vmul.f32 %v9911, %v10041
      %v10074 = vmul.f32 %v9916, %v10042
      %v10075 = vmul.f32 %v9921, %v10043
      %v10076 = vmul.f32 %v9926, %v10044
      %v10077 = vmul.f32 %v9931, %v10045
      %v10078 = vmul.f32 %v9936, %v10046
      %v10079 = vmul.f32 %v9941, %v10047
      %v10080 = vmul.f32 %v9946, %v10048
      %v10081 = vmul.f32 %v9951, %v10049
      %v10082 = vmul.f32 %v9956, %v10050
      %v10083 = vmul.f32 %v9961, %v10051
      %v10084 = vmul.f32 %v9966, %v10052
      %v10085 = vmul.f32 %v9971, %v10053
      %v10086 = vmul.f32 %v9976, %v10054
      %v10087 = vmul.f32 %v9981, %v10055
      %v10088 = vmul.f32 %v9986, %v10056
      %v10089 = vmul.f32 %v9991, %v10057
      %v10090 = vmul.f32 %v9996, %v10058
      %v10091 = vmul.f32 %v10001, %v10059
      %v10092 = vmul.f32 %v10006, %v10060
      %v10093 = vmul.f32 %v10011, %v10061
      %v10094 = vmul.f32 %v10016, %v10062
      %v10095 = vmul.f32 %v10021, %v10063
      %v10096 = vmul.f32 %v10026, %v10064
      %v10097 = vmul.f32 %v10031, %v10065
      %v10098 = vadd.f32 %v9647, %v10066
      %v10099 = vadd.f32 %v9648, %v10067
      %v10100 = vadd.f32 %v9649, %v10068
      %v10101 = vadd.f32 %v9650, %v10069
      %v10102 = vadd.f32 %v9651, %v10070
      %v10103 = vadd.f32 %v9652, %v10071
      %v10104 = vadd.f32 %v9653, %v10072
      %v10105 = vadd.f32 %v9654, %v10073
      %v10106 = vadd.f32 %v9655, %v10074
      %v10107 = vadd.f32 %v9656, %v10075
      %v10108 = vadd.f32 %v9657, %v10076
      %v10109 = vadd.f32 %v9658, %v10077
      %v10110 = vadd.f32 %v9659, %v10078
      %v10111 = vadd.f32 %v9660, %v10079
      %v10112 = vadd.f32 %v9661, %v10080
      %v10113 = vadd.f32 %v9662, %v10081
      %v10114 = vadd.f32 %v9663, %v10082
      %v10115 = vadd.f32 %v9664, %v10083
      %v10116 = vadd.f32 %v9665, %v10084
      %v10117 = vadd.f32 %v9666, %v10085
      %v10118 = vadd.f32 %v9667, %v10086
      %v10119 = vadd.f32 %v9668, %v10087
      %v10120 = vadd.f32 %v9669, %v10088
      %v10121 = vadd.f32 %v9670, %v10089
      %v10122 = vadd.f32 %v9671, %v10090
      %v10123 = vadd.f32 %v9672, %v10091
      %v10124 = vadd.f32 %v9673, %v10092
      %v10125 = vadd.f32 %v9674, %v10093
      %v10126 = vadd.f32 %v9675, %v10094
      %v10127 = vadd.f32 %v9676, %v10095
      %v10128 = vadd.f32 %v9677, %v10096
      %v10129 = vadd.f32 %v9678, %v10097
      %v10130 = vld [vmem:[#allocation3 + $0x91] sm:$0xff]
      %v10131 = vld [vmem:[#allocation3 + $0x99] sm:$0xff]
      %v10132 = vld [vmem:[#allocation3 + $0xa1] sm:$0xff]
      %v10133 = vld [vmem:[#allocation3 + $0xa9] sm:$0xff]
      %v10134 = vld [vmem:[#allocation3 + $0xb1] sm:$0xff]
      %v10135 = vld [vmem:[#allocation3 + $0xb9] sm:$0xff]
      %v10136 = vld [vmem:[#allocation3 + $0xc1] sm:$0xff]
      %v10137 = vld [vmem:[#allocation3 + $0xc9] sm:$0xff]
      %v10138 = vld [vmem:[#allocation3 + $0xd1] sm:$0xff]
      %v10139 = vld [vmem:[#allocation3 + $0xd9] sm:$0xff]
      %v10140 = vld [vmem:[#allocation3 + $0xe1] sm:$0xff]
      %v10141 = vld [vmem:[#allocation3 + $0xe9] sm:$0xff]
      %v10142 = vld [vmem:[#allocation3 + $0xf1] sm:$0xff]
      %v10143 = vld [vmem:[#allocation3 + $0xf9] sm:$0xff]
      %v10144 = vld [vmem:[#allocation3 + $0x101] sm:$0xff]
      %v10145 = vld [vmem:[#allocation3 + $0x109] sm:$0xff]
      %v10146 = vld [vmem:[#allocation3 + $0x111] sm:$0xff]
      %v10147 = vld [vmem:[#allocation3 + $0x119] sm:$0xff]
      %v10148 = vld [vmem:[#allocation3 + $0x121] sm:$0xff]
      %v10149 = vld [vmem:[#allocation3 + $0x129] sm:$0xff]
      %v10150 = vld [vmem:[#allocation3 + $0x131] sm:$0xff]
      %v10151 = vld [vmem:[#allocation3 + $0x139] sm:$0xff]
      %v10152 = vld [vmem:[#allocation3 + $0x141] sm:$0xff]
      %v10153 = vld [vmem:[#allocation3 + $0x149] sm:$0xff]
      %v10154 = vld [vmem:[#allocation3 + $0x151] sm:$0xff]
      %v10155 = vld [vmem:[#allocation3 + $0x159] sm:$0xff]
      %v10156 = vld [vmem:[#allocation3 + $0x161] sm:$0xff]
      %v10157 = vld [vmem:[#allocation3 + $0x169] sm:$0xff]
      %v10158 = vld [vmem:[#allocation3 + $0x171] sm:$0xff]
      %v10159 = vld [vmem:[#allocation3 + $0x179] sm:$0xff]
      %v10160 = vld [vmem:[#allocation3 + $0x181] sm:$0xff]
      %v10161 = vld [vmem:[#allocation3 + $0x189] sm:$0xff]
      %s10162 = scalar_lea.vmem %s7, 64
      %v10163 = vld [vmem:[%s10162] sm:$0xff]
      %v10165 = vsel %vm398, %v10130, 0
      %v10168 = vsel %vm398, %v10131, 0
      %v10171 = vsel %vm398, %v10132, 0
      %v10174 = vsel %vm398, %v10133, 0
      %v10177 = vsel %vm398, %v10134, 0
      %v10180 = vsel %vm398, %v10135, 0
      %v10183 = vsel %vm398, %v10136, 0
      %v10186 = vsel %vm398, %v10137, 0
      %v10189 = vsel %vm398, %v10138, 0
      %v10192 = vsel %vm398, %v10139, 0
      %v10195 = vsel %vm398, %v10140, 0
      %v10198 = vsel %vm398, %v10141, 0
      %v10201 = vsel %vm398, %v10142, 0
      %v10204 = vsel %vm398, %v10143, 0
      %v10207 = vsel %vm398, %v10144, 0
      %v10210 = vsel %vm398, %v10145, 0
      %v10213 = vsel %vm398, %v10146, 0
      %v10216 = vsel %vm398, %v10147, 0
      %v10219 = vsel %vm398, %v10148, 0
      %v10222 = vsel %vm398, %v10149, 0
      %v10225 = vsel %vm398, %v10150, 0
      %v10228 = vsel %vm398, %v10151, 0
      %v10231 = vsel %vm398, %v10152, 0
      %v10234 = vsel %vm398, %v10153, 0
      %v10237 = vsel %vm398, %v10154, 0
      %v10240 = vsel %vm398, %v10155, 0
      %v10243 = vsel %vm398, %v10156, 0
      %v10246 = vsel %vm398, %v10157, 0
      %v10249 = vsel %vm398, %v10158, 0
      %v10252 = vsel %vm398, %v10159, 0
      %v10255 = vsel %vm398, %v10160, 0
      %v10258 = vsel %vm398, %v10161, 0
      %10260 = vmatprep.subr.mxu0 0.0
      %10261 = vmatpush1.msra.mxu0 0.0
      %10262 = vmatprep.subr.mxu0 0.0
      %10263 = vmatpush1.msra.mxu0 0.0
      %10264 = vmatprep.subr.mxu0 0.0
      %10265 = vmatpush1.msra.mxu0 0.0
      %10266 = vmatprep.subr.mxu0 0.0
      %10267 = vmatpush1.msra.mxu0 0.0
      %10268 = vmatprep.subr.mxu0 0.0
      %10269 = vmatpush1.msra.mxu0 0.0
      %10270 = vmatprep.subr.mxu0 0.0
      %10271 = vmatpush1.msra.mxu0 0.0
      %10272 = vmatprep.subr.mxu0 0.0
      %10273 = vmatpush1.msra.mxu0 0.0
      %10274 = vmatprep.subr.mxu0 0.0
      %10275 = vmatpush1.msra.mxu0 0.0
      %10276 = vmatprep.subr.mxu0 0.0
      %10277 = vmatpush1.msra.mxu0 0.0
      %10278 = vmatprep.subr.mxu0 0.0
      %10279 = vmatpush1.msra.mxu0 0.0
      %10280 = vmatprep.subr.mxu0 0.0
      %10281 = vmatpush1.msra.mxu0 0.0
      %10282 = vmatprep.subr.mxu0 0.0
      %10283 = vmatpush1.msra.mxu0 0.0
      %10284 = vmatprep.subr.mxu0 0.0
      %10285 = vmatpush1.msra.mxu0 0.0
      %10286 = vmatprep.subr.mxu0 0.0
      %10287 = vmatpush1.msra.mxu0 0.0
      %10288 = vmatprep.subr.mxu0 0.0
      %10289 = vmatpush1.msra.mxu0 0.0
      %10290 = vmatprep.subr.mxu0 0.0
      %10291 = vmatpush1.msra.mxu0 %v10163
      %10292 = vmatprep.subr.mxu0 0.0
      %10293 = vmatpush2.msra.mxu0 0.0
      %10294 = vmatprep.subr.mxu0 0.0
      %10295 = vmatpush2.msra.mxu0 0.0
      %10296 = vmatprep.subr.mxu0 0.0
      %10297 = vmatpush2.msra.mxu0 0.0
      %10298 = vmatprep.subr.mxu0 0.0
      %10299 = vmatpush2.msra.mxu0 0.0
      %10300 = vmatprep.subr.mxu0 0.0
      %10301 = vmatpush2.msra.mxu0 0.0
      %10302 = vmatprep.subr.mxu0 0.0
      %10303 = vmatpush2.msra.mxu0 0.0
      %10304 = vmatprep.subr.mxu0 0.0
      %10305 = vmatpush2.msra.mxu0 0.0
      %10306 = vmatprep.subr.mxu0 0.0
      %10307 = vmatpush2.msra.mxu0 0.0
      %10308 = vmatprep.subr.mxu0 0.0
      %10309 = vmatpush2.msra.mxu0 0.0
      %10310 = vmatprep.subr.mxu0 0.0
      %10311 = vmatpush2.msra.mxu0 0.0
      %10312 = vmatprep.subr.mxu0 0.0
      %10313 = vmatpush2.msra.mxu0 0.0
      %10314 = vmatprep.subr.mxu0 0.0
      %10315 = vmatpush2.msra.mxu0 0.0
      %10316 = vmatprep.subr.mxu0 0.0
      %10317 = vmatpush2.msra.mxu0 0.0
      %10318 = vmatprep.subr.mxu0 0.0
      %10319 = vmatpush2.msra.mxu0 0.0
      %10320 = vmatprep.subr.mxu0 0.0
      %10321 = vmatpush2.msra.mxu0 0.0
      %10322 = vmatprep.subr.mxu0 0.0
      %10323 = vmatpush2.msra.mxu0 0.0
      %10324 = vmatprep.mubr.f32.mxu0 0.0
      %10325 = vmatmul.mubr.f32.gmra.mxu0 %v10165
      %v10326 = vpop.f32.mrf.mxu0
      %v10327 = vadd.f32 0.0, %v10326
      %v10328 = vpop.f32.mrf.mxu0
      %10329 = vmatprep.mubr.f32.mxu0 0.0
      %10330 = vmatmul.mubr.f32.gmra.mxu0 %v10168
      %v10331 = vpop.f32.mrf.mxu0
      %v10332 = vadd.f32 0.0, %v10331
      %v10333 = vpop.f32.mrf.mxu0
      %10334 = vmatprep.mubr.f32.mxu0 0.0
      %10335 = vmatmul.mubr.f32.gmra.mxu0 %v10171
      %v10336 = vpop.f32.mrf.mxu0
      %v10337 = vadd.f32 0.0, %v10336
      %v10338 = vpop.f32.mrf.mxu0
      %10339 = vmatprep.mubr.f32.mxu0 0.0
      %10340 = vmatmul.mubr.f32.gmra.mxu0 %v10174
      %v10341 = vpop.f32.mrf.mxu0
      %v10342 = vadd.f32 0.0, %v10341
      %v10343 = vpop.f32.mrf.mxu0
      %10344 = vmatprep.mubr.f32.mxu0 0.0
      %10345 = vmatmul.mubr.f32.gmra.mxu0 %v10177
      %v10346 = vpop.f32.mrf.mxu0
      %v10347 = vadd.f32 0.0, %v10346
      %v10348 = vpop.f32.mrf.mxu0
      %10349 = vmatprep.mubr.f32.mxu0 0.0
      %10350 = vmatmul.mubr.f32.gmra.mxu0 %v10180
      %v10351 = vpop.f32.mrf.mxu0
      %v10352 = vadd.f32 0.0, %v10351
      %v10353 = vpop.f32.mrf.mxu0
      %10354 = vmatprep.mubr.f32.mxu0 0.0
      %10355 = vmatmul.mubr.f32.gmra.mxu0 %v10183
      %v10356 = vpop.f32.mrf.mxu0
      %v10357 = vadd.f32 0.0, %v10356
      %v10358 = vpop.f32.mrf.mxu0
      %10359 = vmatprep.mubr.f32.mxu0 0.0
      %10360 = vmatmul.mubr.f32.gmra.mxu0 %v10186
      %v10361 = vpop.f32.mrf.mxu0
      %v10362 = vadd.f32 0.0, %v10361
      %v10363 = vpop.f32.mrf.mxu0
      %10364 = vmatprep.mubr.f32.mxu0 0.0
      %10365 = vmatmul.mubr.f32.gmra.mxu0 %v10189
      %v10366 = vpop.f32.mrf.mxu0
      %v10367 = vadd.f32 0.0, %v10366
      %v10368 = vpop.f32.mrf.mxu0
      %10369 = vmatprep.mubr.f32.mxu0 0.0
      %10370 = vmatmul.mubr.f32.gmra.mxu0 %v10192
      %v10371 = vpop.f32.mrf.mxu0
      %v10372 = vadd.f32 0.0, %v10371
      %v10373 = vpop.f32.mrf.mxu0
      %10374 = vmatprep.mubr.f32.mxu0 0.0
      %10375 = vmatmul.mubr.f32.gmra.mxu0 %v10195
      %v10376 = vpop.f32.mrf.mxu0
      %v10377 = vadd.f32 0.0, %v10376
      %v10378 = vpop.f32.mrf.mxu0
      %10379 = vmatprep.mubr.f32.mxu0 0.0
      %10380 = vmatmul.mubr.f32.gmra.mxu0 %v10198
      %v10381 = vpop.f32.mrf.mxu0
      %v10382 = vadd.f32 0.0, %v10381
      %v10383 = vpop.f32.mrf.mxu0
      %10384 = vmatprep.mubr.f32.mxu0 0.0
      %10385 = vmatmul.mubr.f32.gmra.mxu0 %v10201
      %v10386 = vpop.f32.mrf.mxu0
      %v10387 = vadd.f32 0.0, %v10386
      %v10388 = vpop.f32.mrf.mxu0
      %10389 = vmatprep.mubr.f32.mxu0 0.0
      %10390 = vmatmul.mubr.f32.gmra.mxu0 %v10204
      %v10391 = vpop.f32.mrf.mxu0
      %v10392 = vadd.f32 0.0, %v10391
      %v10393 = vpop.f32.mrf.mxu0
      %10394 = vmatprep.mubr.f32.mxu0 0.0
      %10395 = vmatmul.mubr.f32.gmra.mxu0 %v10207
      %v10396 = vpop.f32.mrf.mxu0
      %v10397 = vadd.f32 0.0, %v10396
      %v10398 = vpop.f32.mrf.mxu0
      %10399 = vmatprep.mubr.f32.mxu0 0.0
      %10400 = vmatmul.mubr.f32.gmra.mxu0 %v10210
      %v10401 = vpop.f32.mrf.mxu0
      %v10402 = vadd.f32 0.0, %v10401
      %v10403 = vpop.f32.mrf.mxu0
      %10404 = vmatprep.mubr.f32.mxu0 0.0
      %10405 = vmatmul.mubr.f32.gmra.mxu0 %v10213
      %v10406 = vpop.f32.mrf.mxu0
      %v10407 = vadd.f32 0.0, %v10406
      %v10408 = vpop.f32.mrf.mxu0
      %10409 = vmatprep.mubr.f32.mxu0 0.0
      %10410 = vmatmul.mubr.f32.gmra.mxu0 %v10216
      %v10411 = vpop.f32.mrf.mxu0
      %v10412 = vadd.f32 0.0, %v10411
      %v10413 = vpop.f32.mrf.mxu0
      %10414 = vmatprep.mubr.f32.mxu0 0.0
      %10415 = vmatmul.mubr.f32.gmra.mxu0 %v10219
      %v10416 = vpop.f32.mrf.mxu0
      %v10417 = vadd.f32 0.0, %v10416
      %v10418 = vpop.f32.mrf.mxu0
      %10419 = vmatprep.mubr.f32.mxu0 0.0
      %10420 = vmatmul.mubr.f32.gmra.mxu0 %v10222
      %v10421 = vpop.f32.mrf.mxu0
      %v10422 = vadd.f32 0.0, %v10421
      %v10423 = vpop.f32.mrf.mxu0
      %10424 = vmatprep.mubr.f32.mxu0 0.0
      %10425 = vmatmul.mubr.f32.gmra.mxu0 %v10225
      %v10426 = vpop.f32.mrf.mxu0
      %v10427 = vadd.f32 0.0, %v10426
      %v10428 = vpop.f32.mrf.mxu0
      %10429 = vmatprep.mubr.f32.mxu0 0.0
      %10430 = vmatmul.mubr.f32.gmra.mxu0 %v10228
      %v10431 = vpop.f32.mrf.mxu0
      %v10432 = vadd.f32 0.0, %v10431
      %v10433 = vpop.f32.mrf.mxu0
      %10434 = vmatprep.mubr.f32.mxu0 0.0
      %10435 = vmatmul.mubr.f32.gmra.mxu0 %v10231
      %v10436 = vpop.f32.mrf.mxu0
      %v10437 = vadd.f32 0.0, %v10436
      %v10438 = vpop.f32.mrf.mxu0
      %10439 = vmatprep.mubr.f32.mxu0 0.0
      %10440 = vmatmul.mubr.f32.gmra.mxu0 %v10234
      %v10441 = vpop.f32.mrf.mxu0
      %v10442 = vadd.f32 0.0, %v10441
      %v10443 = vpop.f32.mrf.mxu0
      %10444 = vmatprep.mubr.f32.mxu0 0.0
      %10445 = vmatmul.mubr.f32.gmra.mxu0 %v10237
      %v10446 = vpop.f32.mrf.mxu0
      %v10447 = vadd.f32 0.0, %v10446
      %v10448 = vpop.f32.mrf.mxu0
      %10449 = vmatprep.mubr.f32.mxu0 0.0
      %10450 = vmatmul.mubr.f32.gmra.mxu0 %v10240
      %v10451 = vpop.f32.mrf.mxu0
      %v10452 = vadd.f32 0.0, %v10451
      %v10453 = vpop.f32.mrf.mxu0
      %10454 = vmatprep.mubr.f32.mxu0 0.0
      %10455 = vmatmul.mubr.f32.gmra.mxu0 %v10243
      %v10456 = vpop.f32.mrf.mxu0
      %v10457 = vadd.f32 0.0, %v10456
      %v10458 = vpop.f32.mrf.mxu0
      %10459 = vmatprep.mubr.f32.mxu0 0.0
      %10460 = vmatmul.mubr.f32.gmra.mxu0 %v10246
      %v10461 = vpop.f32.mrf.mxu0
      %v10462 = vadd.f32 0.0, %v10461
      %v10463 = vpop.f32.mrf.mxu0
      %10464 = vmatprep.mubr.f32.mxu0 0.0
      %10465 = vmatmul.mubr.f32.gmra.mxu0 %v10249
      %v10466 = vpop.f32.mrf.mxu0
      %v10467 = vadd.f32 0.0, %v10466
      %v10468 = vpop.f32.mrf.mxu0
      %10469 = vmatprep.mubr.f32.mxu0 0.0
      %10470 = vmatmul.mubr.f32.gmra.mxu0 %v10252
      %v10471 = vpop.f32.mrf.mxu0
      %v10472 = vadd.f32 0.0, %v10471
      %v10473 = vpop.f32.mrf.mxu0
      %10474 = vmatprep.mubr.f32.mxu0 0.0
      %10475 = vmatmul.mubr.f32.gmra.mxu0 %v10255
      %v10476 = vpop.f32.mrf.mxu0
      %v10477 = vadd.f32 0.0, %v10476
      %v10478 = vpop.f32.mrf.mxu0
      %10479 = vmatprep.mubr.f32.mxu0 0.0
      %10480 = vmatmul.mubr.f32.gmra.mxu0 %v10258
      %v10481 = vpop.f32.mrf.mxu0
      %v10482 = vadd.f32 0.0, %v10481
      %v10483 = vpop.f32.mrf.mxu0
      %10484 = vdwg.mxu0
      %v10485 = vld [vmem:[%s5414] sm:$0xff]
      %v10486 = vld [vmem:[%s5414 + $0x8] sm:$0xff]
      %v10487 = vld [vmem:[%s5414 + $0x10] sm:$0xff]
      %v10488 = vld [vmem:[%s5414 + $0x18] sm:$0xff]
      %v10489 = vld [vmem:[%s5414 + $0x20] sm:$0xff]
      %v10490 = vld [vmem:[%s5414 + $0x28] sm:$0xff]
      %v10491 = vld [vmem:[%s5414 + $0x30] sm:$0xff]
      %v10492 = vld [vmem:[%s5414 + $0x38] sm:$0xff]
      %v10493 = vld [vmem:[%s5414 + $0x40] sm:$0xff]
      %v10494 = vld [vmem:[%s5414 + $0x48] sm:$0xff]
      %v10495 = vld [vmem:[%s5414 + $0x50] sm:$0xff]
      %v10496 = vld [vmem:[%s5414 + $0x58] sm:$0xff]
      %v10497 = vld [vmem:[%s5414 + $0x60] sm:$0xff]
      %v10498 = vld [vmem:[%s5414 + $0x68] sm:$0xff]
      %v10499 = vld [vmem:[%s5414 + $0x70] sm:$0xff]
      %v10500 = vld [vmem:[%s5414 + $0x78] sm:$0xff]
      %v10501 = vld [vmem:[%s5414 + $0x80] sm:$0xff]
      %v10502 = vld [vmem:[%s5414 + $0x88] sm:$0xff]
      %v10503 = vld [vmem:[%s5414 + $0x90] sm:$0xff]
      %v10504 = vld [vmem:[%s5414 + $0x98] sm:$0xff]
      %v10505 = vld [vmem:[%s5414 + $0xa0] sm:$0xff]
      %v10506 = vld [vmem:[%s5414 + $0xa8] sm:$0xff]
      %v10507 = vld [vmem:[%s5414 + $0xb0] sm:$0xff]
      %v10508 = vld [vmem:[%s5414 + $0xb8] sm:$0xff]
      %v10509 = vld [vmem:[%s5414 + $0xc0] sm:$0xff]
      %v10510 = vld [vmem:[%s5414 + $0xc8] sm:$0xff]
      %v10511 = vld [vmem:[%s5414 + $0xd0] sm:$0xff]
      %v10512 = vld [vmem:[%s5414 + $0xd8] sm:$0xff]
      %v10513 = vld [vmem:[%s5414 + $0xe0] sm:$0xff]
      %v10514 = vld [vmem:[%s5414 + $0xe8] sm:$0xff]
      %v10515 = vld [vmem:[%s5414 + $0xf0] sm:$0xff]
      %v10516 = vld [vmem:[%s5414 + $0xf8] sm:$0xff]
      %v10517 = vmul.f32 %v10327, %v10485
      %v10518 = vmul.f32 %v10332, %v10486
      %v10519 = vmul.f32 %v10337, %v10487
      %v10520 = vmul.f32 %v10342, %v10488
      %v10521 = vmul.f32 %v10347, %v10489
      %v10522 = vmul.f32 %v10352, %v10490
      %v10523 = vmul.f32 %v10357, %v10491
      %v10524 = vmul.f32 %v10362, %v10492
      %v10525 = vmul.f32 %v10367, %v10493
      %v10526 = vmul.f32 %v10372, %v10494
      %v10527 = vmul.f32 %v10377, %v10495
      %v10528 = vmul.f32 %v10382, %v10496
      %v10529 = vmul.f32 %v10387, %v10497
      %v10530 = vmul.f32 %v10392, %v10498
      %v10531 = vmul.f32 %v10397, %v10499
      %v10532 = vmul.f32 %v10402, %v10500
      %v10533 = vmul.f32 %v10407, %v10501
      %v10534 = vmul.f32 %v10412, %v10502
      %v10535 = vmul.f32 %v10417, %v10503
      %v10536 = vmul.f32 %v10422, %v10504
      %v10537 = vmul.f32 %v10427, %v10505
      %v10538 = vmul.f32 %v10432, %v10506
      %v10539 = vmul.f32 %v10437, %v10507
      %v10540 = vmul.f32 %v10442, %v10508
      %v10541 = vmul.f32 %v10447, %v10509
      %v10542 = vmul.f32 %v10452, %v10510
      %v10543 = vmul.f32 %v10457, %v10511
      %v10544 = vmul.f32 %v10462, %v10512
      %v10545 = vmul.f32 %v10467, %v10513
      %v10546 = vmul.f32 %v10472, %v10514
      %v10547 = vmul.f32 %v10477, %v10515
      %v10548 = vmul.f32 %v10482, %v10516
      %v10549 = vadd.f32 %v10098, %v10517
      %v10550 = vadd.f32 %v10099, %v10518
      %v10551 = vadd.f32 %v10100, %v10519
      %v10552 = vadd.f32 %v10101, %v10520
      %v10553 = vadd.f32 %v10102, %v10521
      %v10554 = vadd.f32 %v10103, %v10522
      %v10555 = vadd.f32 %v10104, %v10523
      %v10556 = vadd.f32 %v10105, %v10524
      %v10557 = vadd.f32 %v10106, %v10525
      %v10558 = vadd.f32 %v10107, %v10526
      %v10559 = vadd.f32 %v10108, %v10527
      %v10560 = vadd.f32 %v10109, %v10528
      %v10561 = vadd.f32 %v10110, %v10529
      %v10562 = vadd.f32 %v10111, %v10530
      %v10563 = vadd.f32 %v10112, %v10531
      %v10564 = vadd.f32 %v10113, %v10532
      %v10565 = vadd.f32 %v10114, %v10533
      %v10566 = vadd.f32 %v10115, %v10534
      %v10567 = vadd.f32 %v10116, %v10535
      %v10568 = vadd.f32 %v10117, %v10536
      %v10569 = vadd.f32 %v10118, %v10537
      %v10570 = vadd.f32 %v10119, %v10538
      %v10571 = vadd.f32 %v10120, %v10539
      %v10572 = vadd.f32 %v10121, %v10540
      %v10573 = vadd.f32 %v10122, %v10541
      %v10574 = vadd.f32 %v10123, %v10542
      %v10575 = vadd.f32 %v10124, %v10543
      %v10576 = vadd.f32 %v10125, %v10544
      %v10577 = vadd.f32 %v10126, %v10545
      %v10578 = vadd.f32 %v10127, %v10546
      %v10579 = vadd.f32 %v10128, %v10547
      %v10580 = vadd.f32 %v10129, %v10548
      %vm10581 = vcmask 7168
      %10582 = vst.msk [vmem:[%s332] sm:$0xff] %vm10581, %v10549
      %10583 = vst.msk [vmem:[%s332 + $0x8] sm:$0xff] %vm10581, %v10550
      %10584 = vst.msk [vmem:[%s332 + $0x10] sm:$0xff] %vm10581, %v10551
      %10585 = vst.msk [vmem:[%s332 + $0x18] sm:$0xff] %vm10581, %v10552
      %10586 = vst.msk [vmem:[%s332 + $0x20] sm:$0xff] %vm10581, %v10553
      %10587 = vst.msk [vmem:[%s332 + $0x28] sm:$0xff] %vm10581, %v10554
      %10588 = vst.msk [vmem:[%s332 + $0x30] sm:$0xff] %vm10581, %v10555
      %10589 = vst.msk [vmem:[%s332 + $0x38] sm:$0xff] %vm10581, %v10556
      %10590 = vst.msk [vmem:[%s332 + $0x40] sm:$0xff] %vm10581, %v10557
      %10591 = vst.msk [vmem:[%s332 + $0x48] sm:$0xff] %vm10581, %v10558
      %10592 = vst.msk [vmem:[%s332 + $0x50] sm:$0xff] %vm10581, %v10559
      %10593 = vst.msk [vmem:[%s332 + $0x58] sm:$0xff] %vm10581, %v10560
      %10594 = vst.msk [vmem:[%s332 + $0x60] sm:$0xff] %vm10581, %v10561
      %10595 = vst.msk [vmem:[%s332 + $0x68] sm:$0xff] %vm10581, %v10562
      %10596 = vst.msk [vmem:[%s332 + $0x70] sm:$0xff] %vm10581, %v10563
      %10597 = vst.msk [vmem:[%s332 + $0x78] sm:$0xff] %vm10581, %v10564
      %10598 = vst.msk [vmem:[%s332 + $0x80] sm:$0xff] %vm10581, %v10565
      %10599 = vst.msk [vmem:[%s332 + $0x88] sm:$0xff] %vm10581, %v10566
      %10600 = vst.msk [vmem:[%s332 + $0x90] sm:$0xff] %vm10581, %v10567
      %10601 = vst.msk [vmem:[%s332 + $0x98] sm:$0xff] %vm10581, %v10568
      %10602 = vst.msk [vmem:[%s332 + $0xa0] sm:$0xff] %vm10581, %v10569
      %10603 = vst.msk [vmem:[%s332 + $0xa8] sm:$0xff] %vm10581, %v10570
      %10604 = vst.msk [vmem:[%s332 + $0xb0] sm:$0xff] %vm10581, %v10571
      %10605 = vst.msk [vmem:[%s332 + $0xb8] sm:$0xff] %vm10581, %v10572
      %10606 = vst.msk [vmem:[%s332 + $0xc0] sm:$0xff] %vm10581, %v10573
      %10607 = vst.msk [vmem:[%s332 + $0xc8] sm:$0xff] %vm10581, %v10574
      %10608 = vst.msk [vmem:[%s332 + $0xd0] sm:$0xff] %vm10581, %v10575
      %10609 = vst.msk [vmem:[%s332 + $0xd8] sm:$0xff] %vm10581, %v10576
      %10610 = vst.msk [vmem:[%s332 + $0xe0] sm:$0xff] %vm10581, %v10577
      %10611 = vst.msk [vmem:[%s332 + $0xe8] sm:$0xff] %vm10581, %v10578
      %10612 = vst.msk [vmem:[%s332 + $0xf0] sm:$0xff] %vm10581, %v10579
      %10613 = vst.msk [vmem:[%s332 + $0xf8] sm:$0xff] %vm10581, %v10580
      %p10614 = scmp.lt.s32.totalorder %s20, 1
      %s10615 = scalar_select %p10614, %s20, 1
      %s10616 = smul.addr %s10615, 32
      %s10617 = smul.addr %s10616, 8
      %s10618 = scalar_lea.vmem %s9, %s10617
      // Predicated region
      $region57: #{lrp_model_forward.1} parent=55 // pred_check
        %p10619 = pneg %p232
      $region58: #{lrp_model_forward.1} parent=55 // pred_check_branch
        %10621 = sbr.rel (%p10619) target = $region60
      $region59: #{lrp_model_forward.1} parent=55 // pred_region
        _
      $region60: #{lrp_model_forward.1} parent=55 // pred_fallthru
        _
    $region56: #{lrp_model_forward.1} parent=5 // pred_fallthru
      _
    %p10622 = scmp.le.s32.totalorder 2, %s15
    // Predicated region
    $region61: #{lrp_model_forward.1} parent=5 // pred_check
      %p10623 = pneg %p10622
    $region62: #{lrp_model_forward.1} parent=5 // pred_check_branch
      %10625 = sbr.rel (%p10623) target = $region64
    $region63: #{lrp_model_forward.1} parent=5 // pred_region
      %s10626 = ssub.s32 %s15, 2
      // Predicated region
      $region65: #{lrp_model_forward.1} parent=63 // pred_check
        %p10627 = pneg %p238
      $region66: #{lrp_model_forward.1} parent=63 // pred_check_branch
        %10629 = sbr.rel (%p10627) target = $region68
      $region67: #{lrp_model_forward.1} parent=63 // pred_region
        %p10630 = scmp.lt.s32.totalorder %s21, 1
        %s10631 = scalar_select %p10630, %s21, 1
        %s10632 = smul.addr %s10631, 32
        %s10633 = smul.addr %s10632, 8
        %s10634 = scalar_lea.vmem %s9, %s10633
      $region68: #{lrp_model_forward.1} parent=63 // pred_fallthru
        _
    $region64: #{lrp_model_forward.1} parent=5 // pred_fallthru
      _
  $region6: #{lrp_model_forward.1} parent=0 // loop_footer
    %s19 = sadd.s32 1, %s15
  $region7: #{lrp_model_forward.1} parent=0 // loop_footer_branch
    %14 = sbr.rel target = $region3
  $region8: #{lrp_model_forward.1} parent=0 // loop_exit
    _

</llo_original>
